<compile_context>
chip_gen: v7x
topology: tpu7x:2x2x1
jax: 0.10.0
libtpu: 0.0.40
codegen_flags: <defaults>
</compile_context>

<pallas_src>
import functools

import jax
import jax.numpy as jnp
import numpy as np
from jax import lax
from jax.experimental import pallas as pl
from jax.experimental.pallas import tpu as pltpu

C = 3    # in/out channels of both convs (fixed by the PyTorch module)
KS = 3   # kernel size


# ---------------------------------------------------------------------------
# Fused Pallas kernel: B images per grid step, everything stays in VMEM.
# ---------------------------------------------------------------------------
def _residual_block_kernel(x_ref, mask_ref, w1_ref, b1_ref, w2_ref, b2_ref,
                           o_ref, xe_ref, he_ref, *, H, W):
    """Refs:
      x_ref   : (B, C, L)          input block, L = H*W (lane-dense)      VMEM
      mask_ref: (2, L)             0/1 column masks (row0: dx=-1, row1: dx=+1)
      w*_ref  : (C*C*KS*KS,) f32   flat conv weights                      SMEM
      b*_ref  : (C,) f32           conv biases                            SMEM
      o_ref   : (B, C, L)          output block                           VMEM
      xe_ref  : (C, B, M+L+M)      scratch: input planes w/ zero margins  VMEM
      he_ref  : (C, B, M+L+M)      scratch: conv1 activation w/ margins   VMEM
    """
    B = x_ref.shape[0]
    L = H * W
    M = (xe_ref.shape[2] - L) // 2     # 128-lane-aligned margin, >= W + 1

    # 0/1 masks killing cross-row leakage of the +/-1 column taps: in the flat
    # layout, column -1 / W of an image row is a real pixel of the adjacent
    # row, but conv padding says it must read as zero.
    ok_l = jnp.broadcast_to(mask_ref[0:1, :], (B, L))   # dx = -1: dest col 0
    ok_r = jnp.broadcast_to(mask_ref[1:2, :], (B, L))   # dx = +1: dest col W-1

    def conv3x3(src_ref, w_ref, b_ref):
        """3x3 'same' conv over the C margin-padded flat planes in src_ref."""
        accs = [jnp.zeros((B, L), jnp.float32) + b_ref[co] for co in range(C)]
        for ci in range(C):
            for ky in range(KS):
                for kx in range(KS):
                    s = (ky - 1) * W + (kx - 1)             # flat source offset
                    t = src_ref[ci, :, M + s:M + s + L]     # shifted dense view
                    if kx == 0:
                        t = t * ok_l
                    elif kx == 2:
                        t = t * ok_r
                    for co in range(C):                     # reuse t across co
                        w = w_ref[(co * C + ci) * (KS * KS) + ky * KS + kx]
                        accs[co] = accs[co] + w * t
        return accs

    # ---- stage the input block into the margin-padded scratch ---------------
    zero_m = jnp.zeros((B, M), jnp.float32)
    for ci in range(C):
        xe_ref[ci, :, 0:M] = zero_m
        xe_ref[ci, :, M + L:2 * M + L] = zero_m
        he_ref[ci, :, 0:M] = zero_m
        he_ref[ci, :, M + L:2 * M + L] = zero_m
        xe_ref[ci, :, M:M + L] = x_ref[:, ci, :]

    # ---- conv1 + ReLU: activation kept in VMEM, stored lane-aligned ---------
    h = conv3x3(xe_ref, w1_ref, b1_ref)
    for co in range(C):
        he_ref[co, :, M:M + L] = jnp.maximum(h[co], 0.0)

    # ---- conv2 + ReLU + residual add (aligned residual read from xe) --------
    y = conv3x3(he_ref, w2_ref, b2_ref)
    for co in range(C):
        res = xe_ref[co, :, M:M + L]
        o_ref[:, co, :] = (jnp.maximum(y[co], 0.0) + res).astype(o_ref.dtype)


# ---------------------------------------------------------------------------
# Wrapper
# ---------------------------------------------------------------------------
def _pick_block_batch(n, max_b=8):
    """Largest divisor of n <= max_b, preferring to keep >= 2 grid steps."""
    divisors = [b for b in range(1, min(n, max_b) + 1) if n % b == 0]
    multi_step = [b for b in divisors if n // b >= 2]
    return max(multi_step) if multi_step else max(divisors)


def simple_residual_block(x, w1, b1, w2, b2, *, block_batch=None):
    """x: (N, C, H, W) NCHW like PyTorch; weights in torch (O, I, kH, kW) layout."""
    N, cin, H, W = x.shape
    assert cin == C
    L = H * W
    B = block_batch if block_batch is not None else _pick_block_batch(N)
    assert N % B == 0

    # Lane-aligned zero margin large enough to absorb every +/-(W+1) tap shift.
    margin = ((W + 1 + 127) // 128) * 128
    ext = 2 * margin + L

    # Free, contiguous reshape to the lane-dense (N, C, H*W) layout (no pad).
    x_flat = x.astype(jnp.float32).reshape(N, C, L)

    # Host-built 0/1 column masks for the dx = -1 / dx = +1 taps.
    cols = np.arange(L) % W
    mask_np = np.ones((2, L), np.float32)
    mask_np[0, cols == 0] = 0.0        # dx = -1: destination column 0 is padding
    mask_np[1, cols == W - 1] = 0.0    # dx = +1: destination column W-1 is padding
    masks = jnp.asarray(mask_np)

    w1f = w1.reshape(-1).astype(jnp.float32)
    w2f = w2.reshape(-1).astype(jnp.float32)
    b1f = b1.astype(jnp.float32)
    b2f = b2.astype(jnp.float32)

    kernel = functools.partial(_residual_block_kernel, H=H, W=W)

    out_flat = pl.pallas_call(
        kernel,
        out_shape=jax.ShapeDtypeStruct((N, C, L), jnp.float32),
        grid=(N // B,),
        in_specs=[
            pl.BlockSpec((B, C, L), lambda n: (n, 0, 0)),
            pl.BlockSpec((2, L), lambda n: (0, 0)),
            pl.BlockSpec(memory_space=pltpu.MemorySpace.SMEM),
            pl.BlockSpec(memory_space=pltpu.MemorySpace.SMEM),
            pl.BlockSpec(memory_space=pltpu.MemorySpace.SMEM),
            pl.BlockSpec(memory_space=pltpu.MemorySpace.SMEM),
        ],
        out_specs=pl.BlockSpec((B, C, L), lambda n: (n, 0, 0)),
        scratch_shapes=[
            pltpu.VMEM((C, B, ext), jnp.float32),
            pltpu.VMEM((C, B, ext), jnp.float32),
        ],
        compiler_params=pltpu.CompilerParams(
            dimension_semantics=("parallel",),   # v7x: split grid over both TCs
        ),
    )(x_flat, masks, w1f, b1f, w2f, b2f)

    return out_flat.reshape(N, C, H, W)


# ---------------------------------------------------------------------------
# Pure-JAX reference (exact semantics of the PyTorch module, eval mode)
# ---------------------------------------------------------------------------
def simple_residual_block_ref(x, w1, b1, w2, b2):
    dn = ("NCHW", "OIHW", "NCHW")
    y = lax.conv_general_dilated(x, w1, (1, 1), "SAME", dimension_numbers=dn,
                                 precision=lax.Precision.HIGHEST)
    y = jnp.maximum(y + b1[None, :, None, None], 0.0)
    y = lax.conv_general_dilated(y, w2, (1, 1), "SAME", dimension_numbers=dn,
                                 precision=lax.Precision.HIGHEST)
    return jnp.maximum(y + b2[None, :, None, None], 0.0) + x


# ---------------------------------------------------------------------------
if __name__ == "__main__":
    key = jax.random.PRNGKey(0)
    kx, k1, k2, k3, k4 = jax.random.split(key, 5)

    # CIFAR-like input consistent with the module (in_channels=3).
    N, H, W = 8, 32, 32          # -> B = 4 images/step, grid = (2,)
    x = jax.random.normal(kx, (N, C, H, W), jnp.float32)

    # PyTorch Conv2d default init: U(-1/sqrt(fan_in), 1/sqrt(fan_in)).
    fan_in = C * KS * KS
    bound = float(1.0 / np.sqrt(fan_in))
    w1 = jax.random.uniform(k1, (C, C, KS, KS), jnp.float32, -bound, bound)
    b1 = jax.random.uniform(k2, (C,), jnp.float32, -bound, bound)
    w2 = jax.random.uniform(k3, (C, C, KS, KS), jnp.float32, -bound, bound)
    b2 = jax.random.uniform(k4, (C,), jnp.float32, -bound, bound)

    fwd = jax.jit(simple_residual_block)
    out = jax.block_until_ready(fwd(x, w1, b1, w2, b2))

    assert out.shape == (N, C, H, W)
    assert bool(jnp.all(jnp.isfinite(out)))

    ref = jax.block_until_ready(
        jax.jit(simple_residual_block_ref)(x, w1, b1, w2, b2))
    np.testing.assert_allclose(np.asarray(out), np.asarray(ref),
                               rtol=1e-4, atol=1e-4)

    print("KERNEL_OK")
</pallas_src>

<mosaic_0001>
module attributes {stable_mosaic.version = 11 : i64} {
  func.func @_residual_block_kernel(%arg0: i32, %arg1: memref<4x3x1024xf32, #tpu.memory_space<vmem>>, %arg2: memref<2x1024xf32, #tpu.memory_space<vmem>>, %arg3: memref<81xf32, #tpu.memory_space<smem>>, %arg4: memref<3xf32, #tpu.memory_space<smem>>, %arg5: memref<81xf32, #tpu.memory_space<smem>>, %arg6: memref<3xf32, #tpu.memory_space<smem>>, %arg7: memref<4x3x1024xf32, #tpu.memory_space<vmem>>, %arg8: memref<3x4x1280xf32, #tpu.memory_space<vmem>>, %arg9: memref<3x4x1280xf32, #tpu.memory_space<vmem>>) attributes {dimension_semantics = [#tpu.dimension_semantics<parallel>], iteration_bounds = array<i64: 2>, scalar_prefetch = 0 : i64, scratch_operands = 2 : i64, tpu.core_type = #tpu.core_type<tc>, window_params = [{transform_indices = @transform_0, window_bounds = array<i64: 4, 3, 1024>}, {pipeline_mode = #tpu.pipeline_mode<synchronous>, transform_indices = @transform_1, window_bounds = array<i64: 2, 1024>}, {transform_indices = @transform_2, window_bounds = array<i64: 81>}, {transform_indices = @transform_3, window_bounds = array<i64: 3>}, {transform_indices = @transform_4, window_bounds = array<i64: 81>}, {transform_indices = @transform_5, window_bounds = array<i64: 3>}, {transform_indices = @transform_6, window_bounds = array<i64: 4, 3, 1024>}]} {
    %c0 = arith.constant 0 : index
    %c0_0 = arith.constant 0 : index
    %0 = vector.load %arg2[%c0, %c0_0] : memref<2x1024xf32, #tpu.memory_space<vmem>>, vector<1x1024xf32>
    %1 = vector.shape_cast %0 : vector<1x1024xf32> to vector<1x1024xf32>
    %2 = vector.broadcast %1 : vector<1x1024xf32> to vector<4x1024xf32>
    %c1 = arith.constant 1 : index
    %c0_1 = arith.constant 0 : index
    %3 = vector.load %arg2[%c1, %c0_1] : memref<2x1024xf32, #tpu.memory_space<vmem>>, vector<1x1024xf32>
    %4 = vector.shape_cast %3 : vector<1x1024xf32> to vector<1x1024xf32>
    %5 = vector.broadcast %4 : vector<1x1024xf32> to vector<4x1024xf32>
    %cst = arith.constant 0.000000e+00 : f32
    %6 = vector.broadcast %cst : f32 to vector<4x128xf32>
    %c0_2 = arith.constant 0 : index
    %c0_3 = arith.constant 0 : index
    %c0_4 = arith.constant 0 : index
    %7 = vector.load %arg8[%c0_2, %c0_3, %c0_4] : memref<3x4x1280xf32, #tpu.memory_space<vmem>>, vector<1x4x128xf32>
    %8 = vector.shape_cast %7 : vector<1x4x128xf32> to vector<4x128xf32>
    %9 = vector.shape_cast %6 : vector<4x128xf32> to vector<1x4x128xf32>
    tpu.vector_store %arg8[%c0_2, %c0_3, %c0_4], %9 {strides = array<i32>} : memref<3x4x1280xf32, #tpu.memory_space<vmem>>, vector<1x4x128xf32>,
    %c0_5 = arith.constant 0 : index
    %c0_6 = arith.constant 0 : index
    %c1152 = arith.constant 1152 : index
    %10 = vector.load %arg8[%c0_5, %c0_6, %c1152] : memref<3x4x1280xf32, #tpu.memory_space<vmem>>, vector<1x4x128xf32>
    %11 = vector.shape_cast %10 : vector<1x4x128xf32> to vector<4x128xf32>
    %12 = vector.shape_cast %6 : vector<4x128xf32> to vector<1x4x128xf32>
    tpu.vector_store %arg8[%c0_5, %c0_6, %c1152], %12 {strides = array<i32>} : memref<3x4x1280xf32, #tpu.memory_space<vmem>>, vector<1x4x128xf32>,
    %c0_7 = arith.constant 0 : index
    %c0_8 = arith.constant 0 : index
    %c0_9 = arith.constant 0 : index
    %13 = vector.load %arg9[%c0_7, %c0_8, %c0_9] : memref<3x4x1280xf32, #tpu.memory_space<vmem>>, vector<1x4x128xf32>
    %14 = vector.shape_cast %13 : vector<1x4x128xf32> to vector<4x128xf32>
    %15 = vector.shape_cast %6 : vector<4x128xf32> to vector<1x4x128xf32>
    tpu.vector_store %arg9[%c0_7, %c0_8, %c0_9], %15 {strides = array<i32>} : memref<3x4x1280xf32, #tpu.memory_space<vmem>>, vector<1x4x128xf32>,
    %c0_10 = arith.constant 0 : index
    %c0_11 = arith.constant 0 : index
    %c1152_12 = arith.constant 1152 : index
    %16 = vector.load %arg9[%c0_10, %c0_11, %c1152_12] : memref<3x4x1280xf32, #tpu.memory_space<vmem>>, vector<1x4x128xf32>
    %17 = vector.shape_cast %16 : vector<1x4x128xf32> to vector<4x128xf32>
    %18 = vector.shape_cast %6 : vector<4x128xf32> to vector<1x4x128xf32>
    tpu.vector_store %arg9[%c0_10, %c0_11, %c1152_12], %18 {strides = array<i32>} : memref<3x4x1280xf32, #tpu.memory_space<vmem>>, vector<1x4x128xf32>,
    %c0_13 = arith.constant 0 : index
    %c0_14 = arith.constant 0 : index
    %c0_15 = arith.constant 0 : index
    %19 = vector.load %arg1[%c0_13, %c0_14, %c0_15] : memref<4x3x1024xf32, #tpu.memory_space<vmem>>, vector<4x1x1024xf32>
    %20 = vector.shape_cast %19 : vector<4x1x1024xf32> to vector<4x1024xf32>
    %c0_16 = arith.constant 0 : index
    %c0_17 = arith.constant 0 : index
    %c128 = arith.constant 128 : index
    %21 = vector.load %arg8[%c0_16, %c0_17, %c128] : memref<3x4x1280xf32, #tpu.memory_space<vmem>>, vector<1x4x1024xf32>
    %22 = vector.shape_cast %21 : vector<1x4x1024xf32> to vector<4x1024xf32>
    %23 = vector.shape_cast %20 : vector<4x1024xf32> to vector<1x4x1024xf32>
    tpu.vector_store %arg8[%c0_16, %c0_17, %c128], %23 {strides = array<i32>} : memref<3x4x1280xf32, #tpu.memory_space<vmem>>, vector<1x4x1024xf32>,
    %c1_18 = arith.constant 1 : index
    %c0_19 = arith.constant 0 : index
    %c0_20 = arith.constant 0 : index
    %24 = vector.load %arg8[%c1_18, %c0_19, %c0_20] : memref<3x4x1280xf32, #tpu.memory_space<vmem>>, vector<1x4x128xf32>
    %25 = vector.shape_cast %24 : vector<1x4x128xf32> to vector<4x128xf32>
    %26 = vector.shape_cast %6 : vector<4x128xf32> to vector<1x4x128xf32>
    tpu.vector_store %arg8[%c1_18, %c0_19, %c0_20], %26 {strides = array<i32>} : memref<3x4x1280xf32, #tpu.memory_space<vmem>>, vector<1x4x128xf32>,
    %c1_21 = arith.constant 1 : index
    %c0_22 = arith.constant 0 : index
    %c1152_23 = arith.constant 1152 : index
    %27 = vector.load %arg8[%c1_21, %c0_22, %c1152_23] : memref<3x4x1280xf32, #tpu.memory_space<vmem>>, vector<1x4x128xf32>
    %28 = vector.shape_cast %27 : vector<1x4x128xf32> to vector<4x128xf32>
    %29 = vector.shape_cast %6 : vector<4x128xf32> to vector<1x4x128xf32>
    tpu.vector_store %arg8[%c1_21, %c0_22, %c1152_23], %29 {strides = array<i32>} : memref<3x4x1280xf32, #tpu.memory_space<vmem>>, vector<1x4x128xf32>,
    %c1_24 = arith.constant 1 : index
    %c0_25 = arith.constant 0 : index
    %c0_26 = arith.constant 0 : index
    %30 = vector.load %arg9[%c1_24, %c0_25, %c0_26] : memref<3x4x1280xf32, #tpu.memory_space<vmem>>, vector<1x4x128xf32>
    %31 = vector.shape_cast %30 : vector<1x4x128xf32> to vector<4x128xf32>
    %32 = vector.shape_cast %6 : vector<4x128xf32> to vector<1x4x128xf32>
    tpu.vector_store %arg9[%c1_24, %c0_25, %c0_26], %32 {strides = array<i32>} : memref<3x4x1280xf32, #tpu.memory_space<vmem>>, vector<1x4x128xf32>,
    %c1_27 = arith.constant 1 : index
    %c0_28 = arith.constant 0 : index
    %c1152_29 = arith.constant 1152 : index
    %33 = vector.load %arg9[%c1_27, %c0_28, %c1152_29] : memref<3x4x1280xf32, #tpu.memory_space<vmem>>, vector<1x4x128xf32>
    %34 = vector.shape_cast %33 : vector<1x4x128xf32> to vector<4x128xf32>
    %35 = vector.shape_cast %6 : vector<4x128xf32> to vector<1x4x128xf32>
    tpu.vector_store %arg9[%c1_27, %c0_28, %c1152_29], %35 {strides = array<i32>} : memref<3x4x1280xf32, #tpu.memory_space<vmem>>, vector<1x4x128xf32>,
    %c0_30 = arith.constant 0 : index
    %c1_31 = arith.constant 1 : index
    %c0_32 = arith.constant 0 : index
    %36 = vector.load %arg1[%c0_30, %c1_31, %c0_32] : memref<4x3x1024xf32, #tpu.memory_space<vmem>>, vector<4x1x1024xf32>
    %37 = vector.shape_cast %36 : vector<4x1x1024xf32> to vector<4x1024xf32>
    %c1_33 = arith.constant 1 : index
    %c0_34 = arith.constant 0 : index
    %c128_35 = arith.constant 128 : index
    %38 = vector.load %arg8[%c1_33, %c0_34, %c128_35] : memref<3x4x1280xf32, #tpu.memory_space<vmem>>, vector<1x4x1024xf32>
    %39 = vector.shape_cast %38 : vector<1x4x1024xf32> to vector<4x1024xf32>
    %40 = vector.shape_cast %37 : vector<4x1024xf32> to vector<1x4x1024xf32>
    tpu.vector_store %arg8[%c1_33, %c0_34, %c128_35], %40 {strides = array<i32>} : memref<3x4x1280xf32, #tpu.memory_space<vmem>>, vector<1x4x1024xf32>,
    %c2 = arith.constant 2 : index
    %c0_36 = arith.constant 0 : index
    %c0_37 = arith.constant 0 : index
    %41 = vector.load %arg8[%c2, %c0_36, %c0_37] : memref<3x4x1280xf32, #tpu.memory_space<vmem>>, vector<1x4x128xf32>
    %42 = vector.shape_cast %41 : vector<1x4x128xf32> to vector<4x128xf32>
    %43 = vector.shape_cast %6 : vector<4x128xf32> to vector<1x4x128xf32>
    tpu.vector_store %arg8[%c2, %c0_36, %c0_37], %43 {strides = array<i32>} : memref<3x4x1280xf32, #tpu.memory_space<vmem>>, vector<1x4x128xf32>,
    %c2_38 = arith.constant 2 : index
    %c0_39 = arith.constant 0 : index
    %c1152_40 = arith.constant 1152 : index
    %44 = vector.load %arg8[%c2_38, %c0_39, %c1152_40] : memref<3x4x1280xf32, #tpu.memory_space<vmem>>, vector<1x4x128xf32>
    %45 = vector.shape_cast %44 : vector<1x4x128xf32> to vector<4x128xf32>
    %46 = vector.shape_cast %6 : vector<4x128xf32> to vector<1x4x128xf32>
    tpu.vector_store %arg8[%c2_38, %c0_39, %c1152_40], %46 {strides = array<i32>} : memref<3x4x1280xf32, #tpu.memory_space<vmem>>, vector<1x4x128xf32>,
    %c2_41 = arith.constant 2 : index
    %c0_42 = arith.constant 0 : index
    %c0_43 = arith.constant 0 : index
    %47 = vector.load %arg9[%c2_41, %c0_42, %c0_43] : memref<3x4x1280xf32, #tpu.memory_space<vmem>>, vector<1x4x128xf32>
    %48 = vector.shape_cast %47 : vector<1x4x128xf32> to vector<4x128xf32>
    %49 = vector.shape_cast %6 : vector<4x128xf32> to vector<1x4x128xf32>
    tpu.vector_store %arg9[%c2_41, %c0_42, %c0_43], %49 {strides = array<i32>} : memref<3x4x1280xf32, #tpu.memory_space<vmem>>, vector<1x4x128xf32>,
    %c2_44 = arith.constant 2 : index
    %c0_45 = arith.constant 0 : index
    %c1152_46 = arith.constant 1152 : index
    %50 = vector.load %arg9[%c2_44, %c0_45, %c1152_46] : memref<3x4x1280xf32, #tpu.memory_space<vmem>>, vector<1x4x128xf32>
    %51 = vector.shape_cast %50 : vector<1x4x128xf32> to vector<4x128xf32>
    %52 = vector.shape_cast %6 : vector<4x128xf32> to vector<1x4x128xf32>
    tpu.vector_store %arg9[%c2_44, %c0_45, %c1152_46], %52 {strides = array<i32>} : memref<3x4x1280xf32, #tpu.memory_space<vmem>>, vector<1x4x128xf32>,
    %c0_47 = arith.constant 0 : index
    %c2_48 = arith.constant 2 : index
    %c0_49 = arith.constant 0 : index
    %53 = vector.load %arg1[%c0_47, %c2_48, %c0_49] : memref<4x3x1024xf32, #tpu.memory_space<vmem>>, vector<4x1x1024xf32>
    %54 = vector.shape_cast %53 : vector<4x1x1024xf32> to vector<4x1024xf32>
    %c2_50 = arith.constant 2 : index
    %c0_51 = arith.constant 0 : index
    %c128_52 = arith.constant 128 : index
    %55 = vector.load %arg8[%c2_50, %c0_51, %c128_52] : memref<3x4x1280xf32, #tpu.memory_space<vmem>>, vector<1x4x1024xf32>
    %56 = vector.shape_cast %55 : vector<1x4x1024xf32> to vector<4x1024xf32>
    %57 = vector.shape_cast %54 : vector<4x1024xf32> to vector<1x4x1024xf32>
    tpu.vector_store %arg8[%c2_50, %c0_51, %c128_52], %57 {strides = array<i32>} : memref<3x4x1280xf32, #tpu.memory_space<vmem>>, vector<1x4x1024xf32>,
    %cst_53 = arith.constant 0.000000e+00 : f32
    %58 = vector.broadcast %cst_53 : f32 to vector<4x1024xf32>
    %c0_54 = arith.constant 0 : index
    %59 = memref.load %arg4[%c0_54] : memref<3xf32, #tpu.memory_space<smem>>
    %60 = vector.broadcast %59 : f32 to vector<4x1024xf32>
    %61 = arith.addf %58, %60 : vector<4x1024xf32>
    %cst_55 = arith.constant 0.000000e+00 : f32
    %62 = vector.broadcast %cst_55 : f32 to vector<4x1024xf32>
    %c1_56 = arith.constant 1 : index
    %63 = memref.load %arg4[%c1_56] : memref<3xf32, #tpu.memory_space<smem>>
    %64 = vector.broadcast %63 : f32 to vector<4x1024xf32>
    %65 = arith.addf %62, %64 : vector<4x1024xf32>
    %cst_57 = arith.constant 0.000000e+00 : f32
    %66 = vector.broadcast %cst_57 : f32 to vector<4x1024xf32>
    %c2_58 = arith.constant 2 : index
    %67 = memref.load %arg4[%c2_58] : memref<3xf32, #tpu.memory_space<smem>>
    %68 = vector.broadcast %67 : f32 to vector<4x1024xf32>
    %69 = arith.addf %66, %68 : vector<4x1024xf32>
    %c0_59 = arith.constant 0 : index
    %c0_60 = arith.constant 0 : index
    %c95 = arith.constant 95 : index
    %70 = vector.load %arg8[%c0_59, %c0_60, %c95] : memref<3x4x1280xf32, #tpu.memory_space<vmem>>, vector<1x4x1024xf32>
    %71 = vector.shape_cast %70 : vector<1x4x1024xf32> to vector<4x1024xf32>
    %72 = arith.mulf %71, %2 : vector<4x1024xf32>
    %c0_61 = arith.constant 0 : index
    %73 = memref.load %arg3[%c0_61] : memref<81xf32, #tpu.memory_space<smem>>
    %74 = vector.broadcast %73 : f32 to vector<4x1024xf32>
    %75 = arith.mulf %74, %72 : vector<4x1024xf32>
    %76 = arith.addf %61, %75 : vector<4x1024xf32>
    %c27 = arith.constant 27 : index
    %77 = memref.load %arg3[%c27] : memref<81xf32, #tpu.memory_space<smem>>
    %78 = vector.broadcast %77 : f32 to vector<4x1024xf32>
    %79 = arith.mulf %78, %72 : vector<4x1024xf32>
    %80 = arith.addf %65, %79 : vector<4x1024xf32>
    %c54 = arith.constant 54 : index
    %81 = memref.load %arg3[%c54] : memref<81xf32, #tpu.memory_space<smem>>
    %82 = vector.broadcast %81 : f32 to vector<4x1024xf32>
    %83 = arith.mulf %82, %72 : vector<4x1024xf32>
    %84 = arith.addf %69, %83 : vector<4x1024xf32>
    %c0_62 = arith.constant 0 : index
    %c0_63 = arith.constant 0 : index
    %c96 = arith.constant 96 : index
    %85 = vector.load %arg8[%c0_62, %c0_63, %c96] : memref<3x4x1280xf32, #tpu.memory_space<vmem>>, vector<1x4x1024xf32>
    %86 = vector.shape_cast %85 : vector<1x4x1024xf32> to vector<4x1024xf32>
    %c1_64 = arith.constant 1 : index
    %87 = memref.load %arg3[%c1_64] : memref<81xf32, #tpu.memory_space<smem>>
    %88 = vector.broadcast %87 : f32 to vector<4x1024xf32>
    %89 = arith.mulf %88, %86 : vector<4x1024xf32>
    %90 = arith.addf %76, %89 : vector<4x1024xf32>
    %c28 = arith.constant 28 : index
    %91 = memref.load %arg3[%c28] : memref<81xf32, #tpu.memory_space<smem>>
    %92 = vector.broadcast %91 : f32 to vector<4x1024xf32>
    %93 = arith.mulf %92, %86 : vector<4x1024xf32>
    %94 = arith.addf %80, %93 : vector<4x1024xf32>
    %c55 = arith.constant 55 : index
    %95 = memref.load %arg3[%c55] : memref<81xf32, #tpu.memory_space<smem>>
    %96 = vector.broadcast %95 : f32 to vector<4x1024xf32>
    %97 = arith.mulf %96, %86 : vector<4x1024xf32>
    %98 = arith.addf %84, %97 : vector<4x1024xf32>
    %c0_65 = arith.constant 0 : index
    %c0_66 = arith.constant 0 : index
    %c97 = arith.constant 97 : index
    %99 = vector.load %arg8[%c0_65, %c0_66, %c97] : memref<3x4x1280xf32, #tpu.memory_space<vmem>>, vector<1x4x1024xf32>
    %100 = vector.shape_cast %99 : vector<1x4x1024xf32> to vector<4x1024xf32>
    %101 = arith.mulf %100, %5 : vector<4x1024xf32>
    %c2_67 = arith.constant 2 : index
    %102 = memref.load %arg3[%c2_67] : memref<81xf32, #tpu.memory_space<smem>>
    %103 = vector.broadcast %102 : f32 to vector<4x1024xf32>
    %104 = arith.mulf %103, %101 : vector<4x1024xf32>
    %105 = arith.addf %90, %104 : vector<4x1024xf32>
    %c29 = arith.constant 29 : index
    %106 = memref.load %arg3[%c29] : memref<81xf32, #tpu.memory_space<smem>>
    %107 = vector.broadcast %106 : f32 to vector<4x1024xf32>
    %108 = arith.mulf %107, %101 : vector<4x1024xf32>
    %109 = arith.addf %94, %108 : vector<4x1024xf32>
    %c56 = arith.constant 56 : index
    %110 = memref.load %arg3[%c56] : memref<81xf32, #tpu.memory_space<smem>>
    %111 = vector.broadcast %110 : f32 to vector<4x1024xf32>
    %112 = arith.mulf %111, %101 : vector<4x1024xf32>
    %113 = arith.addf %98, %112 : vector<4x1024xf32>
    %c0_68 = arith.constant 0 : index
    %c0_69 = arith.constant 0 : index
    %c127 = arith.constant 127 : index
    %114 = vector.load %arg8[%c0_68, %c0_69, %c127] : memref<3x4x1280xf32, #tpu.memory_space<vmem>>, vector<1x4x1024xf32>
    %115 = vector.shape_cast %114 : vector<1x4x1024xf32> to vector<4x1024xf32>
    %116 = arith.mulf %115, %2 : vector<4x1024xf32>
    %c3 = arith.constant 3 : index
    %117 = memref.load %arg3[%c3] : memref<81xf32, #tpu.memory_space<smem>>
    %118 = vector.broadcast %117 : f32 to vector<4x1024xf32>
    %119 = arith.mulf %118, %116 : vector<4x1024xf32>
    %120 = arith.addf %105, %119 : vector<4x1024xf32>
    %c30 = arith.constant 30 : index
    %121 = memref.load %arg3[%c30] : memref<81xf32, #tpu.memory_space<smem>>
    %122 = vector.broadcast %121 : f32 to vector<4x1024xf32>
    %123 = arith.mulf %122, %116 : vector<4x1024xf32>
    %124 = arith.addf %109, %123 : vector<4x1024xf32>
    %c57 = arith.constant 57 : index
    %125 = memref.load %arg3[%c57] : memref<81xf32, #tpu.memory_space<smem>>
    %126 = vector.broadcast %125 : f32 to vector<4x1024xf32>
    %127 = arith.mulf %126, %116 : vector<4x1024xf32>
    %128 = arith.addf %113, %127 : vector<4x1024xf32>
    %c0_70 = arith.constant 0 : index
    %c0_71 = arith.constant 0 : index
    %c128_72 = arith.constant 128 : index
    %129 = vector.load %arg8[%c0_70, %c0_71, %c128_72] : memref<3x4x1280xf32, #tpu.memory_space<vmem>>, vector<1x4x1024xf32>
    %130 = vector.shape_cast %129 : vector<1x4x1024xf32> to vector<4x1024xf32>
    %c4 = arith.constant 4 : index
    %131 = memref.load %arg3[%c4] : memref<81xf32, #tpu.memory_space<smem>>
    %132 = vector.broadcast %131 : f32 to vector<4x1024xf32>
    %133 = arith.mulf %132, %130 : vector<4x1024xf32>
    %134 = arith.addf %120, %133 : vector<4x1024xf32>
    %c31 = arith.constant 31 : index
    %135 = memref.load %arg3[%c31] : memref<81xf32, #tpu.memory_space<smem>>
    %136 = vector.broadcast %135 : f32 to vector<4x1024xf32>
    %137 = arith.mulf %136, %130 : vector<4x1024xf32>
    %138 = arith.addf %124, %137 : vector<4x1024xf32>
    %c58 = arith.constant 58 : index
    %139 = memref.load %arg3[%c58] : memref<81xf32, #tpu.memory_space<smem>>
    %140 = vector.broadcast %139 : f32 to vector<4x1024xf32>
    %141 = arith.mulf %140, %130 : vector<4x1024xf32>
    %142 = arith.addf %128, %141 : vector<4x1024xf32>
    %c0_73 = arith.constant 0 : index
    %c0_74 = arith.constant 0 : index
    %c129 = arith.constant 129 : index
    %143 = vector.load %arg8[%c0_73, %c0_74, %c129] : memref<3x4x1280xf32, #tpu.memory_space<vmem>>, vector<1x4x1024xf32>
    %144 = vector.shape_cast %143 : vector<1x4x1024xf32> to vector<4x1024xf32>
    %145 = arith.mulf %144, %5 : vector<4x1024xf32>
    %c5 = arith.constant 5 : index
    %146 = memref.load %arg3[%c5] : memref<81xf32, #tpu.memory_space<smem>>
    %147 = vector.broadcast %146 : f32 to vector<4x1024xf32>
    %148 = arith.mulf %147, %145 : vector<4x1024xf32>
    %149 = arith.addf %134, %148 : vector<4x1024xf32>
    %c32 = arith.constant 32 : index
    %150 = memref.load %arg3[%c32] : memref<81xf32, #tpu.memory_space<smem>>
    %151 = vector.broadcast %150 : f32 to vector<4x1024xf32>
    %152 = arith.mulf %151, %145 : vector<4x1024xf32>
    %153 = arith.addf %138, %152 : vector<4x1024xf32>
    %c59 = arith.constant 59 : index
    %154 = memref.load %arg3[%c59] : memref<81xf32, #tpu.memory_space<smem>>
    %155 = vector.broadcast %154 : f32 to vector<4x1024xf32>
    %156 = arith.mulf %155, %145 : vector<4x1024xf32>
    %157 = arith.addf %142, %156 : vector<4x1024xf32>
    %c0_75 = arith.constant 0 : index
    %c0_76 = arith.constant 0 : index
    %c159 = arith.constant 159 : index
    %158 = vector.load %arg8[%c0_75, %c0_76, %c159] : memref<3x4x1280xf32, #tpu.memory_space<vmem>>, vector<1x4x1024xf32>
    %159 = vector.shape_cast %158 : vector<1x4x1024xf32> to vector<4x1024xf32>
    %160 = arith.mulf %159, %2 : vector<4x1024xf32>
    %c6 = arith.constant 6 : index
    %161 = memref.load %arg3[%c6] : memref<81xf32, #tpu.memory_space<smem>>
    %162 = vector.broadcast %161 : f32 to vector<4x1024xf32>
    %163 = arith.mulf %162, %160 : vector<4x1024xf32>
    %164 = arith.addf %149, %163 : vector<4x1024xf32>
    %c33 = arith.constant 33 : index
    %165 = memref.load %arg3[%c33] : memref<81xf32, #tpu.memory_space<smem>>
    %166 = vector.broadcast %165 : f32 to vector<4x1024xf32>
    %167 = arith.mulf %166, %160 : vector<4x1024xf32>
    %168 = arith.addf %153, %167 : vector<4x1024xf32>
    %c60 = arith.constant 60 : index
    %169 = memref.load %arg3[%c60] : memref<81xf32, #tpu.memory_space<smem>>
    %170 = vector.broadcast %169 : f32 to vector<4x1024xf32>
    %171 = arith.mulf %170, %160 : vector<4x1024xf32>
    %172 = arith.addf %157, %171 : vector<4x1024xf32>
    %c0_77 = arith.constant 0 : index
    %c0_78 = arith.constant 0 : index
    %c160 = arith.constant 160 : index
    %173 = vector.load %arg8[%c0_77, %c0_78, %c160] : memref<3x4x1280xf32, #tpu.memory_space<vmem>>, vector<1x4x1024xf32>
    %174 = vector.shape_cast %173 : vector<1x4x1024xf32> to vector<4x1024xf32>
    %c7 = arith.constant 7 : index
    %175 = memref.load %arg3[%c7] : memref<81xf32, #tpu.memory_space<smem>>
    %176 = vector.broadcast %175 : f32 to vector<4x1024xf32>
    %177 = arith.mulf %176, %174 : vector<4x1024xf32>
    %178 = arith.addf %164, %177 : vector<4x1024xf32>
    %c34 = arith.constant 34 : index
    %179 = memref.load %arg3[%c34] : memref<81xf32, #tpu.memory_space<smem>>
    %180 = vector.broadcast %179 : f32 to vector<4x1024xf32>
    %181 = arith.mulf %180, %174 : vector<4x1024xf32>
    %182 = arith.addf %168, %181 : vector<4x1024xf32>
    %c61 = arith.constant 61 : index
    %183 = memref.load %arg3[%c61] : memref<81xf32, #tpu.memory_space<smem>>
    %184 = vector.broadcast %183 : f32 to vector<4x1024xf32>
    %185 = arith.mulf %184, %174 : vector<4x1024xf32>
    %186 = arith.addf %172, %185 : vector<4x1024xf32>
    %c0_79 = arith.constant 0 : index
    %c0_80 = arith.constant 0 : index
    %c161 = arith.constant 161 : index
    %187 = vector.load %arg8[%c0_79, %c0_80, %c161] : memref<3x4x1280xf32, #tpu.memory_space<vmem>>, vector<1x4x1024xf32>
    %188 = vector.shape_cast %187 : vector<1x4x1024xf32> to vector<4x1024xf32>
    %189 = arith.mulf %188, %5 : vector<4x1024xf32>
    %c8 = arith.constant 8 : index
    %190 = memref.load %arg3[%c8] : memref<81xf32, #tpu.memory_space<smem>>
    %191 = vector.broadcast %190 : f32 to vector<4x1024xf32>
    %192 = arith.mulf %191, %189 : vector<4x1024xf32>
    %193 = arith.addf %178, %192 : vector<4x1024xf32>
    %c35 = arith.constant 35 : index
    %194 = memref.load %arg3[%c35] : memref<81xf32, #tpu.memory_space<smem>>
    %195 = vector.broadcast %194 : f32 to vector<4x1024xf32>
    %196 = arith.mulf %195, %189 : vector<4x1024xf32>
    %197 = arith.addf %182, %196 : vector<4x1024xf32>
    %c62 = arith.constant 62 : index
    %198 = memref.load %arg3[%c62] : memref<81xf32, #tpu.memory_space<smem>>
    %199 = vector.broadcast %198 : f32 to vector<4x1024xf32>
    %200 = arith.mulf %199, %189 : vector<4x1024xf32>
    %201 = arith.addf %186, %200 : vector<4x1024xf32>
    %c1_81 = arith.constant 1 : index
    %c0_82 = arith.constant 0 : index
    %c95_83 = arith.constant 95 : index
    %202 = vector.load %arg8[%c1_81, %c0_82, %c95_83] : memref<3x4x1280xf32, #tpu.memory_space<vmem>>, vector<1x4x1024xf32>
    %203 = vector.shape_cast %202 : vector<1x4x1024xf32> to vector<4x1024xf32>
    %204 = arith.mulf %203, %2 : vector<4x1024xf32>
    %c9 = arith.constant 9 : index
    %205 = memref.load %arg3[%c9] : memref<81xf32, #tpu.memory_space<smem>>
    %206 = vector.broadcast %205 : f32 to vector<4x1024xf32>
    %207 = arith.mulf %206, %204 : vector<4x1024xf32>
    %208 = arith.addf %193, %207 : vector<4x1024xf32>
    %c36 = arith.constant 36 : index
    %209 = memref.load %arg3[%c36] : memref<81xf32, #tpu.memory_space<smem>>
    %210 = vector.broadcast %209 : f32 to vector<4x1024xf32>
    %211 = arith.mulf %210, %204 : vector<4x1024xf32>
    %212 = arith.addf %197, %211 : vector<4x1024xf32>
    %c63 = arith.constant 63 : index
    %213 = memref.load %arg3[%c63] : memref<81xf32, #tpu.memory_space<smem>>
    %214 = vector.broadcast %213 : f32 to vector<4x1024xf32>
    %215 = arith.mulf %214, %204 : vector<4x1024xf32>
    %216 = arith.addf %201, %215 : vector<4x1024xf32>
    %c1_84 = arith.constant 1 : index
    %c0_85 = arith.constant 0 : index
    %c96_86 = arith.constant 96 : index
    %217 = vector.load %arg8[%c1_84, %c0_85, %c96_86] : memref<3x4x1280xf32, #tpu.memory_space<vmem>>, vector<1x4x1024xf32>
    %218 = vector.shape_cast %217 : vector<1x4x1024xf32> to vector<4x1024xf32>
    %c10 = arith.constant 10 : index
    %219 = memref.load %arg3[%c10] : memref<81xf32, #tpu.memory_space<smem>>
    %220 = vector.broadcast %219 : f32 to vector<4x1024xf32>
    %221 = arith.mulf %220, %218 : vector<4x1024xf32>
    %222 = arith.addf %208, %221 : vector<4x1024xf32>
    %c37 = arith.constant 37 : index
    %223 = memref.load %arg3[%c37] : memref<81xf32, #tpu.memory_space<smem>>
    %224 = vector.broadcast %223 : f32 to vector<4x1024xf32>
    %225 = arith.mulf %224, %218 : vector<4x1024xf32>
    %226 = arith.addf %212, %225 : vector<4x1024xf32>
    %c64 = arith.constant 64 : index
    %227 = memref.load %arg3[%c64] : memref<81xf32, #tpu.memory_space<smem>>
    %228 = vector.broadcast %227 : f32 to vector<4x1024xf32>
    %229 = arith.mulf %228, %218 : vector<4x1024xf32>
    %230 = arith.addf %216, %229 : vector<4x1024xf32>
    %c1_87 = arith.constant 1 : index
    %c0_88 = arith.constant 0 : index
    %c97_89 = arith.constant 97 : index
    %231 = vector.load %arg8[%c1_87, %c0_88, %c97_89] : memref<3x4x1280xf32, #tpu.memory_space<vmem>>, vector<1x4x1024xf32>
    %232 = vector.shape_cast %231 : vector<1x4x1024xf32> to vector<4x1024xf32>
    %233 = arith.mulf %232, %5 : vector<4x1024xf32>
    %c11 = arith.constant 11 : index
    %234 = memref.load %arg3[%c11] : memref<81xf32, #tpu.memory_space<smem>>
    %235 = vector.broadcast %234 : f32 to vector<4x1024xf32>
    %236 = arith.mulf %235, %233 : vector<4x1024xf32>
    %237 = arith.addf %222, %236 : vector<4x1024xf32>
    %c38 = arith.constant 38 : index
    %238 = memref.load %arg3[%c38] : memref<81xf32, #tpu.memory_space<smem>>
    %239 = vector.broadcast %238 : f32 to vector<4x1024xf32>
    %240 = arith.mulf %239, %233 : vector<4x1024xf32>
    %241 = arith.addf %226, %240 : vector<4x1024xf32>
    %c65 = arith.constant 65 : index
    %242 = memref.load %arg3[%c65] : memref<81xf32, #tpu.memory_space<smem>>
    %243 = vector.broadcast %242 : f32 to vector<4x1024xf32>
    %244 = arith.mulf %243, %233 : vector<4x1024xf32>
    %245 = arith.addf %230, %244 : vector<4x1024xf32>
    %c1_90 = arith.constant 1 : index
    %c0_91 = arith.constant 0 : index
    %c127_92 = arith.constant 127 : index
    %246 = vector.load %arg8[%c1_90, %c0_91, %c127_92] : memref<3x4x1280xf32, #tpu.memory_space<vmem>>, vector<1x4x1024xf32>
    %247 = vector.shape_cast %246 : vector<1x4x1024xf32> to vector<4x1024xf32>
    %248 = arith.mulf %247, %2 : vector<4x1024xf32>
    %c12 = arith.constant 12 : index
    %249 = memref.load %arg3[%c12] : memref<81xf32, #tpu.memory_space<smem>>
    %250 = vector.broadcast %249 : f32 to vector<4x1024xf32>
    %251 = arith.mulf %250, %248 : vector<4x1024xf32>
    %252 = arith.addf %237, %251 : vector<4x1024xf32>
    %c39 = arith.constant 39 : index
    %253 = memref.load %arg3[%c39] : memref<81xf32, #tpu.memory_space<smem>>
    %254 = vector.broadcast %253 : f32 to vector<4x1024xf32>
    %255 = arith.mulf %254, %248 : vector<4x1024xf32>
    %256 = arith.addf %241, %255 : vector<4x1024xf32>
    %c66 = arith.constant 66 : index
    %257 = memref.load %arg3[%c66] : memref<81xf32, #tpu.memory_space<smem>>
    %258 = vector.broadcast %257 : f32 to vector<4x1024xf32>
    %259 = arith.mulf %258, %248 : vector<4x1024xf32>
    %260 = arith.addf %245, %259 : vector<4x1024xf32>
    %c1_93 = arith.constant 1 : index
    %c0_94 = arith.constant 0 : index
    %c128_95 = arith.constant 128 : index
    %261 = vector.load %arg8[%c1_93, %c0_94, %c128_95] : memref<3x4x1280xf32, #tpu.memory_space<vmem>>, vector<1x4x1024xf32>
    %262 = vector.shape_cast %261 : vector<1x4x1024xf32> to vector<4x1024xf32>
    %c13 = arith.constant 13 : index
    %263 = memref.load %arg3[%c13] : memref<81xf32, #tpu.memory_space<smem>>
    %264 = vector.broadcast %263 : f32 to vector<4x1024xf32>
    %265 = arith.mulf %264, %262 : vector<4x1024xf32>
    %266 = arith.addf %252, %265 : vector<4x1024xf32>
    %c40 = arith.constant 40 : index
    %267 = memref.load %arg3[%c40] : memref<81xf32, #tpu.memory_space<smem>>
    %268 = vector.broadcast %267 : f32 to vector<4x1024xf32>
    %269 = arith.mulf %268, %262 : vector<4x1024xf32>
    %270 = arith.addf %256, %269 : vector<4x1024xf32>
    %c67 = arith.constant 67 : index
    %271 = memref.load %arg3[%c67] : memref<81xf32, #tpu.memory_space<smem>>
    %272 = vector.broadcast %271 : f32 to vector<4x1024xf32>
    %273 = arith.mulf %272, %262 : vector<4x1024xf32>
    %274 = arith.addf %260, %273 : vector<4x1024xf32>
    %c1_96 = arith.constant 1 : index
    %c0_97 = arith.constant 0 : index
    %c129_98 = arith.constant 129 : index
    %275 = vector.load %arg8[%c1_96, %c0_97, %c129_98] : memref<3x4x1280xf32, #tpu.memory_space<vmem>>, vector<1x4x1024xf32>
    %276 = vector.shape_cast %275 : vector<1x4x1024xf32> to vector<4x1024xf32>
    %277 = arith.mulf %276, %5 : vector<4x1024xf32>
    %c14 = arith.constant 14 : index
    %278 = memref.load %arg3[%c14] : memref<81xf32, #tpu.memory_space<smem>>
    %279 = vector.broadcast %278 : f32 to vector<4x1024xf32>
    %280 = arith.mulf %279, %277 : vector<4x1024xf32>
    %281 = arith.addf %266, %280 : vector<4x1024xf32>
    %c41 = arith.constant 41 : index
    %282 = memref.load %arg3[%c41] : memref<81xf32, #tpu.memory_space<smem>>
    %283 = vector.broadcast %282 : f32 to vector<4x1024xf32>
    %284 = arith.mulf %283, %277 : vector<4x1024xf32>
    %285 = arith.addf %270, %284 : vector<4x1024xf32>
    %c68 = arith.constant 68 : index
    %286 = memref.load %arg3[%c68] : memref<81xf32, #tpu.memory_space<smem>>
    %287 = vector.broadcast %286 : f32 to vector<4x1024xf32>
    %288 = arith.mulf %287, %277 : vector<4x1024xf32>
    %289 = arith.addf %274, %288 : vector<4x1024xf32>
    %c1_99 = arith.constant 1 : index
    %c0_100 = arith.constant 0 : index
    %c159_101 = arith.constant 159 : index
    %290 = vector.load %arg8[%c1_99, %c0_100, %c159_101] : memref<3x4x1280xf32, #tpu.memory_space<vmem>>, vector<1x4x1024xf32>
    %291 = vector.shape_cast %290 : vector<1x4x1024xf32> to vector<4x1024xf32>
    %292 = arith.mulf %291, %2 : vector<4x1024xf32>
    %c15 = arith.constant 15 : index
    %293 = memref.load %arg3[%c15] : memref<81xf32, #tpu.memory_space<smem>>
    %294 = vector.broadcast %293 : f32 to vector<4x1024xf32>
    %295 = arith.mulf %294, %292 : vector<4x1024xf32>
    %296 = arith.addf %281, %295 : vector<4x1024xf32>
    %c42 = arith.constant 42 : index
    %297 = memref.load %arg3[%c42] : memref<81xf32, #tpu.memory_space<smem>>
    %298 = vector.broadcast %297 : f32 to vector<4x1024xf32>
    %299 = arith.mulf %298, %292 : vector<4x1024xf32>
    %300 = arith.addf %285, %299 : vector<4x1024xf32>
    %c69 = arith.constant 69 : index
    %301 = memref.load %arg3[%c69] : memref<81xf32, #tpu.memory_space<smem>>
    %302 = vector.broadcast %301 : f32 to vector<4x1024xf32>
    %303 = arith.mulf %302, %292 : vector<4x1024xf32>
    %304 = arith.addf %289, %303 : vector<4x1024xf32>
    %c1_102 = arith.constant 1 : index
    %c0_103 = arith.constant 0 : index
    %c160_104 = arith.constant 160 : index
    %305 = vector.load %arg8[%c1_102, %c0_103, %c160_104] : memref<3x4x1280xf32, #tpu.memory_space<vmem>>, vector<1x4x1024xf32>
    %306 = vector.shape_cast %305 : vector<1x4x1024xf32> to vector<4x1024xf32>
    %c16 = arith.constant 16 : index
    %307 = memref.load %arg3[%c16] : memref<81xf32, #tpu.memory_space<smem>>
    %308 = vector.broadcast %307 : f32 to vector<4x1024xf32>
    %309 = arith.mulf %308, %306 : vector<4x1024xf32>
    %310 = arith.addf %296, %309 : vector<4x1024xf32>
    %c43 = arith.constant 43 : index
    %311 = memref.load %arg3[%c43] : memref<81xf32, #tpu.memory_space<smem>>
    %312 = vector.broadcast %311 : f32 to vector<4x1024xf32>
    %313 = arith.mulf %312, %306 : vector<4x1024xf32>
    %314 = arith.addf %300, %313 : vector<4x1024xf32>
    %c70 = arith.constant 70 : index
    %315 = memref.load %arg3[%c70] : memref<81xf32, #tpu.memory_space<smem>>
    %316 = vector.broadcast %315 : f32 to vector<4x1024xf32>
    %317 = arith.mulf %316, %306 : vector<4x1024xf32>
    %318 = arith.addf %304, %317 : vector<4x1024xf32>
    %c1_105 = arith.constant 1 : index
    %c0_106 = arith.constant 0 : index
    %c161_107 = arith.constant 161 : index
    %319 = vector.load %arg8[%c1_105, %c0_106, %c161_107] : memref<3x4x1280xf32, #tpu.memory_space<vmem>>, vector<1x4x1024xf32>
    %320 = vector.shape_cast %319 : vector<1x4x1024xf32> to vector<4x1024xf32>
    %321 = arith.mulf %320, %5 : vector<4x1024xf32>
    %c17 = arith.constant 17 : index
    %322 = memref.load %arg3[%c17] : memref<81xf32, #tpu.memory_space<smem>>
    %323 = vector.broadcast %322 : f32 to vector<4x1024xf32>
    %324 = arith.mulf %323, %321 : vector<4x1024xf32>
    %325 = arith.addf %310, %324 : vector<4x1024xf32>
    %c44 = arith.constant 44 : index
    %326 = memref.load %arg3[%c44] : memref<81xf32, #tpu.memory_space<smem>>
    %327 = vector.broadcast %326 : f32 to vector<4x1024xf32>
    %328 = arith.mulf %327, %321 : vector<4x1024xf32>
    %329 = arith.addf %314, %328 : vector<4x1024xf32>
    %c71 = arith.constant 71 : index
    %330 = memref.load %arg3[%c71] : memref<81xf32, #tpu.memory_space<smem>>
    %331 = vector.broadcast %330 : f32 to vector<4x1024xf32>
    %332 = arith.mulf %331, %321 : vector<4x1024xf32>
    %333 = arith.addf %318, %332 : vector<4x1024xf32>
    %c2_108 = arith.constant 2 : index
    %c0_109 = arith.constant 0 : index
    %c95_110 = arith.constant 95 : index
    %334 = vector.load %arg8[%c2_108, %c0_109, %c95_110] : memref<3x4x1280xf32, #tpu.memory_space<vmem>>, vector<1x4x1024xf32>
    %335 = vector.shape_cast %334 : vector<1x4x1024xf32> to vector<4x1024xf32>
    %336 = arith.mulf %335, %2 : vector<4x1024xf32>
    %c18 = arith.constant 18 : index
    %337 = memref.load %arg3[%c18] : memref<81xf32, #tpu.memory_space<smem>>
    %338 = vector.broadcast %337 : f32 to vector<4x1024xf32>
    %339 = arith.mulf %338, %336 : vector<4x1024xf32>
    %340 = arith.addf %325, %339 : vector<4x1024xf32>
    %c45 = arith.constant 45 : index
    %341 = memref.load %arg3[%c45] : memref<81xf32, #tpu.memory_space<smem>>
    %342 = vector.broadcast %341 : f32 to vector<4x1024xf32>
    %343 = arith.mulf %342, %336 : vector<4x1024xf32>
    %344 = arith.addf %329, %343 : vector<4x1024xf32>
    %c72 = arith.constant 72 : index
    %345 = memref.load %arg3[%c72] : memref<81xf32, #tpu.memory_space<smem>>
    %346 = vector.broadcast %345 : f32 to vector<4x1024xf32>
    %347 = arith.mulf %346, %336 : vector<4x1024xf32>
    %348 = arith.addf %333, %347 : vector<4x1024xf32>
    %c2_111 = arith.constant 2 : index
    %c0_112 = arith.constant 0 : index
    %c96_113 = arith.constant 96 : index
    %349 = vector.load %arg8[%c2_111, %c0_112, %c96_113] : memref<3x4x1280xf32, #tpu.memory_space<vmem>>, vector<1x4x1024xf32>
    %350 = vector.shape_cast %349 : vector<1x4x1024xf32> to vector<4x1024xf32>
    %c19 = arith.constant 19 : index
    %351 = memref.load %arg3[%c19] : memref<81xf32, #tpu.memory_space<smem>>
    %352 = vector.broadcast %351 : f32 to vector<4x1024xf32>
    %353 = arith.mulf %352, %350 : vector<4x1024xf32>
    %354 = arith.addf %340, %353 : vector<4x1024xf32>
    %c46 = arith.constant 46 : index
    %355 = memref.load %arg3[%c46] : memref<81xf32, #tpu.memory_space<smem>>
    %356 = vector.broadcast %355 : f32 to vector<4x1024xf32>
    %357 = arith.mulf %356, %350 : vector<4x1024xf32>
    %358 = arith.addf %344, %357 : vector<4x1024xf32>
    %c73 = arith.constant 73 : index
    %359 = memref.load %arg3[%c73] : memref<81xf32, #tpu.memory_space<smem>>
    %360 = vector.broadcast %359 : f32 to vector<4x1024xf32>
    %361 = arith.mulf %360, %350 : vector<4x1024xf32>
    %362 = arith.addf %348, %361 : vector<4x1024xf32>
    %c2_114 = arith.constant 2 : index
    %c0_115 = arith.constant 0 : index
    %c97_116 = arith.constant 97 : index
    %363 = vector.load %arg8[%c2_114, %c0_115, %c97_116] : memref<3x4x1280xf32, #tpu.memory_space<vmem>>, vector<1x4x1024xf32>
    %364 = vector.shape_cast %363 : vector<1x4x1024xf32> to vector<4x1024xf32>
    %365 = arith.mulf %364, %5 : vector<4x1024xf32>
    %c20 = arith.constant 20 : index
    %366 = memref.load %arg3[%c20] : memref<81xf32, #tpu.memory_space<smem>>
    %367 = vector.broadcast %366 : f32 to vector<4x1024xf32>
    %368 = arith.mulf %367, %365 : vector<4x1024xf32>
    %369 = arith.addf %354, %368 : vector<4x1024xf32>
    %c47 = arith.constant 47 : index
    %370 = memref.load %arg3[%c47] : memref<81xf32, #tpu.memory_space<smem>>
    %371 = vector.broadcast %370 : f32 to vector<4x1024xf32>
    %372 = arith.mulf %371, %365 : vector<4x1024xf32>
    %373 = arith.addf %358, %372 : vector<4x1024xf32>
    %c74 = arith.constant 74 : index
    %374 = memref.load %arg3[%c74] : memref<81xf32, #tpu.memory_space<smem>>
    %375 = vector.broadcast %374 : f32 to vector<4x1024xf32>
    %376 = arith.mulf %375, %365 : vector<4x1024xf32>
    %377 = arith.addf %362, %376 : vector<4x1024xf32>
    %c2_117 = arith.constant 2 : index
    %c0_118 = arith.constant 0 : index
    %c127_119 = arith.constant 127 : index
    %378 = vector.load %arg8[%c2_117, %c0_118, %c127_119] : memref<3x4x1280xf32, #tpu.memory_space<vmem>>, vector<1x4x1024xf32>
    %379 = vector.shape_cast %378 : vector<1x4x1024xf32> to vector<4x1024xf32>
    %380 = arith.mulf %379, %2 : vector<4x1024xf32>
    %c21 = arith.constant 21 : index
    %381 = memref.load %arg3[%c21] : memref<81xf32, #tpu.memory_space<smem>>
    %382 = vector.broadcast %381 : f32 to vector<4x1024xf32>
    %383 = arith.mulf %382, %380 : vector<4x1024xf32>
    %384 = arith.addf %369, %383 : vector<4x1024xf32>
    %c48 = arith.constant 48 : index
    %385 = memref.load %arg3[%c48] : memref<81xf32, #tpu.memory_space<smem>>
    %386 = vector.broadcast %385 : f32 to vector<4x1024xf32>
    %387 = arith.mulf %386, %380 : vector<4x1024xf32>
    %388 = arith.addf %373, %387 : vector<4x1024xf32>
    %c75 = arith.constant 75 : index
    %389 = memref.load %arg3[%c75] : memref<81xf32, #tpu.memory_space<smem>>
    %390 = vector.broadcast %389 : f32 to vector<4x1024xf32>
    %391 = arith.mulf %390, %380 : vector<4x1024xf32>
    %392 = arith.addf %377, %391 : vector<4x1024xf32>
    %c2_120 = arith.constant 2 : index
    %c0_121 = arith.constant 0 : index
    %c128_122 = arith.constant 128 : index
    %393 = vector.load %arg8[%c2_120, %c0_121, %c128_122] : memref<3x4x1280xf32, #tpu.memory_space<vmem>>, vector<1x4x1024xf32>
    %394 = vector.shape_cast %393 : vector<1x4x1024xf32> to vector<4x1024xf32>
    %c22 = arith.constant 22 : index
    %395 = memref.load %arg3[%c22] : memref<81xf32, #tpu.memory_space<smem>>
    %396 = vector.broadcast %395 : f32 to vector<4x1024xf32>
    %397 = arith.mulf %396, %394 : vector<4x1024xf32>
    %398 = arith.addf %384, %397 : vector<4x1024xf32>
    %c49 = arith.constant 49 : index
    %399 = memref.load %arg3[%c49] : memref<81xf32, #tpu.memory_space<smem>>
    %400 = vector.broadcast %399 : f32 to vector<4x1024xf32>
    %401 = arith.mulf %400, %394 : vector<4x1024xf32>
    %402 = arith.addf %388, %401 : vector<4x1024xf32>
    %c76 = arith.constant 76 : index
    %403 = memref.load %arg3[%c76] : memref<81xf32, #tpu.memory_space<smem>>
    %404 = vector.broadcast %403 : f32 to vector<4x1024xf32>
    %405 = arith.mulf %404, %394 : vector<4x1024xf32>
    %406 = arith.addf %392, %405 : vector<4x1024xf32>
    %c2_123 = arith.constant 2 : index
    %c0_124 = arith.constant 0 : index
    %c129_125 = arith.constant 129 : index
    %407 = vector.load %arg8[%c2_123, %c0_124, %c129_125] : memref<3x4x1280xf32, #tpu.memory_space<vmem>>, vector<1x4x1024xf32>
    %408 = vector.shape_cast %407 : vector<1x4x1024xf32> to vector<4x1024xf32>
    %409 = arith.mulf %408, %5 : vector<4x1024xf32>
    %c23 = arith.constant 23 : index
    %410 = memref.load %arg3[%c23] : memref<81xf32, #tpu.memory_space<smem>>
    %411 = vector.broadcast %410 : f32 to vector<4x1024xf32>
    %412 = arith.mulf %411, %409 : vector<4x1024xf32>
    %413 = arith.addf %398, %412 : vector<4x1024xf32>
    %c50 = arith.constant 50 : index
    %414 = memref.load %arg3[%c50] : memref<81xf32, #tpu.memory_space<smem>>
    %415 = vector.broadcast %414 : f32 to vector<4x1024xf32>
    %416 = arith.mulf %415, %409 : vector<4x1024xf32>
    %417 = arith.addf %402, %416 : vector<4x1024xf32>
    %c77 = arith.constant 77 : index
    %418 = memref.load %arg3[%c77] : memref<81xf32, #tpu.memory_space<smem>>
    %419 = vector.broadcast %418 : f32 to vector<4x1024xf32>
    %420 = arith.mulf %419, %409 : vector<4x1024xf32>
    %421 = arith.addf %406, %420 : vector<4x1024xf32>
    %c2_126 = arith.constant 2 : index
    %c0_127 = arith.constant 0 : index
    %c159_128 = arith.constant 159 : index
    %422 = vector.load %arg8[%c2_126, %c0_127, %c159_128] : memref<3x4x1280xf32, #tpu.memory_space<vmem>>, vector<1x4x1024xf32>
    %423 = vector.shape_cast %422 : vector<1x4x1024xf32> to vector<4x1024xf32>
    %424 = arith.mulf %423, %2 : vector<4x1024xf32>
    %c24 = arith.constant 24 : index
    %425 = memref.load %arg3[%c24] : memref<81xf32, #tpu.memory_space<smem>>
    %426 = vector.broadcast %425 : f32 to vector<4x1024xf32>
    %427 = arith.mulf %426, %424 : vector<4x1024xf32>
    %428 = arith.addf %413, %427 : vector<4x1024xf32>
    %c51 = arith.constant 51 : index
    %429 = memref.load %arg3[%c51] : memref<81xf32, #tpu.memory_space<smem>>
    %430 = vector.broadcast %429 : f32 to vector<4x1024xf32>
    %431 = arith.mulf %430, %424 : vector<4x1024xf32>
    %432 = arith.addf %417, %431 : vector<4x1024xf32>
    %c78 = arith.constant 78 : index
    %433 = memref.load %arg3[%c78] : memref<81xf32, #tpu.memory_space<smem>>
    %434 = vector.broadcast %433 : f32 to vector<4x1024xf32>
    %435 = arith.mulf %434, %424 : vector<4x1024xf32>
    %436 = arith.addf %421, %435 : vector<4x1024xf32>
    %c2_129 = arith.constant 2 : index
    %c0_130 = arith.constant 0 : index
    %c160_131 = arith.constant 160 : index
    %437 = vector.load %arg8[%c2_129, %c0_130, %c160_131] : memref<3x4x1280xf32, #tpu.memory_space<vmem>>, vector<1x4x1024xf32>
    %438 = vector.shape_cast %437 : vector<1x4x1024xf32> to vector<4x1024xf32>
    %c25 = arith.constant 25 : index
    %439 = memref.load %arg3[%c25] : memref<81xf32, #tpu.memory_space<smem>>
    %440 = vector.broadcast %439 : f32 to vector<4x1024xf32>
    %441 = arith.mulf %440, %438 : vector<4x1024xf32>
    %442 = arith.addf %428, %441 : vector<4x1024xf32>
    %c52 = arith.constant 52 : index
    %443 = memref.load %arg3[%c52] : memref<81xf32, #tpu.memory_space<smem>>
    %444 = vector.broadcast %443 : f32 to vector<4x1024xf32>
    %445 = arith.mulf %444, %438 : vector<4x1024xf32>
    %446 = arith.addf %432, %445 : vector<4x1024xf32>
    %c79 = arith.constant 79 : index
    %447 = memref.load %arg3[%c79] : memref<81xf32, #tpu.memory_space<smem>>
    %448 = vector.broadcast %447 : f32 to vector<4x1024xf32>
    %449 = arith.mulf %448, %438 : vector<4x1024xf32>
    %450 = arith.addf %436, %449 : vector<4x1024xf32>
    %c2_132 = arith.constant 2 : index
    %c0_133 = arith.constant 0 : index
    %c161_134 = arith.constant 161 : index
    %451 = vector.load %arg8[%c2_132, %c0_133, %c161_134] : memref<3x4x1280xf32, #tpu.memory_space<vmem>>, vector<1x4x1024xf32>
    %452 = vector.shape_cast %451 : vector<1x4x1024xf32> to vector<4x1024xf32>
    %453 = arith.mulf %452, %5 : vector<4x1024xf32>
    %c26 = arith.constant 26 : index
    %454 = memref.load %arg3[%c26] : memref<81xf32, #tpu.memory_space<smem>>
    %455 = vector.broadcast %454 : f32 to vector<4x1024xf32>
    %456 = arith.mulf %455, %453 : vector<4x1024xf32>
    %457 = arith.addf %442, %456 : vector<4x1024xf32>
    %c53 = arith.constant 53 : index
    %458 = memref.load %arg3[%c53] : memref<81xf32, #tpu.memory_space<smem>>
    %459 = vector.broadcast %458 : f32 to vector<4x1024xf32>
    %460 = arith.mulf %459, %453 : vector<4x1024xf32>
    %461 = arith.addf %446, %460 : vector<4x1024xf32>
    %c80 = arith.constant 80 : index
    %462 = memref.load %arg3[%c80] : memref<81xf32, #tpu.memory_space<smem>>
    %463 = vector.broadcast %462 : f32 to vector<4x1024xf32>
    %464 = arith.mulf %463, %453 : vector<4x1024xf32>
    %465 = arith.addf %450, %464 : vector<4x1024xf32>
    %cst_135 = arith.constant 0.000000e+00 : f32
    %466 = vector.broadcast %cst_135 : f32 to vector<4x1024xf32>
    %467 = arith.maximumf %457, %466 : vector<4x1024xf32>
    %c0_136 = arith.constant 0 : index
    %c0_137 = arith.constant 0 : index
    %c128_138 = arith.constant 128 : index
    %468 = vector.load %arg9[%c0_136, %c0_137, %c128_138] : memref<3x4x1280xf32, #tpu.memory_space<vmem>>, vector<1x4x1024xf32>
    %469 = vector.shape_cast %468 : vector<1x4x1024xf32> to vector<4x1024xf32>
    %470 = vector.shape_cast %467 : vector<4x1024xf32> to vector<1x4x1024xf32>
    tpu.vector_store %arg9[%c0_136, %c0_137, %c128_138], %470 {strides = array<i32>} : memref<3x4x1280xf32, #tpu.memory_space<vmem>>, vector<1x4x1024xf32>,
    %cst_139 = arith.constant 0.000000e+00 : f32
    %471 = vector.broadcast %cst_139 : f32 to vector<4x1024xf32>
    %472 = arith.maximumf %461, %471 : vector<4x1024xf32>
    %c1_140 = arith.constant 1 : index
    %c0_141 = arith.constant 0 : index
    %c128_142 = arith.constant 128 : index
    %473 = vector.load %arg9[%c1_140, %c0_141, %c128_142] : memref<3x4x1280xf32, #tpu.memory_space<vmem>>, vector<1x4x1024xf32>
    %474 = vector.shape_cast %473 : vector<1x4x1024xf32> to vector<4x1024xf32>
    %475 = vector.shape_cast %472 : vector<4x1024xf32> to vector<1x4x1024xf32>
    tpu.vector_store %arg9[%c1_140, %c0_141, %c128_142], %475 {strides = array<i32>} : memref<3x4x1280xf32, #tpu.memory_space<vmem>>, vector<1x4x1024xf32>,
    %cst_143 = arith.constant 0.000000e+00 : f32
    %476 = vector.broadcast %cst_143 : f32 to vector<4x1024xf32>
    %477 = arith.maximumf %465, %476 : vector<4x1024xf32>
    %c2_144 = arith.constant 2 : index
    %c0_145 = arith.constant 0 : index
    %c128_146 = arith.constant 128 : index
    %478 = vector.load %arg9[%c2_144, %c0_145, %c128_146] : memref<3x4x1280xf32, #tpu.memory_space<vmem>>, vector<1x4x1024xf32>
    %479 = vector.shape_cast %478 : vector<1x4x1024xf32> to vector<4x1024xf32>
    %480 = vector.shape_cast %477 : vector<4x1024xf32> to vector<1x4x1024xf32>
    tpu.vector_store %arg9[%c2_144, %c0_145, %c128_146], %480 {strides = array<i32>} : memref<3x4x1280xf32, #tpu.memory_space<vmem>>, vector<1x4x1024xf32>,
    %cst_147 = arith.constant 0.000000e+00 : f32
    %481 = vector.broadcast %cst_147 : f32 to vector<4x1024xf32>
    %c0_148 = arith.constant 0 : index
    %482 = memref.load %arg6[%c0_148] : memref<3xf32, #tpu.memory_space<smem>>
    %483 = vector.broadcast %482 : f32 to vector<4x1024xf32>
    %484 = arith.addf %481, %483 : vector<4x1024xf32>
    %cst_149 = arith.constant 0.000000e+00 : f32
    %485 = vector.broadcast %cst_149 : f32 to vector<4x1024xf32>
    %c1_150 = arith.constant 1 : index
    %486 = memref.load %arg6[%c1_150] : memref<3xf32, #tpu.memory_space<smem>>
    %487 = vector.broadcast %486 : f32 to vector<4x1024xf32>
    %488 = arith.addf %485, %487 : vector<4x1024xf32>
    %cst_151 = arith.constant 0.000000e+00 : f32
    %489 = vector.broadcast %cst_151 : f32 to vector<4x1024xf32>
    %c2_152 = arith.constant 2 : index
    %490 = memref.load %arg6[%c2_152] : memref<3xf32, #tpu.memory_space<smem>>
    %491 = vector.broadcast %490 : f32 to vector<4x1024xf32>
    %492 = arith.addf %489, %491 : vector<4x1024xf32>
    %c0_153 = arith.constant 0 : index
    %c0_154 = arith.constant 0 : index
    %c95_155 = arith.constant 95 : index
    %493 = vector.load %arg9[%c0_153, %c0_154, %c95_155] : memref<3x4x1280xf32, #tpu.memory_space<vmem>>, vector<1x4x1024xf32>
    %494 = vector.shape_cast %493 : vector<1x4x1024xf32> to vector<4x1024xf32>
    %495 = arith.mulf %494, %2 : vector<4x1024xf32>
    %c0_156 = arith.constant 0 : index
    %496 = memref.load %arg5[%c0_156] : memref<81xf32, #tpu.memory_space<smem>>
    %497 = vector.broadcast %496 : f32 to vector<4x1024xf32>
    %498 = arith.mulf %497, %495 : vector<4x1024xf32>
    %499 = arith.addf %484, %498 : vector<4x1024xf32>
    %c27_157 = arith.constant 27 : index
    %500 = memref.load %arg5[%c27_157] : memref<81xf32, #tpu.memory_space<smem>>
    %501 = vector.broadcast %500 : f32 to vector<4x1024xf32>
    %502 = arith.mulf %501, %495 : vector<4x1024xf32>
    %503 = arith.addf %488, %502 : vector<4x1024xf32>
    %c54_158 = arith.constant 54 : index
    %504 = memref.load %arg5[%c54_158] : memref<81xf32, #tpu.memory_space<smem>>
    %505 = vector.broadcast %504 : f32 to vector<4x1024xf32>
    %506 = arith.mulf %505, %495 : vector<4x1024xf32>
    %507 = arith.addf %492, %506 : vector<4x1024xf32>
    %c0_159 = arith.constant 0 : index
    %c0_160 = arith.constant 0 : index
    %c96_161 = arith.constant 96 : index
    %508 = vector.load %arg9[%c0_159, %c0_160, %c96_161] : memref<3x4x1280xf32, #tpu.memory_space<vmem>>, vector<1x4x1024xf32>
    %509 = vector.shape_cast %508 : vector<1x4x1024xf32> to vector<4x1024xf32>
    %c1_162 = arith.constant 1 : index
    %510 = memref.load %arg5[%c1_162] : memref<81xf32, #tpu.memory_space<smem>>
    %511 = vector.broadcast %510 : f32 to vector<4x1024xf32>
    %512 = arith.mulf %511, %509 : vector<4x1024xf32>
    %513 = arith.addf %499, %512 : vector<4x1024xf32>
    %c28_163 = arith.constant 28 : index
    %514 = memref.load %arg5[%c28_163] : memref<81xf32, #tpu.memory_space<smem>>
    %515 = vector.broadcast %514 : f32 to vector<4x1024xf32>
    %516 = arith.mulf %515, %509 : vector<4x1024xf32>
    %517 = arith.addf %503, %516 : vector<4x1024xf32>
    %c55_164 = arith.constant 55 : index
    %518 = memref.load %arg5[%c55_164] : memref<81xf32, #tpu.memory_space<smem>>
    %519 = vector.broadcast %518 : f32 to vector<4x1024xf32>
    %520 = arith.mulf %519, %509 : vector<4x1024xf32>
    %521 = arith.addf %507, %520 : vector<4x1024xf32>
    %c0_165 = arith.constant 0 : index
    %c0_166 = arith.constant 0 : index
    %c97_167 = arith.constant 97 : index
    %522 = vector.load %arg9[%c0_165, %c0_166, %c97_167] : memref<3x4x1280xf32, #tpu.memory_space<vmem>>, vector<1x4x1024xf32>
    %523 = vector.shape_cast %522 : vector<1x4x1024xf32> to vector<4x1024xf32>
    %524 = arith.mulf %523, %5 : vector<4x1024xf32>
    %c2_168 = arith.constant 2 : index
    %525 = memref.load %arg5[%c2_168] : memref<81xf32, #tpu.memory_space<smem>>
    %526 = vector.broadcast %525 : f32 to vector<4x1024xf32>
    %527 = arith.mulf %526, %524 : vector<4x1024xf32>
    %528 = arith.addf %513, %527 : vector<4x1024xf32>
    %c29_169 = arith.constant 29 : index
    %529 = memref.load %arg5[%c29_169] : memref<81xf32, #tpu.memory_space<smem>>
    %530 = vector.broadcast %529 : f32 to vector<4x1024xf32>
    %531 = arith.mulf %530, %524 : vector<4x1024xf32>
    %532 = arith.addf %517, %531 : vector<4x1024xf32>
    %c56_170 = arith.constant 56 : index
    %533 = memref.load %arg5[%c56_170] : memref<81xf32, #tpu.memory_space<smem>>
    %534 = vector.broadcast %533 : f32 to vector<4x1024xf32>
    %535 = arith.mulf %534, %524 : vector<4x1024xf32>
    %536 = arith.addf %521, %535 : vector<4x1024xf32>
    %c0_171 = arith.constant 0 : index
    %c0_172 = arith.constant 0 : index
    %c127_173 = arith.constant 127 : index
    %537 = vector.load %arg9[%c0_171, %c0_172, %c127_173] : memref<3x4x1280xf32, #tpu.memory_space<vmem>>, vector<1x4x1024xf32>
    %538 = vector.shape_cast %537 : vector<1x4x1024xf32> to vector<4x1024xf32>
    %539 = arith.mulf %538, %2 : vector<4x1024xf32>
    %c3_174 = arith.constant 3 : index
    %540 = memref.load %arg5[%c3_174] : memref<81xf32, #tpu.memory_space<smem>>
    %541 = vector.broadcast %540 : f32 to vector<4x1024xf32>
    %542 = arith.mulf %541, %539 : vector<4x1024xf32>
    %543 = arith.addf %528, %542 : vector<4x1024xf32>
    %c30_175 = arith.constant 30 : index
    %544 = memref.load %arg5[%c30_175] : memref<81xf32, #tpu.memory_space<smem>>
    %545 = vector.broadcast %544 : f32 to vector<4x1024xf32>
    %546 = arith.mulf %545, %539 : vector<4x1024xf32>
    %547 = arith.addf %532, %546 : vector<4x1024xf32>
    %c57_176 = arith.constant 57 : index
    %548 = memref.load %arg5[%c57_176] : memref<81xf32, #tpu.memory_space<smem>>
    %549 = vector.broadcast %548 : f32 to vector<4x1024xf32>
    %550 = arith.mulf %549, %539 : vector<4x1024xf32>
    %551 = arith.addf %536, %550 : vector<4x1024xf32>
    %c0_177 = arith.constant 0 : index
    %c0_178 = arith.constant 0 : index
    %c128_179 = arith.constant 128 : index
    %552 = vector.load %arg9[%c0_177, %c0_178, %c128_179] : memref<3x4x1280xf32, #tpu.memory_space<vmem>>, vector<1x4x1024xf32>
    %553 = vector.shape_cast %552 : vector<1x4x1024xf32> to vector<4x1024xf32>
    %c4_180 = arith.constant 4 : index
    %554 = memref.load %arg5[%c4_180] : memref<81xf32, #tpu.memory_space<smem>>
    %555 = vector.broadcast %554 : f32 to vector<4x1024xf32>
    %556 = arith.mulf %555, %553 : vector<4x1024xf32>
    %557 = arith.addf %543, %556 : vector<4x1024xf32>
    %c31_181 = arith.constant 31 : index
    %558 = memref.load %arg5[%c31_181] : memref<81xf32, #tpu.memory_space<smem>>
    %559 = vector.broadcast %558 : f32 to vector<4x1024xf32>
    %560 = arith.mulf %559, %553 : vector<4x1024xf32>
    %561 = arith.addf %547, %560 : vector<4x1024xf32>
    %c58_182 = arith.constant 58 : index
    %562 = memref.load %arg5[%c58_182] : memref<81xf32, #tpu.memory_space<smem>>
    %563 = vector.broadcast %562 : f32 to vector<4x1024xf32>
    %564 = arith.mulf %563, %553 : vector<4x1024xf32>
    %565 = arith.addf %551, %564 : vector<4x1024xf32>
    %c0_183 = arith.constant 0 : index
    %c0_184 = arith.constant 0 : index
    %c129_185 = arith.constant 129 : index
    %566 = vector.load %arg9[%c0_183, %c0_184, %c129_185] : memref<3x4x1280xf32, #tpu.memory_space<vmem>>, vector<1x4x1024xf32>
    %567 = vector.shape_cast %566 : vector<1x4x1024xf32> to vector<4x1024xf32>
    %568 = arith.mulf %567, %5 : vector<4x1024xf32>
    %c5_186 = arith.constant 5 : index
    %569 = memref.load %arg5[%c5_186] : memref<81xf32, #tpu.memory_space<smem>>
    %570 = vector.broadcast %569 : f32 to vector<4x1024xf32>
    %571 = arith.mulf %570, %568 : vector<4x1024xf32>
    %572 = arith.addf %557, %571 : vector<4x1024xf32>
    %c32_187 = arith.constant 32 : index
    %573 = memref.load %arg5[%c32_187] : memref<81xf32, #tpu.memory_space<smem>>
    %574 = vector.broadcast %573 : f32 to vector<4x1024xf32>
    %575 = arith.mulf %574, %568 : vector<4x1024xf32>
    %576 = arith.addf %561, %575 : vector<4x1024xf32>
    %c59_188 = arith.constant 59 : index
    %577 = memref.load %arg5[%c59_188] : memref<81xf32, #tpu.memory_space<smem>>
    %578 = vector.broadcast %577 : f32 to vector<4x1024xf32>
    %579 = arith.mulf %578, %568 : vector<4x1024xf32>
    %580 = arith.addf %565, %579 : vector<4x1024xf32>
    %c0_189 = arith.constant 0 : index
    %c0_190 = arith.constant 0 : index
    %c159_191 = arith.constant 159 : index
    %581 = vector.load %arg9[%c0_189, %c0_190, %c159_191] : memref<3x4x1280xf32, #tpu.memory_space<vmem>>, vector<1x4x1024xf32>
    %582 = vector.shape_cast %581 : vector<1x4x1024xf32> to vector<4x1024xf32>
    %583 = arith.mulf %582, %2 : vector<4x1024xf32>
    %c6_192 = arith.constant 6 : index
    %584 = memref.load %arg5[%c6_192] : memref<81xf32, #tpu.memory_space<smem>>
    %585 = vector.broadcast %584 : f32 to vector<4x1024xf32>
    %586 = arith.mulf %585, %583 : vector<4x1024xf32>
    %587 = arith.addf %572, %586 : vector<4x1024xf32>
    %c33_193 = arith.constant 33 : index
    %588 = memref.load %arg5[%c33_193] : memref<81xf32, #tpu.memory_space<smem>>
    %589 = vector.broadcast %588 : f32 to vector<4x1024xf32>
    %590 = arith.mulf %589, %583 : vector<4x1024xf32>
    %591 = arith.addf %576, %590 : vector<4x1024xf32>
    %c60_194 = arith.constant 60 : index
    %592 = memref.load %arg5[%c60_194] : memref<81xf32, #tpu.memory_space<smem>>
    %593 = vector.broadcast %592 : f32 to vector<4x1024xf32>
    %594 = arith.mulf %593, %583 : vector<4x1024xf32>
    %595 = arith.addf %580, %594 : vector<4x1024xf32>
    %c0_195 = arith.constant 0 : index
    %c0_196 = arith.constant 0 : index
    %c160_197 = arith.constant 160 : index
    %596 = vector.load %arg9[%c0_195, %c0_196, %c160_197] : memref<3x4x1280xf32, #tpu.memory_space<vmem>>, vector<1x4x1024xf32>
    %597 = vector.shape_cast %596 : vector<1x4x1024xf32> to vector<4x1024xf32>
    %c7_198 = arith.constant 7 : index
    %598 = memref.load %arg5[%c7_198] : memref<81xf32, #tpu.memory_space<smem>>
    %599 = vector.broadcast %598 : f32 to vector<4x1024xf32>
    %600 = arith.mulf %599, %597 : vector<4x1024xf32>
    %601 = arith.addf %587, %600 : vector<4x1024xf32>
    %c34_199 = arith.constant 34 : index
    %602 = memref.load %arg5[%c34_199] : memref<81xf32, #tpu.memory_space<smem>>
    %603 = vector.broadcast %602 : f32 to vector<4x1024xf32>
    %604 = arith.mulf %603, %597 : vector<4x1024xf32>
    %605 = arith.addf %591, %604 : vector<4x1024xf32>
    %c61_200 = arith.constant 61 : index
    %606 = memref.load %arg5[%c61_200] : memref<81xf32, #tpu.memory_space<smem>>
    %607 = vector.broadcast %606 : f32 to vector<4x1024xf32>
    %608 = arith.mulf %607, %597 : vector<4x1024xf32>
    %609 = arith.addf %595, %608 : vector<4x1024xf32>
    %c0_201 = arith.constant 0 : index
    %c0_202 = arith.constant 0 : index
    %c161_203 = arith.constant 161 : index
    %610 = vector.load %arg9[%c0_201, %c0_202, %c161_203] : memref<3x4x1280xf32, #tpu.memory_space<vmem>>, vector<1x4x1024xf32>
    %611 = vector.shape_cast %610 : vector<1x4x1024xf32> to vector<4x1024xf32>
    %612 = arith.mulf %611, %5 : vector<4x1024xf32>
    %c8_204 = arith.constant 8 : index
    %613 = memref.load %arg5[%c8_204] : memref<81xf32, #tpu.memory_space<smem>>
    %614 = vector.broadcast %613 : f32 to vector<4x1024xf32>
    %615 = arith.mulf %614, %612 : vector<4x1024xf32>
    %616 = arith.addf %601, %615 : vector<4x1024xf32>
    %c35_205 = arith.constant 35 : index
    %617 = memref.load %arg5[%c35_205] : memref<81xf32, #tpu.memory_space<smem>>
    %618 = vector.broadcast %617 : f32 to vector<4x1024xf32>
    %619 = arith.mulf %618, %612 : vector<4x1024xf32>
    %620 = arith.addf %605, %619 : vector<4x1024xf32>
    %c62_206 = arith.constant 62 : index
    %621 = memref.load %arg5[%c62_206] : memref<81xf32, #tpu.memory_space<smem>>
    %622 = vector.broadcast %621 : f32 to vector<4x1024xf32>
    %623 = arith.mulf %622, %612 : vector<4x1024xf32>
    %624 = arith.addf %609, %623 : vector<4x1024xf32>
    %c1_207 = arith.constant 1 : index
    %c0_208 = arith.constant 0 : index
    %c95_209 = arith.constant 95 : index
    %625 = vector.load %arg9[%c1_207, %c0_208, %c95_209] : memref<3x4x1280xf32, #tpu.memory_space<vmem>>, vector<1x4x1024xf32>
    %626 = vector.shape_cast %625 : vector<1x4x1024xf32> to vector<4x1024xf32>
    %627 = arith.mulf %626, %2 : vector<4x1024xf32>
    %c9_210 = arith.constant 9 : index
    %628 = memref.load %arg5[%c9_210] : memref<81xf32, #tpu.memory_space<smem>>
    %629 = vector.broadcast %628 : f32 to vector<4x1024xf32>
    %630 = arith.mulf %629, %627 : vector<4x1024xf32>
    %631 = arith.addf %616, %630 : vector<4x1024xf32>
    %c36_211 = arith.constant 36 : index
    %632 = memref.load %arg5[%c36_211] : memref<81xf32, #tpu.memory_space<smem>>
    %633 = vector.broadcast %632 : f32 to vector<4x1024xf32>
    %634 = arith.mulf %633, %627 : vector<4x1024xf32>
    %635 = arith.addf %620, %634 : vector<4x1024xf32>
    %c63_212 = arith.constant 63 : index
    %636 = memref.load %arg5[%c63_212] : memref<81xf32, #tpu.memory_space<smem>>
    %637 = vector.broadcast %636 : f32 to vector<4x1024xf32>
    %638 = arith.mulf %637, %627 : vector<4x1024xf32>
    %639 = arith.addf %624, %638 : vector<4x1024xf32>
    %c1_213 = arith.constant 1 : index
    %c0_214 = arith.constant 0 : index
    %c96_215 = arith.constant 96 : index
    %640 = vector.load %arg9[%c1_213, %c0_214, %c96_215] : memref<3x4x1280xf32, #tpu.memory_space<vmem>>, vector<1x4x1024xf32>
    %641 = vector.shape_cast %640 : vector<1x4x1024xf32> to vector<4x1024xf32>
    %c10_216 = arith.constant 10 : index
    %642 = memref.load %arg5[%c10_216] : memref<81xf32, #tpu.memory_space<smem>>
    %643 = vector.broadcast %642 : f32 to vector<4x1024xf32>
    %644 = arith.mulf %643, %641 : vector<4x1024xf32>
    %645 = arith.addf %631, %644 : vector<4x1024xf32>
    %c37_217 = arith.constant 37 : index
    %646 = memref.load %arg5[%c37_217] : memref<81xf32, #tpu.memory_space<smem>>
    %647 = vector.broadcast %646 : f32 to vector<4x1024xf32>
    %648 = arith.mulf %647, %641 : vector<4x1024xf32>
    %649 = arith.addf %635, %648 : vector<4x1024xf32>
    %c64_218 = arith.constant 64 : index
    %650 = memref.load %arg5[%c64_218] : memref<81xf32, #tpu.memory_space<smem>>
    %651 = vector.broadcast %650 : f32 to vector<4x1024xf32>
    %652 = arith.mulf %651, %641 : vector<4x1024xf32>
    %653 = arith.addf %639, %652 : vector<4x1024xf32>
    %c1_219 = arith.constant 1 : index
    %c0_220 = arith.constant 0 : index
    %c97_221 = arith.constant 97 : index
    %654 = vector.load %arg9[%c1_219, %c0_220, %c97_221] : memref<3x4x1280xf32, #tpu.memory_space<vmem>>, vector<1x4x1024xf32>
    %655 = vector.shape_cast %654 : vector<1x4x1024xf32> to vector<4x1024xf32>
    %656 = arith.mulf %655, %5 : vector<4x1024xf32>
    %c11_222 = arith.constant 11 : index
    %657 = memref.load %arg5[%c11_222] : memref<81xf32, #tpu.memory_space<smem>>
    %658 = vector.broadcast %657 : f32 to vector<4x1024xf32>
    %659 = arith.mulf %658, %656 : vector<4x1024xf32>
    %660 = arith.addf %645, %659 : vector<4x1024xf32>
    %c38_223 = arith.constant 38 : index
    %661 = memref.load %arg5[%c38_223] : memref<81xf32, #tpu.memory_space<smem>>
    %662 = vector.broadcast %661 : f32 to vector<4x1024xf32>
    %663 = arith.mulf %662, %656 : vector<4x1024xf32>
    %664 = arith.addf %649, %663 : vector<4x1024xf32>
    %c65_224 = arith.constant 65 : index
    %665 = memref.load %arg5[%c65_224] : memref<81xf32, #tpu.memory_space<smem>>
    %666 = vector.broadcast %665 : f32 to vector<4x1024xf32>
    %667 = arith.mulf %666, %656 : vector<4x1024xf32>
    %668 = arith.addf %653, %667 : vector<4x1024xf32>
    %c1_225 = arith.constant 1 : index
    %c0_226 = arith.constant 0 : index
    %c127_227 = arith.constant 127 : index
    %669 = vector.load %arg9[%c1_225, %c0_226, %c127_227] : memref<3x4x1280xf32, #tpu.memory_space<vmem>>, vector<1x4x1024xf32>
    %670 = vector.shape_cast %669 : vector<1x4x1024xf32> to vector<4x1024xf32>
    %671 = arith.mulf %670, %2 : vector<4x1024xf32>
    %c12_228 = arith.constant 12 : index
    %672 = memref.load %arg5[%c12_228] : memref<81xf32, #tpu.memory_space<smem>>
    %673 = vector.broadcast %672 : f32 to vector<4x1024xf32>
    %674 = arith.mulf %673, %671 : vector<4x1024xf32>
    %675 = arith.addf %660, %674 : vector<4x1024xf32>
    %c39_229 = arith.constant 39 : index
    %676 = memref.load %arg5[%c39_229] : memref<81xf32, #tpu.memory_space<smem>>
    %677 = vector.broadcast %676 : f32 to vector<4x1024xf32>
    %678 = arith.mulf %677, %671 : vector<4x1024xf32>
    %679 = arith.addf %664, %678 : vector<4x1024xf32>
    %c66_230 = arith.constant 66 : index
    %680 = memref.load %arg5[%c66_230] : memref<81xf32, #tpu.memory_space<smem>>
    %681 = vector.broadcast %680 : f32 to vector<4x1024xf32>
    %682 = arith.mulf %681, %671 : vector<4x1024xf32>
    %683 = arith.addf %668, %682 : vector<4x1024xf32>
    %c1_231 = arith.constant 1 : index
    %c0_232 = arith.constant 0 : index
    %c128_233 = arith.constant 128 : index
    %684 = vector.load %arg9[%c1_231, %c0_232, %c128_233] : memref<3x4x1280xf32, #tpu.memory_space<vmem>>, vector<1x4x1024xf32>
    %685 = vector.shape_cast %684 : vector<1x4x1024xf32> to vector<4x1024xf32>
    %c13_234 = arith.constant 13 : index
    %686 = memref.load %arg5[%c13_234] : memref<81xf32, #tpu.memory_space<smem>>
    %687 = vector.broadcast %686 : f32 to vector<4x1024xf32>
    %688 = arith.mulf %687, %685 : vector<4x1024xf32>
    %689 = arith.addf %675, %688 : vector<4x1024xf32>
    %c40_235 = arith.constant 40 : index
    %690 = memref.load %arg5[%c40_235] : memref<81xf32, #tpu.memory_space<smem>>
    %691 = vector.broadcast %690 : f32 to vector<4x1024xf32>
    %692 = arith.mulf %691, %685 : vector<4x1024xf32>
    %693 = arith.addf %679, %692 : vector<4x1024xf32>
    %c67_236 = arith.constant 67 : index
    %694 = memref.load %arg5[%c67_236] : memref<81xf32, #tpu.memory_space<smem>>
    %695 = vector.broadcast %694 : f32 to vector<4x1024xf32>
    %696 = arith.mulf %695, %685 : vector<4x1024xf32>
    %697 = arith.addf %683, %696 : vector<4x1024xf32>
    %c1_237 = arith.constant 1 : index
    %c0_238 = arith.constant 0 : index
    %c129_239 = arith.constant 129 : index
    %698 = vector.load %arg9[%c1_237, %c0_238, %c129_239] : memref<3x4x1280xf32, #tpu.memory_space<vmem>>, vector<1x4x1024xf32>
    %699 = vector.shape_cast %698 : vector<1x4x1024xf32> to vector<4x1024xf32>
    %700 = arith.mulf %699, %5 : vector<4x1024xf32>
    %c14_240 = arith.constant 14 : index
    %701 = memref.load %arg5[%c14_240] : memref<81xf32, #tpu.memory_space<smem>>
    %702 = vector.broadcast %701 : f32 to vector<4x1024xf32>
    %703 = arith.mulf %702, %700 : vector<4x1024xf32>
    %704 = arith.addf %689, %703 : vector<4x1024xf32>
    %c41_241 = arith.constant 41 : index
    %705 = memref.load %arg5[%c41_241] : memref<81xf32, #tpu.memory_space<smem>>
    %706 = vector.broadcast %705 : f32 to vector<4x1024xf32>
    %707 = arith.mulf %706, %700 : vector<4x1024xf32>
    %708 = arith.addf %693, %707 : vector<4x1024xf32>
    %c68_242 = arith.constant 68 : index
    %709 = memref.load %arg5[%c68_242] : memref<81xf32, #tpu.memory_space<smem>>
    %710 = vector.broadcast %709 : f32 to vector<4x1024xf32>
    %711 = arith.mulf %710, %700 : vector<4x1024xf32>
    %712 = arith.addf %697, %711 : vector<4x1024xf32>
    %c1_243 = arith.constant 1 : index
    %c0_244 = arith.constant 0 : index
    %c159_245 = arith.constant 159 : index
    %713 = vector.load %arg9[%c1_243, %c0_244, %c159_245] : memref<3x4x1280xf32, #tpu.memory_space<vmem>>, vector<1x4x1024xf32>
    %714 = vector.shape_cast %713 : vector<1x4x1024xf32> to vector<4x1024xf32>
    %715 = arith.mulf %714, %2 : vector<4x1024xf32>
    %c15_246 = arith.constant 15 : index
    %716 = memref.load %arg5[%c15_246] : memref<81xf32, #tpu.memory_space<smem>>
    %717 = vector.broadcast %716 : f32 to vector<4x1024xf32>
    %718 = arith.mulf %717, %715 : vector<4x1024xf32>
    %719 = arith.addf %704, %718 : vector<4x1024xf32>
    %c42_247 = arith.constant 42 : index
    %720 = memref.load %arg5[%c42_247] : memref<81xf32, #tpu.memory_space<smem>>
    %721 = vector.broadcast %720 : f32 to vector<4x1024xf32>
    %722 = arith.mulf %721, %715 : vector<4x1024xf32>
    %723 = arith.addf %708, %722 : vector<4x1024xf32>
    %c69_248 = arith.constant 69 : index
    %724 = memref.load %arg5[%c69_248] : memref<81xf32, #tpu.memory_space<smem>>
    %725 = vector.broadcast %724 : f32 to vector<4x1024xf32>
    %726 = arith.mulf %725, %715 : vector<4x1024xf32>
    %727 = arith.addf %712, %726 : vector<4x1024xf32>
    %c1_249 = arith.constant 1 : index
    %c0_250 = arith.constant 0 : index
    %c160_251 = arith.constant 160 : index
    %728 = vector.load %arg9[%c1_249, %c0_250, %c160_251] : memref<3x4x1280xf32, #tpu.memory_space<vmem>>, vector<1x4x1024xf32>
    %729 = vector.shape_cast %728 : vector<1x4x1024xf32> to vector<4x1024xf32>
    %c16_252 = arith.constant 16 : index
    %730 = memref.load %arg5[%c16_252] : memref<81xf32, #tpu.memory_space<smem>>
    %731 = vector.broadcast %730 : f32 to vector<4x1024xf32>
    %732 = arith.mulf %731, %729 : vector<4x1024xf32>
    %733 = arith.addf %719, %732 : vector<4x1024xf32>
    %c43_253 = arith.constant 43 : index
    %734 = memref.load %arg5[%c43_253] : memref<81xf32, #tpu.memory_space<smem>>
    %735 = vector.broadcast %734 : f32 to vector<4x1024xf32>
    %736 = arith.mulf %735, %729 : vector<4x1024xf32>
    %737 = arith.addf %723, %736 : vector<4x1024xf32>
    %c70_254 = arith.constant 70 : index
    %738 = memref.load %arg5[%c70_254] : memref<81xf32, #tpu.memory_space<smem>>
    %739 = vector.broadcast %738 : f32 to vector<4x1024xf32>
    %740 = arith.mulf %739, %729 : vector<4x1024xf32>
    %741 = arith.addf %727, %740 : vector<4x1024xf32>
    %c1_255 = arith.constant 1 : index
    %c0_256 = arith.constant 0 : index
    %c161_257 = arith.constant 161 : index
    %742 = vector.load %arg9[%c1_255, %c0_256, %c161_257] : memref<3x4x1280xf32, #tpu.memory_space<vmem>>, vector<1x4x1024xf32>
    %743 = vector.shape_cast %742 : vector<1x4x1024xf32> to vector<4x1024xf32>
    %744 = arith.mulf %743, %5 : vector<4x1024xf32>
    %c17_258 = arith.constant 17 : index
    %745 = memref.load %arg5[%c17_258] : memref<81xf32, #tpu.memory_space<smem>>
    %746 = vector.broadcast %745 : f32 to vector<4x1024xf32>
    %747 = arith.mulf %746, %744 : vector<4x1024xf32>
    %748 = arith.addf %733, %747 : vector<4x1024xf32>
    %c44_259 = arith.constant 44 : index
    %749 = memref.load %arg5[%c44_259] : memref<81xf32, #tpu.memory_space<smem>>
    %750 = vector.broadcast %749 : f32 to vector<4x1024xf32>
    %751 = arith.mulf %750, %744 : vector<4x1024xf32>
    %752 = arith.addf %737, %751 : vector<4x1024xf32>
    %c71_260 = arith.constant 71 : index
    %753 = memref.load %arg5[%c71_260] : memref<81xf32, #tpu.memory_space<smem>>
    %754 = vector.broadcast %753 : f32 to vector<4x1024xf32>
    %755 = arith.mulf %754, %744 : vector<4x1024xf32>
    %756 = arith.addf %741, %755 : vector<4x1024xf32>
    %c2_261 = arith.constant 2 : index
    %c0_262 = arith.constant 0 : index
    %c95_263 = arith.constant 95 : index
    %757 = vector.load %arg9[%c2_261, %c0_262, %c95_263] : memref<3x4x1280xf32, #tpu.memory_space<vmem>>, vector<1x4x1024xf32>
    %758 = vector.shape_cast %757 : vector<1x4x1024xf32> to vector<4x1024xf32>
    %759 = arith.mulf %758, %2 : vector<4x1024xf32>
    %c18_264 = arith.constant 18 : index
    %760 = memref.load %arg5[%c18_264] : memref<81xf32, #tpu.memory_space<smem>>
    %761 = vector.broadcast %760 : f32 to vector<4x1024xf32>
    %762 = arith.mulf %761, %759 : vector<4x1024xf32>
    %763 = arith.addf %748, %762 : vector<4x1024xf32>
    %c45_265 = arith.constant 45 : index
    %764 = memref.load %arg5[%c45_265] : memref<81xf32, #tpu.memory_space<smem>>
    %765 = vector.broadcast %764 : f32 to vector<4x1024xf32>
    %766 = arith.mulf %765, %759 : vector<4x1024xf32>
    %767 = arith.addf %752, %766 : vector<4x1024xf32>
    %c72_266 = arith.constant 72 : index
    %768 = memref.load %arg5[%c72_266] : memref<81xf32, #tpu.memory_space<smem>>
    %769 = vector.broadcast %768 : f32 to vector<4x1024xf32>
    %770 = arith.mulf %769, %759 : vector<4x1024xf32>
    %771 = arith.addf %756, %770 : vector<4x1024xf32>
    %c2_267 = arith.constant 2 : index
    %c0_268 = arith.constant 0 : index
    %c96_269 = arith.constant 96 : index
    %772 = vector.load %arg9[%c2_267, %c0_268, %c96_269] : memref<3x4x1280xf32, #tpu.memory_space<vmem>>, vector<1x4x1024xf32>
    %773 = vector.shape_cast %772 : vector<1x4x1024xf32> to vector<4x1024xf32>
    %c19_270 = arith.constant 19 : index
    %774 = memref.load %arg5[%c19_270] : memref<81xf32, #tpu.memory_space<smem>>
    %775 = vector.broadcast %774 : f32 to vector<4x1024xf32>
    %776 = arith.mulf %775, %773 : vector<4x1024xf32>
    %777 = arith.addf %763, %776 : vector<4x1024xf32>
    %c46_271 = arith.constant 46 : index
    %778 = memref.load %arg5[%c46_271] : memref<81xf32, #tpu.memory_space<smem>>
    %779 = vector.broadcast %778 : f32 to vector<4x1024xf32>
    %780 = arith.mulf %779, %773 : vector<4x1024xf32>
    %781 = arith.addf %767, %780 : vector<4x1024xf32>
    %c73_272 = arith.constant 73 : index
    %782 = memref.load %arg5[%c73_272] : memref<81xf32, #tpu.memory_space<smem>>
    %783 = vector.broadcast %782 : f32 to vector<4x1024xf32>
    %784 = arith.mulf %783, %773 : vector<4x1024xf32>
    %785 = arith.addf %771, %784 : vector<4x1024xf32>
    %c2_273 = arith.constant 2 : index
    %c0_274 = arith.constant 0 : index
    %c97_275 = arith.constant 97 : index
    %786 = vector.load %arg9[%c2_273, %c0_274, %c97_275] : memref<3x4x1280xf32, #tpu.memory_space<vmem>>, vector<1x4x1024xf32>
    %787 = vector.shape_cast %786 : vector<1x4x1024xf32> to vector<4x1024xf32>
    %788 = arith.mulf %787, %5 : vector<4x1024xf32>
    %c20_276 = arith.constant 20 : index
    %789 = memref.load %arg5[%c20_276] : memref<81xf32, #tpu.memory_space<smem>>
    %790 = vector.broadcast %789 : f32 to vector<4x1024xf32>
    %791 = arith.mulf %790, %788 : vector<4x1024xf32>
    %792 = arith.addf %777, %791 : vector<4x1024xf32>
    %c47_277 = arith.constant 47 : index
    %793 = memref.load %arg5[%c47_277] : memref<81xf32, #tpu.memory_space<smem>>
    %794 = vector.broadcast %793 : f32 to vector<4x1024xf32>
    %795 = arith.mulf %794, %788 : vector<4x1024xf32>
    %796 = arith.addf %781, %795 : vector<4x1024xf32>
    %c74_278 = arith.constant 74 : index
    %797 = memref.load %arg5[%c74_278] : memref<81xf32, #tpu.memory_space<smem>>
    %798 = vector.broadcast %797 : f32 to vector<4x1024xf32>
    %799 = arith.mulf %798, %788 : vector<4x1024xf32>
    %800 = arith.addf %785, %799 : vector<4x1024xf32>
    %c2_279 = arith.constant 2 : index
    %c0_280 = arith.constant 0 : index
    %c127_281 = arith.constant 127 : index
    %801 = vector.load %arg9[%c2_279, %c0_280, %c127_281] : memref<3x4x1280xf32, #tpu.memory_space<vmem>>, vector<1x4x1024xf32>
    %802 = vector.shape_cast %801 : vector<1x4x1024xf32> to vector<4x1024xf32>
    %803 = arith.mulf %802, %2 : vector<4x1024xf32>
    %c21_282 = arith.constant 21 : index
    %804 = memref.load %arg5[%c21_282] : memref<81xf32, #tpu.memory_space<smem>>
    %805 = vector.broadcast %804 : f32 to vector<4x1024xf32>
    %806 = arith.mulf %805, %803 : vector<4x1024xf32>
    %807 = arith.addf %792, %806 : vector<4x1024xf32>
    %c48_283 = arith.constant 48 : index
    %808 = memref.load %arg5[%c48_283] : memref<81xf32, #tpu.memory_space<smem>>
    %809 = vector.broadcast %808 : f32 to vector<4x1024xf32>
    %810 = arith.mulf %809, %803 : vector<4x1024xf32>
    %811 = arith.addf %796, %810 : vector<4x1024xf32>
    %c75_284 = arith.constant 75 : index
    %812 = memref.load %arg5[%c75_284] : memref<81xf32, #tpu.memory_space<smem>>
    %813 = vector.broadcast %812 : f32 to vector<4x1024xf32>
    %814 = arith.mulf %813, %803 : vector<4x1024xf32>
    %815 = arith.addf %800, %814 : vector<4x1024xf32>
    %c2_285 = arith.constant 2 : index
    %c0_286 = arith.constant 0 : index
    %c128_287 = arith.constant 128 : index
    %816 = vector.load %arg9[%c2_285, %c0_286, %c128_287] : memref<3x4x1280xf32, #tpu.memory_space<vmem>>, vector<1x4x1024xf32>
    %817 = vector.shape_cast %816 : vector<1x4x1024xf32> to vector<4x1024xf32>
    %c22_288 = arith.constant 22 : index
    %818 = memref.load %arg5[%c22_288] : memref<81xf32, #tpu.memory_space<smem>>
    %819 = vector.broadcast %818 : f32 to vector<4x1024xf32>
    %820 = arith.mulf %819, %817 : vector<4x1024xf32>
    %821 = arith.addf %807, %820 : vector<4x1024xf32>
    %c49_289 = arith.constant 49 : index
    %822 = memref.load %arg5[%c49_289] : memref<81xf32, #tpu.memory_space<smem>>
    %823 = vector.broadcast %822 : f32 to vector<4x1024xf32>
    %824 = arith.mulf %823, %817 : vector<4x1024xf32>
    %825 = arith.addf %811, %824 : vector<4x1024xf32>
    %c76_290 = arith.constant 76 : index
    %826 = memref.load %arg5[%c76_290] : memref<81xf32, #tpu.memory_space<smem>>
    %827 = vector.broadcast %826 : f32 to vector<4x1024xf32>
    %828 = arith.mulf %827, %817 : vector<4x1024xf32>
    %829 = arith.addf %815, %828 : vector<4x1024xf32>
    %c2_291 = arith.constant 2 : index
    %c0_292 = arith.constant 0 : index
    %c129_293 = arith.constant 129 : index
    %830 = vector.load %arg9[%c2_291, %c0_292, %c129_293] : memref<3x4x1280xf32, #tpu.memory_space<vmem>>, vector<1x4x1024xf32>
    %831 = vector.shape_cast %830 : vector<1x4x1024xf32> to vector<4x1024xf32>
    %832 = arith.mulf %831, %5 : vector<4x1024xf32>
    %c23_294 = arith.constant 23 : index
    %833 = memref.load %arg5[%c23_294] : memref<81xf32, #tpu.memory_space<smem>>
    %834 = vector.broadcast %833 : f32 to vector<4x1024xf32>
    %835 = arith.mulf %834, %832 : vector<4x1024xf32>
    %836 = arith.addf %821, %835 : vector<4x1024xf32>
    %c50_295 = arith.constant 50 : index
    %837 = memref.load %arg5[%c50_295] : memref<81xf32, #tpu.memory_space<smem>>
    %838 = vector.broadcast %837 : f32 to vector<4x1024xf32>
    %839 = arith.mulf %838, %832 : vector<4x1024xf32>
    %840 = arith.addf %825, %839 : vector<4x1024xf32>
    %c77_296 = arith.constant 77 : index
    %841 = memref.load %arg5[%c77_296] : memref<81xf32, #tpu.memory_space<smem>>
    %842 = vector.broadcast %841 : f32 to vector<4x1024xf32>
    %843 = arith.mulf %842, %832 : vector<4x1024xf32>
    %844 = arith.addf %829, %843 : vector<4x1024xf32>
    %c2_297 = arith.constant 2 : index
    %c0_298 = arith.constant 0 : index
    %c159_299 = arith.constant 159 : index
    %845 = vector.load %arg9[%c2_297, %c0_298, %c159_299] : memref<3x4x1280xf32, #tpu.memory_space<vmem>>, vector<1x4x1024xf32>
    %846 = vector.shape_cast %845 : vector<1x4x1024xf32> to vector<4x1024xf32>
    %847 = arith.mulf %846, %2 : vector<4x1024xf32>
    %c24_300 = arith.constant 24 : index
    %848 = memref.load %arg5[%c24_300] : memref<81xf32, #tpu.memory_space<smem>>
    %849 = vector.broadcast %848 : f32 to vector<4x1024xf32>
    %850 = arith.mulf %849, %847 : vector<4x1024xf32>
    %851 = arith.addf %836, %850 : vector<4x1024xf32>
    %c51_301 = arith.constant 51 : index
    %852 = memref.load %arg5[%c51_301] : memref<81xf32, #tpu.memory_space<smem>>
    %853 = vector.broadcast %852 : f32 to vector<4x1024xf32>
    %854 = arith.mulf %853, %847 : vector<4x1024xf32>
    %855 = arith.addf %840, %854 : vector<4x1024xf32>
    %c78_302 = arith.constant 78 : index
    %856 = memref.load %arg5[%c78_302] : memref<81xf32, #tpu.memory_space<smem>>
    %857 = vector.broadcast %856 : f32 to vector<4x1024xf32>
    %858 = arith.mulf %857, %847 : vector<4x1024xf32>
    %859 = arith.addf %844, %858 : vector<4x1024xf32>
    %c2_303 = arith.constant 2 : index
    %c0_304 = arith.constant 0 : index
    %c160_305 = arith.constant 160 : index
    %860 = vector.load %arg9[%c2_303, %c0_304, %c160_305] : memref<3x4x1280xf32, #tpu.memory_space<vmem>>, vector<1x4x1024xf32>
    %861 = vector.shape_cast %860 : vector<1x4x1024xf32> to vector<4x1024xf32>
    %c25_306 = arith.constant 25 : index
    %862 = memref.load %arg5[%c25_306] : memref<81xf32, #tpu.memory_space<smem>>
    %863 = vector.broadcast %862 : f32 to vector<4x1024xf32>
    %864 = arith.mulf %863, %861 : vector<4x1024xf32>
    %865 = arith.addf %851, %864 : vector<4x1024xf32>
    %c52_307 = arith.constant 52 : index
    %866 = memref.load %arg5[%c52_307] : memref<81xf32, #tpu.memory_space<smem>>
    %867 = vector.broadcast %866 : f32 to vector<4x1024xf32>
    %868 = arith.mulf %867, %861 : vector<4x1024xf32>
    %869 = arith.addf %855, %868 : vector<4x1024xf32>
    %c79_308 = arith.constant 79 : index
    %870 = memref.load %arg5[%c79_308] : memref<81xf32, #tpu.memory_space<smem>>
    %871 = vector.broadcast %870 : f32 to vector<4x1024xf32>
    %872 = arith.mulf %871, %861 : vector<4x1024xf32>
    %873 = arith.addf %859, %872 : vector<4x1024xf32>
    %c2_309 = arith.constant 2 : index
    %c0_310 = arith.constant 0 : index
    %c161_311 = arith.constant 161 : index
    %874 = vector.load %arg9[%c2_309, %c0_310, %c161_311] : memref<3x4x1280xf32, #tpu.memory_space<vmem>>, vector<1x4x1024xf32>
    %875 = vector.shape_cast %874 : vector<1x4x1024xf32> to vector<4x1024xf32>
    %876 = arith.mulf %875, %5 : vector<4x1024xf32>
    %c26_312 = arith.constant 26 : index
    %877 = memref.load %arg5[%c26_312] : memref<81xf32, #tpu.memory_space<smem>>
    %878 = vector.broadcast %877 : f32 to vector<4x1024xf32>
    %879 = arith.mulf %878, %876 : vector<4x1024xf32>
    %880 = arith.addf %865, %879 : vector<4x1024xf32>
    %c53_313 = arith.constant 53 : index
    %881 = memref.load %arg5[%c53_313] : memref<81xf32, #tpu.memory_space<smem>>
    %882 = vector.broadcast %881 : f32 to vector<4x1024xf32>
    %883 = arith.mulf %882, %876 : vector<4x1024xf32>
    %884 = arith.addf %869, %883 : vector<4x1024xf32>
    %c80_314 = arith.constant 80 : index
    %885 = memref.load %arg5[%c80_314] : memref<81xf32, #tpu.memory_space<smem>>
    %886 = vector.broadcast %885 : f32 to vector<4x1024xf32>
    %887 = arith.mulf %886, %876 : vector<4x1024xf32>
    %888 = arith.addf %873, %887 : vector<4x1024xf32>
    %c0_315 = arith.constant 0 : index
    %c0_316 = arith.constant 0 : index
    %c128_317 = arith.constant 128 : index
    %889 = vector.load %arg8[%c0_315, %c0_316, %c128_317] : memref<3x4x1280xf32, #tpu.memory_space<vmem>>, vector<1x4x1024xf32>
    %890 = vector.shape_cast %889 : vector<1x4x1024xf32> to vector<4x1024xf32>
    %cst_318 = arith.constant 0.000000e+00 : f32
    %891 = vector.broadcast %cst_318 : f32 to vector<4x1024xf32>
    %892 = arith.maximumf %880, %891 : vector<4x1024xf32>
    %893 = arith.addf %892, %890 : vector<4x1024xf32>
    %c0_319 = arith.constant 0 : index
    %c0_320 = arith.constant 0 : index
    %c0_321 = arith.constant 0 : index
    %894 = vector.load %arg7[%c0_319, %c0_320, %c0_321] : memref<4x3x1024xf32, #tpu.memory_space<vmem>>, vector<4x1x1024xf32>
    %895 = vector.shape_cast %894 : vector<4x1x1024xf32> to vector<4x1024xf32>
    %896 = vector.shape_cast %893 : vector<4x1024xf32> to vector<4x1x1024xf32>
    tpu.vector_store %arg7[%c0_319, %c0_320, %c0_321], %896 {strides = array<i32>} : memref<4x3x1024xf32, #tpu.memory_space<vmem>>, vector<4x1x1024xf32>,
    %c1_322 = arith.constant 1 : index
    %c0_323 = arith.constant 0 : index
    %c128_324 = arith.constant 128 : index
    %897 = vector.load %arg8[%c1_322, %c0_323, %c128_324] : memref<3x4x1280xf32, #tpu.memory_space<vmem>>, vector<1x4x1024xf32>
    %898 = vector.shape_cast %897 : vector<1x4x1024xf32> to vector<4x1024xf32>
    %cst_325 = arith.constant 0.000000e+00 : f32
    %899 = vector.broadcast %cst_325 : f32 to vector<4x1024xf32>
    %900 = arith.maximumf %884, %899 : vector<4x1024xf32>
    %901 = arith.addf %900, %898 : vector<4x1024xf32>
    %c0_326 = arith.constant 0 : index
    %c1_327 = arith.constant 1 : index
    %c0_328 = arith.constant 0 : index
    %902 = vector.load %arg7[%c0_326, %c1_327, %c0_328] : memref<4x3x1024xf32, #tpu.memory_space<vmem>>, vector<4x1x1024xf32>
    %903 = vector.shape_cast %902 : vector<4x1x1024xf32> to vector<4x1024xf32>
    %904 = vector.shape_cast %901 : vector<4x1024xf32> to vector<4x1x1024xf32>
    tpu.vector_store %arg7[%c0_326, %c1_327, %c0_328], %904 {strides = array<i32>} : memref<4x3x1024xf32, #tpu.memory_space<vmem>>, vector<4x1x1024xf32>,
    %c2_329 = arith.constant 2 : index
    %c0_330 = arith.constant 0 : index
    %c128_331 = arith.constant 128 : index
    %905 = vector.load %arg8[%c2_329, %c0_330, %c128_331] : memref<3x4x1280xf32, #tpu.memory_space<vmem>>, vector<1x4x1024xf32>
    %906 = vector.shape_cast %905 : vector<1x4x1024xf32> to vector<4x1024xf32>
    %cst_332 = arith.constant 0.000000e+00 : f32
    %907 = vector.broadcast %cst_332 : f32 to vector<4x1024xf32>
    %908 = arith.maximumf %888, %907 : vector<4x1024xf32>
    %909 = arith.addf %908, %906 : vector<4x1024xf32>
    %c0_333 = arith.constant 0 : index
    %c2_334 = arith.constant 2 : index
    %c0_335 = arith.constant 0 : index
    %910 = vector.load %arg7[%c0_333, %c2_334, %c0_335] : memref<4x3x1024xf32, #tpu.memory_space<vmem>>, vector<4x1x1024xf32>
    %911 = vector.shape_cast %910 : vector<4x1x1024xf32> to vector<4x1024xf32>
    %912 = vector.shape_cast %909 : vector<4x1024xf32> to vector<4x1x1024xf32>
    tpu.vector_store %arg7[%c0_333, %c2_334, %c0_335], %912 {strides = array<i32>} : memref<4x3x1024xf32, #tpu.memory_space<vmem>>, vector<4x1x1024xf32>,
    return
  }
  func.func @transform_0(%arg0: i32) -> (i32, i32, i32) {
    %c0_i32 = arith.constant 0 : i32
    %c0_i32_0 = arith.constant 0 : i32
    %c0_i32_1 = arith.constant 0 : i32
    return %arg0, %c0_i32, %c0_i32_0 : i32, i32, i32
  }
  func.func @transform_1(%arg0: i32) -> (i32, i32) {
    %c0_i32 = arith.constant 0 : i32
    %c0_i32_0 = arith.constant 0 : i32
    %c0_i32_1 = arith.constant 0 : i32
    return %c0_i32, %c0_i32_0 : i32, i32
  }
  func.func @transform_2(%arg0: i32) -> i32 {
    %c0_i32 = arith.constant 0 : i32
    %c0_i32_0 = arith.constant 0 : i32
    return %c0_i32 : i32
  }
  func.func @transform_3(%arg0: i32) -> i32 {
    %c0_i32 = arith.constant 0 : i32
    %c0_i32_0 = arith.constant 0 : i32
    return %c0_i32 : i32
  }
  func.func @transform_4(%arg0: i32) -> i32 {
    %c0_i32 = arith.constant 0 : i32
    %c0_i32_0 = arith.constant 0 : i32
    return %c0_i32 : i32
  }
  func.func @transform_5(%arg0: i32) -> i32 {
    %c0_i32 = arith.constant 0 : i32
    %c0_i32_0 = arith.constant 0 : i32
    return %c0_i32 : i32
  }
  func.func @transform_6(%arg0: i32) -> (i32, i32, i32) {
    %c0_i32 = arith.constant 0 : i32
    %c0_i32_0 = arith.constant 0 : i32
    %c0_i32_1 = arith.constant 0 : i32
    return %arg0, %c0_i32, %c0_i32_0 : i32, i32, i32
  }
}

</mosaic_0001>

<llo_original>
// kernel: simple_residual_block.1
$region0: #{simple_residual_block.1}
  #allocation0 [shape = 'u32[]', space=smem, size = 0x4, offset = 0x4, fixed_abs, tag = 'smem constant byte address 0x4 - core index']
  #allocation1 [shape = 'u32[144,128]{1,0:T(1,128)}', space=vmem, size = 0x12000, scoped, tag = 'internal scratch']
  #allocation2 [shape = 'f32[3,4,1280]{2,1,0:T(4,128)}', space=vmem, size = 0xf000, scoped, tag = 'scratch operand']
  #allocation3 [shape = 'f32[3,4,1280]{2,1,0:T(4,128)}', space=vmem, size = 0xf000, scoped, tag = 'scratch operand']
  %s0 = inlined_call_operand.vmem [shape: f32[8,3,1024], index: 0, kind: input, shape index: {}]
  %s1 = inlined_call_operand.vmem [shape: f32[2,1024], index: 1, kind: input, shape index: {}]
  %s2 = inlined_call_operand.vmem [shape: f32[81], index: 2, kind: input, shape index: {}]
  %s3 = inlined_call_operand.vmem [shape: f32[3], index: 3, kind: input, shape index: {}]
  %s4 = inlined_call_operand.vmem [shape: f32[81], index: 4, kind: input, shape index: {}]
  %s5 = inlined_call_operand.vmem [shape: f32[3], index: 5, kind: input, shape index: {}]
  %s6 = inlined_call_operand.vmem [shape: f32[8,3,1024], index: 6, kind: output, shape index: {}]
  %s7 = sld [smem:[#allocation0]]
  $region73: #{simple_residual_block.1} parent=0
    _
  %s9 = ssub.s32 1, %s7
  %s10 = scalar_select 0, %s9, %s7
  $region1: #{simple_residual_block.1} parent=0
    #allocation4 [shape = 'u8[512]{0}', space=smem, size = 0x200, scoped, tag = 'input window, operand 2, single buffered']
    #allocation5 [shape = 's32[2]{0}', space=sflag, size = 0x8, scoped, tag = 'scoped memory for simple_residual_block.1']
    #allocation6 [shape = 'u8[512]{0}', space=smem, size = 0x200, scoped, tag = 'input window, operand 3, single buffered']
    #allocation7 [shape = 's32[1]{0}', space=sflag, size = 0x4, scoped, tag = 'scoped memory for simple_residual_block.1']
    #allocation8 [shape = 'u8[512]{0}', space=smem, size = 0x200, scoped, tag = 'input window, operand 4, single buffered']
    #allocation9 [shape = 'u8[512]{0}', space=smem, size = 0x200, scoped, tag = 'input window, operand 5, single buffered']
    #allocation10 [shape = 's32[1]{0}', space=sflag, size = 0x4, scoped, tag = 'scoped memory for simple_residual_block.1']
    %11 = vsyncpa [#allocation5], 0
    %12 = vsyncpa [#allocation7], 0
    %13 = vsyncpa [#allocation10], 0
    loop: start=0, step=1, limit=4
    $region2: #{simple_residual_block.1} parent=1 // loop_pre_header
      _
    $region3: #{simple_residual_block.1} parent=1 // loop_header
      %s15 = sphi 0, %s19
      %p16 = scmp.ge.s32.totalorder %s15, 4
      %s25 = sphi 0, %s27
      %s28 = sphi 0, %s25
      %s29 = sphi 0, %s28
      %s45 = sphi 0, %s29
      %s49 = sphi 0, %s49
      %s51 = sphi 0, %s49
      %s52 = sphi 0, %s51
      %s66 = sphi 0, %s52
      %s70 = sphi 0, %s70
      %s72 = sphi 0, %s70
      %s73 = sphi 0, %s72
      %s87 = sphi 0, %s73
      %s91 = sphi 0, %s91
      %s93 = sphi 0, %s91
      %s94 = sphi 0, %s93
      %s108 = sphi 0, %s94
      %s112 = sphi 0, %s112
      %s114 = sphi 0, %s112
      %s115 = sphi 0, %s114
      %s129 = sphi 0, %s115
      %s133 = sphi 0, %s133
      %s135 = sphi 0, %s133
      %s136 = sphi 0, %s135
      %s150 = sphi 0, %s136
      %s156 = sphi 0, %s158
      %s159 = sphi 0, %s156
      %s160 = sphi 0, %s159
      %s176 = sphi 0, %s160
    $region4: #{simple_residual_block.1} parent=1 // loop_header_branch
      %18 = sbr.rel (%p16) target = $region8
    $region5: #{simple_residual_block.1} parent=1 // loop_body
      %s20 = ssub.s32 %s15, 1
      %s21 = ssub.s32 %s15, 2
      %s22 = sadd.s32 %s15, 1
      %s23 = ssub.s32 %s15, %s22
      %p24 = scmp.eq.s32.totalorder %s23, 0
      %s26 = sadd.s32 %s25, 1
      %s27 = scalar_select %p24, %s25, %s26
      %p30 = pneg %p24
      %p31 = scmp.eq.s32.totalorder %s15, 1
      %p32 = por %p30, %p31
      %p33 = scmp.ne.s32.totalorder %s25, %s28
      %p34 = scmp.eq.s32.totalorder %s15, 0
      %p35 = por %p33, %p34
      %p36 = scmp.ne.s32.totalorder %s25, %s28
      %p37 = scmp.eq.s32.totalorder %s20, 1
      %p38 = por %p36, %p37
      %p39 = scmp.ne.s32.totalorder %s28, %s29
      %p40 = scmp.eq.s32.totalorder %s20, 0
      %p41 = por %p39, %p40
      %p42 = scmp.ne.s32.totalorder %s28, %s29
      %p43 = scmp.eq.s32.totalorder %s21, 1
      %p44 = por %p42, %p43
      %p46 = scmp.ne.s32.totalorder %s29, %s45
      %p47 = scmp.eq.s32.totalorder %s21, 0
      %p48 = por %p46, %p47
      %s50 = sadd.s32 %s49, 1
      %p53 = scmp.eq.s32.totalorder %s15, 1
      %p54 = scmp.ne.s32.totalorder %s49, %s51
      %p55 = scmp.eq.s32.totalorder %s15, 0
      %p56 = por %p54, %p55
      %p57 = scmp.ne.s32.totalorder %s49, %s51
      %p58 = scmp.eq.s32.totalorder %s20, 1
      %p59 = por %p57, %p58
      %p60 = scmp.ne.s32.totalorder %s51, %s52
      %p61 = scmp.eq.s32.totalorder %s20, 0
      %p62 = por %p60, %p61
      %p63 = scmp.ne.s32.totalorder %s51, %s52
      %p64 = scmp.eq.s32.totalorder %s21, 1
      %p65 = por %p63, %p64
      %p67 = scmp.ne.s32.totalorder %s52, %s66
      %p68 = scmp.eq.s32.totalorder %s21, 0
      %p69 = por %p67, %p68
      %s71 = sadd.s32 %s70, 1
      %p74 = scmp.eq.s32.totalorder %s15, 1
      %p75 = scmp.ne.s32.totalorder %s70, %s72
      %p76 = scmp.eq.s32.totalorder %s15, 0
      %p77 = por %p75, %p76
      %p78 = scmp.ne.s32.totalorder %s70, %s72
      %p79 = scmp.eq.s32.totalorder %s20, 1
      %p80 = por %p78, %p79
      %p81 = scmp.ne.s32.totalorder %s72, %s73
      %p82 = scmp.eq.s32.totalorder %s20, 0
      %p83 = por %p81, %p82
      %p84 = scmp.ne.s32.totalorder %s72, %s73
      %p85 = scmp.eq.s32.totalorder %s21, 1
      %p86 = por %p84, %p85
      %p88 = scmp.ne.s32.totalorder %s73, %s87
      %p89 = scmp.eq.s32.totalorder %s21, 0
      %p90 = por %p88, %p89
      %s92 = sadd.s32 %s91, 1
      %p95 = scmp.eq.s32.totalorder %s15, 1
      %p96 = scmp.ne.s32.totalorder %s91, %s93
      %p97 = scmp.eq.s32.totalorder %s15, 0
      %p98 = por %p96, %p97
      %p99 = scmp.ne.s32.totalorder %s91, %s93
      %p100 = scmp.eq.s32.totalorder %s20, 1
      %p101 = por %p99, %p100
      %p102 = scmp.ne.s32.totalorder %s93, %s94
      %p103 = scmp.eq.s32.totalorder %s20, 0
      %p104 = por %p102, %p103
      %p105 = scmp.ne.s32.totalorder %s93, %s94
      %p106 = scmp.eq.s32.totalorder %s21, 1
      %p107 = por %p105, %p106
      %p109 = scmp.ne.s32.totalorder %s94, %s108
      %p110 = scmp.eq.s32.totalorder %s21, 0
      %p111 = por %p109, %p110
      %s113 = sadd.s32 %s112, 1
      %p116 = scmp.eq.s32.totalorder %s15, 1
      %p117 = scmp.ne.s32.totalorder %s112, %s114
      %p118 = scmp.eq.s32.totalorder %s15, 0
      %p119 = por %p117, %p118
      %p120 = scmp.ne.s32.totalorder %s112, %s114
      %p121 = scmp.eq.s32.totalorder %s20, 1
      %p122 = por %p120, %p121
      %p123 = scmp.ne.s32.totalorder %s114, %s115
      %p124 = scmp.eq.s32.totalorder %s20, 0
      %p125 = por %p123, %p124
      %p126 = scmp.ne.s32.totalorder %s114, %s115
      %p127 = scmp.eq.s32.totalorder %s21, 1
      %p128 = por %p126, %p127
      %p130 = scmp.ne.s32.totalorder %s115, %s129
      %p131 = scmp.eq.s32.totalorder %s21, 0
      %p132 = por %p130, %p131
      %s134 = sadd.s32 %s133, 1
      %p137 = scmp.eq.s32.totalorder %s15, 1
      %p138 = scmp.ne.s32.totalorder %s133, %s135
      %p139 = scmp.eq.s32.totalorder %s15, 0
      %p140 = por %p138, %p139
      %p141 = scmp.ne.s32.totalorder %s133, %s135
      %p142 = scmp.eq.s32.totalorder %s20, 1
      %p143 = por %p141, %p142
      %p144 = scmp.ne.s32.totalorder %s135, %s136
      %p145 = scmp.eq.s32.totalorder %s20, 0
      %p146 = por %p144, %p145
      %p147 = scmp.ne.s32.totalorder %s135, %s136
      %p148 = scmp.eq.s32.totalorder %s21, 1
      %p149 = por %p147, %p148
      %p151 = scmp.ne.s32.totalorder %s136, %s150
      %p152 = scmp.eq.s32.totalorder %s21, 0
      %p153 = por %p151, %p152
      %s154 = ssub.s32 %s15, %s22
      %p155 = scmp.eq.s32.totalorder %s154, 0
      %s157 = sadd.s32 %s156, 1
      %s158 = scalar_select %p155, %s156, %s157
      %p161 = pneg %p155
      %p162 = scmp.eq.s32.totalorder %s15, 1
      %p163 = por %p161, %p162
      %p164 = scmp.ne.s32.totalorder %s156, %s159
      %p165 = scmp.eq.s32.totalorder %s15, 0
      %p166 = por %p164, %p165
      %p167 = scmp.ne.s32.totalorder %s156, %s159
      %p168 = scmp.eq.s32.totalorder %s20, 1
      %p169 = por %p167, %p168
      %p170 = scmp.ne.s32.totalorder %s159, %s160
      %p171 = scmp.eq.s32.totalorder %s20, 0
      %p172 = por %p170, %p171
      %p173 = scmp.ne.s32.totalorder %s159, %s160
      %p174 = scmp.eq.s32.totalorder %s21, 1
      %p175 = por %p173, %p174
      %p177 = scmp.ne.s32.totalorder %s160, %s176
      %p178 = scmp.eq.s32.totalorder %s21, 0
      %p179 = por %p177, %p178
      %p180 = scmp.le.s32.totalorder 1, %s15
      %p181 = scmp.lt.s32.totalorder %s15, 3
      %p182 = pnand %p180, %p181
      %p183 = pneg %p182
      // Predicated region
      $region9: #{simple_residual_block.1} parent=5 // pred_check
        _
      $region10: #{simple_residual_block.1} parent=5 // pred_check_branch
        %185 = sbr.rel (%p182) target = $region12
      $region11: #{simple_residual_block.1} parent=5 // pred_region
        %s186 = ssub.s32 %s15, 1
        // Predicated region
        $region13: #{simple_residual_block.1} parent=11 // pred_check
          %p187 = pneg %p62
        $region14: #{simple_residual_block.1} parent=11 // pred_check_branch
          %189 = sbr.rel (%p187) target = $region16
        $region15: #{simple_residual_block.1} parent=11 // pred_region
          _
        $region16: #{simple_residual_block.1} parent=11 // pred_fallthru
          _
        // Predicated region
        $region17: #{simple_residual_block.1} parent=11 // pred_check
          %p190 = pneg %p83
        $region18: #{simple_residual_block.1} parent=11 // pred_check_branch
          %192 = sbr.rel (%p190) target = $region20
        $region19: #{simple_residual_block.1} parent=11 // pred_region
          %s194 = ssub.s32 16, 16
          %195 = vsyncadd [#allocation5], %s194
          %s197 = sshll.u32 %s2, 4
          %s198 = int_to_ptr.vmem [resolvable:$true] %s197
          %200 = dma.vmem_to_smem %s198, 16, [#allocation4], [#allocation5]
        $region20: #{simple_residual_block.1} parent=11 // pred_fallthru
          _
        // Predicated region
        $region21: #{simple_residual_block.1} parent=11 // pred_check
          %p201 = pneg %p104
        $region22: #{simple_residual_block.1} parent=11 // pred_check_branch
          %203 = sbr.rel (%p201) target = $region24
        $region23: #{simple_residual_block.1} parent=11 // pred_region
          %s205 = ssub.s32 16, 16
          %206 = vsyncadd [#allocation7], %s205
          %s208 = sshll.u32 %s3, 4
          %s209 = int_to_ptr.vmem [resolvable:$true] %s208
          %211 = dma.vmem_to_smem %s209, 16, [#allocation6], [#allocation7]
        $region24: #{simple_residual_block.1} parent=11 // pred_fallthru
          _
        // Predicated region
        $region25: #{simple_residual_block.1} parent=11 // pred_check
          %p212 = pneg %p125
        $region26: #{simple_residual_block.1} parent=11 // pred_check_branch
          %214 = sbr.rel (%p212) target = $region28
        $region27: #{simple_residual_block.1} parent=11 // pred_region
          %s216 = ssub.s32 16, 16
          %217 = vsyncadd [#allocation7], %s216
          %s219 = sshll.u32 %s4, 4
          %s220 = int_to_ptr.vmem [resolvable:$true] %s219
          %222 = dma.vmem_to_smem %s220, 16, [#allocation8], [#allocation7]
        $region28: #{simple_residual_block.1} parent=11 // pred_fallthru
          _
        // Predicated region
        $region29: #{simple_residual_block.1} parent=11 // pred_check
          %p223 = pneg %p146
        $region30: #{simple_residual_block.1} parent=11 // pred_check_branch
          %225 = sbr.rel (%p223) target = $region32
        $region31: #{simple_residual_block.1} parent=11 // pred_region
          %s227 = ssub.s32 16, 16
          %228 = vsyncadd [#allocation10], %s227
          %s230 = sshll.u32 %s5, 4
          %s231 = int_to_ptr.vmem [resolvable:$true] %s230
          %233 = dma.vmem_to_smem %s231, 16, [#allocation9], [#allocation10]
        $region32: #{simple_residual_block.1} parent=11 // pred_fallthru
          _
      $region12: #{simple_residual_block.1} parent=5 // pred_fallthru
        _
      %p234 = scmp.lt.s32.totalorder %s15, 2
      // Predicated region
      $region33: #{simple_residual_block.1} parent=5 // pred_check
        %p235 = pneg %p234
      $region34: #{simple_residual_block.1} parent=5 // pred_check_branch
        %237 = sbr.rel (%p235) target = $region36
      $region35: #{simple_residual_block.1} parent=5 // pred_region
        // Predicated region
        $region37: #{simple_residual_block.1} parent=35 // pred_check
          %p238 = pneg %p35
        $region38: #{simple_residual_block.1} parent=35 // pred_check_branch
          %240 = sbr.rel (%p238) target = $region40
        $region39: #{simple_residual_block.1} parent=35 // pred_region
          %s241 = smul.u32 4, %s15
          %p242 = scmp.lt.s32.totalorder %s241, 7
          %s243 = scalar_select %p242, %s241, 7
          %s244 = smul.addr %s243, 8
          %s245 = smul.addr %s244, 4
          %s246 = scalar_lea.vmem %s0, %s245
          %s247 = smul.u32 4, %s15
        $region40: #{simple_residual_block.1} parent=35 // pred_fallthru
          _
      $region36: #{simple_residual_block.1} parent=5 // pred_fallthru
        _
      %p248 = scmp.le.s32.totalorder 1, %s15
      %p249 = scmp.lt.s32.totalorder %s15, 3
      %p250 = pnand %p248, %p249
      %p251 = pneg %p250
      // Predicated region
      $region41: #{simple_residual_block.1} parent=5 // pred_check
        _
      $region42: #{simple_residual_block.1} parent=5 // pred_check_branch
        %253 = sbr.rel (%p250) target = $region44
      $region43: #{simple_residual_block.1} parent=5 // pred_region
        %s254 = ssub.s32 %s15, 1
        // Predicated region
        $region45: #{simple_residual_block.1} parent=43 // pred_check
          %p255 = pneg %p83
        $region46: #{simple_residual_block.1} parent=43 // pred_check_branch
          %257 = sbr.rel (%p255) target = $region48
        $region47: #{simple_residual_block.1} parent=43 // pred_region
          %258 = dma.done [#allocation5], 16
        $region48: #{simple_residual_block.1} parent=43 // pred_fallthru
          _
        // Predicated region
        $region49: #{simple_residual_block.1} parent=43 // pred_check
          %p259 = pneg %p104
        $region50: #{simple_residual_block.1} parent=43 // pred_check_branch
          %261 = sbr.rel (%p259) target = $region52
        $region51: #{simple_residual_block.1} parent=43 // pred_region
          %262 = dma.done [#allocation7], 16
        $region52: #{simple_residual_block.1} parent=43 // pred_fallthru
          _
        // Predicated region
        $region53: #{simple_residual_block.1} parent=43 // pred_check
          %p263 = pneg %p125
        $region54: #{simple_residual_block.1} parent=43 // pred_check_branch
          %265 = sbr.rel (%p263) target = $region56
        $region55: #{simple_residual_block.1} parent=43 // pred_region
          %266 = dma.done [#allocation7], 16
        $region56: #{simple_residual_block.1} parent=43 // pred_fallthru
          _
        // Predicated region
        $region57: #{simple_residual_block.1} parent=43 // pred_check
          %p267 = pneg %p146
        $region58: #{simple_residual_block.1} parent=43 // pred_check_branch
          %269 = sbr.rel (%p267) target = $region60
        $region59: #{simple_residual_block.1} parent=43 // pred_region
          %270 = dma.done [#allocation10], 16
        $region60: #{simple_residual_block.1} parent=43 // pred_fallthru
          _
        %271 = sfence
        %s272 = smul.u32 4, %s20
        %p273 = scmp.lt.s32.totalorder %s272, 7
        %s274 = scalar_select %p273, %s272, 7
        %s275 = smul.addr %s274, 8
        %s276 = smul.addr %s275, 4
        %s277 = scalar_lea.vmem %s0, %s276
        %p278 = pneg %p41
        %p279 = pneg %p38
        %p280 = pneg %p62
        %p281 = pneg %p59
        %p282 = pneg %p83
        %p283 = pneg %p80
        %p284 = pneg %p104
        %p285 = pneg %p101
        %p286 = pneg %p125
        %p287 = pneg %p122
        %p288 = pneg %p146
        %p289 = pneg %p143
        %p290 = pneg %p172
        %p291 = pneg %p169
        %s292 = smul.u32 4, %s20
        %p293 = scmp.lt.s32.totalorder %s292, 7
        %s294 = scalar_select %p293, %s292, 7
        %s295 = smul.addr %s294, 8
        %s296 = smul.addr %s295, 4
        %s297 = scalar_lea.vmem %s6, %s296
        %s298 = smul.u32 4, %s20
        %p299 = scmp.lt.s32.totalorder %s298, 7
        %s300 = scalar_select %p299, %s298, 7
        %s301 = smul.addr %s300, 8
        %s302 = smul.addr %s301, 4
        %s303 = scalar_lea.vmem %s0, %s302
        %s304 = smul.u32 4, %s20
        %s305 = smul.u32 4, %s20
        %p306 = scmp.lt.s32.totalorder %s305, 7
        %s307 = scalar_select %p306, %s305, 7
        %s308 = smul.addr %s307, 8
        %s309 = smul.addr %s308, 4
        %s310 = scalar_lea.vmem %s6, %s309
        %s311 = smul.u32 4, %s20
        %v312 = vld [vmem:[%s1] ss:$2 sm:$0xff]
        %v314 = vlaneseq
        %v315 = vshrl.u32 %v314, 7
        %v316 = vsub.s32 0, %v315
        %v317 = vrot.slane %v312, %v316
        %v318 = vlaneseq
        %v319 = vshrl.u32 %v318, 7
        %v320 = vsub.s32 1, %v319
        %v321 = vrot.slane %v312, %v320
        %v322 = vlaneseq
        %v323 = vshrl.u32 %v322, 7
        %v324 = vsub.s32 2, %v323
        %v325 = vrot.slane %v312, %v324
        %v326 = vlaneseq
        %v327 = vshrl.u32 %v326, 7
        %v328 = vsub.s32 3, %v327
        %v329 = vrot.slane %v312, %v328
        %v330 = vlaneseq
        %v331 = vshrl.u32 %v330, 7
        %v332 = vsub.s32 4, %v331
        %v333 = vrot.slane %v312, %v332
        %v334 = vlaneseq
        %v335 = vshrl.u32 %v334, 7
        %v336 = vsub.s32 5, %v335
        %v337 = vrot.slane %v312, %v336
        %v338 = vlaneseq
        %v339 = vshrl.u32 %v338, 7
        %v340 = vsub.s32 6, %v339
        %v341 = vrot.slane %v312, %v340
        %v342 = vlaneseq
        %v343 = vshrl.u32 %v342, 7
        %v344 = vsub.s32 7, %v343
        %v345 = vrot.slane %v312, %v344
        %s346 = scalar_lea.vmem %s1, 1
        %v347 = vld [vmem:[%s346] ss:$2 sm:$0xff]
        %v349 = vlaneseq
        %v350 = vshrl.u32 %v349, 7
        %v351 = vsub.s32 0, %v350
        %v352 = vrot.slane %v347, %v351
        %v353 = vlaneseq
        %v354 = vshrl.u32 %v353, 7
        %v355 = vsub.s32 1, %v354
        %v356 = vrot.slane %v347, %v355
        %v357 = vlaneseq
        %v358 = vshrl.u32 %v357, 7
        %v359 = vsub.s32 2, %v358
        %v360 = vrot.slane %v347, %v359
        %v361 = vlaneseq
        %v362 = vshrl.u32 %v361, 7
        %v363 = vsub.s32 3, %v362
        %v364 = vrot.slane %v347, %v363
        %v365 = vlaneseq
        %v366 = vshrl.u32 %v365, 7
        %v367 = vsub.s32 4, %v366
        %v368 = vrot.slane %v347, %v367
        %v369 = vlaneseq
        %v370 = vshrl.u32 %v369, 7
        %v371 = vsub.s32 5, %v370
        %v372 = vrot.slane %v347, %v371
        %v373 = vlaneseq
        %v374 = vshrl.u32 %v373, 7
        %v375 = vsub.s32 6, %v374
        %v376 = vrot.slane %v347, %v375
        %v377 = vlaneseq
        %v378 = vshrl.u32 %v377, 7
        %v379 = vsub.s32 7, %v378
        %v380 = vrot.slane %v347, %v379
        %381 = vst [vmem:[#allocation2] sm:$0xf] 0.0
        %382 = vst [vmem:[#allocation2 + $0x24] sm:$0xf] 0.0
        %383 = vst [vmem:[#allocation3] sm:$0xf] 0.0
        %384 = vst [vmem:[#allocation3 + $0x24] sm:$0xf] 0.0
        %v385 = vld [vmem:[%s303] ss:$4 sm:$0xff]
        %s386 = scalar_lea.vmem %s303, 32
        %v387 = vld [vmem:[%s386] ss:$4 sm:$0xff]
        %s388 = scalar_lea.vmem %s303, 64
        %v389 = vld [vmem:[%s388] ss:$4 sm:$0xff]
        %s390 = scalar_lea.vmem %s303, 96
        %v391 = vld [vmem:[%s390] ss:$4 sm:$0xff]
        %v396 = vcombine.low %v385, %v389
        %v397 = vcombine.high %v385, %v389
        %v398 = vcombine.low %v387, %v391
        %v399 = vcombine.high %v387, %v391
        %v401 = vunpack.c.l.s4 1935823168
        %v402 = vunpack.c.0.s8 %v401
        %v403 = vlaneseq
        %v404 = vshrl.u32 %v403, 7
        %v405 = vsub.s32 %v402, %v404
        %v406 = vrot.slane %v396, %v405
        %v408 = vunpack.c.l.s4 1935823168
        %v409 = vunpack.c.0.s8 %v408
        %v410 = vlaneseq
        %v411 = vshrl.u32 %v410, 7
        %v412 = vsub.s32 %v409, %v411
        %v413 = vrot.slane %v398, %v412
        %v415 = vunpack.c.l.s4 1935823168
        %v416 = vunpack.c.0.s8 %v415
        %v417 = vlaneseq
        %v418 = vshrl.u32 %v417, 7
        %v419 = vsub.s32 %v416, %v418
        %v420 = vrot.slane %v397, %v419
        %v422 = vunpack.c.l.s4 1935823168
        %v423 = vunpack.c.0.s8 %v422
        %v424 = vlaneseq
        %v425 = vshrl.u32 %v424, 7
        %v426 = vsub.s32 %v423, %v425
        %v427 = vrot.slane %v399, %v426
        %v428 = vcombine.low %v406, %v413
        %v429 = vcombine.high %v406, %v413
        %v430 = vcombine.low %v420, %v427
        %v431 = vcombine.high %v420, %v427
        %v433 = vunpack.c.l.s4 1935823168
        %v434 = vunpack.c.0.s8 %v433
        %v435 = vlaneseq
        %v436 = vshrl.u32 %v435, 7
        %v437 = vsub.s32 %v434, %v436
        %v438 = vrot.slane %v428, %v437
        %v440 = vunpack.c.l.s4 1935823168
        %v441 = vunpack.c.0.s8 %v440
        %v442 = vlaneseq
        %v443 = vshrl.u32 %v442, 7
        %v444 = vsub.s32 %v441, %v443
        %v445 = vrot.slane %v429, %v444
        %v447 = vunpack.c.l.s4 1935823168
        %v448 = vunpack.c.0.s8 %v447
        %v449 = vlaneseq
        %v450 = vshrl.u32 %v449, 7
        %v451 = vsub.s32 %v448, %v450
        %v452 = vrot.slane %v430, %v451
        %v454 = vunpack.c.l.s4 1935823168
        %v455 = vunpack.c.0.s8 %v454
        %v456 = vlaneseq
        %v457 = vshrl.u32 %v456, 7
        %v458 = vsub.s32 %v455, %v457
        %v459 = vrot.slane %v431, %v458
        %464 = vst [vmem:[#allocation2 + $0x4] sm:$0xff] %v438
        %465 = vst [vmem:[#allocation2 + $0xc] sm:$0xff] %v445
        %466 = vst [vmem:[#allocation2 + $0x14] sm:$0xff] %v452
        %467 = vst [vmem:[#allocation2 + $0x1c] sm:$0xff] %v459
        %s468 = scalar_lea.vmem [#allocation2], 40
        %469 = vst [vmem:[%s468] sm:$0xf] 0.0
        %470 = vst [vmem:[%s468 + $0x24] sm:$0xf] 0.0
        %s471 = scalar_lea.vmem [#allocation3], 40
        %472 = vst [vmem:[%s471] sm:$0xf] 0.0
        %473 = vst [vmem:[%s471 + $0x24] sm:$0xf] 0.0
        %s474 = scalar_lea.vmem %s303, 1
        %v475 = vld [vmem:[%s474] ss:$4 sm:$0xff]
        %s476 = scalar_lea.vmem %s303, 33
        %v477 = vld [vmem:[%s476] ss:$4 sm:$0xff]
        %s478 = scalar_lea.vmem %s303, 65
        %v479 = vld [vmem:[%s478] ss:$4 sm:$0xff]
        %s480 = scalar_lea.vmem %s303, 97
        %v481 = vld [vmem:[%s480] ss:$4 sm:$0xff]
        %v486 = vcombine.low %v475, %v479
        %v487 = vcombine.high %v475, %v479
        %v488 = vcombine.low %v477, %v481
        %v489 = vcombine.high %v477, %v481
        %v491 = vunpack.c.l.s4 1935823168
        %v492 = vunpack.c.0.s8 %v491
        %v493 = vlaneseq
        %v494 = vshrl.u32 %v493, 7
        %v495 = vsub.s32 %v492, %v494
        %v496 = vrot.slane %v486, %v495
        %v498 = vunpack.c.l.s4 1935823168
        %v499 = vunpack.c.0.s8 %v498
        %v500 = vlaneseq
        %v501 = vshrl.u32 %v500, 7
        %v502 = vsub.s32 %v499, %v501
        %v503 = vrot.slane %v488, %v502
        %v505 = vunpack.c.l.s4 1935823168
        %v506 = vunpack.c.0.s8 %v505
        %v507 = vlaneseq
        %v508 = vshrl.u32 %v507, 7
        %v509 = vsub.s32 %v506, %v508
        %v510 = vrot.slane %v487, %v509
        %v512 = vunpack.c.l.s4 1935823168
        %v513 = vunpack.c.0.s8 %v512
        %v514 = vlaneseq
        %v515 = vshrl.u32 %v514, 7
        %v516 = vsub.s32 %v513, %v515
        %v517 = vrot.slane %v489, %v516
        %v518 = vcombine.low %v496, %v503
        %v519 = vcombine.high %v496, %v503
        %v520 = vcombine.low %v510, %v517
        %v521 = vcombine.high %v510, %v517
        %v523 = vunpack.c.l.s4 1935823168
        %v524 = vunpack.c.0.s8 %v523
        %v525 = vlaneseq
        %v526 = vshrl.u32 %v525, 7
        %v527 = vsub.s32 %v524, %v526
        %v528 = vrot.slane %v518, %v527
        %v530 = vunpack.c.l.s4 1935823168
        %v531 = vunpack.c.0.s8 %v530
        %v532 = vlaneseq
        %v533 = vshrl.u32 %v532, 7
        %v534 = vsub.s32 %v531, %v533
        %v535 = vrot.slane %v519, %v534
        %v537 = vunpack.c.l.s4 1935823168
        %v538 = vunpack.c.0.s8 %v537
        %v539 = vlaneseq
        %v540 = vshrl.u32 %v539, 7
        %v541 = vsub.s32 %v538, %v540
        %v542 = vrot.slane %v520, %v541
        %v544 = vunpack.c.l.s4 1935823168
        %v545 = vunpack.c.0.s8 %v544
        %v546 = vlaneseq
        %v547 = vshrl.u32 %v546, 7
        %v548 = vsub.s32 %v545, %v547
        %v549 = vrot.slane %v521, %v548
        %554 = vst [vmem:[%s468 + $0x4] sm:$0xff] %v528
        %555 = vst [vmem:[%s468 + $0xc] sm:$0xff] %v535
        %556 = vst [vmem:[%s468 + $0x14] sm:$0xff] %v542
        %557 = vst [vmem:[%s468 + $0x1c] sm:$0xff] %v549
        %s558 = scalar_lea.vmem [#allocation2], 80
        %559 = vst [vmem:[%s558] sm:$0xf] 0.0
        %560 = vst [vmem:[%s558 + $0x24] sm:$0xf] 0.0
        %s561 = scalar_lea.vmem [#allocation3], 80
        %562 = vst [vmem:[%s561] sm:$0xf] 0.0
        %563 = vst [vmem:[%s561 + $0x24] sm:$0xf] 0.0
        %s564 = scalar_lea.vmem %s303, 2
        %v565 = vld [vmem:[%s564] ss:$4 sm:$0xff]
        %s566 = scalar_lea.vmem %s303, 34
        %v567 = vld [vmem:[%s566] ss:$4 sm:$0xff]
        %s568 = scalar_lea.vmem %s303, 66
        %v569 = vld [vmem:[%s568] ss:$4 sm:$0xff]
        %s570 = scalar_lea.vmem %s303, 98
        %v571 = vld [vmem:[%s570] ss:$4 sm:$0xff]
        %v576 = vcombine.low %v565, %v569
        %v577 = vcombine.high %v565, %v569
        %v578 = vcombine.low %v567, %v571
        %v579 = vcombine.high %v567, %v571
        %v581 = vunpack.c.l.s4 1935823168
        %v582 = vunpack.c.0.s8 %v581
        %v583 = vlaneseq
        %v584 = vshrl.u32 %v583, 7
        %v585 = vsub.s32 %v582, %v584
        %v586 = vrot.slane %v576, %v585
        %v588 = vunpack.c.l.s4 1935823168
        %v589 = vunpack.c.0.s8 %v588
        %v590 = vlaneseq
        %v591 = vshrl.u32 %v590, 7
        %v592 = vsub.s32 %v589, %v591
        %v593 = vrot.slane %v578, %v592
        %v595 = vunpack.c.l.s4 1935823168
        %v596 = vunpack.c.0.s8 %v595
        %v597 = vlaneseq
        %v598 = vshrl.u32 %v597, 7
        %v599 = vsub.s32 %v596, %v598
        %v600 = vrot.slane %v577, %v599
        %v602 = vunpack.c.l.s4 1935823168
        %v603 = vunpack.c.0.s8 %v602
        %v604 = vlaneseq
        %v605 = vshrl.u32 %v604, 7
        %v606 = vsub.s32 %v603, %v605
        %v607 = vrot.slane %v579, %v606
        %v608 = vcombine.low %v586, %v593
        %v609 = vcombine.high %v586, %v593
        %v610 = vcombine.low %v600, %v607
        %v611 = vcombine.high %v600, %v607
        %v613 = vunpack.c.l.s4 1935823168
        %v614 = vunpack.c.0.s8 %v613
        %v615 = vlaneseq
        %v616 = vshrl.u32 %v615, 7
        %v617 = vsub.s32 %v614, %v616
        %v618 = vrot.slane %v608, %v617
        %v620 = vunpack.c.l.s4 1935823168
        %v621 = vunpack.c.0.s8 %v620
        %v622 = vlaneseq
        %v623 = vshrl.u32 %v622, 7
        %v624 = vsub.s32 %v621, %v623
        %v625 = vrot.slane %v609, %v624
        %v627 = vunpack.c.l.s4 1935823168
        %v628 = vunpack.c.0.s8 %v627
        %v629 = vlaneseq
        %v630 = vshrl.u32 %v629, 7
        %v631 = vsub.s32 %v628, %v630
        %v632 = vrot.slane %v610, %v631
        %v634 = vunpack.c.l.s4 1935823168
        %v635 = vunpack.c.0.s8 %v634
        %v636 = vlaneseq
        %v637 = vshrl.u32 %v636, 7
        %v638 = vsub.s32 %v635, %v637
        %v639 = vrot.slane %v611, %v638
        %644 = vst [vmem:[%s558 + $0x4] sm:$0xff] %v618
        %645 = vst [vmem:[%s558 + $0xc] sm:$0xff] %v625
        %646 = vst [vmem:[%s558 + $0x14] sm:$0xff] %v632
        %647 = vst [vmem:[%s558 + $0x1c] sm:$0xff] %v639
        %s648 = sld [smem:[#allocation6]]
        %v649 = vstv %s648
        %v650 = vadd.f32 %v649, 0.0
        %s651 = sld [smem:[#allocation6 + $0x1]]
        %v652 = vstv %s651
        %v653 = vadd.f32 %v652, 0.0
        %s654 = sld [smem:[#allocation6 + $0x2]]
        %v655 = vstv %s654
        %v656 = vadd.f32 %v655, 0.0
        %v657 = vld [vmem:[#allocation2] sm:$0xff]
        %v658 = vld [vmem:[#allocation2 + $0x8] sm:$0xff]
        %v659 = vld [vmem:[#allocation2 + $0x10] sm:$0xff]
        %v660 = vld [vmem:[#allocation2 + $0x18] sm:$0xff]
        %v661 = vld [vmem:[#allocation2 + $0x20] sm:$0xf]
        %v662 = vcombine.low %v317, %v321
        %v663 = vcombine.low %v325, %v329
        %v664 = vcombine.low %v333, %v337
        %v665 = vcombine.low %v341, %v345
        %666 = vrot.lane.b32.xlu0 %v662, 95
        %v667 = vpop.permute.xlu0 %666
        %668 = vrot.lane.b32.xlu0 %v663, 95
        %v669 = vpop.permute.xlu0 %668
        %670 = vrot.lane.b32.xlu0 %v664, 95
        %v671 = vpop.permute.xlu0 %670
        %672 = vrot.lane.b32.xlu0 %v665, 95
        %v673 = vpop.permute.xlu0 %672
        %v674 = vrot.slane %v667, 4
        %v675 = vrot.slane %v669, 4
        %v676 = vrot.slane %v671, 4
        %v677 = vrot.slane %v673, 4
        %vm678 = vcmask 777216
        %v679 = vsel %vm678, %v674, %v667
        %vm680 = vcmask 1043456
        %v681 = vsel %vm680, %v674, %v675
        %v682 = vsel %vm678, %v681, %v669
        %v683 = vsel %vm680, %v675, %v676
        %v684 = vsel %vm678, %v683, %v671
        %v685 = vsel %vm680, %v676, %v677
        %v686 = vsel %vm678, %v685, %v673
        %v692 = vmul.f32 %v657, %v679
        %v693 = vmul.f32 %v658, %v682
        %v694 = vmul.f32 %v659, %v684
        %v695 = vmul.f32 %v660, %v686
        %v696 = vmul.f32 %v661, %v677
        %s697 = sld [smem:[#allocation4]]
        %v698 = vstv %s697
        %v699 = vmul.f32 %v698, %v692
        %v700 = vmul.f32 %v698, %v693
        %v701 = vmul.f32 %v698, %v694
        %v702 = vmul.f32 %v698, %v695
        %v703 = vmul.f32 %v698, %v696
        %v704 = vadd.f32 %v650, %v699
        %v705 = vadd.f32 %v650, %v700
        %v706 = vadd.f32 %v650, %v701
        %v707 = vadd.f32 %v650, %v702
        %v708 = vadd.f32 %v650, %v703
        %s709 = sld [smem:[#allocation4 + $0x1b]]
        %v710 = vstv %s709
        %v711 = vmul.f32 %v710, %v692
        %v712 = vmul.f32 %v710, %v693
        %v713 = vmul.f32 %v710, %v694
        %v714 = vmul.f32 %v710, %v695
        %v715 = vmul.f32 %v710, %v696
        %v716 = vadd.f32 %v653, %v711
        %v717 = vadd.f32 %v653, %v712
        %v718 = vadd.f32 %v653, %v713
        %v719 = vadd.f32 %v653, %v714
        %v720 = vadd.f32 %v653, %v715
        %s721 = sld [smem:[#allocation4 + $0x36]]
        %v722 = vstv %s721
        %v723 = vmul.f32 %v722, %v692
        %v724 = vmul.f32 %v722, %v693
        %v725 = vmul.f32 %v722, %v694
        %v726 = vmul.f32 %v722, %v695
        %v727 = vmul.f32 %v722, %v696
        %v728 = vadd.f32 %v656, %v723
        %v729 = vadd.f32 %v656, %v724
        %v730 = vadd.f32 %v656, %v725
        %v731 = vadd.f32 %v656, %v726
        %v732 = vadd.f32 %v656, %v727
        %v733 = vld [vmem:[#allocation2] sm:$0xff]
        %v734 = vld [vmem:[#allocation2 + $0x8] sm:$0xff]
        %v735 = vld [vmem:[#allocation2 + $0x10] sm:$0xff]
        %v736 = vld [vmem:[#allocation2 + $0x18] sm:$0xff]
        %v737 = vld [vmem:[#allocation2 + $0x20] sm:$0xf]
        %s738 = sld [smem:[#allocation4 + $0x1]]
        %v739 = vstv %s738
        %v740 = vmul.f32 %v739, %v733
        %v741 = vmul.f32 %v739, %v734
        %v742 = vmul.f32 %v739, %v735
        %v743 = vmul.f32 %v739, %v736
        %v744 = vmul.f32 %v739, %v737
        %750 = vrot.lane.b32.xlu0 %v740, 127
        %v751 = vpop.permute.xlu0 %750
        %752 = vrot.lane.b32.xlu0 %v741, 127
        %v753 = vpop.permute.xlu0 %752
        %754 = vrot.lane.b32.xlu0 %v742, 127
        %v755 = vpop.permute.xlu0 %754
        %756 = vrot.lane.b32.xlu0 %v743, 127
        %v757 = vpop.permute.xlu0 %756
        %758 = vrot.lane.b32.xlu0 %v744, 127
        %v759 = vpop.permute.xlu0 %758
        %v760 = vrot.slane %v751, 4
        %v761 = vrot.slane %v753, 4
        %v762 = vrot.slane %v755, 4
        %v763 = vrot.slane %v757, 4
        %v764 = vrot.slane %v759, 4
        %v765 = vsel %vm680, %v760, %v761
        %vm766 = vcmask 1039360
        %v767 = vsel %vm766, %v751, %v765
        %v768 = vsel %vm680, %v761, %v762
        %v769 = vsel %vm766, %v753, %v768
        %v770 = vsel %vm680, %v762, %v763
        %v771 = vsel %vm766, %v755, %v770
        %v772 = vsel %vm680, %v763, %v764
        %v773 = vsel %vm766, %v757, %v772
        %v779 = vadd.f32 %v704, %v767
        %v780 = vadd.f32 %v705, %v769
        %v781 = vadd.f32 %v706, %v771
        %v782 = vadd.f32 %v707, %v773
        %v783 = vadd.f32 %v708, %v759
        %s784 = sld [smem:[#allocation4 + $0x1c]]
        %v785 = vstv %s784
        %v786 = vmul.f32 %v785, %v733
        %v787 = vmul.f32 %v785, %v734
        %v788 = vmul.f32 %v785, %v735
        %v789 = vmul.f32 %v785, %v736
        %v790 = vmul.f32 %v785, %v737
        %796 = vrot.lane.b32.xlu0 %v786, 127
        %v797 = vpop.permute.xlu0 %796
        %798 = vrot.lane.b32.xlu0 %v787, 127
        %v799 = vpop.permute.xlu0 %798
        %800 = vrot.lane.b32.xlu0 %v788, 127
        %v801 = vpop.permute.xlu0 %800
        %802 = vrot.lane.b32.xlu0 %v789, 127
        %v803 = vpop.permute.xlu0 %802
        %804 = vrot.lane.b32.xlu0 %v790, 127
        %v805 = vpop.permute.xlu0 %804
        %v806 = vrot.slane %v797, 4
        %v807 = vrot.slane %v799, 4
        %v808 = vrot.slane %v801, 4
        %v809 = vrot.slane %v803, 4
        %v810 = vrot.slane %v805, 4
        %v811 = vsel %vm680, %v806, %v807
        %v812 = vsel %vm766, %v797, %v811
        %v813 = vsel %vm680, %v807, %v808
        %v814 = vsel %vm766, %v799, %v813
        %v815 = vsel %vm680, %v808, %v809
        %v816 = vsel %vm766, %v801, %v815
        %v817 = vsel %vm680, %v809, %v810
        %v818 = vsel %vm766, %v803, %v817
        %v824 = vadd.f32 %v716, %v812
        %v825 = vadd.f32 %v717, %v814
        %v826 = vadd.f32 %v718, %v816
        %v827 = vadd.f32 %v719, %v818
        %v828 = vadd.f32 %v720, %v805
        %s829 = sld [smem:[#allocation4 + $0x37]]
        %v830 = vstv %s829
        %v831 = vmul.f32 %v830, %v733
        %v832 = vmul.f32 %v830, %v734
        %v833 = vmul.f32 %v830, %v735
        %v834 = vmul.f32 %v830, %v736
        %v835 = vmul.f32 %v830, %v737
        %841 = vrot.lane.b32.xlu0 %v831, 127
        %v842 = vpop.permute.xlu0 %841
        %843 = vrot.lane.b32.xlu0 %v832, 127
        %v844 = vpop.permute.xlu0 %843
        %845 = vrot.lane.b32.xlu0 %v833, 127
        %v846 = vpop.permute.xlu0 %845
        %847 = vrot.lane.b32.xlu0 %v834, 127
        %v848 = vpop.permute.xlu0 %847
        %849 = vrot.lane.b32.xlu0 %v835, 127
        %v850 = vpop.permute.xlu0 %849
        %v851 = vrot.slane %v842, 4
        %v852 = vrot.slane %v844, 4
        %v853 = vrot.slane %v846, 4
        %v854 = vrot.slane %v848, 4
        %v855 = vrot.slane %v850, 4
        %v856 = vsel %vm680, %v851, %v852
        %v857 = vsel %vm766, %v842, %v856
        %v858 = vsel %vm680, %v852, %v853
        %v859 = vsel %vm766, %v844, %v858
        %v860 = vsel %vm680, %v853, %v854
        %v861 = vsel %vm766, %v846, %v860
        %v862 = vsel %vm680, %v854, %v855
        %v863 = vsel %vm766, %v848, %v862
        %v869 = vadd.f32 %v728, %v857
        %v870 = vadd.f32 %v729, %v859
        %v871 = vadd.f32 %v730, %v861
        %v872 = vadd.f32 %v731, %v863
        %v873 = vadd.f32 %v732, %v850
        %v874 = vcombine.low %v352, %v356
        %v875 = vcombine.low %v360, %v364
        %v876 = vcombine.low %v368, %v372
        %v877 = vcombine.low %v376, %v380
        %878 = vrot.lane.b32.xlu0 %v874, 97
        %v879 = vpop.permute.xlu0 %878
        %880 = vrot.lane.b32.xlu0 %v875, 97
        %v881 = vpop.permute.xlu0 %880
        %882 = vrot.lane.b32.xlu0 %v876, 97
        %v883 = vpop.permute.xlu0 %882
        %884 = vrot.lane.b32.xlu0 %v877, 97
        %v885 = vpop.permute.xlu0 %884
        %v886 = vrot.slane %v879, 4
        %v887 = vrot.slane %v881, 4
        %v888 = vrot.slane %v883, 4
        %v889 = vrot.slane %v885, 4
        %vm890 = vcmask 793600
        %v891 = vsel %vm890, %v886, %v879
        %v892 = vsel %vm680, %v886, %v887
        %v893 = vsel %vm890, %v892, %v881
        %v894 = vsel %vm680, %v887, %v888
        %v895 = vsel %vm890, %v894, %v883
        %v896 = vsel %vm680, %v888, %v889
        %v897 = vsel %vm890, %v896, %v885
        %v903 = vmul.f32 %v733, %v891
        %v904 = vmul.f32 %v734, %v893
        %v905 = vmul.f32 %v735, %v895
        %v906 = vmul.f32 %v736, %v897
        %v907 = vmul.f32 %v737, %v889
        %s908 = sld [smem:[#allocation4 + $0x2]]
        %v909 = vstv %s908
        %v910 = vmul.f32 %v909, %v903
        %v911 = vmul.f32 %v909, %v904
        %v912 = vmul.f32 %v909, %v905
        %v913 = vmul.f32 %v909, %v906
        %v914 = vmul.f32 %v909, %v907
        %920 = vrot.lane.b32.xlu0 %v910, 126
        %v921 = vpop.permute.xlu0 %920
        %922 = vrot.lane.b32.xlu0 %v911, 126
        %v923 = vpop.permute.xlu0 %922
        %924 = vrot.lane.b32.xlu0 %v912, 126
        %v925 = vpop.permute.xlu0 %924
        %926 = vrot.lane.b32.xlu0 %v913, 126
        %v927 = vpop.permute.xlu0 %926
        %928 = vrot.lane.b32.xlu0 %v914, 126
        %v929 = vpop.permute.xlu0 %928
        %v930 = vrot.slane %v921, 4
        %v931 = vrot.slane %v923, 4
        %v932 = vrot.slane %v925, 4
        %v933 = vrot.slane %v927, 4
        %v934 = vrot.slane %v929, 4
        %v935 = vsel %vm680, %v930, %v931
        %vm936 = vcmask 1031168
        %v937 = vsel %vm936, %v921, %v935
        %v938 = vsel %vm680, %v931, %v932
        %v939 = vsel %vm936, %v923, %v938
        %v940 = vsel %vm680, %v932, %v933
        %v941 = vsel %vm936, %v925, %v940
        %v942 = vsel %vm680, %v933, %v934
        %v943 = vsel %vm936, %v927, %v942
        %v949 = vadd.f32 %v779, %v937
        %v950 = vadd.f32 %v780, %v939
        %v951 = vadd.f32 %v781, %v941
        %v952 = vadd.f32 %v782, %v943
        %v953 = vadd.f32 %v783, %v929
        %s954 = sld [smem:[#allocation4 + $0x1d]]
        %v955 = vstv %s954
        %v956 = vmul.f32 %v955, %v903
        %v957 = vmul.f32 %v955, %v904
        %v958 = vmul.f32 %v955, %v905
        %v959 = vmul.f32 %v955, %v906
        %v960 = vmul.f32 %v955, %v907
        %966 = vrot.lane.b32.xlu0 %v956, 126
        %v967 = vpop.permute.xlu0 %966
        %968 = vrot.lane.b32.xlu0 %v957, 126
        %v969 = vpop.permute.xlu0 %968
        %970 = vrot.lane.b32.xlu0 %v958, 126
        %v971 = vpop.permute.xlu0 %970
        %972 = vrot.lane.b32.xlu0 %v959, 126
        %v973 = vpop.permute.xlu0 %972
        %974 = vrot.lane.b32.xlu0 %v960, 126
        %v975 = vpop.permute.xlu0 %974
        %v976 = vrot.slane %v967, 4
        %v977 = vrot.slane %v969, 4
        %v978 = vrot.slane %v971, 4
        %v979 = vrot.slane %v973, 4
        %v980 = vrot.slane %v975, 4
        %v981 = vsel %vm680, %v976, %v977
        %v982 = vsel %vm936, %v967, %v981
        %v983 = vsel %vm680, %v977, %v978
        %v984 = vsel %vm936, %v969, %v983
        %v985 = vsel %vm680, %v978, %v979
        %v986 = vsel %vm936, %v971, %v985
        %v987 = vsel %vm680, %v979, %v980
        %v988 = vsel %vm936, %v973, %v987
        %v994 = vadd.f32 %v824, %v982
        %v995 = vadd.f32 %v825, %v984
        %v996 = vadd.f32 %v826, %v986
        %v997 = vadd.f32 %v827, %v988
        %v998 = vadd.f32 %v828, %v975
        %s999 = sld [smem:[#allocation4 + $0x38]]
        %v1000 = vstv %s999
        %v1001 = vmul.f32 %v1000, %v903
        %v1002 = vmul.f32 %v1000, %v904
        %v1003 = vmul.f32 %v1000, %v905
        %v1004 = vmul.f32 %v1000, %v906
        %v1005 = vmul.f32 %v1000, %v907
        %1011 = vrot.lane.b32.xlu0 %v1001, 126
        %v1012 = vpop.permute.xlu0 %1011
        %1013 = vrot.lane.b32.xlu0 %v1002, 126
        %v1014 = vpop.permute.xlu0 %1013
        %1015 = vrot.lane.b32.xlu0 %v1003, 126
        %v1016 = vpop.permute.xlu0 %1015
        %1017 = vrot.lane.b32.xlu0 %v1004, 126
        %v1018 = vpop.permute.xlu0 %1017
        %1019 = vrot.lane.b32.xlu0 %v1005, 126
        %v1020 = vpop.permute.xlu0 %1019
        %v1021 = vrot.slane %v1012, 4
        %v1022 = vrot.slane %v1014, 4
        %v1023 = vrot.slane %v1016, 4
        %v1024 = vrot.slane %v1018, 4
        %v1025 = vrot.slane %v1020, 4
        %v1026 = vsel %vm680, %v1021, %v1022
        %v1027 = vsel %vm936, %v1012, %v1026
        %v1028 = vsel %vm680, %v1022, %v1023
        %v1029 = vsel %vm936, %v1014, %v1028
        %v1030 = vsel %vm680, %v1023, %v1024
        %v1031 = vsel %vm936, %v1016, %v1030
        %v1032 = vsel %vm680, %v1024, %v1025
        %v1033 = vsel %vm936, %v1018, %v1032
        %v1039 = vadd.f32 %v869, %v1027
        %v1040 = vadd.f32 %v870, %v1029
        %v1041 = vadd.f32 %v871, %v1031
        %v1042 = vadd.f32 %v872, %v1033
        %v1043 = vadd.f32 %v873, %v1020
        %v1044 = vld [vmem:[#allocation2] sm:$0xff]
        %v1045 = vld [vmem:[#allocation2 + $0x8] sm:$0xff]
        %v1046 = vld [vmem:[#allocation2 + $0x10] sm:$0xff]
        %v1047 = vld [vmem:[#allocation2 + $0x18] sm:$0xff]
        %v1048 = vld [vmem:[#allocation2 + $0x20] sm:$0xf]
        %1049 = vrot.lane.b32.xlu0 %v662, 127
        %v1050 = vpop.permute.xlu0 %1049
        %1051 = vrot.lane.b32.xlu0 %v663, 127
        %v1052 = vpop.permute.xlu0 %1051
        %1053 = vrot.lane.b32.xlu0 %v664, 127
        %v1054 = vpop.permute.xlu0 %1053
        %1055 = vrot.lane.b32.xlu0 %v665, 127
        %v1056 = vpop.permute.xlu0 %1055
        %v1057 = vrot.slane %v1050, 4
        %v1058 = vrot.slane %v1052, 4
        %v1059 = vrot.slane %v1054, 4
        %v1060 = vrot.slane %v1056, 4
        %v1061 = vsel %vm766, %v1057, %v1050
        %v1062 = vsel %vm680, %v1057, %v1058
        %v1063 = vsel %vm766, %v1062, %v1052
        %v1064 = vsel %vm680, %v1058, %v1059
        %v1065 = vsel %vm766, %v1064, %v1054
        %v1066 = vsel %vm680, %v1059, %v1060
        %v1067 = vsel %vm766, %v1066, %v1056
        %v1073 = vmul.f32 %v1044, %v1061
        %v1074 = vmul.f32 %v1045, %v1063
        %v1075 = vmul.f32 %v1046, %v1065
        %v1076 = vmul.f32 %v1047, %v1067
        %v1077 = vmul.f32 %v1048, %v1060
        %s1078 = sld [smem:[#allocation4 + $0x3]]
        %v1079 = vstv %s1078
        %v1080 = vmul.f32 %v1079, %v1073
        %v1081 = vmul.f32 %v1079, %v1074
        %v1082 = vmul.f32 %v1079, %v1075
        %v1083 = vmul.f32 %v1079, %v1076
        %v1084 = vmul.f32 %v1079, %v1077
        %1090 = vrot.lane.b32.xlu0 %v1080, 96
        %v1091 = vpop.permute.xlu0 %1090
        %1092 = vrot.lane.b32.xlu0 %v1081, 96
        %v1093 = vpop.permute.xlu0 %1092
        %1094 = vrot.lane.b32.xlu0 %v1082, 96
        %v1095 = vpop.permute.xlu0 %1094
        %1096 = vrot.lane.b32.xlu0 %v1083, 96
        %v1097 = vpop.permute.xlu0 %1096
        %1098 = vrot.lane.b32.xlu0 %v1084, 96
        %v1099 = vpop.permute.xlu0 %1098
        %v1100 = vrot.slane %v1091, 4
        %v1101 = vrot.slane %v1093, 4
        %v1102 = vrot.slane %v1095, 4
        %v1103 = vrot.slane %v1097, 4
        %v1104 = vrot.slane %v1099, 4
        %v1105 = vsel %vm680, %v1100, %v1101
        %vm1106 = vcmask 785408
        %v1107 = vsel %vm1106, %v1091, %v1105
        %v1108 = vsel %vm680, %v1101, %v1102
        %v1109 = vsel %vm1106, %v1093, %v1108
        %v1110 = vsel %vm680, %v1102, %v1103
        %v1111 = vsel %vm1106, %v1095, %v1110
        %v1112 = vsel %vm680, %v1103, %v1104
        %v1113 = vsel %vm1106, %v1097, %v1112
        %v1119 = vadd.f32 %v949, %v1107
        %v1120 = vadd.f32 %v950, %v1109
        %v1121 = vadd.f32 %v951, %v1111
        %v1122 = vadd.f32 %v952, %v1113
        %v1123 = vadd.f32 %v953, %v1099
        %s1124 = sld [smem:[#allocation4 + $0x1e]]
        %v1125 = vstv %s1124
        %v1126 = vmul.f32 %v1125, %v1073
        %v1127 = vmul.f32 %v1125, %v1074
        %v1128 = vmul.f32 %v1125, %v1075
        %v1129 = vmul.f32 %v1125, %v1076
        %v1130 = vmul.f32 %v1125, %v1077
        %1136 = vrot.lane.b32.xlu0 %v1126, 96
        %v1137 = vpop.permute.xlu0 %1136
        %1138 = vrot.lane.b32.xlu0 %v1127, 96
        %v1139 = vpop.permute.xlu0 %1138
        %1140 = vrot.lane.b32.xlu0 %v1128, 96
        %v1141 = vpop.permute.xlu0 %1140
        %1142 = vrot.lane.b32.xlu0 %v1129, 96
        %v1143 = vpop.permute.xlu0 %1142
        %1144 = vrot.lane.b32.xlu0 %v1130, 96
        %v1145 = vpop.permute.xlu0 %1144
        %v1146 = vrot.slane %v1137, 4
        %v1147 = vrot.slane %v1139, 4
        %v1148 = vrot.slane %v1141, 4
        %v1149 = vrot.slane %v1143, 4
        %v1150 = vrot.slane %v1145, 4
        %v1151 = vsel %vm680, %v1146, %v1147
        %v1152 = vsel %vm1106, %v1137, %v1151
        %v1153 = vsel %vm680, %v1147, %v1148
        %v1154 = vsel %vm1106, %v1139, %v1153
        %v1155 = vsel %vm680, %v1148, %v1149
        %v1156 = vsel %vm1106, %v1141, %v1155
        %v1157 = vsel %vm680, %v1149, %v1150
        %v1158 = vsel %vm1106, %v1143, %v1157
        %v1164 = vadd.f32 %v994, %v1152
        %v1165 = vadd.f32 %v995, %v1154
        %v1166 = vadd.f32 %v996, %v1156
        %v1167 = vadd.f32 %v997, %v1158
        %v1168 = vadd.f32 %v998, %v1145
        %s1169 = sld [smem:[#allocation4 + $0x39]]
        %v1170 = vstv %s1169
        %v1171 = vmul.f32 %v1170, %v1073
        %v1172 = vmul.f32 %v1170, %v1074
        %v1173 = vmul.f32 %v1170, %v1075
        %v1174 = vmul.f32 %v1170, %v1076
        %v1175 = vmul.f32 %v1170, %v1077
        %1181 = vrot.lane.b32.xlu0 %v1171, 96
        %v1182 = vpop.permute.xlu0 %1181
        %1183 = vrot.lane.b32.xlu0 %v1172, 96
        %v1184 = vpop.permute.xlu0 %1183
        %1185 = vrot.lane.b32.xlu0 %v1173, 96
        %v1186 = vpop.permute.xlu0 %1185
        %1187 = vrot.lane.b32.xlu0 %v1174, 96
        %v1188 = vpop.permute.xlu0 %1187
        %1189 = vrot.lane.b32.xlu0 %v1175, 96
        %v1190 = vpop.permute.xlu0 %1189
        %v1191 = vrot.slane %v1182, 4
        %v1192 = vrot.slane %v1184, 4
        %v1193 = vrot.slane %v1186, 4
        %v1194 = vrot.slane %v1188, 4
        %v1195 = vrot.slane %v1190, 4
        %v1196 = vsel %vm680, %v1191, %v1192
        %v1197 = vsel %vm1106, %v1182, %v1196
        %v1198 = vsel %vm680, %v1192, %v1193
        %v1199 = vsel %vm1106, %v1184, %v1198
        %v1200 = vsel %vm680, %v1193, %v1194
        %v1201 = vsel %vm1106, %v1186, %v1200
        %v1202 = vsel %vm680, %v1194, %v1195
        %v1203 = vsel %vm1106, %v1188, %v1202
        %v1209 = vadd.f32 %v1039, %v1197
        %v1210 = vadd.f32 %v1040, %v1199
        %v1211 = vadd.f32 %v1041, %v1201
        %v1212 = vadd.f32 %v1042, %v1203
        %v1213 = vadd.f32 %v1043, %v1190
        %v1214 = vld [vmem:[#allocation2 + $0x4] sm:$0xff]
        %v1215 = vld [vmem:[#allocation2 + $0xc] sm:$0xff]
        %v1216 = vld [vmem:[#allocation2 + $0x14] sm:$0xff]
        %v1217 = vld [vmem:[#allocation2 + $0x1c] sm:$0xff]
        %s1218 = sld [smem:[#allocation4 + $0x4]]
        %v1219 = vstv %s1218
        %v1220 = vmul.f32 %v1219, %v1214
        %v1221 = vmul.f32 %v1219, %v1215
        %v1222 = vmul.f32 %v1219, %v1216
        %v1223 = vmul.f32 %v1219, %v1217
        %1228 = vrot.lane.b32.xlu0 %v1220, 95
        %v1229 = vpop.permute.xlu0 %1228
        %1230 = vrot.lane.b32.xlu0 %v1221, 95
        %v1231 = vpop.permute.xlu0 %1230
        %1232 = vrot.lane.b32.xlu0 %v1222, 95
        %v1233 = vpop.permute.xlu0 %1232
        %1234 = vrot.lane.b32.xlu0 %v1223, 95
        %v1235 = vpop.permute.xlu0 %1234
        %v1236 = vrot.slane %v1229, 4
        %v1237 = vrot.slane %v1231, 4
        %v1238 = vrot.slane %v1233, 4
        %v1239 = vrot.slane %v1235, 4
        %v1240 = vsel %vm678, %v1236, %v1229
        %v1241 = vsel %vm680, %v1236, %v1237
        %v1242 = vsel %vm678, %v1241, %v1231
        %v1243 = vsel %vm680, %v1237, %v1238
        %v1244 = vsel %vm678, %v1243, %v1233
        %v1245 = vsel %vm680, %v1238, %v1239
        %v1246 = vsel %vm678, %v1245, %v1235
        %v1252 = vadd.f32 %v1119, %v1240
        %v1253 = vadd.f32 %v1120, %v1242
        %v1254 = vadd.f32 %v1121, %v1244
        %v1255 = vadd.f32 %v1122, %v1246
        %v1256 = vadd.f32 %v1123, %v1239
        %s1257 = sld [smem:[#allocation4 + $0x1f]]
        %v1258 = vstv %s1257
        %v1259 = vmul.f32 %v1258, %v1214
        %v1260 = vmul.f32 %v1258, %v1215
        %v1261 = vmul.f32 %v1258, %v1216
        %v1262 = vmul.f32 %v1258, %v1217
        %1267 = vrot.lane.b32.xlu0 %v1259, 95
        %v1268 = vpop.permute.xlu0 %1267
        %1269 = vrot.lane.b32.xlu0 %v1260, 95
        %v1270 = vpop.permute.xlu0 %1269
        %1271 = vrot.lane.b32.xlu0 %v1261, 95
        %v1272 = vpop.permute.xlu0 %1271
        %1273 = vrot.lane.b32.xlu0 %v1262, 95
        %v1274 = vpop.permute.xlu0 %1273
        %v1275 = vrot.slane %v1268, 4
        %v1276 = vrot.slane %v1270, 4
        %v1277 = vrot.slane %v1272, 4
        %v1278 = vrot.slane %v1274, 4
        %v1279 = vsel %vm678, %v1275, %v1268
        %v1280 = vsel %vm680, %v1275, %v1276
        %v1281 = vsel %vm678, %v1280, %v1270
        %v1282 = vsel %vm680, %v1276, %v1277
        %v1283 = vsel %vm678, %v1282, %v1272
        %v1284 = vsel %vm680, %v1277, %v1278
        %v1285 = vsel %vm678, %v1284, %v1274
        %v1291 = vadd.f32 %v1164, %v1279
        %v1292 = vadd.f32 %v1165, %v1281
        %v1293 = vadd.f32 %v1166, %v1283
        %v1294 = vadd.f32 %v1167, %v1285
        %v1295 = vadd.f32 %v1168, %v1278
        %s1296 = sld [smem:[#allocation4 + $0x3a]]
        %v1297 = vstv %s1296
        %v1298 = vmul.f32 %v1297, %v1214
        %v1299 = vmul.f32 %v1297, %v1215
        %v1300 = vmul.f32 %v1297, %v1216
        %v1301 = vmul.f32 %v1297, %v1217
        %1306 = vrot.lane.b32.xlu0 %v1298, 95
        %v1307 = vpop.permute.xlu0 %1306
        %1308 = vrot.lane.b32.xlu0 %v1299, 95
        %v1309 = vpop.permute.xlu0 %1308
        %1310 = vrot.lane.b32.xlu0 %v1300, 95
        %v1311 = vpop.permute.xlu0 %1310
        %1312 = vrot.lane.b32.xlu0 %v1301, 95
        %v1313 = vpop.permute.xlu0 %1312
        %v1314 = vrot.slane %v1307, 4
        %v1315 = vrot.slane %v1309, 4
        %v1316 = vrot.slane %v1311, 4
        %v1317 = vrot.slane %v1313, 4
        %v1318 = vsel %vm678, %v1314, %v1307
        %v1319 = vsel %vm680, %v1314, %v1315
        %v1320 = vsel %vm678, %v1319, %v1309
        %v1321 = vsel %vm680, %v1315, %v1316
        %v1322 = vsel %vm678, %v1321, %v1311
        %v1323 = vsel %vm680, %v1316, %v1317
        %v1324 = vsel %vm678, %v1323, %v1313
        %v1330 = vadd.f32 %v1209, %v1318
        %v1331 = vadd.f32 %v1210, %v1320
        %v1332 = vadd.f32 %v1211, %v1322
        %v1333 = vadd.f32 %v1212, %v1324
        %v1334 = vadd.f32 %v1213, %v1317
        %v1335 = vld [vmem:[#allocation2 + $0x4] sm:$0xff]
        %v1336 = vld [vmem:[#allocation2 + $0xc] sm:$0xff]
        %v1337 = vld [vmem:[#allocation2 + $0x14] sm:$0xff]
        %v1338 = vld [vmem:[#allocation2 + $0x1c] sm:$0xff]
        %v1339 = vld [vmem:[#allocation2 + $0x24] sm:$0xf]
        %1340 = vrot.lane.b32.xlu0 %v874, 1
        %v1341 = vpop.permute.xlu0 %1340
        %1342 = vrot.lane.b32.xlu0 %v875, 1
        %v1343 = vpop.permute.xlu0 %1342
        %1344 = vrot.lane.b32.xlu0 %v876, 1
        %v1345 = vpop.permute.xlu0 %1344
        %1346 = vrot.lane.b32.xlu0 %v877, 1
        %v1347 = vpop.permute.xlu0 %1346
        %v1348 = vrot.slane %v1341, 4
        %v1349 = vrot.slane %v1343, 4
        %v1350 = vrot.slane %v1345, 4
        %v1351 = vrot.slane %v1347, 4
        %vm1352 = vcmask 7168
        %v1353 = vsel %vm1352, %v1348, %v1341
        %v1354 = vsel %vm680, %v1348, %v1349
        %v1355 = vsel %vm1352, %v1354, %v1343
        %v1356 = vsel %vm680, %v1349, %v1350
        %v1357 = vsel %vm1352, %v1356, %v1345
        %v1358 = vsel %vm680, %v1350, %v1351
        %v1359 = vsel %vm1352, %v1358, %v1347
        %v1365 = vmul.f32 %v1335, %v1353
        %v1366 = vmul.f32 %v1336, %v1355
        %v1367 = vmul.f32 %v1337, %v1357
        %v1368 = vmul.f32 %v1338, %v1359
        %v1369 = vmul.f32 %v1339, %v1351
        %s1370 = sld [smem:[#allocation4 + $0x5]]
        %v1371 = vstv %s1370
        %v1372 = vmul.f32 %v1371, %v1365
        %v1373 = vmul.f32 %v1371, %v1366
        %v1374 = vmul.f32 %v1371, %v1367
        %v1375 = vmul.f32 %v1371, %v1368
        %v1376 = vmul.f32 %v1371, %v1369
        %1382 = vrot.lane.b32.xlu0 %v1372, 94
        %v1383 = vpop.permute.xlu0 %1382
        %1384 = vrot.lane.b32.xlu0 %v1373, 94
        %v1385 = vpop.permute.xlu0 %1384
        %1386 = vrot.lane.b32.xlu0 %v1374, 94
        %v1387 = vpop.permute.xlu0 %1386
        %1388 = vrot.lane.b32.xlu0 %v1375, 94
        %v1389 = vpop.permute.xlu0 %1388
        %1390 = vrot.lane.b32.xlu0 %v1376, 94
        %v1391 = vpop.permute.xlu0 %1390
        %v1392 = vrot.slane %v1383, 4
        %v1393 = vrot.slane %v1385, 4
        %v1394 = vrot.slane %v1387, 4
        %v1395 = vrot.slane %v1389, 4
        %vm1396 = vcmask 769024
        %v1397 = vsel %vm1396, %v1392, %v1383
        %v1398 = vsel %vm680, %v1392, %v1393
        %v1399 = vsel %vm1396, %v1398, %v1385
        %v1400 = vsel %vm680, %v1393, %v1394
        %v1401 = vsel %vm1396, %v1400, %v1387
        %v1402 = vsel %vm680, %v1394, %v1395
        %v1403 = vsel %vm1396, %v1402, %v1389
        %v1404 = vsel %vm1396, %v1395, %v1391
        %v1410 = vadd.f32 %v1252, %v1397
        %v1411 = vadd.f32 %v1253, %v1399
        %v1412 = vadd.f32 %v1254, %v1401
        %v1413 = vadd.f32 %v1255, %v1403
        %v1414 = vadd.f32 %v1256, %v1404
        %s1415 = sld [smem:[#allocation4 + $0x20]]
        %v1416 = vstv %s1415
        %v1417 = vmul.f32 %v1416, %v1365
        %v1418 = vmul.f32 %v1416, %v1366
        %v1419 = vmul.f32 %v1416, %v1367
        %v1420 = vmul.f32 %v1416, %v1368
        %v1421 = vmul.f32 %v1416, %v1369
        %1427 = vrot.lane.b32.xlu0 %v1417, 94
        %v1428 = vpop.permute.xlu0 %1427
        %1429 = vrot.lane.b32.xlu0 %v1418, 94
        %v1430 = vpop.permute.xlu0 %1429
        %1431 = vrot.lane.b32.xlu0 %v1419, 94
        %v1432 = vpop.permute.xlu0 %1431
        %1433 = vrot.lane.b32.xlu0 %v1420, 94
        %v1434 = vpop.permute.xlu0 %1433
        %1435 = vrot.lane.b32.xlu0 %v1421, 94
        %v1436 = vpop.permute.xlu0 %1435
        %v1437 = vrot.slane %v1428, 4
        %v1438 = vrot.slane %v1430, 4
        %v1439 = vrot.slane %v1432, 4
        %v1440 = vrot.slane %v1434, 4
        %v1441 = vsel %vm1396, %v1437, %v1428
        %v1442 = vsel %vm680, %v1437, %v1438
        %v1443 = vsel %vm1396, %v1442, %v1430
        %v1444 = vsel %vm680, %v1438, %v1439
        %v1445 = vsel %vm1396, %v1444, %v1432
        %v1446 = vsel %vm680, %v1439, %v1440
        %v1447 = vsel %vm1396, %v1446, %v1434
        %v1448 = vsel %vm1396, %v1440, %v1436
        %v1454 = vadd.f32 %v1291, %v1441
        %v1455 = vadd.f32 %v1292, %v1443
        %v1456 = vadd.f32 %v1293, %v1445
        %v1457 = vadd.f32 %v1294, %v1447
        %v1458 = vadd.f32 %v1295, %v1448
        %s1459 = sld [smem:[#allocation4 + $0x3b]]
        %v1460 = vstv %s1459
        %v1461 = vmul.f32 %v1460, %v1365
        %v1462 = vmul.f32 %v1460, %v1366
        %v1463 = vmul.f32 %v1460, %v1367
        %v1464 = vmul.f32 %v1460, %v1368
        %v1465 = vmul.f32 %v1460, %v1369
        %1471 = vrot.lane.b32.xlu0 %v1461, 94
        %v1472 = vpop.permute.xlu0 %1471
        %1473 = vrot.lane.b32.xlu0 %v1462, 94
        %v1474 = vpop.permute.xlu0 %1473
        %1475 = vrot.lane.b32.xlu0 %v1463, 94
        %v1476 = vpop.permute.xlu0 %1475
        %1477 = vrot.lane.b32.xlu0 %v1464, 94
        %v1478 = vpop.permute.xlu0 %1477
        %1479 = vrot.lane.b32.xlu0 %v1465, 94
        %v1480 = vpop.permute.xlu0 %1479
        %v1481 = vrot.slane %v1472, 4
        %v1482 = vrot.slane %v1474, 4
        %v1483 = vrot.slane %v1476, 4
        %v1484 = vrot.slane %v1478, 4
        %v1485 = vsel %vm1396, %v1481, %v1472
        %v1486 = vsel %vm680, %v1481, %v1482
        %v1487 = vsel %vm1396, %v1486, %v1474
        %v1488 = vsel %vm680, %v1482, %v1483
        %v1489 = vsel %vm1396, %v1488, %v1476
        %v1490 = vsel %vm680, %v1483, %v1484
        %v1491 = vsel %vm1396, %v1490, %v1478
        %v1492 = vsel %vm1396, %v1484, %v1480
        %v1498 = vadd.f32 %v1330, %v1485
        %v1499 = vadd.f32 %v1331, %v1487
        %v1500 = vadd.f32 %v1332, %v1489
        %v1501 = vadd.f32 %v1333, %v1491
        %v1502 = vadd.f32 %v1334, %v1492
        %v1503 = vld [vmem:[#allocation2 + $0x4] sm:$0xff]
        %v1504 = vld [vmem:[#allocation2 + $0xc] sm:$0xff]
        %v1505 = vld [vmem:[#allocation2 + $0x14] sm:$0xff]
        %v1506 = vld [vmem:[#allocation2 + $0x1c] sm:$0xff]
        %v1507 = vld [vmem:[#allocation2 + $0x24] sm:$0xf]
        %1508 = vrot.lane.b32.xlu0 %v662, 31
        %v1509 = vpop.permute.xlu0 %1508
        %1510 = vrot.lane.b32.xlu0 %v663, 31
        %v1511 = vpop.permute.xlu0 %1510
        %1512 = vrot.lane.b32.xlu0 %v664, 31
        %v1513 = vpop.permute.xlu0 %1512
        %1514 = vrot.lane.b32.xlu0 %v665, 31
        %v1515 = vpop.permute.xlu0 %1514
        %v1516 = vrot.slane %v1509, 4
        %v1517 = vrot.slane %v1511, 4
        %v1518 = vrot.slane %v1513, 4
        %v1519 = vrot.slane %v1515, 4
        %vm1520 = vcmask 252928
        %v1521 = vsel %vm1520, %v1516, %v1509
        %v1522 = vsel %vm680, %v1516, %v1517
        %v1523 = vsel %vm1520, %v1522, %v1511
        %v1524 = vsel %vm680, %v1517, %v1518
        %v1525 = vsel %vm1520, %v1524, %v1513
        %v1526 = vsel %vm680, %v1518, %v1519
        %v1527 = vsel %vm1520, %v1526, %v1515
        %v1533 = vmul.f32 %v1503, %v1521
        %v1534 = vmul.f32 %v1504, %v1523
        %v1535 = vmul.f32 %v1505, %v1525
        %v1536 = vmul.f32 %v1506, %v1527
        %v1537 = vmul.f32 %v1507, %v1519
        %s1538 = sld [smem:[#allocation4 + $0x6]]
        %v1539 = vstv %s1538
        %v1540 = vmul.f32 %v1539, %v1533
        %v1541 = vmul.f32 %v1539, %v1534
        %v1542 = vmul.f32 %v1539, %v1535
        %v1543 = vmul.f32 %v1539, %v1536
        %v1544 = vmul.f32 %v1539, %v1537
        %1550 = vrot.lane.b32.xlu0 %v1540, 64
        %v1551 = vpop.permute.xlu0 %1550
        %1552 = vrot.lane.b32.xlu0 %v1541, 64
        %v1553 = vpop.permute.xlu0 %1552
        %1554 = vrot.lane.b32.xlu0 %v1542, 64
        %v1555 = vpop.permute.xlu0 %1554
        %1556 = vrot.lane.b32.xlu0 %v1543, 64
        %v1557 = vpop.permute.xlu0 %1556
        %1558 = vrot.lane.b32.xlu0 %v1544, 64
        %v1559 = vpop.permute.xlu0 %1558
        %v1560 = vrot.slane %v1551, 4
        %v1561 = vrot.slane %v1553, 4
        %v1562 = vrot.slane %v1555, 4
        %v1563 = vrot.slane %v1557, 4
        %vm1564 = vcmask 523264
        %v1565 = vsel %vm1564, %v1560, %v1551
        %v1566 = vsel %vm680, %v1560, %v1561
        %v1567 = vsel %vm1564, %v1566, %v1553
        %v1568 = vsel %vm680, %v1561, %v1562
        %v1569 = vsel %vm1564, %v1568, %v1555
        %v1570 = vsel %vm680, %v1562, %v1563
        %v1571 = vsel %vm1564, %v1570, %v1557
        %v1572 = vsel %vm1564, %v1563, %v1559
        %v1578 = vadd.f32 %v1410, %v1565
        %v1579 = vadd.f32 %v1411, %v1567
        %v1580 = vadd.f32 %v1412, %v1569
        %v1581 = vadd.f32 %v1413, %v1571
        %v1582 = vadd.f32 %v1414, %v1572
        %s1583 = sld [smem:[#allocation4 + $0x21]]
        %v1584 = vstv %s1583
        %v1585 = vmul.f32 %v1584, %v1533
        %v1586 = vmul.f32 %v1584, %v1534
        %v1587 = vmul.f32 %v1584, %v1535
        %v1588 = vmul.f32 %v1584, %v1536
        %v1589 = vmul.f32 %v1584, %v1537
        %1595 = vrot.lane.b32.xlu0 %v1585, 64
        %v1596 = vpop.permute.xlu0 %1595
        %1597 = vrot.lane.b32.xlu0 %v1586, 64
        %v1598 = vpop.permute.xlu0 %1597
        %1599 = vrot.lane.b32.xlu0 %v1587, 64
        %v1600 = vpop.permute.xlu0 %1599
        %1601 = vrot.lane.b32.xlu0 %v1588, 64
        %v1602 = vpop.permute.xlu0 %1601
        %1603 = vrot.lane.b32.xlu0 %v1589, 64
        %v1604 = vpop.permute.xlu0 %1603
        %v1605 = vrot.slane %v1596, 4
        %v1606 = vrot.slane %v1598, 4
        %v1607 = vrot.slane %v1600, 4
        %v1608 = vrot.slane %v1602, 4
        %v1609 = vsel %vm1564, %v1605, %v1596
        %v1610 = vsel %vm680, %v1605, %v1606
        %v1611 = vsel %vm1564, %v1610, %v1598
        %v1612 = vsel %vm680, %v1606, %v1607
        %v1613 = vsel %vm1564, %v1612, %v1600
        %v1614 = vsel %vm680, %v1607, %v1608
        %v1615 = vsel %vm1564, %v1614, %v1602
        %v1616 = vsel %vm1564, %v1608, %v1604
        %v1622 = vadd.f32 %v1454, %v1609
        %v1623 = vadd.f32 %v1455, %v1611
        %v1624 = vadd.f32 %v1456, %v1613
        %v1625 = vadd.f32 %v1457, %v1615
        %v1626 = vadd.f32 %v1458, %v1616
        %s1627 = sld [smem:[#allocation4 + $0x3c]]
        %v1628 = vstv %s1627
        %v1629 = vmul.f32 %v1628, %v1533
        %v1630 = vmul.f32 %v1628, %v1534
        %v1631 = vmul.f32 %v1628, %v1535
        %v1632 = vmul.f32 %v1628, %v1536
        %v1633 = vmul.f32 %v1628, %v1537
        %1639 = vrot.lane.b32.xlu0 %v1629, 64
        %v1640 = vpop.permute.xlu0 %1639
        %1641 = vrot.lane.b32.xlu0 %v1630, 64
        %v1642 = vpop.permute.xlu0 %1641
        %1643 = vrot.lane.b32.xlu0 %v1631, 64
        %v1644 = vpop.permute.xlu0 %1643
        %1645 = vrot.lane.b32.xlu0 %v1632, 64
        %v1646 = vpop.permute.xlu0 %1645
        %1647 = vrot.lane.b32.xlu0 %v1633, 64
        %v1648 = vpop.permute.xlu0 %1647
        %v1649 = vrot.slane %v1640, 4
        %v1650 = vrot.slane %v1642, 4
        %v1651 = vrot.slane %v1644, 4
        %v1652 = vrot.slane %v1646, 4
        %v1653 = vsel %vm1564, %v1649, %v1640
        %v1654 = vsel %vm680, %v1649, %v1650
        %v1655 = vsel %vm1564, %v1654, %v1642
        %v1656 = vsel %vm680, %v1650, %v1651
        %v1657 = vsel %vm1564, %v1656, %v1644
        %v1658 = vsel %vm680, %v1651, %v1652
        %v1659 = vsel %vm1564, %v1658, %v1646
        %v1660 = vsel %vm1564, %v1652, %v1648
        %v1666 = vadd.f32 %v1498, %v1653
        %v1667 = vadd.f32 %v1499, %v1655
        %v1668 = vadd.f32 %v1500, %v1657
        %v1669 = vadd.f32 %v1501, %v1659
        %v1670 = vadd.f32 %v1502, %v1660
        %v1671 = vld [vmem:[#allocation2 + $0x4] sm:$0xff]
        %v1672 = vld [vmem:[#allocation2 + $0xc] sm:$0xff]
        %v1673 = vld [vmem:[#allocation2 + $0x14] sm:$0xff]
        %v1674 = vld [vmem:[#allocation2 + $0x1c] sm:$0xff]
        %v1675 = vld [vmem:[#allocation2 + $0x24] sm:$0xf]
        %s1676 = sld [smem:[#allocation4 + $0x7]]
        %v1677 = vstv %s1676
        %v1678 = vmul.f32 %v1677, %v1671
        %v1679 = vmul.f32 %v1677, %v1672
        %v1680 = vmul.f32 %v1677, %v1673
        %v1681 = vmul.f32 %v1677, %v1674
        %v1682 = vmul.f32 %v1677, %v1675
        %1688 = vrot.lane.b32.xlu0 %v1678, 63
        %v1689 = vpop.permute.xlu0 %1688
        %1690 = vrot.lane.b32.xlu0 %v1679, 63
        %v1691 = vpop.permute.xlu0 %1690
        %1692 = vrot.lane.b32.xlu0 %v1680, 63
        %v1693 = vpop.permute.xlu0 %1692
        %1694 = vrot.lane.b32.xlu0 %v1681, 63
        %v1695 = vpop.permute.xlu0 %1694
        %1696 = vrot.lane.b32.xlu0 %v1682, 63
        %v1697 = vpop.permute.xlu0 %1696
        %v1698 = vrot.slane %v1689, 4
        %v1699 = vrot.slane %v1691, 4
        %v1700 = vrot.slane %v1693, 4
        %v1701 = vrot.slane %v1695, 4
        %vm1702 = vcmask 515072
        %v1703 = vsel %vm1702, %v1698, %v1689
        %v1704 = vsel %vm680, %v1698, %v1699
        %v1705 = vsel %vm1702, %v1704, %v1691
        %v1706 = vsel %vm680, %v1699, %v1700
        %v1707 = vsel %vm1702, %v1706, %v1693
        %v1708 = vsel %vm680, %v1700, %v1701
        %v1709 = vsel %vm1702, %v1708, %v1695
        %v1710 = vsel %vm1702, %v1701, %v1697
        %v1716 = vadd.f32 %v1578, %v1703
        %v1717 = vadd.f32 %v1579, %v1705
        %v1718 = vadd.f32 %v1580, %v1707
        %v1719 = vadd.f32 %v1581, %v1709
        %v1720 = vadd.f32 %v1582, %v1710
        %s1721 = sld [smem:[#allocation4 + $0x22]]
        %v1722 = vstv %s1721
        %v1723 = vmul.f32 %v1722, %v1671
        %v1724 = vmul.f32 %v1722, %v1672
        %v1725 = vmul.f32 %v1722, %v1673
        %v1726 = vmul.f32 %v1722, %v1674
        %v1727 = vmul.f32 %v1722, %v1675
        %1733 = vrot.lane.b32.xlu0 %v1723, 63
        %v1734 = vpop.permute.xlu0 %1733
        %1735 = vrot.lane.b32.xlu0 %v1724, 63
        %v1736 = vpop.permute.xlu0 %1735
        %1737 = vrot.lane.b32.xlu0 %v1725, 63
        %v1738 = vpop.permute.xlu0 %1737
        %1739 = vrot.lane.b32.xlu0 %v1726, 63
        %v1740 = vpop.permute.xlu0 %1739
        %1741 = vrot.lane.b32.xlu0 %v1727, 63
        %v1742 = vpop.permute.xlu0 %1741
        %v1743 = vrot.slane %v1734, 4
        %v1744 = vrot.slane %v1736, 4
        %v1745 = vrot.slane %v1738, 4
        %v1746 = vrot.slane %v1740, 4
        %v1747 = vsel %vm1702, %v1743, %v1734
        %v1748 = vsel %vm680, %v1743, %v1744
        %v1749 = vsel %vm1702, %v1748, %v1736
        %v1750 = vsel %vm680, %v1744, %v1745
        %v1751 = vsel %vm1702, %v1750, %v1738
        %v1752 = vsel %vm680, %v1745, %v1746
        %v1753 = vsel %vm1702, %v1752, %v1740
        %v1754 = vsel %vm1702, %v1746, %v1742
        %v1760 = vadd.f32 %v1622, %v1747
        %v1761 = vadd.f32 %v1623, %v1749
        %v1762 = vadd.f32 %v1624, %v1751
        %v1763 = vadd.f32 %v1625, %v1753
        %v1764 = vadd.f32 %v1626, %v1754
        %s1765 = sld [smem:[#allocation4 + $0x3d]]
        %v1766 = vstv %s1765
        %v1767 = vmul.f32 %v1766, %v1671
        %v1768 = vmul.f32 %v1766, %v1672
        %v1769 = vmul.f32 %v1766, %v1673
        %v1770 = vmul.f32 %v1766, %v1674
        %v1771 = vmul.f32 %v1766, %v1675
        %1777 = vrot.lane.b32.xlu0 %v1767, 63
        %v1778 = vpop.permute.xlu0 %1777
        %1779 = vrot.lane.b32.xlu0 %v1768, 63
        %v1780 = vpop.permute.xlu0 %1779
        %1781 = vrot.lane.b32.xlu0 %v1769, 63
        %v1782 = vpop.permute.xlu0 %1781
        %1783 = vrot.lane.b32.xlu0 %v1770, 63
        %v1784 = vpop.permute.xlu0 %1783
        %1785 = vrot.lane.b32.xlu0 %v1771, 63
        %v1786 = vpop.permute.xlu0 %1785
        %v1787 = vrot.slane %v1778, 4
        %v1788 = vrot.slane %v1780, 4
        %v1789 = vrot.slane %v1782, 4
        %v1790 = vrot.slane %v1784, 4
        %v1791 = vsel %vm1702, %v1787, %v1778
        %v1792 = vsel %vm680, %v1787, %v1788
        %v1793 = vsel %vm1702, %v1792, %v1780
        %v1794 = vsel %vm680, %v1788, %v1789
        %v1795 = vsel %vm1702, %v1794, %v1782
        %v1796 = vsel %vm680, %v1789, %v1790
        %v1797 = vsel %vm1702, %v1796, %v1784
        %v1798 = vsel %vm1702, %v1790, %v1786
        %v1804 = vadd.f32 %v1666, %v1791
        %v1805 = vadd.f32 %v1667, %v1793
        %v1806 = vadd.f32 %v1668, %v1795
        %v1807 = vadd.f32 %v1669, %v1797
        %v1808 = vadd.f32 %v1670, %v1798
        %1809 = vrot.lane.b32.xlu0 %v874, 33
        %v1810 = vpop.permute.xlu0 %1809
        %1811 = vrot.lane.b32.xlu0 %v875, 33
        %v1812 = vpop.permute.xlu0 %1811
        %1813 = vrot.lane.b32.xlu0 %v876, 33
        %v1814 = vpop.permute.xlu0 %1813
        %1815 = vrot.lane.b32.xlu0 %v877, 33
        %v1816 = vpop.permute.xlu0 %1815
        %v1817 = vrot.slane %v1810, 4
        %v1818 = vrot.slane %v1812, 4
        %v1819 = vrot.slane %v1814, 4
        %v1820 = vrot.slane %v1816, 4
        %vm1821 = vcmask 269312
        %v1822 = vsel %vm1821, %v1817, %v1810
        %v1823 = vsel %vm680, %v1817, %v1818
        %v1824 = vsel %vm1821, %v1823, %v1812
        %v1825 = vsel %vm680, %v1818, %v1819
        %v1826 = vsel %vm1821, %v1825, %v1814
        %v1827 = vsel %vm680, %v1819, %v1820
        %v1828 = vsel %vm1821, %v1827, %v1816
        %v1834 = vmul.f32 %v1671, %v1822
        %v1835 = vmul.f32 %v1672, %v1824
        %v1836 = vmul.f32 %v1673, %v1826
        %v1837 = vmul.f32 %v1674, %v1828
        %v1838 = vmul.f32 %v1675, %v1820
        %s1839 = sld [smem:[#allocation4 + $0x8]]
        %v1840 = vstv %s1839
        %v1841 = vmul.f32 %v1840, %v1834
        %v1842 = vmul.f32 %v1840, %v1835
        %v1843 = vmul.f32 %v1840, %v1836
        %v1844 = vmul.f32 %v1840, %v1837
        %v1845 = vmul.f32 %v1840, %v1838
        %1851 = vrot.lane.b32.xlu0 %v1841, 62
        %v1852 = vpop.permute.xlu0 %1851
        %1853 = vrot.lane.b32.xlu0 %v1842, 62
        %v1854 = vpop.permute.xlu0 %1853
        %1855 = vrot.lane.b32.xlu0 %v1843, 62
        %v1856 = vpop.permute.xlu0 %1855
        %1857 = vrot.lane.b32.xlu0 %v1844, 62
        %v1858 = vpop.permute.xlu0 %1857
        %1859 = vrot.lane.b32.xlu0 %v1845, 62
        %v1860 = vpop.permute.xlu0 %1859
        %v1861 = vrot.slane %v1852, 4
        %v1862 = vrot.slane %v1854, 4
        %v1863 = vrot.slane %v1856, 4
        %v1864 = vrot.slane %v1858, 4
        %vm1865 = vcmask 506880
        %v1866 = vsel %vm1865, %v1861, %v1852
        %v1867 = vsel %vm680, %v1861, %v1862
        %v1868 = vsel %vm1865, %v1867, %v1854
        %v1869 = vsel %vm680, %v1862, %v1863
        %v1870 = vsel %vm1865, %v1869, %v1856
        %v1871 = vsel %vm680, %v1863, %v1864
        %v1872 = vsel %vm1865, %v1871, %v1858
        %v1873 = vsel %vm1865, %v1864, %v1860
        %v1879 = vadd.f32 %v1716, %v1866
        %v1880 = vadd.f32 %v1717, %v1868
        %v1881 = vadd.f32 %v1718, %v1870
        %v1882 = vadd.f32 %v1719, %v1872
        %v1883 = vadd.f32 %v1720, %v1873
        %s1884 = sld [smem:[#allocation4 + $0x23]]
        %v1885 = vstv %s1884
        %v1886 = vmul.f32 %v1885, %v1834
        %v1887 = vmul.f32 %v1885, %v1835
        %v1888 = vmul.f32 %v1885, %v1836
        %v1889 = vmul.f32 %v1885, %v1837
        %v1890 = vmul.f32 %v1885, %v1838
        %1896 = vrot.lane.b32.xlu0 %v1886, 62
        %v1897 = vpop.permute.xlu0 %1896
        %1898 = vrot.lane.b32.xlu0 %v1887, 62
        %v1899 = vpop.permute.xlu0 %1898
        %1900 = vrot.lane.b32.xlu0 %v1888, 62
        %v1901 = vpop.permute.xlu0 %1900
        %1902 = vrot.lane.b32.xlu0 %v1889, 62
        %v1903 = vpop.permute.xlu0 %1902
        %1904 = vrot.lane.b32.xlu0 %v1890, 62
        %v1905 = vpop.permute.xlu0 %1904
        %v1906 = vrot.slane %v1897, 4
        %v1907 = vrot.slane %v1899, 4
        %v1908 = vrot.slane %v1901, 4
        %v1909 = vrot.slane %v1903, 4
        %v1910 = vsel %vm1865, %v1906, %v1897
        %v1911 = vsel %vm680, %v1906, %v1907
        %v1912 = vsel %vm1865, %v1911, %v1899
        %v1913 = vsel %vm680, %v1907, %v1908
        %v1914 = vsel %vm1865, %v1913, %v1901
        %v1915 = vsel %vm680, %v1908, %v1909
        %v1916 = vsel %vm1865, %v1915, %v1903
        %v1917 = vsel %vm1865, %v1909, %v1905
        %v1923 = vadd.f32 %v1760, %v1910
        %v1924 = vadd.f32 %v1761, %v1912
        %v1925 = vadd.f32 %v1762, %v1914
        %v1926 = vadd.f32 %v1763, %v1916
        %v1927 = vadd.f32 %v1764, %v1917
        %s1928 = sld [smem:[#allocation4 + $0x3e]]
        %v1929 = vstv %s1928
        %v1930 = vmul.f32 %v1929, %v1834
        %v1931 = vmul.f32 %v1929, %v1835
        %v1932 = vmul.f32 %v1929, %v1836
        %v1933 = vmul.f32 %v1929, %v1837
        %v1934 = vmul.f32 %v1929, %v1838
        %1940 = vrot.lane.b32.xlu0 %v1930, 62
        %v1941 = vpop.permute.xlu0 %1940
        %1942 = vrot.lane.b32.xlu0 %v1931, 62
        %v1943 = vpop.permute.xlu0 %1942
        %1944 = vrot.lane.b32.xlu0 %v1932, 62
        %v1945 = vpop.permute.xlu0 %1944
        %1946 = vrot.lane.b32.xlu0 %v1933, 62
        %v1947 = vpop.permute.xlu0 %1946
        %1948 = vrot.lane.b32.xlu0 %v1934, 62
        %v1949 = vpop.permute.xlu0 %1948
        %v1950 = vrot.slane %v1941, 4
        %v1951 = vrot.slane %v1943, 4
        %v1952 = vrot.slane %v1945, 4
        %v1953 = vrot.slane %v1947, 4
        %v1954 = vsel %vm1865, %v1950, %v1941
        %v1955 = vsel %vm680, %v1950, %v1951
        %v1956 = vsel %vm1865, %v1955, %v1943
        %v1957 = vsel %vm680, %v1951, %v1952
        %v1958 = vsel %vm1865, %v1957, %v1945
        %v1959 = vsel %vm680, %v1952, %v1953
        %v1960 = vsel %vm1865, %v1959, %v1947
        %v1961 = vsel %vm1865, %v1953, %v1949
        %v1967 = vadd.f32 %v1804, %v1954
        %v1968 = vadd.f32 %v1805, %v1956
        %v1969 = vadd.f32 %v1806, %v1958
        %v1970 = vadd.f32 %v1807, %v1960
        %v1971 = vadd.f32 %v1808, %v1961
        %v1972 = vld [vmem:[%s468] sm:$0xff]
        %v1973 = vld [vmem:[%s468 + $0x8] sm:$0xff]
        %v1974 = vld [vmem:[%s468 + $0x10] sm:$0xff]
        %v1975 = vld [vmem:[%s468 + $0x18] sm:$0xff]
        %v1976 = vld [vmem:[%s468 + $0x20] sm:$0xf]
        %v1977 = vmul.f32 %v1972, %v679
        %v1978 = vmul.f32 %v1973, %v682
        %v1979 = vmul.f32 %v1974, %v684
        %v1980 = vmul.f32 %v1975, %v686
        %v1981 = vmul.f32 %v1976, %v677
        %s1982 = sld [smem:[#allocation4 + $0x9]]
        %v1983 = vstv %s1982
        %v1984 = vmul.f32 %v1983, %v1977
        %v1985 = vmul.f32 %v1983, %v1978
        %v1986 = vmul.f32 %v1983, %v1979
        %v1987 = vmul.f32 %v1983, %v1980
        %v1988 = vmul.f32 %v1983, %v1981
        %v1989 = vadd.f32 %v1879, %v1984
        %v1990 = vadd.f32 %v1880, %v1985
        %v1991 = vadd.f32 %v1881, %v1986
        %v1992 = vadd.f32 %v1882, %v1987
        %v1993 = vadd.f32 %v1883, %v1988
        %s1994 = sld [smem:[#allocation4 + $0x24]]
        %v1995 = vstv %s1994
        %v1996 = vmul.f32 %v1995, %v1977
        %v1997 = vmul.f32 %v1995, %v1978
        %v1998 = vmul.f32 %v1995, %v1979
        %v1999 = vmul.f32 %v1995, %v1980
        %v2000 = vmul.f32 %v1995, %v1981
        %v2001 = vadd.f32 %v1923, %v1996
        %v2002 = vadd.f32 %v1924, %v1997
        %v2003 = vadd.f32 %v1925, %v1998
        %v2004 = vadd.f32 %v1926, %v1999
        %v2005 = vadd.f32 %v1927, %v2000
        %s2006 = sld [smem:[#allocation4 + $0x3f]]
        %v2007 = vstv %s2006
        %v2008 = vmul.f32 %v2007, %v1977
        %v2009 = vmul.f32 %v2007, %v1978
        %v2010 = vmul.f32 %v2007, %v1979
        %v2011 = vmul.f32 %v2007, %v1980
        %v2012 = vmul.f32 %v2007, %v1981
        %v2013 = vadd.f32 %v1967, %v2008
        %v2014 = vadd.f32 %v1968, %v2009
        %v2015 = vadd.f32 %v1969, %v2010
        %v2016 = vadd.f32 %v1970, %v2011
        %v2017 = vadd.f32 %v1971, %v2012
        %v2018 = vld [vmem:[%s468] sm:$0xff]
        %v2019 = vld [vmem:[%s468 + $0x8] sm:$0xff]
        %v2020 = vld [vmem:[%s468 + $0x10] sm:$0xff]
        %v2021 = vld [vmem:[%s468 + $0x18] sm:$0xff]
        %v2022 = vld [vmem:[%s468 + $0x20] sm:$0xf]
        %s2023 = sld [smem:[#allocation4 + $0xa]]
        %v2024 = vstv %s2023
        %v2025 = vmul.f32 %v2024, %v2018
        %v2026 = vmul.f32 %v2024, %v2019
        %v2027 = vmul.f32 %v2024, %v2020
        %v2028 = vmul.f32 %v2024, %v2021
        %v2029 = vmul.f32 %v2024, %v2022
        %2035 = vrot.lane.b32.xlu0 %v2025, 127
        %v2036 = vpop.permute.xlu0 %2035
        %2037 = vrot.lane.b32.xlu0 %v2026, 127
        %v2038 = vpop.permute.xlu0 %2037
        %2039 = vrot.lane.b32.xlu0 %v2027, 127
        %v2040 = vpop.permute.xlu0 %2039
        %2041 = vrot.lane.b32.xlu0 %v2028, 127
        %v2042 = vpop.permute.xlu0 %2041
        %2043 = vrot.lane.b32.xlu0 %v2029, 127
        %v2044 = vpop.permute.xlu0 %2043
        %v2045 = vrot.slane %v2036, 4
        %v2046 = vrot.slane %v2038, 4
        %v2047 = vrot.slane %v2040, 4
        %v2048 = vrot.slane %v2042, 4
        %v2049 = vrot.slane %v2044, 4
        %v2050 = vsel %vm680, %v2045, %v2046
        %v2051 = vsel %vm766, %v2036, %v2050
        %v2052 = vsel %vm680, %v2046, %v2047
        %v2053 = vsel %vm766, %v2038, %v2052
        %v2054 = vsel %vm680, %v2047, %v2048
        %v2055 = vsel %vm766, %v2040, %v2054
        %v2056 = vsel %vm680, %v2048, %v2049
        %v2057 = vsel %vm766, %v2042, %v2056
        %v2063 = vadd.f32 %v1989, %v2051
        %v2064 = vadd.f32 %v1990, %v2053
        %v2065 = vadd.f32 %v1991, %v2055
        %v2066 = vadd.f32 %v1992, %v2057
        %v2067 = vadd.f32 %v1993, %v2044
        %s2068 = sld [smem:[#allocation4 + $0x25]]
        %v2069 = vstv %s2068
        %v2070 = vmul.f32 %v2069, %v2018
        %v2071 = vmul.f32 %v2069, %v2019
        %v2072 = vmul.f32 %v2069, %v2020
        %v2073 = vmul.f32 %v2069, %v2021
        %v2074 = vmul.f32 %v2069, %v2022
        %2080 = vrot.lane.b32.xlu0 %v2070, 127
        %v2081 = vpop.permute.xlu0 %2080
        %2082 = vrot.lane.b32.xlu0 %v2071, 127
        %v2083 = vpop.permute.xlu0 %2082
        %2084 = vrot.lane.b32.xlu0 %v2072, 127
        %v2085 = vpop.permute.xlu0 %2084
        %2086 = vrot.lane.b32.xlu0 %v2073, 127
        %v2087 = vpop.permute.xlu0 %2086
        %2088 = vrot.lane.b32.xlu0 %v2074, 127
        %v2089 = vpop.permute.xlu0 %2088
        %v2090 = vrot.slane %v2081, 4
        %v2091 = vrot.slane %v2083, 4
        %v2092 = vrot.slane %v2085, 4
        %v2093 = vrot.slane %v2087, 4
        %v2094 = vrot.slane %v2089, 4
        %v2095 = vsel %vm680, %v2090, %v2091
        %v2096 = vsel %vm766, %v2081, %v2095
        %v2097 = vsel %vm680, %v2091, %v2092
        %v2098 = vsel %vm766, %v2083, %v2097
        %v2099 = vsel %vm680, %v2092, %v2093
        %v2100 = vsel %vm766, %v2085, %v2099
        %v2101 = vsel %vm680, %v2093, %v2094
        %v2102 = vsel %vm766, %v2087, %v2101
        %v2108 = vadd.f32 %v2001, %v2096
        %v2109 = vadd.f32 %v2002, %v2098
        %v2110 = vadd.f32 %v2003, %v2100
        %v2111 = vadd.f32 %v2004, %v2102
        %v2112 = vadd.f32 %v2005, %v2089
        %s2113 = sld [smem:[#allocation4 + $0x40]]
        %v2114 = vstv %s2113
        %v2115 = vmul.f32 %v2114, %v2018
        %v2116 = vmul.f32 %v2114, %v2019
        %v2117 = vmul.f32 %v2114, %v2020
        %v2118 = vmul.f32 %v2114, %v2021
        %v2119 = vmul.f32 %v2114, %v2022
        %2125 = vrot.lane.b32.xlu0 %v2115, 127
        %v2126 = vpop.permute.xlu0 %2125
        %2127 = vrot.lane.b32.xlu0 %v2116, 127
        %v2128 = vpop.permute.xlu0 %2127
        %2129 = vrot.lane.b32.xlu0 %v2117, 127
        %v2130 = vpop.permute.xlu0 %2129
        %2131 = vrot.lane.b32.xlu0 %v2118, 127
        %v2132 = vpop.permute.xlu0 %2131
        %2133 = vrot.lane.b32.xlu0 %v2119, 127
        %v2134 = vpop.permute.xlu0 %2133
        %v2135 = vrot.slane %v2126, 4
        %v2136 = vrot.slane %v2128, 4
        %v2137 = vrot.slane %v2130, 4
        %v2138 = vrot.slane %v2132, 4
        %v2139 = vrot.slane %v2134, 4
        %v2140 = vsel %vm680, %v2135, %v2136
        %v2141 = vsel %vm766, %v2126, %v2140
        %v2142 = vsel %vm680, %v2136, %v2137
        %v2143 = vsel %vm766, %v2128, %v2142
        %v2144 = vsel %vm680, %v2137, %v2138
        %v2145 = vsel %vm766, %v2130, %v2144
        %v2146 = vsel %vm680, %v2138, %v2139
        %v2147 = vsel %vm766, %v2132, %v2146
        %v2153 = vadd.f32 %v2013, %v2141
        %v2154 = vadd.f32 %v2014, %v2143
        %v2155 = vadd.f32 %v2015, %v2145
        %v2156 = vadd.f32 %v2016, %v2147
        %v2157 = vadd.f32 %v2017, %v2134
        %v2158 = vmul.f32 %v2018, %v891
        %v2159 = vmul.f32 %v2019, %v893
        %v2160 = vmul.f32 %v2020, %v895
        %v2161 = vmul.f32 %v2021, %v897
        %v2162 = vmul.f32 %v2022, %v889
        %s2163 = sld [smem:[#allocation4 + $0xb]]
        %v2164 = vstv %s2163
        %v2165 = vmul.f32 %v2164, %v2158
        %v2166 = vmul.f32 %v2164, %v2159
        %v2167 = vmul.f32 %v2164, %v2160
        %v2168 = vmul.f32 %v2164, %v2161
        %v2169 = vmul.f32 %v2164, %v2162
        %2175 = vrot.lane.b32.xlu0 %v2165, 126
        %v2176 = vpop.permute.xlu0 %2175
        %2177 = vrot.lane.b32.xlu0 %v2166, 126
        %v2178 = vpop.permute.xlu0 %2177
        %2179 = vrot.lane.b32.xlu0 %v2167, 126
        %v2180 = vpop.permute.xlu0 %2179
        %2181 = vrot.lane.b32.xlu0 %v2168, 126
        %v2182 = vpop.permute.xlu0 %2181
        %2183 = vrot.lane.b32.xlu0 %v2169, 126
        %v2184 = vpop.permute.xlu0 %2183
        %v2185 = vrot.slane %v2176, 4
        %v2186 = vrot.slane %v2178, 4
        %v2187 = vrot.slane %v2180, 4
        %v2188 = vrot.slane %v2182, 4
        %v2189 = vrot.slane %v2184, 4
        %v2190 = vsel %vm680, %v2185, %v2186
        %v2191 = vsel %vm936, %v2176, %v2190
        %v2192 = vsel %vm680, %v2186, %v2187
        %v2193 = vsel %vm936, %v2178, %v2192
        %v2194 = vsel %vm680, %v2187, %v2188
        %v2195 = vsel %vm936, %v2180, %v2194
        %v2196 = vsel %vm680, %v2188, %v2189
        %v2197 = vsel %vm936, %v2182, %v2196
        %v2203 = vadd.f32 %v2063, %v2191
        %v2204 = vadd.f32 %v2064, %v2193
        %v2205 = vadd.f32 %v2065, %v2195
        %v2206 = vadd.f32 %v2066, %v2197
        %v2207 = vadd.f32 %v2067, %v2184
        %s2208 = sld [smem:[#allocation4 + $0x26]]
        %v2209 = vstv %s2208
        %v2210 = vmul.f32 %v2209, %v2158
        %v2211 = vmul.f32 %v2209, %v2159
        %v2212 = vmul.f32 %v2209, %v2160
        %v2213 = vmul.f32 %v2209, %v2161
        %v2214 = vmul.f32 %v2209, %v2162
        %2220 = vrot.lane.b32.xlu0 %v2210, 126
        %v2221 = vpop.permute.xlu0 %2220
        %2222 = vrot.lane.b32.xlu0 %v2211, 126
        %v2223 = vpop.permute.xlu0 %2222
        %2224 = vrot.lane.b32.xlu0 %v2212, 126
        %v2225 = vpop.permute.xlu0 %2224
        %2226 = vrot.lane.b32.xlu0 %v2213, 126
        %v2227 = vpop.permute.xlu0 %2226
        %2228 = vrot.lane.b32.xlu0 %v2214, 126
        %v2229 = vpop.permute.xlu0 %2228
        %v2230 = vrot.slane %v2221, 4
        %v2231 = vrot.slane %v2223, 4
        %v2232 = vrot.slane %v2225, 4
        %v2233 = vrot.slane %v2227, 4
        %v2234 = vrot.slane %v2229, 4
        %v2235 = vsel %vm680, %v2230, %v2231
        %v2236 = vsel %vm936, %v2221, %v2235
        %v2237 = vsel %vm680, %v2231, %v2232
        %v2238 = vsel %vm936, %v2223, %v2237
        %v2239 = vsel %vm680, %v2232, %v2233
        %v2240 = vsel %vm936, %v2225, %v2239
        %v2241 = vsel %vm680, %v2233, %v2234
        %v2242 = vsel %vm936, %v2227, %v2241
        %v2248 = vadd.f32 %v2108, %v2236
        %v2249 = vadd.f32 %v2109, %v2238
        %v2250 = vadd.f32 %v2110, %v2240
        %v2251 = vadd.f32 %v2111, %v2242
        %v2252 = vadd.f32 %v2112, %v2229
        %s2253 = sld [smem:[#allocation4 + $0x41]]
        %v2254 = vstv %s2253
        %v2255 = vmul.f32 %v2254, %v2158
        %v2256 = vmul.f32 %v2254, %v2159
        %v2257 = vmul.f32 %v2254, %v2160
        %v2258 = vmul.f32 %v2254, %v2161
        %v2259 = vmul.f32 %v2254, %v2162
        %2265 = vrot.lane.b32.xlu0 %v2255, 126
        %v2266 = vpop.permute.xlu0 %2265
        %2267 = vrot.lane.b32.xlu0 %v2256, 126
        %v2268 = vpop.permute.xlu0 %2267
        %2269 = vrot.lane.b32.xlu0 %v2257, 126
        %v2270 = vpop.permute.xlu0 %2269
        %2271 = vrot.lane.b32.xlu0 %v2258, 126
        %v2272 = vpop.permute.xlu0 %2271
        %2273 = vrot.lane.b32.xlu0 %v2259, 126
        %v2274 = vpop.permute.xlu0 %2273
        %v2275 = vrot.slane %v2266, 4
        %v2276 = vrot.slane %v2268, 4
        %v2277 = vrot.slane %v2270, 4
        %v2278 = vrot.slane %v2272, 4
        %v2279 = vrot.slane %v2274, 4
        %v2280 = vsel %vm680, %v2275, %v2276
        %v2281 = vsel %vm936, %v2266, %v2280
        %v2282 = vsel %vm680, %v2276, %v2277
        %v2283 = vsel %vm936, %v2268, %v2282
        %v2284 = vsel %vm680, %v2277, %v2278
        %v2285 = vsel %vm936, %v2270, %v2284
        %v2286 = vsel %vm680, %v2278, %v2279
        %v2287 = vsel %vm936, %v2272, %v2286
        %v2293 = vadd.f32 %v2153, %v2281
        %v2294 = vadd.f32 %v2154, %v2283
        %v2295 = vadd.f32 %v2155, %v2285
        %v2296 = vadd.f32 %v2156, %v2287
        %v2297 = vadd.f32 %v2157, %v2274
        %v2298 = vld [vmem:[%s468] sm:$0xff]
        %v2299 = vld [vmem:[%s468 + $0x8] sm:$0xff]
        %v2300 = vld [vmem:[%s468 + $0x10] sm:$0xff]
        %v2301 = vld [vmem:[%s468 + $0x18] sm:$0xff]
        %v2302 = vld [vmem:[%s468 + $0x20] sm:$0xf]
        %v2303 = vmul.f32 %v2298, %v1061
        %v2304 = vmul.f32 %v2299, %v1063
        %v2305 = vmul.f32 %v2300, %v1065
        %v2306 = vmul.f32 %v2301, %v1067
        %v2307 = vmul.f32 %v2302, %v1060
        %s2308 = sld [smem:[#allocation4 + $0xc]]
        %v2309 = vstv %s2308
        %v2310 = vmul.f32 %v2309, %v2303
        %v2311 = vmul.f32 %v2309, %v2304
        %v2312 = vmul.f32 %v2309, %v2305
        %v2313 = vmul.f32 %v2309, %v2306
        %v2314 = vmul.f32 %v2309, %v2307
        %2320 = vrot.lane.b32.xlu0 %v2310, 96
        %v2321 = vpop.permute.xlu0 %2320
        %2322 = vrot.lane.b32.xlu0 %v2311, 96
        %v2323 = vpop.permute.xlu0 %2322
        %2324 = vrot.lane.b32.xlu0 %v2312, 96
        %v2325 = vpop.permute.xlu0 %2324
        %2326 = vrot.lane.b32.xlu0 %v2313, 96
        %v2327 = vpop.permute.xlu0 %2326
        %2328 = vrot.lane.b32.xlu0 %v2314, 96
        %v2329 = vpop.permute.xlu0 %2328
        %v2330 = vrot.slane %v2321, 4
        %v2331 = vrot.slane %v2323, 4
        %v2332 = vrot.slane %v2325, 4
        %v2333 = vrot.slane %v2327, 4
        %v2334 = vrot.slane %v2329, 4
        %v2335 = vsel %vm680, %v2330, %v2331
        %v2336 = vsel %vm1106, %v2321, %v2335
        %v2337 = vsel %vm680, %v2331, %v2332
        %v2338 = vsel %vm1106, %v2323, %v2337
        %v2339 = vsel %vm680, %v2332, %v2333
        %v2340 = vsel %vm1106, %v2325, %v2339
        %v2341 = vsel %vm680, %v2333, %v2334
        %v2342 = vsel %vm1106, %v2327, %v2341
        %v2348 = vadd.f32 %v2203, %v2336
        %v2349 = vadd.f32 %v2204, %v2338
        %v2350 = vadd.f32 %v2205, %v2340
        %v2351 = vadd.f32 %v2206, %v2342
        %v2352 = vadd.f32 %v2207, %v2329
        %s2353 = sld [smem:[#allocation4 + $0x27]]
        %v2354 = vstv %s2353
        %v2355 = vmul.f32 %v2354, %v2303
        %v2356 = vmul.f32 %v2354, %v2304
        %v2357 = vmul.f32 %v2354, %v2305
        %v2358 = vmul.f32 %v2354, %v2306
        %v2359 = vmul.f32 %v2354, %v2307
        %2365 = vrot.lane.b32.xlu0 %v2355, 96
        %v2366 = vpop.permute.xlu0 %2365
        %2367 = vrot.lane.b32.xlu0 %v2356, 96
        %v2368 = vpop.permute.xlu0 %2367
        %2369 = vrot.lane.b32.xlu0 %v2357, 96
        %v2370 = vpop.permute.xlu0 %2369
        %2371 = vrot.lane.b32.xlu0 %v2358, 96
        %v2372 = vpop.permute.xlu0 %2371
        %2373 = vrot.lane.b32.xlu0 %v2359, 96
        %v2374 = vpop.permute.xlu0 %2373
        %v2375 = vrot.slane %v2366, 4
        %v2376 = vrot.slane %v2368, 4
        %v2377 = vrot.slane %v2370, 4
        %v2378 = vrot.slane %v2372, 4
        %v2379 = vrot.slane %v2374, 4
        %v2380 = vsel %vm680, %v2375, %v2376
        %v2381 = vsel %vm1106, %v2366, %v2380
        %v2382 = vsel %vm680, %v2376, %v2377
        %v2383 = vsel %vm1106, %v2368, %v2382
        %v2384 = vsel %vm680, %v2377, %v2378
        %v2385 = vsel %vm1106, %v2370, %v2384
        %v2386 = vsel %vm680, %v2378, %v2379
        %v2387 = vsel %vm1106, %v2372, %v2386
        %v2393 = vadd.f32 %v2248, %v2381
        %v2394 = vadd.f32 %v2249, %v2383
        %v2395 = vadd.f32 %v2250, %v2385
        %v2396 = vadd.f32 %v2251, %v2387
        %v2397 = vadd.f32 %v2252, %v2374
        %s2398 = sld [smem:[#allocation4 + $0x42]]
        %v2399 = vstv %s2398
        %v2400 = vmul.f32 %v2399, %v2303
        %v2401 = vmul.f32 %v2399, %v2304
        %v2402 = vmul.f32 %v2399, %v2305
        %v2403 = vmul.f32 %v2399, %v2306
        %v2404 = vmul.f32 %v2399, %v2307
        %2410 = vrot.lane.b32.xlu0 %v2400, 96
        %v2411 = vpop.permute.xlu0 %2410
        %2412 = vrot.lane.b32.xlu0 %v2401, 96
        %v2413 = vpop.permute.xlu0 %2412
        %2414 = vrot.lane.b32.xlu0 %v2402, 96
        %v2415 = vpop.permute.xlu0 %2414
        %2416 = vrot.lane.b32.xlu0 %v2403, 96
        %v2417 = vpop.permute.xlu0 %2416
        %2418 = vrot.lane.b32.xlu0 %v2404, 96
        %v2419 = vpop.permute.xlu0 %2418
        %v2420 = vrot.slane %v2411, 4
        %v2421 = vrot.slane %v2413, 4
        %v2422 = vrot.slane %v2415, 4
        %v2423 = vrot.slane %v2417, 4
        %v2424 = vrot.slane %v2419, 4
        %v2425 = vsel %vm680, %v2420, %v2421
        %v2426 = vsel %vm1106, %v2411, %v2425
        %v2427 = vsel %vm680, %v2421, %v2422
        %v2428 = vsel %vm1106, %v2413, %v2427
        %v2429 = vsel %vm680, %v2422, %v2423
        %v2430 = vsel %vm1106, %v2415, %v2429
        %v2431 = vsel %vm680, %v2423, %v2424
        %v2432 = vsel %vm1106, %v2417, %v2431
        %v2438 = vadd.f32 %v2293, %v2426
        %v2439 = vadd.f32 %v2294, %v2428
        %v2440 = vadd.f32 %v2295, %v2430
        %v2441 = vadd.f32 %v2296, %v2432
        %v2442 = vadd.f32 %v2297, %v2419
        %v2443 = vld [vmem:[%s468 + $0x4] sm:$0xff]
        %v2444 = vld [vmem:[%s468 + $0xc] sm:$0xff]
        %v2445 = vld [vmem:[%s468 + $0x14] sm:$0xff]
        %v2446 = vld [vmem:[%s468 + $0x1c] sm:$0xff]
        %s2447 = sld [smem:[#allocation4 + $0xd]]
        %v2448 = vstv %s2447
        %v2449 = vmul.f32 %v2448, %v2443
        %v2450 = vmul.f32 %v2448, %v2444
        %v2451 = vmul.f32 %v2448, %v2445
        %v2452 = vmul.f32 %v2448, %v2446
        %2457 = vrot.lane.b32.xlu0 %v2449, 95
        %v2458 = vpop.permute.xlu0 %2457
        %2459 = vrot.lane.b32.xlu0 %v2450, 95
        %v2460 = vpop.permute.xlu0 %2459
        %2461 = vrot.lane.b32.xlu0 %v2451, 95
        %v2462 = vpop.permute.xlu0 %2461
        %2463 = vrot.lane.b32.xlu0 %v2452, 95
        %v2464 = vpop.permute.xlu0 %2463
        %v2465 = vrot.slane %v2458, 4
        %v2466 = vrot.slane %v2460, 4
        %v2467 = vrot.slane %v2462, 4
        %v2468 = vrot.slane %v2464, 4
        %v2469 = vsel %vm678, %v2465, %v2458
        %v2470 = vsel %vm680, %v2465, %v2466
        %v2471 = vsel %vm678, %v2470, %v2460
        %v2472 = vsel %vm680, %v2466, %v2467
        %v2473 = vsel %vm678, %v2472, %v2462
        %v2474 = vsel %vm680, %v2467, %v2468
        %v2475 = vsel %vm678, %v2474, %v2464
        %v2481 = vadd.f32 %v2348, %v2469
        %v2482 = vadd.f32 %v2349, %v2471
        %v2483 = vadd.f32 %v2350, %v2473
        %v2484 = vadd.f32 %v2351, %v2475
        %v2485 = vadd.f32 %v2352, %v2468
        %s2486 = sld [smem:[#allocation4 + $0x28]]
        %v2487 = vstv %s2486
        %v2488 = vmul.f32 %v2487, %v2443
        %v2489 = vmul.f32 %v2487, %v2444
        %v2490 = vmul.f32 %v2487, %v2445
        %v2491 = vmul.f32 %v2487, %v2446
        %2496 = vrot.lane.b32.xlu0 %v2488, 95
        %v2497 = vpop.permute.xlu0 %2496
        %2498 = vrot.lane.b32.xlu0 %v2489, 95
        %v2499 = vpop.permute.xlu0 %2498
        %2500 = vrot.lane.b32.xlu0 %v2490, 95
        %v2501 = vpop.permute.xlu0 %2500
        %2502 = vrot.lane.b32.xlu0 %v2491, 95
        %v2503 = vpop.permute.xlu0 %2502
        %v2504 = vrot.slane %v2497, 4
        %v2505 = vrot.slane %v2499, 4
        %v2506 = vrot.slane %v2501, 4
        %v2507 = vrot.slane %v2503, 4
        %v2508 = vsel %vm678, %v2504, %v2497
        %v2509 = vsel %vm680, %v2504, %v2505
        %v2510 = vsel %vm678, %v2509, %v2499
        %v2511 = vsel %vm680, %v2505, %v2506
        %v2512 = vsel %vm678, %v2511, %v2501
        %v2513 = vsel %vm680, %v2506, %v2507
        %v2514 = vsel %vm678, %v2513, %v2503
        %v2520 = vadd.f32 %v2393, %v2508
        %v2521 = vadd.f32 %v2394, %v2510
        %v2522 = vadd.f32 %v2395, %v2512
        %v2523 = vadd.f32 %v2396, %v2514
        %v2524 = vadd.f32 %v2397, %v2507
        %s2525 = sld [smem:[#allocation4 + $0x43]]
        %v2526 = vstv %s2525
        %v2527 = vmul.f32 %v2526, %v2443
        %v2528 = vmul.f32 %v2526, %v2444
        %v2529 = vmul.f32 %v2526, %v2445
        %v2530 = vmul.f32 %v2526, %v2446
        %2535 = vrot.lane.b32.xlu0 %v2527, 95
        %v2536 = vpop.permute.xlu0 %2535
        %2537 = vrot.lane.b32.xlu0 %v2528, 95
        %v2538 = vpop.permute.xlu0 %2537
        %2539 = vrot.lane.b32.xlu0 %v2529, 95
        %v2540 = vpop.permute.xlu0 %2539
        %2541 = vrot.lane.b32.xlu0 %v2530, 95
        %v2542 = vpop.permute.xlu0 %2541
        %v2543 = vrot.slane %v2536, 4
        %v2544 = vrot.slane %v2538, 4
        %v2545 = vrot.slane %v2540, 4
        %v2546 = vrot.slane %v2542, 4
        %v2547 = vsel %vm678, %v2543, %v2536
        %v2548 = vsel %vm680, %v2543, %v2544
        %v2549 = vsel %vm678, %v2548, %v2538
        %v2550 = vsel %vm680, %v2544, %v2545
        %v2551 = vsel %vm678, %v2550, %v2540
        %v2552 = vsel %vm680, %v2545, %v2546
        %v2553 = vsel %vm678, %v2552, %v2542
        %v2559 = vadd.f32 %v2438, %v2547
        %v2560 = vadd.f32 %v2439, %v2549
        %v2561 = vadd.f32 %v2440, %v2551
        %v2562 = vadd.f32 %v2441, %v2553
        %v2563 = vadd.f32 %v2442, %v2546
        %v2564 = vld [vmem:[%s468 + $0x4] sm:$0xff]
        %v2565 = vld [vmem:[%s468 + $0xc] sm:$0xff]
        %v2566 = vld [vmem:[%s468 + $0x14] sm:$0xff]
        %v2567 = vld [vmem:[%s468 + $0x1c] sm:$0xff]
        %v2568 = vld [vmem:[%s468 + $0x24] sm:$0xf]
        %v2569 = vmul.f32 %v2564, %v1353
        %v2570 = vmul.f32 %v2565, %v1355
        %v2571 = vmul.f32 %v2566, %v1357
        %v2572 = vmul.f32 %v2567, %v1359
        %v2573 = vmul.f32 %v2568, %v1351
        %s2574 = sld [smem:[#allocation4 + $0xe]]
        %v2575 = vstv %s2574
        %v2576 = vmul.f32 %v2575, %v2569
        %v2577 = vmul.f32 %v2575, %v2570
        %v2578 = vmul.f32 %v2575, %v2571
        %v2579 = vmul.f32 %v2575, %v2572
        %v2580 = vmul.f32 %v2575, %v2573
        %2586 = vrot.lane.b32.xlu0 %v2576, 94
        %v2587 = vpop.permute.xlu0 %2586
        %2588 = vrot.lane.b32.xlu0 %v2577, 94
        %v2589 = vpop.permute.xlu0 %2588
        %2590 = vrot.lane.b32.xlu0 %v2578, 94
        %v2591 = vpop.permute.xlu0 %2590
        %2592 = vrot.lane.b32.xlu0 %v2579, 94
        %v2593 = vpop.permute.xlu0 %2592
        %2594 = vrot.lane.b32.xlu0 %v2580, 94
        %v2595 = vpop.permute.xlu0 %2594
        %v2596 = vrot.slane %v2587, 4
        %v2597 = vrot.slane %v2589, 4
        %v2598 = vrot.slane %v2591, 4
        %v2599 = vrot.slane %v2593, 4
        %v2600 = vsel %vm1396, %v2596, %v2587
        %v2601 = vsel %vm680, %v2596, %v2597
        %v2602 = vsel %vm1396, %v2601, %v2589
        %v2603 = vsel %vm680, %v2597, %v2598
        %v2604 = vsel %vm1396, %v2603, %v2591
        %v2605 = vsel %vm680, %v2598, %v2599
        %v2606 = vsel %vm1396, %v2605, %v2593
        %v2607 = vsel %vm1396, %v2599, %v2595
        %v2613 = vadd.f32 %v2481, %v2600
        %v2614 = vadd.f32 %v2482, %v2602
        %v2615 = vadd.f32 %v2483, %v2604
        %v2616 = vadd.f32 %v2484, %v2606
        %v2617 = vadd.f32 %v2485, %v2607
        %s2618 = sld [smem:[#allocation4 + $0x29]]
        %v2619 = vstv %s2618
        %v2620 = vmul.f32 %v2619, %v2569
        %v2621 = vmul.f32 %v2619, %v2570
        %v2622 = vmul.f32 %v2619, %v2571
        %v2623 = vmul.f32 %v2619, %v2572
        %v2624 = vmul.f32 %v2619, %v2573
        %2630 = vrot.lane.b32.xlu0 %v2620, 94
        %v2631 = vpop.permute.xlu0 %2630
        %2632 = vrot.lane.b32.xlu0 %v2621, 94
        %v2633 = vpop.permute.xlu0 %2632
        %2634 = vrot.lane.b32.xlu0 %v2622, 94
        %v2635 = vpop.permute.xlu0 %2634
        %2636 = vrot.lane.b32.xlu0 %v2623, 94
        %v2637 = vpop.permute.xlu0 %2636
        %2638 = vrot.lane.b32.xlu0 %v2624, 94
        %v2639 = vpop.permute.xlu0 %2638
        %v2640 = vrot.slane %v2631, 4
        %v2641 = vrot.slane %v2633, 4
        %v2642 = vrot.slane %v2635, 4
        %v2643 = vrot.slane %v2637, 4
        %v2644 = vsel %vm1396, %v2640, %v2631
        %v2645 = vsel %vm680, %v2640, %v2641
        %v2646 = vsel %vm1396, %v2645, %v2633
        %v2647 = vsel %vm680, %v2641, %v2642
        %v2648 = vsel %vm1396, %v2647, %v2635
        %v2649 = vsel %vm680, %v2642, %v2643
        %v2650 = vsel %vm1396, %v2649, %v2637
        %v2651 = vsel %vm1396, %v2643, %v2639
        %v2657 = vadd.f32 %v2520, %v2644
        %v2658 = vadd.f32 %v2521, %v2646
        %v2659 = vadd.f32 %v2522, %v2648
        %v2660 = vadd.f32 %v2523, %v2650
        %v2661 = vadd.f32 %v2524, %v2651
        %s2662 = sld [smem:[#allocation4 + $0x44]]
        %v2663 = vstv %s2662
        %v2664 = vmul.f32 %v2663, %v2569
        %v2665 = vmul.f32 %v2663, %v2570
        %v2666 = vmul.f32 %v2663, %v2571
        %v2667 = vmul.f32 %v2663, %v2572
        %v2668 = vmul.f32 %v2663, %v2573
        %2674 = vrot.lane.b32.xlu0 %v2664, 94
        %v2675 = vpop.permute.xlu0 %2674
        %2676 = vrot.lane.b32.xlu0 %v2665, 94
        %v2677 = vpop.permute.xlu0 %2676
        %2678 = vrot.lane.b32.xlu0 %v2666, 94
        %v2679 = vpop.permute.xlu0 %2678
        %2680 = vrot.lane.b32.xlu0 %v2667, 94
        %v2681 = vpop.permute.xlu0 %2680
        %2682 = vrot.lane.b32.xlu0 %v2668, 94
        %v2683 = vpop.permute.xlu0 %2682
        %v2684 = vrot.slane %v2675, 4
        %v2685 = vrot.slane %v2677, 4
        %v2686 = vrot.slane %v2679, 4
        %v2687 = vrot.slane %v2681, 4
        %v2688 = vsel %vm1396, %v2684, %v2675
        %v2689 = vsel %vm680, %v2684, %v2685
        %v2690 = vsel %vm1396, %v2689, %v2677
        %v2691 = vsel %vm680, %v2685, %v2686
        %v2692 = vsel %vm1396, %v2691, %v2679
        %v2693 = vsel %vm680, %v2686, %v2687
        %v2694 = vsel %vm1396, %v2693, %v2681
        %v2695 = vsel %vm1396, %v2687, %v2683
        %v2701 = vadd.f32 %v2559, %v2688
        %v2702 = vadd.f32 %v2560, %v2690
        %v2703 = vadd.f32 %v2561, %v2692
        %v2704 = vadd.f32 %v2562, %v2694
        %v2705 = vadd.f32 %v2563, %v2695
        %v2706 = vld [vmem:[%s468 + $0x4] sm:$0xff]
        %v2707 = vld [vmem:[%s468 + $0xc] sm:$0xff]
        %v2708 = vld [vmem:[%s468 + $0x14] sm:$0xff]
        %v2709 = vld [vmem:[%s468 + $0x1c] sm:$0xff]
        %v2710 = vld [vmem:[%s468 + $0x24] sm:$0xf]
        %v2711 = vmul.f32 %v2706, %v1521
        %v2712 = vmul.f32 %v2707, %v1523
        %v2713 = vmul.f32 %v2708, %v1525
        %v2714 = vmul.f32 %v2709, %v1527
        %v2715 = vmul.f32 %v2710, %v1519
        %s2716 = sld [smem:[#allocation4 + $0xf]]
        %v2717 = vstv %s2716
        %v2718 = vmul.f32 %v2717, %v2711
        %v2719 = vmul.f32 %v2717, %v2712
        %v2720 = vmul.f32 %v2717, %v2713
        %v2721 = vmul.f32 %v2717, %v2714
        %v2722 = vmul.f32 %v2717, %v2715
        %2728 = vrot.lane.b32.xlu0 %v2718, 64
        %v2729 = vpop.permute.xlu0 %2728
        %2730 = vrot.lane.b32.xlu0 %v2719, 64
        %v2731 = vpop.permute.xlu0 %2730
        %2732 = vrot.lane.b32.xlu0 %v2720, 64
        %v2733 = vpop.permute.xlu0 %2732
        %2734 = vrot.lane.b32.xlu0 %v2721, 64
        %v2735 = vpop.permute.xlu0 %2734
        %2736 = vrot.lane.b32.xlu0 %v2722, 64
        %v2737 = vpop.permute.xlu0 %2736
        %v2738 = vrot.slane %v2729, 4
        %v2739 = vrot.slane %v2731, 4
        %v2740 = vrot.slane %v2733, 4
        %v2741 = vrot.slane %v2735, 4
        %v2742 = vsel %vm1564, %v2738, %v2729
        %v2743 = vsel %vm680, %v2738, %v2739
        %v2744 = vsel %vm1564, %v2743, %v2731
        %v2745 = vsel %vm680, %v2739, %v2740
        %v2746 = vsel %vm1564, %v2745, %v2733
        %v2747 = vsel %vm680, %v2740, %v2741
        %v2748 = vsel %vm1564, %v2747, %v2735
        %v2749 = vsel %vm1564, %v2741, %v2737
        %v2755 = vadd.f32 %v2613, %v2742
        %v2756 = vadd.f32 %v2614, %v2744
        %v2757 = vadd.f32 %v2615, %v2746
        %v2758 = vadd.f32 %v2616, %v2748
        %v2759 = vadd.f32 %v2617, %v2749
        %s2760 = sld [smem:[#allocation4 + $0x2a]]
        %v2761 = vstv %s2760
        %v2762 = vmul.f32 %v2761, %v2711
        %v2763 = vmul.f32 %v2761, %v2712
        %v2764 = vmul.f32 %v2761, %v2713
        %v2765 = vmul.f32 %v2761, %v2714
        %v2766 = vmul.f32 %v2761, %v2715
        %2772 = vrot.lane.b32.xlu0 %v2762, 64
        %v2773 = vpop.permute.xlu0 %2772
        %2774 = vrot.lane.b32.xlu0 %v2763, 64
        %v2775 = vpop.permute.xlu0 %2774
        %2776 = vrot.lane.b32.xlu0 %v2764, 64
        %v2777 = vpop.permute.xlu0 %2776
        %2778 = vrot.lane.b32.xlu0 %v2765, 64
        %v2779 = vpop.permute.xlu0 %2778
        %2780 = vrot.lane.b32.xlu0 %v2766, 64
        %v2781 = vpop.permute.xlu0 %2780
        %v2782 = vrot.slane %v2773, 4
        %v2783 = vrot.slane %v2775, 4
        %v2784 = vrot.slane %v2777, 4
        %v2785 = vrot.slane %v2779, 4
        %v2786 = vsel %vm1564, %v2782, %v2773
        %v2787 = vsel %vm680, %v2782, %v2783
        %v2788 = vsel %vm1564, %v2787, %v2775
        %v2789 = vsel %vm680, %v2783, %v2784
        %v2790 = vsel %vm1564, %v2789, %v2777
        %v2791 = vsel %vm680, %v2784, %v2785
        %v2792 = vsel %vm1564, %v2791, %v2779
        %v2793 = vsel %vm1564, %v2785, %v2781
        %v2799 = vadd.f32 %v2657, %v2786
        %v2800 = vadd.f32 %v2658, %v2788
        %v2801 = vadd.f32 %v2659, %v2790
        %v2802 = vadd.f32 %v2660, %v2792
        %v2803 = vadd.f32 %v2661, %v2793
        %s2804 = sld [smem:[#allocation4 + $0x45]]
        %v2805 = vstv %s2804
        %v2806 = vmul.f32 %v2805, %v2711
        %v2807 = vmul.f32 %v2805, %v2712
        %v2808 = vmul.f32 %v2805, %v2713
        %v2809 = vmul.f32 %v2805, %v2714
        %v2810 = vmul.f32 %v2805, %v2715
        %2816 = vrot.lane.b32.xlu0 %v2806, 64
        %v2817 = vpop.permute.xlu0 %2816
        %2818 = vrot.lane.b32.xlu0 %v2807, 64
        %v2819 = vpop.permute.xlu0 %2818
        %2820 = vrot.lane.b32.xlu0 %v2808, 64
        %v2821 = vpop.permute.xlu0 %2820
        %2822 = vrot.lane.b32.xlu0 %v2809, 64
        %v2823 = vpop.permute.xlu0 %2822
        %2824 = vrot.lane.b32.xlu0 %v2810, 64
        %v2825 = vpop.permute.xlu0 %2824
        %v2826 = vrot.slane %v2817, 4
        %v2827 = vrot.slane %v2819, 4
        %v2828 = vrot.slane %v2821, 4
        %v2829 = vrot.slane %v2823, 4
        %v2830 = vsel %vm1564, %v2826, %v2817
        %v2831 = vsel %vm680, %v2826, %v2827
        %v2832 = vsel %vm1564, %v2831, %v2819
        %v2833 = vsel %vm680, %v2827, %v2828
        %v2834 = vsel %vm1564, %v2833, %v2821
        %v2835 = vsel %vm680, %v2828, %v2829
        %v2836 = vsel %vm1564, %v2835, %v2823
        %v2837 = vsel %vm1564, %v2829, %v2825
        %v2843 = vadd.f32 %v2701, %v2830
        %v2844 = vadd.f32 %v2702, %v2832
        %v2845 = vadd.f32 %v2703, %v2834
        %v2846 = vadd.f32 %v2704, %v2836
        %v2847 = vadd.f32 %v2705, %v2837
        %v2848 = vld [vmem:[%s468 + $0x4] sm:$0xff]
        %v2849 = vld [vmem:[%s468 + $0xc] sm:$0xff]
        %v2850 = vld [vmem:[%s468 + $0x14] sm:$0xff]
        %v2851 = vld [vmem:[%s468 + $0x1c] sm:$0xff]
        %v2852 = vld [vmem:[%s468 + $0x24] sm:$0xf]
        %s2853 = sld [smem:[#allocation4 + $0x10]]
        %v2854 = vstv %s2853
        %v2855 = vmul.f32 %v2854, %v2848
        %v2856 = vmul.f32 %v2854, %v2849
        %v2857 = vmul.f32 %v2854, %v2850
        %v2858 = vmul.f32 %v2854, %v2851
        %v2859 = vmul.f32 %v2854, %v2852
        %2865 = vrot.lane.b32.xlu0 %v2855, 63
        %v2866 = vpop.permute.xlu0 %2865
        %2867 = vrot.lane.b32.xlu0 %v2856, 63
        %v2868 = vpop.permute.xlu0 %2867
        %2869 = vrot.lane.b32.xlu0 %v2857, 63
        %v2870 = vpop.permute.xlu0 %2869
        %2871 = vrot.lane.b32.xlu0 %v2858, 63
        %v2872 = vpop.permute.xlu0 %2871
        %2873 = vrot.lane.b32.xlu0 %v2859, 63
        %v2874 = vpop.permute.xlu0 %2873
        %v2875 = vrot.slane %v2866, 4
        %v2876 = vrot.slane %v2868, 4
        %v2877 = vrot.slane %v2870, 4
        %v2878 = vrot.slane %v2872, 4
        %v2879 = vsel %vm1702, %v2875, %v2866
        %v2880 = vsel %vm680, %v2875, %v2876
        %v2881 = vsel %vm1702, %v2880, %v2868
        %v2882 = vsel %vm680, %v2876, %v2877
        %v2883 = vsel %vm1702, %v2882, %v2870
        %v2884 = vsel %vm680, %v2877, %v2878
        %v2885 = vsel %vm1702, %v2884, %v2872
        %v2886 = vsel %vm1702, %v2878, %v2874
        %v2892 = vadd.f32 %v2755, %v2879
        %v2893 = vadd.f32 %v2756, %v2881
        %v2894 = vadd.f32 %v2757, %v2883
        %v2895 = vadd.f32 %v2758, %v2885
        %v2896 = vadd.f32 %v2759, %v2886
        %s2897 = sld [smem:[#allocation4 + $0x2b]]
        %v2898 = vstv %s2897
        %v2899 = vmul.f32 %v2898, %v2848
        %v2900 = vmul.f32 %v2898, %v2849
        %v2901 = vmul.f32 %v2898, %v2850
        %v2902 = vmul.f32 %v2898, %v2851
        %v2903 = vmul.f32 %v2898, %v2852
        %2909 = vrot.lane.b32.xlu0 %v2899, 63
        %v2910 = vpop.permute.xlu0 %2909
        %2911 = vrot.lane.b32.xlu0 %v2900, 63
        %v2912 = vpop.permute.xlu0 %2911
        %2913 = vrot.lane.b32.xlu0 %v2901, 63
        %v2914 = vpop.permute.xlu0 %2913
        %2915 = vrot.lane.b32.xlu0 %v2902, 63
        %v2916 = vpop.permute.xlu0 %2915
        %2917 = vrot.lane.b32.xlu0 %v2903, 63
        %v2918 = vpop.permute.xlu0 %2917
        %v2919 = vrot.slane %v2910, 4
        %v2920 = vrot.slane %v2912, 4
        %v2921 = vrot.slane %v2914, 4
        %v2922 = vrot.slane %v2916, 4
        %v2923 = vsel %vm1702, %v2919, %v2910
        %v2924 = vsel %vm680, %v2919, %v2920
        %v2925 = vsel %vm1702, %v2924, %v2912
        %v2926 = vsel %vm680, %v2920, %v2921
        %v2927 = vsel %vm1702, %v2926, %v2914
        %v2928 = vsel %vm680, %v2921, %v2922
        %v2929 = vsel %vm1702, %v2928, %v2916
        %v2930 = vsel %vm1702, %v2922, %v2918
        %v2936 = vadd.f32 %v2799, %v2923
        %v2937 = vadd.f32 %v2800, %v2925
        %v2938 = vadd.f32 %v2801, %v2927
        %v2939 = vadd.f32 %v2802, %v2929
        %v2940 = vadd.f32 %v2803, %v2930
        %s2941 = sld [smem:[#allocation4 + $0x46]]
        %v2942 = vstv %s2941
        %v2943 = vmul.f32 %v2942, %v2848
        %v2944 = vmul.f32 %v2942, %v2849
        %v2945 = vmul.f32 %v2942, %v2850
        %v2946 = vmul.f32 %v2942, %v2851
        %v2947 = vmul.f32 %v2942, %v2852
        %2953 = vrot.lane.b32.xlu0 %v2943, 63
        %v2954 = vpop.permute.xlu0 %2953
        %2955 = vrot.lane.b32.xlu0 %v2944, 63
        %v2956 = vpop.permute.xlu0 %2955
        %2957 = vrot.lane.b32.xlu0 %v2945, 63
        %v2958 = vpop.permute.xlu0 %2957
        %2959 = vrot.lane.b32.xlu0 %v2946, 63
        %v2960 = vpop.permute.xlu0 %2959
        %2961 = vrot.lane.b32.xlu0 %v2947, 63
        %v2962 = vpop.permute.xlu0 %2961
        %v2963 = vrot.slane %v2954, 4
        %v2964 = vrot.slane %v2956, 4
        %v2965 = vrot.slane %v2958, 4
        %v2966 = vrot.slane %v2960, 4
        %v2967 = vsel %vm1702, %v2963, %v2954
        %v2968 = vsel %vm680, %v2963, %v2964
        %v2969 = vsel %vm1702, %v2968, %v2956
        %v2970 = vsel %vm680, %v2964, %v2965
        %v2971 = vsel %vm1702, %v2970, %v2958
        %v2972 = vsel %vm680, %v2965, %v2966
        %v2973 = vsel %vm1702, %v2972, %v2960
        %v2974 = vsel %vm1702, %v2966, %v2962
        %v2980 = vadd.f32 %v2843, %v2967
        %v2981 = vadd.f32 %v2844, %v2969
        %v2982 = vadd.f32 %v2845, %v2971
        %v2983 = vadd.f32 %v2846, %v2973
        %v2984 = vadd.f32 %v2847, %v2974
        %v2985 = vmul.f32 %v2848, %v1822
        %v2986 = vmul.f32 %v2849, %v1824
        %v2987 = vmul.f32 %v2850, %v1826
        %v2988 = vmul.f32 %v2851, %v1828
        %v2989 = vmul.f32 %v2852, %v1820
        %s2990 = sld [smem:[#allocation4 + $0x11]]
        %v2991 = vstv %s2990
        %v2992 = vmul.f32 %v2991, %v2985
        %v2993 = vmul.f32 %v2991, %v2986
        %v2994 = vmul.f32 %v2991, %v2987
        %v2995 = vmul.f32 %v2991, %v2988
        %v2996 = vmul.f32 %v2991, %v2989
        %3002 = vrot.lane.b32.xlu0 %v2992, 62
        %v3003 = vpop.permute.xlu0 %3002
        %3004 = vrot.lane.b32.xlu0 %v2993, 62
        %v3005 = vpop.permute.xlu0 %3004
        %3006 = vrot.lane.b32.xlu0 %v2994, 62
        %v3007 = vpop.permute.xlu0 %3006
        %3008 = vrot.lane.b32.xlu0 %v2995, 62
        %v3009 = vpop.permute.xlu0 %3008
        %3010 = vrot.lane.b32.xlu0 %v2996, 62
        %v3011 = vpop.permute.xlu0 %3010
        %v3012 = vrot.slane %v3003, 4
        %v3013 = vrot.slane %v3005, 4
        %v3014 = vrot.slane %v3007, 4
        %v3015 = vrot.slane %v3009, 4
        %v3016 = vsel %vm1865, %v3012, %v3003
        %v3017 = vsel %vm680, %v3012, %v3013
        %v3018 = vsel %vm1865, %v3017, %v3005
        %v3019 = vsel %vm680, %v3013, %v3014
        %v3020 = vsel %vm1865, %v3019, %v3007
        %v3021 = vsel %vm680, %v3014, %v3015
        %v3022 = vsel %vm1865, %v3021, %v3009
        %v3023 = vsel %vm1865, %v3015, %v3011
        %v3029 = vadd.f32 %v2892, %v3016
        %v3030 = vadd.f32 %v2893, %v3018
        %v3031 = vadd.f32 %v2894, %v3020
        %v3032 = vadd.f32 %v2895, %v3022
        %v3033 = vadd.f32 %v2896, %v3023
        %s3034 = sld [smem:[#allocation4 + $0x2c]]
        %v3035 = vstv %s3034
        %v3036 = vmul.f32 %v3035, %v2985
        %v3037 = vmul.f32 %v3035, %v2986
        %v3038 = vmul.f32 %v3035, %v2987
        %v3039 = vmul.f32 %v3035, %v2988
        %v3040 = vmul.f32 %v3035, %v2989
        %3046 = vrot.lane.b32.xlu0 %v3036, 62
        %v3047 = vpop.permute.xlu0 %3046
        %3048 = vrot.lane.b32.xlu0 %v3037, 62
        %v3049 = vpop.permute.xlu0 %3048
        %3050 = vrot.lane.b32.xlu0 %v3038, 62
        %v3051 = vpop.permute.xlu0 %3050
        %3052 = vrot.lane.b32.xlu0 %v3039, 62
        %v3053 = vpop.permute.xlu0 %3052
        %3054 = vrot.lane.b32.xlu0 %v3040, 62
        %v3055 = vpop.permute.xlu0 %3054
        %v3056 = vrot.slane %v3047, 4
        %v3057 = vrot.slane %v3049, 4
        %v3058 = vrot.slane %v3051, 4
        %v3059 = vrot.slane %v3053, 4
        %v3060 = vsel %vm1865, %v3056, %v3047
        %v3061 = vsel %vm680, %v3056, %v3057
        %v3062 = vsel %vm1865, %v3061, %v3049
        %v3063 = vsel %vm680, %v3057, %v3058
        %v3064 = vsel %vm1865, %v3063, %v3051
        %v3065 = vsel %vm680, %v3058, %v3059
        %v3066 = vsel %vm1865, %v3065, %v3053
        %v3067 = vsel %vm1865, %v3059, %v3055
        %v3073 = vadd.f32 %v2936, %v3060
        %v3074 = vadd.f32 %v2937, %v3062
        %v3075 = vadd.f32 %v2938, %v3064
        %v3076 = vadd.f32 %v2939, %v3066
        %v3077 = vadd.f32 %v2940, %v3067
        %s3078 = sld [smem:[#allocation4 + $0x47]]
        %v3079 = vstv %s3078
        %v3080 = vmul.f32 %v3079, %v2985
        %v3081 = vmul.f32 %v3079, %v2986
        %v3082 = vmul.f32 %v3079, %v2987
        %v3083 = vmul.f32 %v3079, %v2988
        %v3084 = vmul.f32 %v3079, %v2989
        %3090 = vrot.lane.b32.xlu0 %v3080, 62
        %v3091 = vpop.permute.xlu0 %3090
        %3092 = vrot.lane.b32.xlu0 %v3081, 62
        %v3093 = vpop.permute.xlu0 %3092
        %3094 = vrot.lane.b32.xlu0 %v3082, 62
        %v3095 = vpop.permute.xlu0 %3094
        %3096 = vrot.lane.b32.xlu0 %v3083, 62
        %v3097 = vpop.permute.xlu0 %3096
        %3098 = vrot.lane.b32.xlu0 %v3084, 62
        %v3099 = vpop.permute.xlu0 %3098
        %v3100 = vrot.slane %v3091, 4
        %v3101 = vrot.slane %v3093, 4
        %v3102 = vrot.slane %v3095, 4
        %v3103 = vrot.slane %v3097, 4
        %v3104 = vsel %vm1865, %v3100, %v3091
        %v3105 = vsel %vm680, %v3100, %v3101
        %v3106 = vsel %vm1865, %v3105, %v3093
        %v3107 = vsel %vm680, %v3101, %v3102
        %v3108 = vsel %vm1865, %v3107, %v3095
        %v3109 = vsel %vm680, %v3102, %v3103
        %v3110 = vsel %vm1865, %v3109, %v3097
        %v3111 = vsel %vm1865, %v3103, %v3099
        %v3117 = vadd.f32 %v2980, %v3104
        %v3118 = vadd.f32 %v2981, %v3106
        %v3119 = vadd.f32 %v2982, %v3108
        %v3120 = vadd.f32 %v2983, %v3110
        %v3121 = vadd.f32 %v2984, %v3111
        %v3122 = vld [vmem:[%s558] sm:$0xff]
        %v3123 = vld [vmem:[%s558 + $0x8] sm:$0xff]
        %v3124 = vld [vmem:[%s558 + $0x10] sm:$0xff]
        %v3125 = vld [vmem:[%s558 + $0x18] sm:$0xff]
        %v3126 = vld [vmem:[%s558 + $0x20] sm:$0xf]
        %v3127 = vmul.f32 %v3122, %v679
        %v3128 = vmul.f32 %v3123, %v682
        %v3129 = vmul.f32 %v3124, %v684
        %v3130 = vmul.f32 %v3125, %v686
        %v3131 = vmul.f32 %v3126, %v677
        %s3132 = sld [smem:[#allocation4 + $0x12]]
        %v3133 = vstv %s3132
        %v3134 = vmul.f32 %v3133, %v3127
        %v3135 = vmul.f32 %v3133, %v3128
        %v3136 = vmul.f32 %v3133, %v3129
        %v3137 = vmul.f32 %v3133, %v3130
        %v3138 = vmul.f32 %v3133, %v3131
        %v3139 = vadd.f32 %v3029, %v3134
        %v3140 = vadd.f32 %v3030, %v3135
        %v3141 = vadd.f32 %v3031, %v3136
        %v3142 = vadd.f32 %v3032, %v3137
        %v3143 = vadd.f32 %v3033, %v3138
        %s3144 = sld [smem:[#allocation4 + $0x2d]]
        %v3145 = vstv %s3144
        %v3146 = vmul.f32 %v3145, %v3127
        %v3147 = vmul.f32 %v3145, %v3128
        %v3148 = vmul.f32 %v3145, %v3129
        %v3149 = vmul.f32 %v3145, %v3130
        %v3150 = vmul.f32 %v3145, %v3131
        %v3151 = vadd.f32 %v3073, %v3146
        %v3152 = vadd.f32 %v3074, %v3147
        %v3153 = vadd.f32 %v3075, %v3148
        %v3154 = vadd.f32 %v3076, %v3149
        %v3155 = vadd.f32 %v3077, %v3150
        %s3156 = sld [smem:[#allocation4 + $0x48]]
        %v3157 = vstv %s3156
        %v3158 = vmul.f32 %v3157, %v3127
        %v3159 = vmul.f32 %v3157, %v3128
        %v3160 = vmul.f32 %v3157, %v3129
        %v3161 = vmul.f32 %v3157, %v3130
        %v3162 = vmul.f32 %v3157, %v3131
        %v3163 = vadd.f32 %v3117, %v3158
        %v3164 = vadd.f32 %v3118, %v3159
        %v3165 = vadd.f32 %v3119, %v3160
        %v3166 = vadd.f32 %v3120, %v3161
        %v3167 = vadd.f32 %v3121, %v3162
        %v3168 = vld [vmem:[%s558] sm:$0xff]
        %v3169 = vld [vmem:[%s558 + $0x8] sm:$0xff]
        %v3170 = vld [vmem:[%s558 + $0x10] sm:$0xff]
        %v3171 = vld [vmem:[%s558 + $0x18] sm:$0xff]
        %v3172 = vld [vmem:[%s558 + $0x20] sm:$0xf]
        %s3173 = sld [smem:[#allocation4 + $0x13]]
        %v3174 = vstv %s3173
        %v3175 = vmul.f32 %v3174, %v3168
        %v3176 = vmul.f32 %v3174, %v3169
        %v3177 = vmul.f32 %v3174, %v3170
        %v3178 = vmul.f32 %v3174, %v3171
        %v3179 = vmul.f32 %v3174, %v3172
        %3185 = vrot.lane.b32.xlu0 %v3175, 127
        %v3186 = vpop.permute.xlu0 %3185
        %3187 = vrot.lane.b32.xlu0 %v3176, 127
        %v3188 = vpop.permute.xlu0 %3187
        %3189 = vrot.lane.b32.xlu0 %v3177, 127
        %v3190 = vpop.permute.xlu0 %3189
        %3191 = vrot.lane.b32.xlu0 %v3178, 127
        %v3192 = vpop.permute.xlu0 %3191
        %3193 = vrot.lane.b32.xlu0 %v3179, 127
        %v3194 = vpop.permute.xlu0 %3193
        %v3195 = vrot.slane %v3186, 4
        %v3196 = vrot.slane %v3188, 4
        %v3197 = vrot.slane %v3190, 4
        %v3198 = vrot.slane %v3192, 4
        %v3199 = vrot.slane %v3194, 4
        %v3200 = vsel %vm680, %v3195, %v3196
        %v3201 = vsel %vm766, %v3186, %v3200
        %v3202 = vsel %vm680, %v3196, %v3197
        %v3203 = vsel %vm766, %v3188, %v3202
        %v3204 = vsel %vm680, %v3197, %v3198
        %v3205 = vsel %vm766, %v3190, %v3204
        %v3206 = vsel %vm680, %v3198, %v3199
        %v3207 = vsel %vm766, %v3192, %v3206
        %v3213 = vadd.f32 %v3139, %v3201
        %v3214 = vadd.f32 %v3140, %v3203
        %v3215 = vadd.f32 %v3141, %v3205
        %v3216 = vadd.f32 %v3142, %v3207
        %v3217 = vadd.f32 %v3143, %v3194
        %s3218 = sld [smem:[#allocation4 + $0x2e]]
        %v3219 = vstv %s3218
        %v3220 = vmul.f32 %v3219, %v3168
        %v3221 = vmul.f32 %v3219, %v3169
        %v3222 = vmul.f32 %v3219, %v3170
        %v3223 = vmul.f32 %v3219, %v3171
        %v3224 = vmul.f32 %v3219, %v3172
        %3230 = vrot.lane.b32.xlu0 %v3220, 127
        %v3231 = vpop.permute.xlu0 %3230
        %3232 = vrot.lane.b32.xlu0 %v3221, 127
        %v3233 = vpop.permute.xlu0 %3232
        %3234 = vrot.lane.b32.xlu0 %v3222, 127
        %v3235 = vpop.permute.xlu0 %3234
        %3236 = vrot.lane.b32.xlu0 %v3223, 127
        %v3237 = vpop.permute.xlu0 %3236
        %3238 = vrot.lane.b32.xlu0 %v3224, 127
        %v3239 = vpop.permute.xlu0 %3238
        %v3240 = vrot.slane %v3231, 4
        %v3241 = vrot.slane %v3233, 4
        %v3242 = vrot.slane %v3235, 4
        %v3243 = vrot.slane %v3237, 4
        %v3244 = vrot.slane %v3239, 4
        %v3245 = vsel %vm680, %v3240, %v3241
        %v3246 = vsel %vm766, %v3231, %v3245
        %v3247 = vsel %vm680, %v3241, %v3242
        %v3248 = vsel %vm766, %v3233, %v3247
        %v3249 = vsel %vm680, %v3242, %v3243
        %v3250 = vsel %vm766, %v3235, %v3249
        %v3251 = vsel %vm680, %v3243, %v3244
        %v3252 = vsel %vm766, %v3237, %v3251
        %v3258 = vadd.f32 %v3151, %v3246
        %v3259 = vadd.f32 %v3152, %v3248
        %v3260 = vadd.f32 %v3153, %v3250
        %v3261 = vadd.f32 %v3154, %v3252
        %v3262 = vadd.f32 %v3155, %v3239
        %s3263 = sld [smem:[#allocation4 + $0x49]]
        %v3264 = vstv %s3263
        %v3265 = vmul.f32 %v3264, %v3168
        %v3266 = vmul.f32 %v3264, %v3169
        %v3267 = vmul.f32 %v3264, %v3170
        %v3268 = vmul.f32 %v3264, %v3171
        %v3269 = vmul.f32 %v3264, %v3172
        %3275 = vrot.lane.b32.xlu0 %v3265, 127
        %v3276 = vpop.permute.xlu0 %3275
        %3277 = vrot.lane.b32.xlu0 %v3266, 127
        %v3278 = vpop.permute.xlu0 %3277
        %3279 = vrot.lane.b32.xlu0 %v3267, 127
        %v3280 = vpop.permute.xlu0 %3279
        %3281 = vrot.lane.b32.xlu0 %v3268, 127
        %v3282 = vpop.permute.xlu0 %3281
        %3283 = vrot.lane.b32.xlu0 %v3269, 127
        %v3284 = vpop.permute.xlu0 %3283
        %v3285 = vrot.slane %v3276, 4
        %v3286 = vrot.slane %v3278, 4
        %v3287 = vrot.slane %v3280, 4
        %v3288 = vrot.slane %v3282, 4
        %v3289 = vrot.slane %v3284, 4
        %v3290 = vsel %vm680, %v3285, %v3286
        %v3291 = vsel %vm766, %v3276, %v3290
        %v3292 = vsel %vm680, %v3286, %v3287
        %v3293 = vsel %vm766, %v3278, %v3292
        %v3294 = vsel %vm680, %v3287, %v3288
        %v3295 = vsel %vm766, %v3280, %v3294
        %v3296 = vsel %vm680, %v3288, %v3289
        %v3297 = vsel %vm766, %v3282, %v3296
        %v3303 = vadd.f32 %v3163, %v3291
        %v3304 = vadd.f32 %v3164, %v3293
        %v3305 = vadd.f32 %v3165, %v3295
        %v3306 = vadd.f32 %v3166, %v3297
        %v3307 = vadd.f32 %v3167, %v3284
        %v3308 = vmul.f32 %v3168, %v891
        %v3309 = vmul.f32 %v3169, %v893
        %v3310 = vmul.f32 %v3170, %v895
        %v3311 = vmul.f32 %v3171, %v897
        %v3312 = vmul.f32 %v3172, %v889
        %s3313 = sld [smem:[#allocation4 + $0x14]]
        %v3314 = vstv %s3313
        %v3315 = vmul.f32 %v3314, %v3308
        %v3316 = vmul.f32 %v3314, %v3309
        %v3317 = vmul.f32 %v3314, %v3310
        %v3318 = vmul.f32 %v3314, %v3311
        %v3319 = vmul.f32 %v3314, %v3312
        %3325 = vrot.lane.b32.xlu0 %v3315, 126
        %v3326 = vpop.permute.xlu0 %3325
        %3327 = vrot.lane.b32.xlu0 %v3316, 126
        %v3328 = vpop.permute.xlu0 %3327
        %3329 = vrot.lane.b32.xlu0 %v3317, 126
        %v3330 = vpop.permute.xlu0 %3329
        %3331 = vrot.lane.b32.xlu0 %v3318, 126
        %v3332 = vpop.permute.xlu0 %3331
        %3333 = vrot.lane.b32.xlu0 %v3319, 126
        %v3334 = vpop.permute.xlu0 %3333
        %v3335 = vrot.slane %v3326, 4
        %v3336 = vrot.slane %v3328, 4
        %v3337 = vrot.slane %v3330, 4
        %v3338 = vrot.slane %v3332, 4
        %v3339 = vrot.slane %v3334, 4
        %v3340 = vsel %vm680, %v3335, %v3336
        %v3341 = vsel %vm936, %v3326, %v3340
        %v3342 = vsel %vm680, %v3336, %v3337
        %v3343 = vsel %vm936, %v3328, %v3342
        %v3344 = vsel %vm680, %v3337, %v3338
        %v3345 = vsel %vm936, %v3330, %v3344
        %v3346 = vsel %vm680, %v3338, %v3339
        %v3347 = vsel %vm936, %v3332, %v3346
        %v3353 = vadd.f32 %v3213, %v3341
        %v3354 = vadd.f32 %v3214, %v3343
        %v3355 = vadd.f32 %v3215, %v3345
        %v3356 = vadd.f32 %v3216, %v3347
        %v3357 = vadd.f32 %v3217, %v3334
        %s3358 = sld [smem:[#allocation4 + $0x2f]]
        %v3359 = vstv %s3358
        %v3360 = vmul.f32 %v3359, %v3308
        %v3361 = vmul.f32 %v3359, %v3309
        %v3362 = vmul.f32 %v3359, %v3310
        %v3363 = vmul.f32 %v3359, %v3311
        %v3364 = vmul.f32 %v3359, %v3312
        %3370 = vrot.lane.b32.xlu0 %v3360, 126
        %v3371 = vpop.permute.xlu0 %3370
        %3372 = vrot.lane.b32.xlu0 %v3361, 126
        %v3373 = vpop.permute.xlu0 %3372
        %3374 = vrot.lane.b32.xlu0 %v3362, 126
        %v3375 = vpop.permute.xlu0 %3374
        %3376 = vrot.lane.b32.xlu0 %v3363, 126
        %v3377 = vpop.permute.xlu0 %3376
        %3378 = vrot.lane.b32.xlu0 %v3364, 126
        %v3379 = vpop.permute.xlu0 %3378
        %v3380 = vrot.slane %v3371, 4
        %v3381 = vrot.slane %v3373, 4
        %v3382 = vrot.slane %v3375, 4
        %v3383 = vrot.slane %v3377, 4
        %v3384 = vrot.slane %v3379, 4
        %v3385 = vsel %vm680, %v3380, %v3381
        %v3386 = vsel %vm936, %v3371, %v3385
        %v3387 = vsel %vm680, %v3381, %v3382
        %v3388 = vsel %vm936, %v3373, %v3387
        %v3389 = vsel %vm680, %v3382, %v3383
        %v3390 = vsel %vm936, %v3375, %v3389
        %v3391 = vsel %vm680, %v3383, %v3384
        %v3392 = vsel %vm936, %v3377, %v3391
        %v3398 = vadd.f32 %v3258, %v3386
        %v3399 = vadd.f32 %v3259, %v3388
        %v3400 = vadd.f32 %v3260, %v3390
        %v3401 = vadd.f32 %v3261, %v3392
        %v3402 = vadd.f32 %v3262, %v3379
        %s3403 = sld [smem:[#allocation4 + $0x4a]]
        %v3404 = vstv %s3403
        %v3405 = vmul.f32 %v3404, %v3308
        %v3406 = vmul.f32 %v3404, %v3309
        %v3407 = vmul.f32 %v3404, %v3310
        %v3408 = vmul.f32 %v3404, %v3311
        %v3409 = vmul.f32 %v3404, %v3312
        %3415 = vrot.lane.b32.xlu0 %v3405, 126
        %v3416 = vpop.permute.xlu0 %3415
        %3417 = vrot.lane.b32.xlu0 %v3406, 126
        %v3418 = vpop.permute.xlu0 %3417
        %3419 = vrot.lane.b32.xlu0 %v3407, 126
        %v3420 = vpop.permute.xlu0 %3419
        %3421 = vrot.lane.b32.xlu0 %v3408, 126
        %v3422 = vpop.permute.xlu0 %3421
        %3423 = vrot.lane.b32.xlu0 %v3409, 126
        %v3424 = vpop.permute.xlu0 %3423
        %v3425 = vrot.slane %v3416, 4
        %v3426 = vrot.slane %v3418, 4
        %v3427 = vrot.slane %v3420, 4
        %v3428 = vrot.slane %v3422, 4
        %v3429 = vrot.slane %v3424, 4
        %v3430 = vsel %vm680, %v3425, %v3426
        %v3431 = vsel %vm936, %v3416, %v3430
        %v3432 = vsel %vm680, %v3426, %v3427
        %v3433 = vsel %vm936, %v3418, %v3432
        %v3434 = vsel %vm680, %v3427, %v3428
        %v3435 = vsel %vm936, %v3420, %v3434
        %v3436 = vsel %vm680, %v3428, %v3429
        %v3437 = vsel %vm936, %v3422, %v3436
        %v3443 = vadd.f32 %v3303, %v3431
        %v3444 = vadd.f32 %v3304, %v3433
        %v3445 = vadd.f32 %v3305, %v3435
        %v3446 = vadd.f32 %v3306, %v3437
        %v3447 = vadd.f32 %v3307, %v3424
        %v3448 = vld [vmem:[%s558] sm:$0xff]
        %v3449 = vld [vmem:[%s558 + $0x8] sm:$0xff]
        %v3450 = vld [vmem:[%s558 + $0x10] sm:$0xff]
        %v3451 = vld [vmem:[%s558 + $0x18] sm:$0xff]
        %v3452 = vld [vmem:[%s558 + $0x20] sm:$0xf]
        %v3453 = vmul.f32 %v3448, %v1061
        %v3454 = vmul.f32 %v3449, %v1063
        %v3455 = vmul.f32 %v3450, %v1065
        %v3456 = vmul.f32 %v3451, %v1067
        %v3457 = vmul.f32 %v3452, %v1060
        %s3458 = sld [smem:[#allocation4 + $0x15]]
        %v3459 = vstv %s3458
        %v3460 = vmul.f32 %v3459, %v3453
        %v3461 = vmul.f32 %v3459, %v3454
        %v3462 = vmul.f32 %v3459, %v3455
        %v3463 = vmul.f32 %v3459, %v3456
        %v3464 = vmul.f32 %v3459, %v3457
        %3470 = vrot.lane.b32.xlu0 %v3460, 96
        %v3471 = vpop.permute.xlu0 %3470
        %3472 = vrot.lane.b32.xlu0 %v3461, 96
        %v3473 = vpop.permute.xlu0 %3472
        %3474 = vrot.lane.b32.xlu0 %v3462, 96
        %v3475 = vpop.permute.xlu0 %3474
        %3476 = vrot.lane.b32.xlu0 %v3463, 96
        %v3477 = vpop.permute.xlu0 %3476
        %3478 = vrot.lane.b32.xlu0 %v3464, 96
        %v3479 = vpop.permute.xlu0 %3478
        %v3480 = vrot.slane %v3471, 4
        %v3481 = vrot.slane %v3473, 4
        %v3482 = vrot.slane %v3475, 4
        %v3483 = vrot.slane %v3477, 4
        %v3484 = vrot.slane %v3479, 4
        %v3485 = vsel %vm680, %v3480, %v3481
        %v3486 = vsel %vm1106, %v3471, %v3485
        %v3487 = vsel %vm680, %v3481, %v3482
        %v3488 = vsel %vm1106, %v3473, %v3487
        %v3489 = vsel %vm680, %v3482, %v3483
        %v3490 = vsel %vm1106, %v3475, %v3489
        %v3491 = vsel %vm680, %v3483, %v3484
        %v3492 = vsel %vm1106, %v3477, %v3491
        %v3498 = vadd.f32 %v3353, %v3486
        %v3499 = vadd.f32 %v3354, %v3488
        %v3500 = vadd.f32 %v3355, %v3490
        %v3501 = vadd.f32 %v3356, %v3492
        %v3502 = vadd.f32 %v3357, %v3479
        %s3503 = sld [smem:[#allocation4 + $0x30]]
        %v3504 = vstv %s3503
        %v3505 = vmul.f32 %v3504, %v3453
        %v3506 = vmul.f32 %v3504, %v3454
        %v3507 = vmul.f32 %v3504, %v3455
        %v3508 = vmul.f32 %v3504, %v3456
        %v3509 = vmul.f32 %v3504, %v3457
        %3515 = vrot.lane.b32.xlu0 %v3505, 96
        %v3516 = vpop.permute.xlu0 %3515
        %3517 = vrot.lane.b32.xlu0 %v3506, 96
        %v3518 = vpop.permute.xlu0 %3517
        %3519 = vrot.lane.b32.xlu0 %v3507, 96
        %v3520 = vpop.permute.xlu0 %3519
        %3521 = vrot.lane.b32.xlu0 %v3508, 96
        %v3522 = vpop.permute.xlu0 %3521
        %3523 = vrot.lane.b32.xlu0 %v3509, 96
        %v3524 = vpop.permute.xlu0 %3523
        %v3525 = vrot.slane %v3516, 4
        %v3526 = vrot.slane %v3518, 4
        %v3527 = vrot.slane %v3520, 4
        %v3528 = vrot.slane %v3522, 4
        %v3529 = vrot.slane %v3524, 4
        %v3530 = vsel %vm680, %v3525, %v3526
        %v3531 = vsel %vm1106, %v3516, %v3530
        %v3532 = vsel %vm680, %v3526, %v3527
        %v3533 = vsel %vm1106, %v3518, %v3532
        %v3534 = vsel %vm680, %v3527, %v3528
        %v3535 = vsel %vm1106, %v3520, %v3534
        %v3536 = vsel %vm680, %v3528, %v3529
        %v3537 = vsel %vm1106, %v3522, %v3536
        %v3543 = vadd.f32 %v3398, %v3531
        %v3544 = vadd.f32 %v3399, %v3533
        %v3545 = vadd.f32 %v3400, %v3535
        %v3546 = vadd.f32 %v3401, %v3537
        %v3547 = vadd.f32 %v3402, %v3524
        %s3548 = sld [smem:[#allocation4 + $0x4b]]
        %v3549 = vstv %s3548
        %v3550 = vmul.f32 %v3549, %v3453
        %v3551 = vmul.f32 %v3549, %v3454
        %v3552 = vmul.f32 %v3549, %v3455
        %v3553 = vmul.f32 %v3549, %v3456
        %v3554 = vmul.f32 %v3549, %v3457
        %3560 = vrot.lane.b32.xlu0 %v3550, 96
        %v3561 = vpop.permute.xlu0 %3560
        %3562 = vrot.lane.b32.xlu0 %v3551, 96
        %v3563 = vpop.permute.xlu0 %3562
        %3564 = vrot.lane.b32.xlu0 %v3552, 96
        %v3565 = vpop.permute.xlu0 %3564
        %3566 = vrot.lane.b32.xlu0 %v3553, 96
        %v3567 = vpop.permute.xlu0 %3566
        %3568 = vrot.lane.b32.xlu0 %v3554, 96
        %v3569 = vpop.permute.xlu0 %3568
        %v3570 = vrot.slane %v3561, 4
        %v3571 = vrot.slane %v3563, 4
        %v3572 = vrot.slane %v3565, 4
        %v3573 = vrot.slane %v3567, 4
        %v3574 = vrot.slane %v3569, 4
        %v3575 = vsel %vm680, %v3570, %v3571
        %v3576 = vsel %vm1106, %v3561, %v3575
        %v3577 = vsel %vm680, %v3571, %v3572
        %v3578 = vsel %vm1106, %v3563, %v3577
        %v3579 = vsel %vm680, %v3572, %v3573
        %v3580 = vsel %vm1106, %v3565, %v3579
        %v3581 = vsel %vm680, %v3573, %v3574
        %v3582 = vsel %vm1106, %v3567, %v3581
        %v3588 = vadd.f32 %v3443, %v3576
        %v3589 = vadd.f32 %v3444, %v3578
        %v3590 = vadd.f32 %v3445, %v3580
        %v3591 = vadd.f32 %v3446, %v3582
        %v3592 = vadd.f32 %v3447, %v3569
        %v3593 = vld [vmem:[%s558 + $0x4] sm:$0xff]
        %v3594 = vld [vmem:[%s558 + $0xc] sm:$0xff]
        %v3595 = vld [vmem:[%s558 + $0x14] sm:$0xff]
        %v3596 = vld [vmem:[%s558 + $0x1c] sm:$0xff]
        %s3597 = sld [smem:[#allocation4 + $0x16]]
        %v3598 = vstv %s3597
        %v3599 = vmul.f32 %v3598, %v3593
        %v3600 = vmul.f32 %v3598, %v3594
        %v3601 = vmul.f32 %v3598, %v3595
        %v3602 = vmul.f32 %v3598, %v3596
        %3607 = vrot.lane.b32.xlu0 %v3599, 95
        %v3608 = vpop.permute.xlu0 %3607
        %3609 = vrot.lane.b32.xlu0 %v3600, 95
        %v3610 = vpop.permute.xlu0 %3609
        %3611 = vrot.lane.b32.xlu0 %v3601, 95
        %v3612 = vpop.permute.xlu0 %3611
        %3613 = vrot.lane.b32.xlu0 %v3602, 95
        %v3614 = vpop.permute.xlu0 %3613
        %v3615 = vrot.slane %v3608, 4
        %v3616 = vrot.slane %v3610, 4
        %v3617 = vrot.slane %v3612, 4
        %v3618 = vrot.slane %v3614, 4
        %v3619 = vsel %vm678, %v3615, %v3608
        %v3620 = vsel %vm680, %v3615, %v3616
        %v3621 = vsel %vm678, %v3620, %v3610
        %v3622 = vsel %vm680, %v3616, %v3617
        %v3623 = vsel %vm678, %v3622, %v3612
        %v3624 = vsel %vm680, %v3617, %v3618
        %v3625 = vsel %vm678, %v3624, %v3614
        %v3631 = vadd.f32 %v3498, %v3619
        %v3632 = vadd.f32 %v3499, %v3621
        %v3633 = vadd.f32 %v3500, %v3623
        %v3634 = vadd.f32 %v3501, %v3625
        %v3635 = vadd.f32 %v3502, %v3618
        %s3636 = sld [smem:[#allocation4 + $0x31]]
        %v3637 = vstv %s3636
        %v3638 = vmul.f32 %v3637, %v3593
        %v3639 = vmul.f32 %v3637, %v3594
        %v3640 = vmul.f32 %v3637, %v3595
        %v3641 = vmul.f32 %v3637, %v3596
        %3646 = vrot.lane.b32.xlu0 %v3638, 95
        %v3647 = vpop.permute.xlu0 %3646
        %3648 = vrot.lane.b32.xlu0 %v3639, 95
        %v3649 = vpop.permute.xlu0 %3648
        %3650 = vrot.lane.b32.xlu0 %v3640, 95
        %v3651 = vpop.permute.xlu0 %3650
        %3652 = vrot.lane.b32.xlu0 %v3641, 95
        %v3653 = vpop.permute.xlu0 %3652
        %v3654 = vrot.slane %v3647, 4
        %v3655 = vrot.slane %v3649, 4
        %v3656 = vrot.slane %v3651, 4
        %v3657 = vrot.slane %v3653, 4
        %v3658 = vsel %vm678, %v3654, %v3647
        %v3659 = vsel %vm680, %v3654, %v3655
        %v3660 = vsel %vm678, %v3659, %v3649
        %v3661 = vsel %vm680, %v3655, %v3656
        %v3662 = vsel %vm678, %v3661, %v3651
        %v3663 = vsel %vm680, %v3656, %v3657
        %v3664 = vsel %vm678, %v3663, %v3653
        %v3670 = vadd.f32 %v3543, %v3658
        %v3671 = vadd.f32 %v3544, %v3660
        %v3672 = vadd.f32 %v3545, %v3662
        %v3673 = vadd.f32 %v3546, %v3664
        %v3674 = vadd.f32 %v3547, %v3657
        %s3675 = sld [smem:[#allocation4 + $0x4c]]
        %v3676 = vstv %s3675
        %v3677 = vmul.f32 %v3676, %v3593
        %v3678 = vmul.f32 %v3676, %v3594
        %v3679 = vmul.f32 %v3676, %v3595
        %v3680 = vmul.f32 %v3676, %v3596
        %3685 = vrot.lane.b32.xlu0 %v3677, 95
        %v3686 = vpop.permute.xlu0 %3685
        %3687 = vrot.lane.b32.xlu0 %v3678, 95
        %v3688 = vpop.permute.xlu0 %3687
        %3689 = vrot.lane.b32.xlu0 %v3679, 95
        %v3690 = vpop.permute.xlu0 %3689
        %3691 = vrot.lane.b32.xlu0 %v3680, 95
        %v3692 = vpop.permute.xlu0 %3691
        %v3693 = vrot.slane %v3686, 4
        %v3694 = vrot.slane %v3688, 4
        %v3695 = vrot.slane %v3690, 4
        %v3696 = vrot.slane %v3692, 4
        %v3697 = vsel %vm678, %v3693, %v3686
        %v3698 = vsel %vm680, %v3693, %v3694
        %v3699 = vsel %vm678, %v3698, %v3688
        %v3700 = vsel %vm680, %v3694, %v3695
        %v3701 = vsel %vm678, %v3700, %v3690
        %v3702 = vsel %vm680, %v3695, %v3696
        %v3703 = vsel %vm678, %v3702, %v3692
        %v3709 = vadd.f32 %v3588, %v3697
        %v3710 = vadd.f32 %v3589, %v3699
        %v3711 = vadd.f32 %v3590, %v3701
        %v3712 = vadd.f32 %v3591, %v3703
        %v3713 = vadd.f32 %v3592, %v3696
        %v3714 = vld [vmem:[%s558 + $0x4] sm:$0xff]
        %v3715 = vld [vmem:[%s558 + $0xc] sm:$0xff]
        %v3716 = vld [vmem:[%s558 + $0x14] sm:$0xff]
        %v3717 = vld [vmem:[%s558 + $0x1c] sm:$0xff]
        %v3718 = vld [vmem:[%s558 + $0x24] sm:$0xf]
        %v3719 = vmul.f32 %v3714, %v1353
        %v3720 = vmul.f32 %v3715, %v1355
        %v3721 = vmul.f32 %v3716, %v1357
        %v3722 = vmul.f32 %v3717, %v1359
        %v3723 = vmul.f32 %v3718, %v1351
        %s3724 = sld [smem:[#allocation4 + $0x17]]
        %v3725 = vstv %s3724
        %v3726 = vmul.f32 %v3725, %v3719
        %v3727 = vmul.f32 %v3725, %v3720
        %v3728 = vmul.f32 %v3725, %v3721
        %v3729 = vmul.f32 %v3725, %v3722
        %v3730 = vmul.f32 %v3725, %v3723
        %3736 = vrot.lane.b32.xlu0 %v3726, 94
        %v3737 = vpop.permute.xlu0 %3736
        %3738 = vrot.lane.b32.xlu0 %v3727, 94
        %v3739 = vpop.permute.xlu0 %3738
        %3740 = vrot.lane.b32.xlu0 %v3728, 94
        %v3741 = vpop.permute.xlu0 %3740
        %3742 = vrot.lane.b32.xlu0 %v3729, 94
        %v3743 = vpop.permute.xlu0 %3742
        %3744 = vrot.lane.b32.xlu0 %v3730, 94
        %v3745 = vpop.permute.xlu0 %3744
        %v3746 = vrot.slane %v3737, 4
        %v3747 = vrot.slane %v3739, 4
        %v3748 = vrot.slane %v3741, 4
        %v3749 = vrot.slane %v3743, 4
        %v3750 = vsel %vm1396, %v3746, %v3737
        %v3751 = vsel %vm680, %v3746, %v3747
        %v3752 = vsel %vm1396, %v3751, %v3739
        %v3753 = vsel %vm680, %v3747, %v3748
        %v3754 = vsel %vm1396, %v3753, %v3741
        %v3755 = vsel %vm680, %v3748, %v3749
        %v3756 = vsel %vm1396, %v3755, %v3743
        %v3757 = vsel %vm1396, %v3749, %v3745
        %v3763 = vadd.f32 %v3631, %v3750
        %v3764 = vadd.f32 %v3632, %v3752
        %v3765 = vadd.f32 %v3633, %v3754
        %v3766 = vadd.f32 %v3634, %v3756
        %v3767 = vadd.f32 %v3635, %v3757
        %s3768 = sld [smem:[#allocation4 + $0x32]]
        %v3769 = vstv %s3768
        %v3770 = vmul.f32 %v3769, %v3719
        %v3771 = vmul.f32 %v3769, %v3720
        %v3772 = vmul.f32 %v3769, %v3721
        %v3773 = vmul.f32 %v3769, %v3722
        %v3774 = vmul.f32 %v3769, %v3723
        %3780 = vrot.lane.b32.xlu0 %v3770, 94
        %v3781 = vpop.permute.xlu0 %3780
        %3782 = vrot.lane.b32.xlu0 %v3771, 94
        %v3783 = vpop.permute.xlu0 %3782
        %3784 = vrot.lane.b32.xlu0 %v3772, 94
        %v3785 = vpop.permute.xlu0 %3784
        %3786 = vrot.lane.b32.xlu0 %v3773, 94
        %v3787 = vpop.permute.xlu0 %3786
        %3788 = vrot.lane.b32.xlu0 %v3774, 94
        %v3789 = vpop.permute.xlu0 %3788
        %v3790 = vrot.slane %v3781, 4
        %v3791 = vrot.slane %v3783, 4
        %v3792 = vrot.slane %v3785, 4
        %v3793 = vrot.slane %v3787, 4
        %v3794 = vsel %vm1396, %v3790, %v3781
        %v3795 = vsel %vm680, %v3790, %v3791
        %v3796 = vsel %vm1396, %v3795, %v3783
        %v3797 = vsel %vm680, %v3791, %v3792
        %v3798 = vsel %vm1396, %v3797, %v3785
        %v3799 = vsel %vm680, %v3792, %v3793
        %v3800 = vsel %vm1396, %v3799, %v3787
        %v3801 = vsel %vm1396, %v3793, %v3789
        %v3807 = vadd.f32 %v3670, %v3794
        %v3808 = vadd.f32 %v3671, %v3796
        %v3809 = vadd.f32 %v3672, %v3798
        %v3810 = vadd.f32 %v3673, %v3800
        %v3811 = vadd.f32 %v3674, %v3801
        %s3812 = sld [smem:[#allocation4 + $0x4d]]
        %v3813 = vstv %s3812
        %v3814 = vmul.f32 %v3813, %v3719
        %v3815 = vmul.f32 %v3813, %v3720
        %v3816 = vmul.f32 %v3813, %v3721
        %v3817 = vmul.f32 %v3813, %v3722
        %v3818 = vmul.f32 %v3813, %v3723
        %3824 = vrot.lane.b32.xlu0 %v3814, 94
        %v3825 = vpop.permute.xlu0 %3824
        %3826 = vrot.lane.b32.xlu0 %v3815, 94
        %v3827 = vpop.permute.xlu0 %3826
        %3828 = vrot.lane.b32.xlu0 %v3816, 94
        %v3829 = vpop.permute.xlu0 %3828
        %3830 = vrot.lane.b32.xlu0 %v3817, 94
        %v3831 = vpop.permute.xlu0 %3830
        %3832 = vrot.lane.b32.xlu0 %v3818, 94
        %v3833 = vpop.permute.xlu0 %3832
        %v3834 = vrot.slane %v3825, 4
        %v3835 = vrot.slane %v3827, 4
        %v3836 = vrot.slane %v3829, 4
        %v3837 = vrot.slane %v3831, 4
        %v3838 = vsel %vm1396, %v3834, %v3825
        %v3839 = vsel %vm680, %v3834, %v3835
        %v3840 = vsel %vm1396, %v3839, %v3827
        %v3841 = vsel %vm680, %v3835, %v3836
        %v3842 = vsel %vm1396, %v3841, %v3829
        %v3843 = vsel %vm680, %v3836, %v3837
        %v3844 = vsel %vm1396, %v3843, %v3831
        %v3845 = vsel %vm1396, %v3837, %v3833
        %v3851 = vadd.f32 %v3709, %v3838
        %v3852 = vadd.f32 %v3710, %v3840
        %v3853 = vadd.f32 %v3711, %v3842
        %v3854 = vadd.f32 %v3712, %v3844
        %v3855 = vadd.f32 %v3713, %v3845
        %v3856 = vld [vmem:[%s558 + $0x4] sm:$0xff]
        %v3857 = vld [vmem:[%s558 + $0xc] sm:$0xff]
        %v3858 = vld [vmem:[%s558 + $0x14] sm:$0xff]
        %v3859 = vld [vmem:[%s558 + $0x1c] sm:$0xff]
        %v3860 = vld [vmem:[%s558 + $0x24] sm:$0xf]
        %v3861 = vmul.f32 %v3856, %v1521
        %v3862 = vmul.f32 %v3857, %v1523
        %v3863 = vmul.f32 %v3858, %v1525
        %v3864 = vmul.f32 %v3859, %v1527
        %v3865 = vmul.f32 %v3860, %v1519
        %s3866 = sld [smem:[#allocation4 + $0x18]]
        %v3867 = vstv %s3866
        %v3868 = vmul.f32 %v3867, %v3861
        %v3869 = vmul.f32 %v3867, %v3862
        %v3870 = vmul.f32 %v3867, %v3863
        %v3871 = vmul.f32 %v3867, %v3864
        %v3872 = vmul.f32 %v3867, %v3865
        %3878 = vrot.lane.b32.xlu0 %v3868, 64
        %v3879 = vpop.permute.xlu0 %3878
        %3880 = vrot.lane.b32.xlu0 %v3869, 64
        %v3881 = vpop.permute.xlu0 %3880
        %3882 = vrot.lane.b32.xlu0 %v3870, 64
        %v3883 = vpop.permute.xlu0 %3882
        %3884 = vrot.lane.b32.xlu0 %v3871, 64
        %v3885 = vpop.permute.xlu0 %3884
        %3886 = vrot.lane.b32.xlu0 %v3872, 64
        %v3887 = vpop.permute.xlu0 %3886
        %v3888 = vrot.slane %v3879, 4
        %v3889 = vrot.slane %v3881, 4
        %v3890 = vrot.slane %v3883, 4
        %v3891 = vrot.slane %v3885, 4
        %v3892 = vsel %vm1564, %v3888, %v3879
        %v3893 = vsel %vm680, %v3888, %v3889
        %v3894 = vsel %vm1564, %v3893, %v3881
        %v3895 = vsel %vm680, %v3889, %v3890
        %v3896 = vsel %vm1564, %v3895, %v3883
        %v3897 = vsel %vm680, %v3890, %v3891
        %v3898 = vsel %vm1564, %v3897, %v3885
        %v3899 = vsel %vm1564, %v3891, %v3887
        %v3905 = vadd.f32 %v3763, %v3892
        %v3906 = vadd.f32 %v3764, %v3894
        %v3907 = vadd.f32 %v3765, %v3896
        %v3908 = vadd.f32 %v3766, %v3898
        %v3909 = vadd.f32 %v3767, %v3899
        %s3910 = sld [smem:[#allocation4 + $0x33]]
        %v3911 = vstv %s3910
        %v3912 = vmul.f32 %v3911, %v3861
        %v3913 = vmul.f32 %v3911, %v3862
        %v3914 = vmul.f32 %v3911, %v3863
        %v3915 = vmul.f32 %v3911, %v3864
        %v3916 = vmul.f32 %v3911, %v3865
        %3922 = vrot.lane.b32.xlu0 %v3912, 64
        %v3923 = vpop.permute.xlu0 %3922
        %3924 = vrot.lane.b32.xlu0 %v3913, 64
        %v3925 = vpop.permute.xlu0 %3924
        %3926 = vrot.lane.b32.xlu0 %v3914, 64
        %v3927 = vpop.permute.xlu0 %3926
        %3928 = vrot.lane.b32.xlu0 %v3915, 64
        %v3929 = vpop.permute.xlu0 %3928
        %3930 = vrot.lane.b32.xlu0 %v3916, 64
        %v3931 = vpop.permute.xlu0 %3930
        %v3932 = vrot.slane %v3923, 4
        %v3933 = vrot.slane %v3925, 4
        %v3934 = vrot.slane %v3927, 4
        %v3935 = vrot.slane %v3929, 4
        %v3936 = vsel %vm1564, %v3932, %v3923
        %v3937 = vsel %vm680, %v3932, %v3933
        %v3938 = vsel %vm1564, %v3937, %v3925
        %v3939 = vsel %vm680, %v3933, %v3934
        %v3940 = vsel %vm1564, %v3939, %v3927
        %v3941 = vsel %vm680, %v3934, %v3935
        %v3942 = vsel %vm1564, %v3941, %v3929
        %v3943 = vsel %vm1564, %v3935, %v3931
        %v3949 = vadd.f32 %v3807, %v3936
        %v3950 = vadd.f32 %v3808, %v3938
        %v3951 = vadd.f32 %v3809, %v3940
        %v3952 = vadd.f32 %v3810, %v3942
        %v3953 = vadd.f32 %v3811, %v3943
        %s3954 = sld [smem:[#allocation4 + $0x4e]]
        %v3955 = vstv %s3954
        %v3956 = vmul.f32 %v3955, %v3861
        %v3957 = vmul.f32 %v3955, %v3862
        %v3958 = vmul.f32 %v3955, %v3863
        %v3959 = vmul.f32 %v3955, %v3864
        %v3960 = vmul.f32 %v3955, %v3865
        %3966 = vrot.lane.b32.xlu0 %v3956, 64
        %v3967 = vpop.permute.xlu0 %3966
        %3968 = vrot.lane.b32.xlu0 %v3957, 64
        %v3969 = vpop.permute.xlu0 %3968
        %3970 = vrot.lane.b32.xlu0 %v3958, 64
        %v3971 = vpop.permute.xlu0 %3970
        %3972 = vrot.lane.b32.xlu0 %v3959, 64
        %v3973 = vpop.permute.xlu0 %3972
        %3974 = vrot.lane.b32.xlu0 %v3960, 64
        %v3975 = vpop.permute.xlu0 %3974
        %v3976 = vrot.slane %v3967, 4
        %v3977 = vrot.slane %v3969, 4
        %v3978 = vrot.slane %v3971, 4
        %v3979 = vrot.slane %v3973, 4
        %v3980 = vsel %vm1564, %v3976, %v3967
        %v3981 = vsel %vm680, %v3976, %v3977
        %v3982 = vsel %vm1564, %v3981, %v3969
        %v3983 = vsel %vm680, %v3977, %v3978
        %v3984 = vsel %vm1564, %v3983, %v3971
        %v3985 = vsel %vm680, %v3978, %v3979
        %v3986 = vsel %vm1564, %v3985, %v3973
        %v3987 = vsel %vm1564, %v3979, %v3975
        %v3993 = vadd.f32 %v3851, %v3980
        %v3994 = vadd.f32 %v3852, %v3982
        %v3995 = vadd.f32 %v3853, %v3984
        %v3996 = vadd.f32 %v3854, %v3986
        %v3997 = vadd.f32 %v3855, %v3987
        %v3998 = vld [vmem:[%s558 + $0x4] sm:$0xff]
        %v3999 = vld [vmem:[%s558 + $0xc] sm:$0xff]
        %v4000 = vld [vmem:[%s558 + $0x14] sm:$0xff]
        %v4001 = vld [vmem:[%s558 + $0x1c] sm:$0xff]
        %v4002 = vld [vmem:[%s558 + $0x24] sm:$0xf]
        %s4003 = sld [smem:[#allocation4 + $0x19]]
        %v4004 = vstv %s4003
        %v4005 = vmul.f32 %v4004, %v3998
        %v4006 = vmul.f32 %v4004, %v3999
        %v4007 = vmul.f32 %v4004, %v4000
        %v4008 = vmul.f32 %v4004, %v4001
        %v4009 = vmul.f32 %v4004, %v4002
        %4015 = vrot.lane.b32.xlu0 %v4005, 63
        %v4016 = vpop.permute.xlu0 %4015
        %4017 = vrot.lane.b32.xlu0 %v4006, 63
        %v4018 = vpop.permute.xlu0 %4017
        %4019 = vrot.lane.b32.xlu0 %v4007, 63
        %v4020 = vpop.permute.xlu0 %4019
        %4021 = vrot.lane.b32.xlu0 %v4008, 63
        %v4022 = vpop.permute.xlu0 %4021
        %4023 = vrot.lane.b32.xlu0 %v4009, 63
        %v4024 = vpop.permute.xlu0 %4023
        %v4025 = vrot.slane %v4016, 4
        %v4026 = vrot.slane %v4018, 4
        %v4027 = vrot.slane %v4020, 4
        %v4028 = vrot.slane %v4022, 4
        %v4029 = vsel %vm1702, %v4025, %v4016
        %v4030 = vsel %vm680, %v4025, %v4026
        %v4031 = vsel %vm1702, %v4030, %v4018
        %v4032 = vsel %vm680, %v4026, %v4027
        %v4033 = vsel %vm1702, %v4032, %v4020
        %v4034 = vsel %vm680, %v4027, %v4028
        %v4035 = vsel %vm1702, %v4034, %v4022
        %v4036 = vsel %vm1702, %v4028, %v4024
        %v4042 = vadd.f32 %v3905, %v4029
        %v4043 = vadd.f32 %v3906, %v4031
        %v4044 = vadd.f32 %v3907, %v4033
        %v4045 = vadd.f32 %v3908, %v4035
        %v4046 = vadd.f32 %v3909, %v4036
        %s4047 = sld [smem:[#allocation4 + $0x34]]
        %v4048 = vstv %s4047
        %v4049 = vmul.f32 %v4048, %v3998
        %v4050 = vmul.f32 %v4048, %v3999
        %v4051 = vmul.f32 %v4048, %v4000
        %v4052 = vmul.f32 %v4048, %v4001
        %v4053 = vmul.f32 %v4048, %v4002
        %4059 = vrot.lane.b32.xlu0 %v4049, 63
        %v4060 = vpop.permute.xlu0 %4059
        %4061 = vrot.lane.b32.xlu0 %v4050, 63
        %v4062 = vpop.permute.xlu0 %4061
        %4063 = vrot.lane.b32.xlu0 %v4051, 63
        %v4064 = vpop.permute.xlu0 %4063
        %4065 = vrot.lane.b32.xlu0 %v4052, 63
        %v4066 = vpop.permute.xlu0 %4065
        %4067 = vrot.lane.b32.xlu0 %v4053, 63
        %v4068 = vpop.permute.xlu0 %4067
        %v4069 = vrot.slane %v4060, 4
        %v4070 = vrot.slane %v4062, 4
        %v4071 = vrot.slane %v4064, 4
        %v4072 = vrot.slane %v4066, 4
        %v4073 = vsel %vm1702, %v4069, %v4060
        %v4074 = vsel %vm680, %v4069, %v4070
        %v4075 = vsel %vm1702, %v4074, %v4062
        %v4076 = vsel %vm680, %v4070, %v4071
        %v4077 = vsel %vm1702, %v4076, %v4064
        %v4078 = vsel %vm680, %v4071, %v4072
        %v4079 = vsel %vm1702, %v4078, %v4066
        %v4080 = vsel %vm1702, %v4072, %v4068
        %v4086 = vadd.f32 %v3949, %v4073
        %v4087 = vadd.f32 %v3950, %v4075
        %v4088 = vadd.f32 %v3951, %v4077
        %v4089 = vadd.f32 %v3952, %v4079
        %v4090 = vadd.f32 %v3953, %v4080
        %s4091 = sld [smem:[#allocation4 + $0x4f]]
        %v4092 = vstv %s4091
        %v4093 = vmul.f32 %v4092, %v3998
        %v4094 = vmul.f32 %v4092, %v3999
        %v4095 = vmul.f32 %v4092, %v4000
        %v4096 = vmul.f32 %v4092, %v4001
        %v4097 = vmul.f32 %v4092, %v4002
        %4103 = vrot.lane.b32.xlu0 %v4093, 63
        %v4104 = vpop.permute.xlu0 %4103
        %4105 = vrot.lane.b32.xlu0 %v4094, 63
        %v4106 = vpop.permute.xlu0 %4105
        %4107 = vrot.lane.b32.xlu0 %v4095, 63
        %v4108 = vpop.permute.xlu0 %4107
        %4109 = vrot.lane.b32.xlu0 %v4096, 63
        %v4110 = vpop.permute.xlu0 %4109
        %4111 = vrot.lane.b32.xlu0 %v4097, 63
        %v4112 = vpop.permute.xlu0 %4111
        %v4113 = vrot.slane %v4104, 4
        %v4114 = vrot.slane %v4106, 4
        %v4115 = vrot.slane %v4108, 4
        %v4116 = vrot.slane %v4110, 4
        %v4117 = vsel %vm1702, %v4113, %v4104
        %v4118 = vsel %vm680, %v4113, %v4114
        %v4119 = vsel %vm1702, %v4118, %v4106
        %v4120 = vsel %vm680, %v4114, %v4115
        %v4121 = vsel %vm1702, %v4120, %v4108
        %v4122 = vsel %vm680, %v4115, %v4116
        %v4123 = vsel %vm1702, %v4122, %v4110
        %v4124 = vsel %vm1702, %v4116, %v4112
        %v4130 = vadd.f32 %v3993, %v4117
        %v4131 = vadd.f32 %v3994, %v4119
        %v4132 = vadd.f32 %v3995, %v4121
        %v4133 = vadd.f32 %v3996, %v4123
        %v4134 = vadd.f32 %v3997, %v4124
        %v4135 = vmul.f32 %v3998, %v1822
        %v4136 = vmul.f32 %v3999, %v1824
        %v4137 = vmul.f32 %v4000, %v1826
        %v4138 = vmul.f32 %v4001, %v1828
        %v4139 = vmul.f32 %v4002, %v1820
        %s4140 = sld [smem:[#allocation4 + $0x1a]]
        %v4141 = vstv %s4140
        %v4142 = vmul.f32 %v4141, %v4135
        %v4143 = vmul.f32 %v4141, %v4136
        %v4144 = vmul.f32 %v4141, %v4137
        %v4145 = vmul.f32 %v4141, %v4138
        %v4146 = vmul.f32 %v4141, %v4139
        %4152 = vrot.lane.b32.xlu0 %v4142, 62
        %v4153 = vpop.permute.xlu0 %4152
        %4154 = vrot.lane.b32.xlu0 %v4143, 62
        %v4155 = vpop.permute.xlu0 %4154
        %4156 = vrot.lane.b32.xlu0 %v4144, 62
        %v4157 = vpop.permute.xlu0 %4156
        %4158 = vrot.lane.b32.xlu0 %v4145, 62
        %v4159 = vpop.permute.xlu0 %4158
        %4160 = vrot.lane.b32.xlu0 %v4146, 62
        %v4161 = vpop.permute.xlu0 %4160
        %v4162 = vrot.slane %v4153, 4
        %v4163 = vrot.slane %v4155, 4
        %v4164 = vrot.slane %v4157, 4
        %v4165 = vrot.slane %v4159, 4
        %v4166 = vsel %vm1865, %v4162, %v4153
        %v4167 = vsel %vm680, %v4162, %v4163
        %v4168 = vsel %vm1865, %v4167, %v4155
        %v4169 = vsel %vm680, %v4163, %v4164
        %v4170 = vsel %vm1865, %v4169, %v4157
        %v4171 = vsel %vm680, %v4164, %v4165
        %v4172 = vsel %vm1865, %v4171, %v4159
        %v4173 = vsel %vm1865, %v4165, %v4161
        %v4179 = vadd.f32 %v4042, %v4166
        %v4180 = vadd.f32 %v4043, %v4168
        %v4181 = vadd.f32 %v4044, %v4170
        %v4182 = vadd.f32 %v4045, %v4172
        %v4183 = vadd.f32 %v4046, %v4173
        %s4184 = sld [smem:[#allocation4 + $0x35]]
        %v4185 = vstv %s4184
        %v4186 = vmul.f32 %v4185, %v4135
        %v4187 = vmul.f32 %v4185, %v4136
        %v4188 = vmul.f32 %v4185, %v4137
        %v4189 = vmul.f32 %v4185, %v4138
        %v4190 = vmul.f32 %v4185, %v4139
        %4196 = vrot.lane.b32.xlu0 %v4186, 62
        %v4197 = vpop.permute.xlu0 %4196
        %4198 = vrot.lane.b32.xlu0 %v4187, 62
        %v4199 = vpop.permute.xlu0 %4198
        %4200 = vrot.lane.b32.xlu0 %v4188, 62
        %v4201 = vpop.permute.xlu0 %4200
        %4202 = vrot.lane.b32.xlu0 %v4189, 62
        %v4203 = vpop.permute.xlu0 %4202
        %4204 = vrot.lane.b32.xlu0 %v4190, 62
        %v4205 = vpop.permute.xlu0 %4204
        %v4206 = vrot.slane %v4197, 4
        %v4207 = vrot.slane %v4199, 4
        %v4208 = vrot.slane %v4201, 4
        %v4209 = vrot.slane %v4203, 4
        %v4210 = vsel %vm1865, %v4206, %v4197
        %v4211 = vsel %vm680, %v4206, %v4207
        %v4212 = vsel %vm1865, %v4211, %v4199
        %v4213 = vsel %vm680, %v4207, %v4208
        %v4214 = vsel %vm1865, %v4213, %v4201
        %v4215 = vsel %vm680, %v4208, %v4209
        %v4216 = vsel %vm1865, %v4215, %v4203
        %v4217 = vsel %vm1865, %v4209, %v4205
        %v4223 = vadd.f32 %v4086, %v4210
        %v4224 = vadd.f32 %v4087, %v4212
        %v4225 = vadd.f32 %v4088, %v4214
        %v4226 = vadd.f32 %v4089, %v4216
        %v4227 = vadd.f32 %v4090, %v4217
        %s4228 = sld [smem:[#allocation4 + $0x50]]
        %v4229 = vstv %s4228
        %v4230 = vmul.f32 %v4229, %v4135
        %v4231 = vmul.f32 %v4229, %v4136
        %v4232 = vmul.f32 %v4229, %v4137
        %v4233 = vmul.f32 %v4229, %v4138
        %v4234 = vmul.f32 %v4229, %v4139
        %4240 = vrot.lane.b32.xlu0 %v4230, 62
        %v4241 = vpop.permute.xlu0 %4240
        %4242 = vrot.lane.b32.xlu0 %v4231, 62
        %v4243 = vpop.permute.xlu0 %4242
        %4244 = vrot.lane.b32.xlu0 %v4232, 62
        %v4245 = vpop.permute.xlu0 %4244
        %4246 = vrot.lane.b32.xlu0 %v4233, 62
        %v4247 = vpop.permute.xlu0 %4246
        %4248 = vrot.lane.b32.xlu0 %v4234, 62
        %v4249 = vpop.permute.xlu0 %4248
        %v4250 = vrot.slane %v4241, 4
        %v4251 = vrot.slane %v4243, 4
        %v4252 = vrot.slane %v4245, 4
        %v4253 = vrot.slane %v4247, 4
        %v4254 = vsel %vm1865, %v4250, %v4241
        %v4255 = vsel %vm680, %v4250, %v4251
        %v4256 = vsel %vm1865, %v4255, %v4243
        %v4257 = vsel %vm680, %v4251, %v4252
        %v4258 = vsel %vm1865, %v4257, %v4245
        %v4259 = vsel %vm680, %v4252, %v4253
        %v4260 = vsel %vm1865, %v4259, %v4247
        %v4261 = vsel %vm1865, %v4253, %v4249
        %v4267 = vadd.f32 %v4130, %v4254
        %v4268 = vadd.f32 %v4131, %v4256
        %v4269 = vadd.f32 %v4132, %v4258
        %v4270 = vadd.f32 %v4133, %v4260
        %v4271 = vadd.f32 %v4134, %v4261
        %v4272 = vmax.f32 %v4179, 0.0
        %v4273 = vmax.f32 %v4180, 0.0
        %v4274 = vmax.f32 %v4181, 0.0
        %v4275 = vmax.f32 %v4182, 0.0
        %v4276 = vmax.f32 %v4183, 0.0
        %4282 = vrot.lane.b32.xlu0 %v4272, 33
        %v4283 = vpop.permute.xlu0 %4282
        %4284 = vrot.lane.b32.xlu0 %v4273, 33
        %v4285 = vpop.permute.xlu0 %4284
        %4286 = vrot.lane.b32.xlu0 %v4274, 33
        %v4287 = vpop.permute.xlu0 %4286
        %4288 = vrot.lane.b32.xlu0 %v4275, 33
        %v4289 = vpop.permute.xlu0 %4288
        %4290 = vrot.lane.b32.xlu0 %v4276, 33
        %v4291 = vpop.permute.xlu0 %4290
        %v4292 = vrot.slane %v4283, 4
        %v4293 = vrot.slane %v4285, 4
        %v4294 = vrot.slane %v4287, 4
        %v4295 = vrot.slane %v4289, 4
        %v4296 = vrot.slane %v4291, 4
        %v4297 = vsel %vm680, %v4292, %v4293
        %v4298 = vsel %vm1821, %v4283, %v4297
        %v4299 = vsel %vm680, %v4293, %v4294
        %v4300 = vsel %vm1821, %v4285, %v4299
        %v4301 = vsel %vm680, %v4294, %v4295
        %v4302 = vsel %vm1821, %v4287, %v4301
        %v4303 = vsel %vm680, %v4295, %v4296
        %v4304 = vsel %vm1821, %v4289, %v4303
        %4309 = vst [vmem:[#allocation3 + $0x4] sm:$0xff] %v4298
        %4310 = vst [vmem:[#allocation3 + $0xc] sm:$0xff] %v4300
        %4311 = vst [vmem:[#allocation3 + $0x14] sm:$0xff] %v4302
        %4312 = vst [vmem:[#allocation3 + $0x1c] sm:$0xff] %v4304
        %v4313 = vmax.f32 %v4223, 0.0
        %v4314 = vmax.f32 %v4224, 0.0
        %v4315 = vmax.f32 %v4225, 0.0
        %v4316 = vmax.f32 %v4226, 0.0
        %v4317 = vmax.f32 %v4227, 0.0
        %4323 = vrot.lane.b32.xlu0 %v4313, 33
        %v4324 = vpop.permute.xlu0 %4323
        %4325 = vrot.lane.b32.xlu0 %v4314, 33
        %v4326 = vpop.permute.xlu0 %4325
        %4327 = vrot.lane.b32.xlu0 %v4315, 33
        %v4328 = vpop.permute.xlu0 %4327
        %4329 = vrot.lane.b32.xlu0 %v4316, 33
        %v4330 = vpop.permute.xlu0 %4329
        %4331 = vrot.lane.b32.xlu0 %v4317, 33
        %v4332 = vpop.permute.xlu0 %4331
        %v4333 = vrot.slane %v4324, 4
        %v4334 = vrot.slane %v4326, 4
        %v4335 = vrot.slane %v4328, 4
        %v4336 = vrot.slane %v4330, 4
        %v4337 = vrot.slane %v4332, 4
        %v4338 = vsel %vm680, %v4333, %v4334
        %v4339 = vsel %vm1821, %v4324, %v4338
        %v4340 = vsel %vm680, %v4334, %v4335
        %v4341 = vsel %vm1821, %v4326, %v4340
        %v4342 = vsel %vm680, %v4335, %v4336
        %v4343 = vsel %vm1821, %v4328, %v4342
        %v4344 = vsel %vm680, %v4336, %v4337
        %v4345 = vsel %vm1821, %v4330, %v4344
        %4350 = vst [vmem:[%s471 + $0x4] sm:$0xff] %v4339
        %4351 = vst [vmem:[%s471 + $0xc] sm:$0xff] %v4341
        %4352 = vst [vmem:[%s471 + $0x14] sm:$0xff] %v4343
        %4353 = vst [vmem:[%s471 + $0x1c] sm:$0xff] %v4345
        %v4354 = vmax.f32 %v4267, 0.0
        %v4355 = vmax.f32 %v4268, 0.0
        %v4356 = vmax.f32 %v4269, 0.0
        %v4357 = vmax.f32 %v4270, 0.0
        %v4358 = vmax.f32 %v4271, 0.0
        %4364 = vrot.lane.b32.xlu0 %v4354, 33
        %v4365 = vpop.permute.xlu0 %4364
        %4366 = vrot.lane.b32.xlu0 %v4355, 33
        %v4367 = vpop.permute.xlu0 %4366
        %4368 = vrot.lane.b32.xlu0 %v4356, 33
        %v4369 = vpop.permute.xlu0 %4368
        %4370 = vrot.lane.b32.xlu0 %v4357, 33
        %v4371 = vpop.permute.xlu0 %4370
        %4372 = vrot.lane.b32.xlu0 %v4358, 33
        %v4373 = vpop.permute.xlu0 %4372
        %v4374 = vrot.slane %v4365, 4
        %v4375 = vrot.slane %v4367, 4
        %v4376 = vrot.slane %v4369, 4
        %v4377 = vrot.slane %v4371, 4
        %v4378 = vrot.slane %v4373, 4
        %v4379 = vsel %vm680, %v4374, %v4375
        %v4380 = vsel %vm1821, %v4365, %v4379
        %v4381 = vsel %vm680, %v4375, %v4376
        %v4382 = vsel %vm1821, %v4367, %v4381
        %v4383 = vsel %vm680, %v4376, %v4377
        %v4384 = vsel %vm1821, %v4369, %v4383
        %v4385 = vsel %vm680, %v4377, %v4378
        %v4386 = vsel %vm1821, %v4371, %v4385
        %4391 = vst [vmem:[%s561 + $0x4] sm:$0xff] %v4380
        %4392 = vst [vmem:[%s561 + $0xc] sm:$0xff] %v4382
        %4393 = vst [vmem:[%s561 + $0x14] sm:$0xff] %v4384
        %4394 = vst [vmem:[%s561 + $0x1c] sm:$0xff] %v4386
        %s4395 = sld [smem:[#allocation9]]
        %v4396 = vstv %s4395
        %v4397 = vadd.f32 %v4396, 0.0
        %s4398 = sld [smem:[#allocation9 + $0x1]]
        %v4399 = vstv %s4398
        %v4400 = vadd.f32 %v4399, 0.0
        %s4401 = sld [smem:[#allocation9 + $0x2]]
        %v4402 = vstv %s4401
        %v4403 = vadd.f32 %v4402, 0.0
        %v4404 = vld [vmem:[#allocation3] sm:$0xff]
        %v4405 = vld [vmem:[#allocation3 + $0x8] sm:$0xff]
        %v4406 = vld [vmem:[#allocation3 + $0x10] sm:$0xff]
        %v4407 = vld [vmem:[#allocation3 + $0x18] sm:$0xff]
        %v4408 = vld [vmem:[#allocation3 + $0x20] sm:$0xf]
        %v4409 = vmul.f32 %v4404, %v679
        %v4410 = vmul.f32 %v4405, %v682
        %v4411 = vmul.f32 %v4406, %v684
        %v4412 = vmul.f32 %v4407, %v686
        %v4413 = vmul.f32 %v4408, %v677
        %s4414 = sld [smem:[#allocation8]]
        %v4415 = vstv %s4414
        %v4416 = vmul.f32 %v4415, %v4409
        %v4417 = vmul.f32 %v4415, %v4410
        %v4418 = vmul.f32 %v4415, %v4411
        %v4419 = vmul.f32 %v4415, %v4412
        %v4420 = vmul.f32 %v4415, %v4413
        %v4421 = vadd.f32 %v4397, %v4416
        %v4422 = vadd.f32 %v4397, %v4417
        %v4423 = vadd.f32 %v4397, %v4418
        %v4424 = vadd.f32 %v4397, %v4419
        %v4425 = vadd.f32 %v4397, %v4420
        %s4426 = sld [smem:[#allocation8 + $0x1b]]
        %v4427 = vstv %s4426
        %v4428 = vmul.f32 %v4427, %v4409
        %v4429 = vmul.f32 %v4427, %v4410
        %v4430 = vmul.f32 %v4427, %v4411
        %v4431 = vmul.f32 %v4427, %v4412
        %v4432 = vmul.f32 %v4427, %v4413
        %v4433 = vadd.f32 %v4400, %v4428
        %v4434 = vadd.f32 %v4400, %v4429
        %v4435 = vadd.f32 %v4400, %v4430
        %v4436 = vadd.f32 %v4400, %v4431
        %v4437 = vadd.f32 %v4400, %v4432
        %s4438 = sld [smem:[#allocation8 + $0x36]]
        %v4439 = vstv %s4438
        %v4440 = vmul.f32 %v4439, %v4409
        %v4441 = vmul.f32 %v4439, %v4410
        %v4442 = vmul.f32 %v4439, %v4411
        %v4443 = vmul.f32 %v4439, %v4412
        %v4444 = vmul.f32 %v4439, %v4413
        %v4445 = vadd.f32 %v4403, %v4440
        %v4446 = vadd.f32 %v4403, %v4441
        %v4447 = vadd.f32 %v4403, %v4442
        %v4448 = vadd.f32 %v4403, %v4443
        %v4449 = vadd.f32 %v4403, %v4444
        %v4450 = vld [vmem:[#allocation3] sm:$0xff]
        %v4451 = vld [vmem:[#allocation3 + $0x8] sm:$0xff]
        %v4452 = vld [vmem:[#allocation3 + $0x10] sm:$0xff]
        %v4453 = vld [vmem:[#allocation3 + $0x18] sm:$0xff]
        %v4454 = vld [vmem:[#allocation3 + $0x20] sm:$0xf]
        %s4455 = sld [smem:[#allocation8 + $0x1]]
        %v4456 = vstv %s4455
        %v4457 = vmul.f32 %v4456, %v4450
        %v4458 = vmul.f32 %v4456, %v4451
        %v4459 = vmul.f32 %v4456, %v4452
        %v4460 = vmul.f32 %v4456, %v4453
        %v4461 = vmul.f32 %v4456, %v4454
        %4467 = vrot.lane.b32.xlu0 %v4457, 127
        %v4468 = vpop.permute.xlu0 %4467
        %4469 = vrot.lane.b32.xlu0 %v4458, 127
        %v4470 = vpop.permute.xlu0 %4469
        %4471 = vrot.lane.b32.xlu0 %v4459, 127
        %v4472 = vpop.permute.xlu0 %4471
        %4473 = vrot.lane.b32.xlu0 %v4460, 127
        %v4474 = vpop.permute.xlu0 %4473
        %4475 = vrot.lane.b32.xlu0 %v4461, 127
        %v4476 = vpop.permute.xlu0 %4475
        %v4477 = vrot.slane %v4468, 4
        %v4478 = vrot.slane %v4470, 4
        %v4479 = vrot.slane %v4472, 4
        %v4480 = vrot.slane %v4474, 4
        %v4481 = vrot.slane %v4476, 4
        %v4482 = vsel %vm680, %v4477, %v4478
        %v4483 = vsel %vm766, %v4468, %v4482
        %v4484 = vsel %vm680, %v4478, %v4479
        %v4485 = vsel %vm766, %v4470, %v4484
        %v4486 = vsel %vm680, %v4479, %v4480
        %v4487 = vsel %vm766, %v4472, %v4486
        %v4488 = vsel %vm680, %v4480, %v4481
        %v4489 = vsel %vm766, %v4474, %v4488
        %v4495 = vadd.f32 %v4421, %v4483
        %v4496 = vadd.f32 %v4422, %v4485
        %v4497 = vadd.f32 %v4423, %v4487
        %v4498 = vadd.f32 %v4424, %v4489
        %v4499 = vadd.f32 %v4425, %v4476
        %s4500 = sld [smem:[#allocation8 + $0x1c]]
        %v4501 = vstv %s4500
        %v4502 = vmul.f32 %v4501, %v4450
        %v4503 = vmul.f32 %v4501, %v4451
        %v4504 = vmul.f32 %v4501, %v4452
        %v4505 = vmul.f32 %v4501, %v4453
        %v4506 = vmul.f32 %v4501, %v4454
        %4512 = vrot.lane.b32.xlu0 %v4502, 127
        %v4513 = vpop.permute.xlu0 %4512
        %4514 = vrot.lane.b32.xlu0 %v4503, 127
        %v4515 = vpop.permute.xlu0 %4514
        %4516 = vrot.lane.b32.xlu0 %v4504, 127
        %v4517 = vpop.permute.xlu0 %4516
        %4518 = vrot.lane.b32.xlu0 %v4505, 127
        %v4519 = vpop.permute.xlu0 %4518
        %4520 = vrot.lane.b32.xlu0 %v4506, 127
        %v4521 = vpop.permute.xlu0 %4520
        %v4522 = vrot.slane %v4513, 4
        %v4523 = vrot.slane %v4515, 4
        %v4524 = vrot.slane %v4517, 4
        %v4525 = vrot.slane %v4519, 4
        %v4526 = vrot.slane %v4521, 4
        %v4527 = vsel %vm680, %v4522, %v4523
        %v4528 = vsel %vm766, %v4513, %v4527
        %v4529 = vsel %vm680, %v4523, %v4524
        %v4530 = vsel %vm766, %v4515, %v4529
        %v4531 = vsel %vm680, %v4524, %v4525
        %v4532 = vsel %vm766, %v4517, %v4531
        %v4533 = vsel %vm680, %v4525, %v4526
        %v4534 = vsel %vm766, %v4519, %v4533
        %v4540 = vadd.f32 %v4433, %v4528
        %v4541 = vadd.f32 %v4434, %v4530
        %v4542 = vadd.f32 %v4435, %v4532
        %v4543 = vadd.f32 %v4436, %v4534
        %v4544 = vadd.f32 %v4437, %v4521
        %s4545 = sld [smem:[#allocation8 + $0x37]]
        %v4546 = vstv %s4545
        %v4547 = vmul.f32 %v4546, %v4450
        %v4548 = vmul.f32 %v4546, %v4451
        %v4549 = vmul.f32 %v4546, %v4452
        %v4550 = vmul.f32 %v4546, %v4453
        %v4551 = vmul.f32 %v4546, %v4454
        %4557 = vrot.lane.b32.xlu0 %v4547, 127
        %v4558 = vpop.permute.xlu0 %4557
        %4559 = vrot.lane.b32.xlu0 %v4548, 127
        %v4560 = vpop.permute.xlu0 %4559
        %4561 = vrot.lane.b32.xlu0 %v4549, 127
        %v4562 = vpop.permute.xlu0 %4561
        %4563 = vrot.lane.b32.xlu0 %v4550, 127
        %v4564 = vpop.permute.xlu0 %4563
        %4565 = vrot.lane.b32.xlu0 %v4551, 127
        %v4566 = vpop.permute.xlu0 %4565
        %v4567 = vrot.slane %v4558, 4
        %v4568 = vrot.slane %v4560, 4
        %v4569 = vrot.slane %v4562, 4
        %v4570 = vrot.slane %v4564, 4
        %v4571 = vrot.slane %v4566, 4
        %v4572 = vsel %vm680, %v4567, %v4568
        %v4573 = vsel %vm766, %v4558, %v4572
        %v4574 = vsel %vm680, %v4568, %v4569
        %v4575 = vsel %vm766, %v4560, %v4574
        %v4576 = vsel %vm680, %v4569, %v4570
        %v4577 = vsel %vm766, %v4562, %v4576
        %v4578 = vsel %vm680, %v4570, %v4571
        %v4579 = vsel %vm766, %v4564, %v4578
        %v4585 = vadd.f32 %v4445, %v4573
        %v4586 = vadd.f32 %v4446, %v4575
        %v4587 = vadd.f32 %v4447, %v4577
        %v4588 = vadd.f32 %v4448, %v4579
        %v4589 = vadd.f32 %v4449, %v4566
        %v4590 = vmul.f32 %v4450, %v891
        %v4591 = vmul.f32 %v4451, %v893
        %v4592 = vmul.f32 %v4452, %v895
        %v4593 = vmul.f32 %v4453, %v897
        %v4594 = vmul.f32 %v4454, %v889
        %s4595 = sld [smem:[#allocation8 + $0x2]]
        %v4596 = vstv %s4595
        %v4597 = vmul.f32 %v4596, %v4590
        %v4598 = vmul.f32 %v4596, %v4591
        %v4599 = vmul.f32 %v4596, %v4592
        %v4600 = vmul.f32 %v4596, %v4593
        %v4601 = vmul.f32 %v4596, %v4594
        %4607 = vrot.lane.b32.xlu0 %v4597, 126
        %v4608 = vpop.permute.xlu0 %4607
        %4609 = vrot.lane.b32.xlu0 %v4598, 126
        %v4610 = vpop.permute.xlu0 %4609
        %4611 = vrot.lane.b32.xlu0 %v4599, 126
        %v4612 = vpop.permute.xlu0 %4611
        %4613 = vrot.lane.b32.xlu0 %v4600, 126
        %v4614 = vpop.permute.xlu0 %4613
        %4615 = vrot.lane.b32.xlu0 %v4601, 126
        %v4616 = vpop.permute.xlu0 %4615
        %v4617 = vrot.slane %v4608, 4
        %v4618 = vrot.slane %v4610, 4
        %v4619 = vrot.slane %v4612, 4
        %v4620 = vrot.slane %v4614, 4
        %v4621 = vrot.slane %v4616, 4
        %v4622 = vsel %vm680, %v4617, %v4618
        %v4623 = vsel %vm936, %v4608, %v4622
        %v4624 = vsel %vm680, %v4618, %v4619
        %v4625 = vsel %vm936, %v4610, %v4624
        %v4626 = vsel %vm680, %v4619, %v4620
        %v4627 = vsel %vm936, %v4612, %v4626
        %v4628 = vsel %vm680, %v4620, %v4621
        %v4629 = vsel %vm936, %v4614, %v4628
        %v4635 = vadd.f32 %v4495, %v4623
        %v4636 = vadd.f32 %v4496, %v4625
        %v4637 = vadd.f32 %v4497, %v4627
        %v4638 = vadd.f32 %v4498, %v4629
        %v4639 = vadd.f32 %v4499, %v4616
        %s4640 = sld [smem:[#allocation8 + $0x1d]]
        %v4641 = vstv %s4640
        %v4642 = vmul.f32 %v4641, %v4590
        %v4643 = vmul.f32 %v4641, %v4591
        %v4644 = vmul.f32 %v4641, %v4592
        %v4645 = vmul.f32 %v4641, %v4593
        %v4646 = vmul.f32 %v4641, %v4594
        %4652 = vrot.lane.b32.xlu0 %v4642, 126
        %v4653 = vpop.permute.xlu0 %4652
        %4654 = vrot.lane.b32.xlu0 %v4643, 126
        %v4655 = vpop.permute.xlu0 %4654
        %4656 = vrot.lane.b32.xlu0 %v4644, 126
        %v4657 = vpop.permute.xlu0 %4656
        %4658 = vrot.lane.b32.xlu0 %v4645, 126
        %v4659 = vpop.permute.xlu0 %4658
        %4660 = vrot.lane.b32.xlu0 %v4646, 126
        %v4661 = vpop.permute.xlu0 %4660
        %v4662 = vrot.slane %v4653, 4
        %v4663 = vrot.slane %v4655, 4
        %v4664 = vrot.slane %v4657, 4
        %v4665 = vrot.slane %v4659, 4
        %v4666 = vrot.slane %v4661, 4
        %v4667 = vsel %vm680, %v4662, %v4663
        %v4668 = vsel %vm936, %v4653, %v4667
        %v4669 = vsel %vm680, %v4663, %v4664
        %v4670 = vsel %vm936, %v4655, %v4669
        %v4671 = vsel %vm680, %v4664, %v4665
        %v4672 = vsel %vm936, %v4657, %v4671
        %v4673 = vsel %vm680, %v4665, %v4666
        %v4674 = vsel %vm936, %v4659, %v4673
        %v4680 = vadd.f32 %v4540, %v4668
        %v4681 = vadd.f32 %v4541, %v4670
        %v4682 = vadd.f32 %v4542, %v4672
        %v4683 = vadd.f32 %v4543, %v4674
        %v4684 = vadd.f32 %v4544, %v4661
        %s4685 = sld [smem:[#allocation8 + $0x38]]
        %v4686 = vstv %s4685
        %v4687 = vmul.f32 %v4686, %v4590
        %v4688 = vmul.f32 %v4686, %v4591
        %v4689 = vmul.f32 %v4686, %v4592
        %v4690 = vmul.f32 %v4686, %v4593
        %v4691 = vmul.f32 %v4686, %v4594
        %4697 = vrot.lane.b32.xlu0 %v4687, 126
        %v4698 = vpop.permute.xlu0 %4697
        %4699 = vrot.lane.b32.xlu0 %v4688, 126
        %v4700 = vpop.permute.xlu0 %4699
        %4701 = vrot.lane.b32.xlu0 %v4689, 126
        %v4702 = vpop.permute.xlu0 %4701
        %4703 = vrot.lane.b32.xlu0 %v4690, 126
        %v4704 = vpop.permute.xlu0 %4703
        %4705 = vrot.lane.b32.xlu0 %v4691, 126
        %v4706 = vpop.permute.xlu0 %4705
        %v4707 = vrot.slane %v4698, 4
        %v4708 = vrot.slane %v4700, 4
        %v4709 = vrot.slane %v4702, 4
        %v4710 = vrot.slane %v4704, 4
        %v4711 = vrot.slane %v4706, 4
        %v4712 = vsel %vm680, %v4707, %v4708
        %v4713 = vsel %vm936, %v4698, %v4712
        %v4714 = vsel %vm680, %v4708, %v4709
        %v4715 = vsel %vm936, %v4700, %v4714
        %v4716 = vsel %vm680, %v4709, %v4710
        %v4717 = vsel %vm936, %v4702, %v4716
        %v4718 = vsel %vm680, %v4710, %v4711
        %v4719 = vsel %vm936, %v4704, %v4718
        %v4725 = vadd.f32 %v4585, %v4713
        %v4726 = vadd.f32 %v4586, %v4715
        %v4727 = vadd.f32 %v4587, %v4717
        %v4728 = vadd.f32 %v4588, %v4719
        %v4729 = vadd.f32 %v4589, %v4706
        %v4730 = vld [vmem:[#allocation3] sm:$0xff]
        %v4731 = vld [vmem:[#allocation3 + $0x8] sm:$0xff]
        %v4732 = vld [vmem:[#allocation3 + $0x10] sm:$0xff]
        %v4733 = vld [vmem:[#allocation3 + $0x18] sm:$0xff]
        %v4734 = vld [vmem:[#allocation3 + $0x20] sm:$0xf]
        %v4735 = vmul.f32 %v4730, %v1061
        %v4736 = vmul.f32 %v4731, %v1063
        %v4737 = vmul.f32 %v4732, %v1065
        %v4738 = vmul.f32 %v4733, %v1067
        %v4739 = vmul.f32 %v4734, %v1060
        %s4740 = sld [smem:[#allocation8 + $0x3]]
        %v4741 = vstv %s4740
        %v4742 = vmul.f32 %v4741, %v4735
        %v4743 = vmul.f32 %v4741, %v4736
        %v4744 = vmul.f32 %v4741, %v4737
        %v4745 = vmul.f32 %v4741, %v4738
        %v4746 = vmul.f32 %v4741, %v4739
        %4752 = vrot.lane.b32.xlu0 %v4742, 96
        %v4753 = vpop.permute.xlu0 %4752
        %4754 = vrot.lane.b32.xlu0 %v4743, 96
        %v4755 = vpop.permute.xlu0 %4754
        %4756 = vrot.lane.b32.xlu0 %v4744, 96
        %v4757 = vpop.permute.xlu0 %4756
        %4758 = vrot.lane.b32.xlu0 %v4745, 96
        %v4759 = vpop.permute.xlu0 %4758
        %4760 = vrot.lane.b32.xlu0 %v4746, 96
        %v4761 = vpop.permute.xlu0 %4760
        %v4762 = vrot.slane %v4753, 4
        %v4763 = vrot.slane %v4755, 4
        %v4764 = vrot.slane %v4757, 4
        %v4765 = vrot.slane %v4759, 4
        %v4766 = vrot.slane %v4761, 4
        %v4767 = vsel %vm680, %v4762, %v4763
        %v4768 = vsel %vm1106, %v4753, %v4767
        %v4769 = vsel %vm680, %v4763, %v4764
        %v4770 = vsel %vm1106, %v4755, %v4769
        %v4771 = vsel %vm680, %v4764, %v4765
        %v4772 = vsel %vm1106, %v4757, %v4771
        %v4773 = vsel %vm680, %v4765, %v4766
        %v4774 = vsel %vm1106, %v4759, %v4773
        %v4780 = vadd.f32 %v4635, %v4768
        %v4781 = vadd.f32 %v4636, %v4770
        %v4782 = vadd.f32 %v4637, %v4772
        %v4783 = vadd.f32 %v4638, %v4774
        %v4784 = vadd.f32 %v4639, %v4761
        %s4785 = sld [smem:[#allocation8 + $0x1e]]
        %v4786 = vstv %s4785
        %v4787 = vmul.f32 %v4786, %v4735
        %v4788 = vmul.f32 %v4786, %v4736
        %v4789 = vmul.f32 %v4786, %v4737
        %v4790 = vmul.f32 %v4786, %v4738
        %v4791 = vmul.f32 %v4786, %v4739
        %4797 = vrot.lane.b32.xlu0 %v4787, 96
        %v4798 = vpop.permute.xlu0 %4797
        %4799 = vrot.lane.b32.xlu0 %v4788, 96
        %v4800 = vpop.permute.xlu0 %4799
        %4801 = vrot.lane.b32.xlu0 %v4789, 96
        %v4802 = vpop.permute.xlu0 %4801
        %4803 = vrot.lane.b32.xlu0 %v4790, 96
        %v4804 = vpop.permute.xlu0 %4803
        %4805 = vrot.lane.b32.xlu0 %v4791, 96
        %v4806 = vpop.permute.xlu0 %4805
        %v4807 = vrot.slane %v4798, 4
        %v4808 = vrot.slane %v4800, 4
        %v4809 = vrot.slane %v4802, 4
        %v4810 = vrot.slane %v4804, 4
        %v4811 = vrot.slane %v4806, 4
        %v4812 = vsel %vm680, %v4807, %v4808
        %v4813 = vsel %vm1106, %v4798, %v4812
        %v4814 = vsel %vm680, %v4808, %v4809
        %v4815 = vsel %vm1106, %v4800, %v4814
        %v4816 = vsel %vm680, %v4809, %v4810
        %v4817 = vsel %vm1106, %v4802, %v4816
        %v4818 = vsel %vm680, %v4810, %v4811
        %v4819 = vsel %vm1106, %v4804, %v4818
        %v4825 = vadd.f32 %v4680, %v4813
        %v4826 = vadd.f32 %v4681, %v4815
        %v4827 = vadd.f32 %v4682, %v4817
        %v4828 = vadd.f32 %v4683, %v4819
        %v4829 = vadd.f32 %v4684, %v4806
        %s4830 = sld [smem:[#allocation8 + $0x39]]
        %v4831 = vstv %s4830
        %v4832 = vmul.f32 %v4831, %v4735
        %v4833 = vmul.f32 %v4831, %v4736
        %v4834 = vmul.f32 %v4831, %v4737
        %v4835 = vmul.f32 %v4831, %v4738
        %v4836 = vmul.f32 %v4831, %v4739
        %4842 = vrot.lane.b32.xlu0 %v4832, 96
        %v4843 = vpop.permute.xlu0 %4842
        %4844 = vrot.lane.b32.xlu0 %v4833, 96
        %v4845 = vpop.permute.xlu0 %4844
        %4846 = vrot.lane.b32.xlu0 %v4834, 96
        %v4847 = vpop.permute.xlu0 %4846
        %4848 = vrot.lane.b32.xlu0 %v4835, 96
        %v4849 = vpop.permute.xlu0 %4848
        %4850 = vrot.lane.b32.xlu0 %v4836, 96
        %v4851 = vpop.permute.xlu0 %4850
        %v4852 = vrot.slane %v4843, 4
        %v4853 = vrot.slane %v4845, 4
        %v4854 = vrot.slane %v4847, 4
        %v4855 = vrot.slane %v4849, 4
        %v4856 = vrot.slane %v4851, 4
        %v4857 = vsel %vm680, %v4852, %v4853
        %v4858 = vsel %vm1106, %v4843, %v4857
        %v4859 = vsel %vm680, %v4853, %v4854
        %v4860 = vsel %vm1106, %v4845, %v4859
        %v4861 = vsel %vm680, %v4854, %v4855
        %v4862 = vsel %vm1106, %v4847, %v4861
        %v4863 = vsel %vm680, %v4855, %v4856
        %v4864 = vsel %vm1106, %v4849, %v4863
        %v4870 = vadd.f32 %v4725, %v4858
        %v4871 = vadd.f32 %v4726, %v4860
        %v4872 = vadd.f32 %v4727, %v4862
        %v4873 = vadd.f32 %v4728, %v4864
        %v4874 = vadd.f32 %v4729, %v4851
        %v4875 = vld [vmem:[#allocation3 + $0x4] sm:$0xff]
        %v4876 = vld [vmem:[#allocation3 + $0xc] sm:$0xff]
        %v4877 = vld [vmem:[#allocation3 + $0x14] sm:$0xff]
        %v4878 = vld [vmem:[#allocation3 + $0x1c] sm:$0xff]
        %s4879 = sld [smem:[#allocation8 + $0x4]]
        %v4880 = vstv %s4879
        %v4881 = vmul.f32 %v4880, %v4875
        %v4882 = vmul.f32 %v4880, %v4876
        %v4883 = vmul.f32 %v4880, %v4877
        %v4884 = vmul.f32 %v4880, %v4878
        %4889 = vrot.lane.b32.xlu0 %v4881, 95
        %v4890 = vpop.permute.xlu0 %4889
        %4891 = vrot.lane.b32.xlu0 %v4882, 95
        %v4892 = vpop.permute.xlu0 %4891
        %4893 = vrot.lane.b32.xlu0 %v4883, 95
        %v4894 = vpop.permute.xlu0 %4893
        %4895 = vrot.lane.b32.xlu0 %v4884, 95
        %v4896 = vpop.permute.xlu0 %4895
        %v4897 = vrot.slane %v4890, 4
        %v4898 = vrot.slane %v4892, 4
        %v4899 = vrot.slane %v4894, 4
        %v4900 = vrot.slane %v4896, 4
        %v4901 = vsel %vm678, %v4897, %v4890
        %v4902 = vsel %vm680, %v4897, %v4898
        %v4903 = vsel %vm678, %v4902, %v4892
        %v4904 = vsel %vm680, %v4898, %v4899
        %v4905 = vsel %vm678, %v4904, %v4894
        %v4906 = vsel %vm680, %v4899, %v4900
        %v4907 = vsel %vm678, %v4906, %v4896
        %v4913 = vadd.f32 %v4780, %v4901
        %v4914 = vadd.f32 %v4781, %v4903
        %v4915 = vadd.f32 %v4782, %v4905
        %v4916 = vadd.f32 %v4783, %v4907
        %v4917 = vadd.f32 %v4784, %v4900
        %s4918 = sld [smem:[#allocation8 + $0x1f]]
        %v4919 = vstv %s4918
        %v4920 = vmul.f32 %v4919, %v4875
        %v4921 = vmul.f32 %v4919, %v4876
        %v4922 = vmul.f32 %v4919, %v4877
        %v4923 = vmul.f32 %v4919, %v4878
        %4928 = vrot.lane.b32.xlu0 %v4920, 95
        %v4929 = vpop.permute.xlu0 %4928
        %4930 = vrot.lane.b32.xlu0 %v4921, 95
        %v4931 = vpop.permute.xlu0 %4930
        %4932 = vrot.lane.b32.xlu0 %v4922, 95
        %v4933 = vpop.permute.xlu0 %4932
        %4934 = vrot.lane.b32.xlu0 %v4923, 95
        %v4935 = vpop.permute.xlu0 %4934
        %v4936 = vrot.slane %v4929, 4
        %v4937 = vrot.slane %v4931, 4
        %v4938 = vrot.slane %v4933, 4
        %v4939 = vrot.slane %v4935, 4
        %v4940 = vsel %vm678, %v4936, %v4929
        %v4941 = vsel %vm680, %v4936, %v4937
        %v4942 = vsel %vm678, %v4941, %v4931
        %v4943 = vsel %vm680, %v4937, %v4938
        %v4944 = vsel %vm678, %v4943, %v4933
        %v4945 = vsel %vm680, %v4938, %v4939
        %v4946 = vsel %vm678, %v4945, %v4935
        %v4952 = vadd.f32 %v4825, %v4940
        %v4953 = vadd.f32 %v4826, %v4942
        %v4954 = vadd.f32 %v4827, %v4944
        %v4955 = vadd.f32 %v4828, %v4946
        %v4956 = vadd.f32 %v4829, %v4939
        %s4957 = sld [smem:[#allocation8 + $0x3a]]
        %v4958 = vstv %s4957
        %v4959 = vmul.f32 %v4958, %v4875
        %v4960 = vmul.f32 %v4958, %v4876
        %v4961 = vmul.f32 %v4958, %v4877
        %v4962 = vmul.f32 %v4958, %v4878
        %4967 = vrot.lane.b32.xlu0 %v4959, 95
        %v4968 = vpop.permute.xlu0 %4967
        %4969 = vrot.lane.b32.xlu0 %v4960, 95
        %v4970 = vpop.permute.xlu0 %4969
        %4971 = vrot.lane.b32.xlu0 %v4961, 95
        %v4972 = vpop.permute.xlu0 %4971
        %4973 = vrot.lane.b32.xlu0 %v4962, 95
        %v4974 = vpop.permute.xlu0 %4973
        %v4975 = vrot.slane %v4968, 4
        %v4976 = vrot.slane %v4970, 4
        %v4977 = vrot.slane %v4972, 4
        %v4978 = vrot.slane %v4974, 4
        %v4979 = vsel %vm678, %v4975, %v4968
        %v4980 = vsel %vm680, %v4975, %v4976
        %v4981 = vsel %vm678, %v4980, %v4970
        %v4982 = vsel %vm680, %v4976, %v4977
        %v4983 = vsel %vm678, %v4982, %v4972
        %v4984 = vsel %vm680, %v4977, %v4978
        %v4985 = vsel %vm678, %v4984, %v4974
        %v4991 = vadd.f32 %v4870, %v4979
        %v4992 = vadd.f32 %v4871, %v4981
        %v4993 = vadd.f32 %v4872, %v4983
        %v4994 = vadd.f32 %v4873, %v4985
        %v4995 = vadd.f32 %v4874, %v4978
        %v4996 = vld [vmem:[#allocation3 + $0x4] sm:$0xff]
        %v4997 = vld [vmem:[#allocation3 + $0xc] sm:$0xff]
        %v4998 = vld [vmem:[#allocation3 + $0x14] sm:$0xff]
        %v4999 = vld [vmem:[#allocation3 + $0x1c] sm:$0xff]
        %v5000 = vld [vmem:[#allocation3 + $0x24] sm:$0xf]
        %v5001 = vmul.f32 %v4996, %v1353
        %v5002 = vmul.f32 %v4997, %v1355
        %v5003 = vmul.f32 %v4998, %v1357
        %v5004 = vmul.f32 %v4999, %v1359
        %v5005 = vmul.f32 %v5000, %v1351
        %s5006 = sld [smem:[#allocation8 + $0x5]]
        %v5007 = vstv %s5006
        %v5008 = vmul.f32 %v5007, %v5001
        %v5009 = vmul.f32 %v5007, %v5002
        %v5010 = vmul.f32 %v5007, %v5003
        %v5011 = vmul.f32 %v5007, %v5004
        %v5012 = vmul.f32 %v5007, %v5005
        %5018 = vrot.lane.b32.xlu0 %v5008, 94
        %v5019 = vpop.permute.xlu0 %5018
        %5020 = vrot.lane.b32.xlu0 %v5009, 94
        %v5021 = vpop.permute.xlu0 %5020
        %5022 = vrot.lane.b32.xlu0 %v5010, 94
        %v5023 = vpop.permute.xlu0 %5022
        %5024 = vrot.lane.b32.xlu0 %v5011, 94
        %v5025 = vpop.permute.xlu0 %5024
        %5026 = vrot.lane.b32.xlu0 %v5012, 94
        %v5027 = vpop.permute.xlu0 %5026
        %v5028 = vrot.slane %v5019, 4
        %v5029 = vrot.slane %v5021, 4
        %v5030 = vrot.slane %v5023, 4
        %v5031 = vrot.slane %v5025, 4
        %v5032 = vsel %vm1396, %v5028, %v5019
        %v5033 = vsel %vm680, %v5028, %v5029
        %v5034 = vsel %vm1396, %v5033, %v5021
        %v5035 = vsel %vm680, %v5029, %v5030
        %v5036 = vsel %vm1396, %v5035, %v5023
        %v5037 = vsel %vm680, %v5030, %v5031
        %v5038 = vsel %vm1396, %v5037, %v5025
        %v5039 = vsel %vm1396, %v5031, %v5027
        %v5045 = vadd.f32 %v4913, %v5032
        %v5046 = vadd.f32 %v4914, %v5034
        %v5047 = vadd.f32 %v4915, %v5036
        %v5048 = vadd.f32 %v4916, %v5038
        %v5049 = vadd.f32 %v4917, %v5039
        %s5050 = sld [smem:[#allocation8 + $0x20]]
        %v5051 = vstv %s5050
        %v5052 = vmul.f32 %v5051, %v5001
        %v5053 = vmul.f32 %v5051, %v5002
        %v5054 = vmul.f32 %v5051, %v5003
        %v5055 = vmul.f32 %v5051, %v5004
        %v5056 = vmul.f32 %v5051, %v5005
        %5062 = vrot.lane.b32.xlu0 %v5052, 94
        %v5063 = vpop.permute.xlu0 %5062
        %5064 = vrot.lane.b32.xlu0 %v5053, 94
        %v5065 = vpop.permute.xlu0 %5064
        %5066 = vrot.lane.b32.xlu0 %v5054, 94
        %v5067 = vpop.permute.xlu0 %5066
        %5068 = vrot.lane.b32.xlu0 %v5055, 94
        %v5069 = vpop.permute.xlu0 %5068
        %5070 = vrot.lane.b32.xlu0 %v5056, 94
        %v5071 = vpop.permute.xlu0 %5070
        %v5072 = vrot.slane %v5063, 4
        %v5073 = vrot.slane %v5065, 4
        %v5074 = vrot.slane %v5067, 4
        %v5075 = vrot.slane %v5069, 4
        %v5076 = vsel %vm1396, %v5072, %v5063
        %v5077 = vsel %vm680, %v5072, %v5073
        %v5078 = vsel %vm1396, %v5077, %v5065
        %v5079 = vsel %vm680, %v5073, %v5074
        %v5080 = vsel %vm1396, %v5079, %v5067
        %v5081 = vsel %vm680, %v5074, %v5075
        %v5082 = vsel %vm1396, %v5081, %v5069
        %v5083 = vsel %vm1396, %v5075, %v5071
        %v5089 = vadd.f32 %v4952, %v5076
        %v5090 = vadd.f32 %v4953, %v5078
        %v5091 = vadd.f32 %v4954, %v5080
        %v5092 = vadd.f32 %v4955, %v5082
        %v5093 = vadd.f32 %v4956, %v5083
        %s5094 = sld [smem:[#allocation8 + $0x3b]]
        %v5095 = vstv %s5094
        %v5096 = vmul.f32 %v5095, %v5001
        %v5097 = vmul.f32 %v5095, %v5002
        %v5098 = vmul.f32 %v5095, %v5003
        %v5099 = vmul.f32 %v5095, %v5004
        %v5100 = vmul.f32 %v5095, %v5005
        %5106 = vrot.lane.b32.xlu0 %v5096, 94
        %v5107 = vpop.permute.xlu0 %5106
        %5108 = vrot.lane.b32.xlu0 %v5097, 94
        %v5109 = vpop.permute.xlu0 %5108
        %5110 = vrot.lane.b32.xlu0 %v5098, 94
        %v5111 = vpop.permute.xlu0 %5110
        %5112 = vrot.lane.b32.xlu0 %v5099, 94
        %v5113 = vpop.permute.xlu0 %5112
        %5114 = vrot.lane.b32.xlu0 %v5100, 94
        %v5115 = vpop.permute.xlu0 %5114
        %v5116 = vrot.slane %v5107, 4
        %v5117 = vrot.slane %v5109, 4
        %v5118 = vrot.slane %v5111, 4
        %v5119 = vrot.slane %v5113, 4
        %v5120 = vsel %vm1396, %v5116, %v5107
        %v5121 = vsel %vm680, %v5116, %v5117
        %v5122 = vsel %vm1396, %v5121, %v5109
        %v5123 = vsel %vm680, %v5117, %v5118
        %v5124 = vsel %vm1396, %v5123, %v5111
        %v5125 = vsel %vm680, %v5118, %v5119
        %v5126 = vsel %vm1396, %v5125, %v5113
        %v5127 = vsel %vm1396, %v5119, %v5115
        %v5133 = vadd.f32 %v4991, %v5120
        %v5134 = vadd.f32 %v4992, %v5122
        %v5135 = vadd.f32 %v4993, %v5124
        %v5136 = vadd.f32 %v4994, %v5126
        %v5137 = vadd.f32 %v4995, %v5127
        %v5138 = vld [vmem:[#allocation3 + $0x4] sm:$0xff]
        %v5139 = vld [vmem:[#allocation3 + $0xc] sm:$0xff]
        %v5140 = vld [vmem:[#allocation3 + $0x14] sm:$0xff]
        %v5141 = vld [vmem:[#allocation3 + $0x1c] sm:$0xff]
        %v5142 = vld [vmem:[#allocation3 + $0x24] sm:$0xf]
        %v5143 = vmul.f32 %v5138, %v1521
        %v5144 = vmul.f32 %v5139, %v1523
        %v5145 = vmul.f32 %v5140, %v1525
        %v5146 = vmul.f32 %v5141, %v1527
        %v5147 = vmul.f32 %v5142, %v1519
        %s5148 = sld [smem:[#allocation8 + $0x6]]
        %v5149 = vstv %s5148
        %v5150 = vmul.f32 %v5149, %v5143
        %v5151 = vmul.f32 %v5149, %v5144
        %v5152 = vmul.f32 %v5149, %v5145
        %v5153 = vmul.f32 %v5149, %v5146
        %v5154 = vmul.f32 %v5149, %v5147
        %5160 = vrot.lane.b32.xlu0 %v5150, 64
        %v5161 = vpop.permute.xlu0 %5160
        %5162 = vrot.lane.b32.xlu0 %v5151, 64
        %v5163 = vpop.permute.xlu0 %5162
        %5164 = vrot.lane.b32.xlu0 %v5152, 64
        %v5165 = vpop.permute.xlu0 %5164
        %5166 = vrot.lane.b32.xlu0 %v5153, 64
        %v5167 = vpop.permute.xlu0 %5166
        %5168 = vrot.lane.b32.xlu0 %v5154, 64
        %v5169 = vpop.permute.xlu0 %5168
        %v5170 = vrot.slane %v5161, 4
        %v5171 = vrot.slane %v5163, 4
        %v5172 = vrot.slane %v5165, 4
        %v5173 = vrot.slane %v5167, 4
        %v5174 = vsel %vm1564, %v5170, %v5161
        %v5175 = vsel %vm680, %v5170, %v5171
        %v5176 = vsel %vm1564, %v5175, %v5163
        %v5177 = vsel %vm680, %v5171, %v5172
        %v5178 = vsel %vm1564, %v5177, %v5165
        %v5179 = vsel %vm680, %v5172, %v5173
        %v5180 = vsel %vm1564, %v5179, %v5167
        %v5181 = vsel %vm1564, %v5173, %v5169
        %v5187 = vadd.f32 %v5045, %v5174
        %v5188 = vadd.f32 %v5046, %v5176
        %v5189 = vadd.f32 %v5047, %v5178
        %v5190 = vadd.f32 %v5048, %v5180
        %v5191 = vadd.f32 %v5049, %v5181
        %s5192 = sld [smem:[#allocation8 + $0x21]]
        %v5193 = vstv %s5192
        %v5194 = vmul.f32 %v5193, %v5143
        %v5195 = vmul.f32 %v5193, %v5144
        %v5196 = vmul.f32 %v5193, %v5145
        %v5197 = vmul.f32 %v5193, %v5146
        %v5198 = vmul.f32 %v5193, %v5147
        %5204 = vrot.lane.b32.xlu0 %v5194, 64
        %v5205 = vpop.permute.xlu0 %5204
        %5206 = vrot.lane.b32.xlu0 %v5195, 64
        %v5207 = vpop.permute.xlu0 %5206
        %5208 = vrot.lane.b32.xlu0 %v5196, 64
        %v5209 = vpop.permute.xlu0 %5208
        %5210 = vrot.lane.b32.xlu0 %v5197, 64
        %v5211 = vpop.permute.xlu0 %5210
        %5212 = vrot.lane.b32.xlu0 %v5198, 64
        %v5213 = vpop.permute.xlu0 %5212
        %v5214 = vrot.slane %v5205, 4
        %v5215 = vrot.slane %v5207, 4
        %v5216 = vrot.slane %v5209, 4
        %v5217 = vrot.slane %v5211, 4
        %v5218 = vsel %vm1564, %v5214, %v5205
        %v5219 = vsel %vm680, %v5214, %v5215
        %v5220 = vsel %vm1564, %v5219, %v5207
        %v5221 = vsel %vm680, %v5215, %v5216
        %v5222 = vsel %vm1564, %v5221, %v5209
        %v5223 = vsel %vm680, %v5216, %v5217
        %v5224 = vsel %vm1564, %v5223, %v5211
        %v5225 = vsel %vm1564, %v5217, %v5213
        %v5231 = vadd.f32 %v5089, %v5218
        %v5232 = vadd.f32 %v5090, %v5220
        %v5233 = vadd.f32 %v5091, %v5222
        %v5234 = vadd.f32 %v5092, %v5224
        %v5235 = vadd.f32 %v5093, %v5225
        %s5236 = sld [smem:[#allocation8 + $0x3c]]
        %v5237 = vstv %s5236
        %v5238 = vmul.f32 %v5237, %v5143
        %v5239 = vmul.f32 %v5237, %v5144
        %v5240 = vmul.f32 %v5237, %v5145
        %v5241 = vmul.f32 %v5237, %v5146
        %v5242 = vmul.f32 %v5237, %v5147
        %5248 = vrot.lane.b32.xlu0 %v5238, 64
        %v5249 = vpop.permute.xlu0 %5248
        %5250 = vrot.lane.b32.xlu0 %v5239, 64
        %v5251 = vpop.permute.xlu0 %5250
        %5252 = vrot.lane.b32.xlu0 %v5240, 64
        %v5253 = vpop.permute.xlu0 %5252
        %5254 = vrot.lane.b32.xlu0 %v5241, 64
        %v5255 = vpop.permute.xlu0 %5254
        %5256 = vrot.lane.b32.xlu0 %v5242, 64
        %v5257 = vpop.permute.xlu0 %5256
        %v5258 = vrot.slane %v5249, 4
        %v5259 = vrot.slane %v5251, 4
        %v5260 = vrot.slane %v5253, 4
        %v5261 = vrot.slane %v5255, 4
        %v5262 = vsel %vm1564, %v5258, %v5249
        %v5263 = vsel %vm680, %v5258, %v5259
        %v5264 = vsel %vm1564, %v5263, %v5251
        %v5265 = vsel %vm680, %v5259, %v5260
        %v5266 = vsel %vm1564, %v5265, %v5253
        %v5267 = vsel %vm680, %v5260, %v5261
        %v5268 = vsel %vm1564, %v5267, %v5255
        %v5269 = vsel %vm1564, %v5261, %v5257
        %v5275 = vadd.f32 %v5133, %v5262
        %v5276 = vadd.f32 %v5134, %v5264
        %v5277 = vadd.f32 %v5135, %v5266
        %v5278 = vadd.f32 %v5136, %v5268
        %v5279 = vadd.f32 %v5137, %v5269
        %v5280 = vld [vmem:[#allocation3 + $0x4] sm:$0xff]
        %v5281 = vld [vmem:[#allocation3 + $0xc] sm:$0xff]
        %v5282 = vld [vmem:[#allocation3 + $0x14] sm:$0xff]
        %v5283 = vld [vmem:[#allocation3 + $0x1c] sm:$0xff]
        %v5284 = vld [vmem:[#allocation3 + $0x24] sm:$0xf]
        %s5285 = sld [smem:[#allocation8 + $0x7]]
        %v5286 = vstv %s5285
        %v5287 = vmul.f32 %v5286, %v5280
        %v5288 = vmul.f32 %v5286, %v5281
        %v5289 = vmul.f32 %v5286, %v5282
        %v5290 = vmul.f32 %v5286, %v5283
        %v5291 = vmul.f32 %v5286, %v5284
        %5297 = vrot.lane.b32.xlu0 %v5287, 63
        %v5298 = vpop.permute.xlu0 %5297
        %5299 = vrot.lane.b32.xlu0 %v5288, 63
        %v5300 = vpop.permute.xlu0 %5299
        %5301 = vrot.lane.b32.xlu0 %v5289, 63
        %v5302 = vpop.permute.xlu0 %5301
        %5303 = vrot.lane.b32.xlu0 %v5290, 63
        %v5304 = vpop.permute.xlu0 %5303
        %5305 = vrot.lane.b32.xlu0 %v5291, 63
        %v5306 = vpop.permute.xlu0 %5305
        %v5307 = vrot.slane %v5298, 4
        %v5308 = vrot.slane %v5300, 4
        %v5309 = vrot.slane %v5302, 4
        %v5310 = vrot.slane %v5304, 4
        %v5311 = vsel %vm1702, %v5307, %v5298
        %v5312 = vsel %vm680, %v5307, %v5308
        %v5313 = vsel %vm1702, %v5312, %v5300
        %v5314 = vsel %vm680, %v5308, %v5309
        %v5315 = vsel %vm1702, %v5314, %v5302
        %v5316 = vsel %vm680, %v5309, %v5310
        %v5317 = vsel %vm1702, %v5316, %v5304
        %v5318 = vsel %vm1702, %v5310, %v5306
        %v5324 = vadd.f32 %v5187, %v5311
        %v5325 = vadd.f32 %v5188, %v5313
        %v5326 = vadd.f32 %v5189, %v5315
        %v5327 = vadd.f32 %v5190, %v5317
        %v5328 = vadd.f32 %v5191, %v5318
        %s5329 = sld [smem:[#allocation8 + $0x22]]
        %v5330 = vstv %s5329
        %v5331 = vmul.f32 %v5330, %v5280
        %v5332 = vmul.f32 %v5330, %v5281
        %v5333 = vmul.f32 %v5330, %v5282
        %v5334 = vmul.f32 %v5330, %v5283
        %v5335 = vmul.f32 %v5330, %v5284
        %5341 = vrot.lane.b32.xlu0 %v5331, 63
        %v5342 = vpop.permute.xlu0 %5341
        %5343 = vrot.lane.b32.xlu0 %v5332, 63
        %v5344 = vpop.permute.xlu0 %5343
        %5345 = vrot.lane.b32.xlu0 %v5333, 63
        %v5346 = vpop.permute.xlu0 %5345
        %5347 = vrot.lane.b32.xlu0 %v5334, 63
        %v5348 = vpop.permute.xlu0 %5347
        %5349 = vrot.lane.b32.xlu0 %v5335, 63
        %v5350 = vpop.permute.xlu0 %5349
        %v5351 = vrot.slane %v5342, 4
        %v5352 = vrot.slane %v5344, 4
        %v5353 = vrot.slane %v5346, 4
        %v5354 = vrot.slane %v5348, 4
        %v5355 = vsel %vm1702, %v5351, %v5342
        %v5356 = vsel %vm680, %v5351, %v5352
        %v5357 = vsel %vm1702, %v5356, %v5344
        %v5358 = vsel %vm680, %v5352, %v5353
        %v5359 = vsel %vm1702, %v5358, %v5346
        %v5360 = vsel %vm680, %v5353, %v5354
        %v5361 = vsel %vm1702, %v5360, %v5348
        %v5362 = vsel %vm1702, %v5354, %v5350
        %v5368 = vadd.f32 %v5231, %v5355
        %v5369 = vadd.f32 %v5232, %v5357
        %v5370 = vadd.f32 %v5233, %v5359
        %v5371 = vadd.f32 %v5234, %v5361
        %v5372 = vadd.f32 %v5235, %v5362
        %s5373 = sld [smem:[#allocation8 + $0x3d]]
        %v5374 = vstv %s5373
        %v5375 = vmul.f32 %v5374, %v5280
        %v5376 = vmul.f32 %v5374, %v5281
        %v5377 = vmul.f32 %v5374, %v5282
        %v5378 = vmul.f32 %v5374, %v5283
        %v5379 = vmul.f32 %v5374, %v5284
        %5385 = vrot.lane.b32.xlu0 %v5375, 63
        %v5386 = vpop.permute.xlu0 %5385
        %5387 = vrot.lane.b32.xlu0 %v5376, 63
        %v5388 = vpop.permute.xlu0 %5387
        %5389 = vrot.lane.b32.xlu0 %v5377, 63
        %v5390 = vpop.permute.xlu0 %5389
        %5391 = vrot.lane.b32.xlu0 %v5378, 63
        %v5392 = vpop.permute.xlu0 %5391
        %5393 = vrot.lane.b32.xlu0 %v5379, 63
        %v5394 = vpop.permute.xlu0 %5393
        %v5395 = vrot.slane %v5386, 4
        %v5396 = vrot.slane %v5388, 4
        %v5397 = vrot.slane %v5390, 4
        %v5398 = vrot.slane %v5392, 4
        %v5399 = vsel %vm1702, %v5395, %v5386
        %v5400 = vsel %vm680, %v5395, %v5396
        %v5401 = vsel %vm1702, %v5400, %v5388
        %v5402 = vsel %vm680, %v5396, %v5397
        %v5403 = vsel %vm1702, %v5402, %v5390
        %v5404 = vsel %vm680, %v5397, %v5398
        %v5405 = vsel %vm1702, %v5404, %v5392
        %v5406 = vsel %vm1702, %v5398, %v5394
        %v5412 = vadd.f32 %v5275, %v5399
        %v5413 = vadd.f32 %v5276, %v5401
        %v5414 = vadd.f32 %v5277, %v5403
        %v5415 = vadd.f32 %v5278, %v5405
        %v5416 = vadd.f32 %v5279, %v5406
        %v5417 = vmul.f32 %v5280, %v1822
        %v5418 = vmul.f32 %v5281, %v1824
        %v5419 = vmul.f32 %v5282, %v1826
        %v5420 = vmul.f32 %v5283, %v1828
        %v5421 = vmul.f32 %v5284, %v1820
        %s5422 = sld [smem:[#allocation8 + $0x8]]
        %v5423 = vstv %s5422
        %v5424 = vmul.f32 %v5423, %v5417
        %v5425 = vmul.f32 %v5423, %v5418
        %v5426 = vmul.f32 %v5423, %v5419
        %v5427 = vmul.f32 %v5423, %v5420
        %v5428 = vmul.f32 %v5423, %v5421
        %5434 = vrot.lane.b32.xlu0 %v5424, 62
        %v5435 = vpop.permute.xlu0 %5434
        %5436 = vrot.lane.b32.xlu0 %v5425, 62
        %v5437 = vpop.permute.xlu0 %5436
        %5438 = vrot.lane.b32.xlu0 %v5426, 62
        %v5439 = vpop.permute.xlu0 %5438
        %5440 = vrot.lane.b32.xlu0 %v5427, 62
        %v5441 = vpop.permute.xlu0 %5440
        %5442 = vrot.lane.b32.xlu0 %v5428, 62
        %v5443 = vpop.permute.xlu0 %5442
        %v5444 = vrot.slane %v5435, 4
        %v5445 = vrot.slane %v5437, 4
        %v5446 = vrot.slane %v5439, 4
        %v5447 = vrot.slane %v5441, 4
        %v5448 = vsel %vm1865, %v5444, %v5435
        %v5449 = vsel %vm680, %v5444, %v5445
        %v5450 = vsel %vm1865, %v5449, %v5437
        %v5451 = vsel %vm680, %v5445, %v5446
        %v5452 = vsel %vm1865, %v5451, %v5439
        %v5453 = vsel %vm680, %v5446, %v5447
        %v5454 = vsel %vm1865, %v5453, %v5441
        %v5455 = vsel %vm1865, %v5447, %v5443
        %v5461 = vadd.f32 %v5324, %v5448
        %v5462 = vadd.f32 %v5325, %v5450
        %v5463 = vadd.f32 %v5326, %v5452
        %v5464 = vadd.f32 %v5327, %v5454
        %v5465 = vadd.f32 %v5328, %v5455
        %s5466 = sld [smem:[#allocation8 + $0x23]]
        %v5467 = vstv %s5466
        %v5468 = vmul.f32 %v5467, %v5417
        %v5469 = vmul.f32 %v5467, %v5418
        %v5470 = vmul.f32 %v5467, %v5419
        %v5471 = vmul.f32 %v5467, %v5420
        %v5472 = vmul.f32 %v5467, %v5421
        %5478 = vrot.lane.b32.xlu0 %v5468, 62
        %v5479 = vpop.permute.xlu0 %5478
        %5480 = vrot.lane.b32.xlu0 %v5469, 62
        %v5481 = vpop.permute.xlu0 %5480
        %5482 = vrot.lane.b32.xlu0 %v5470, 62
        %v5483 = vpop.permute.xlu0 %5482
        %5484 = vrot.lane.b32.xlu0 %v5471, 62
        %v5485 = vpop.permute.xlu0 %5484
        %5486 = vrot.lane.b32.xlu0 %v5472, 62
        %v5487 = vpop.permute.xlu0 %5486
        %v5488 = vrot.slane %v5479, 4
        %v5489 = vrot.slane %v5481, 4
        %v5490 = vrot.slane %v5483, 4
        %v5491 = vrot.slane %v5485, 4
        %v5492 = vsel %vm1865, %v5488, %v5479
        %v5493 = vsel %vm680, %v5488, %v5489
        %v5494 = vsel %vm1865, %v5493, %v5481
        %v5495 = vsel %vm680, %v5489, %v5490
        %v5496 = vsel %vm1865, %v5495, %v5483
        %v5497 = vsel %vm680, %v5490, %v5491
        %v5498 = vsel %vm1865, %v5497, %v5485
        %v5499 = vsel %vm1865, %v5491, %v5487
        %v5505 = vadd.f32 %v5368, %v5492
        %v5506 = vadd.f32 %v5369, %v5494
        %v5507 = vadd.f32 %v5370, %v5496
        %v5508 = vadd.f32 %v5371, %v5498
        %v5509 = vadd.f32 %v5372, %v5499
        %s5510 = sld [smem:[#allocation8 + $0x3e]]
        %v5511 = vstv %s5510
        %v5512 = vmul.f32 %v5511, %v5417
        %v5513 = vmul.f32 %v5511, %v5418
        %v5514 = vmul.f32 %v5511, %v5419
        %v5515 = vmul.f32 %v5511, %v5420
        %v5516 = vmul.f32 %v5511, %v5421
        %5522 = vrot.lane.b32.xlu0 %v5512, 62
        %v5523 = vpop.permute.xlu0 %5522
        %5524 = vrot.lane.b32.xlu0 %v5513, 62
        %v5525 = vpop.permute.xlu0 %5524
        %5526 = vrot.lane.b32.xlu0 %v5514, 62
        %v5527 = vpop.permute.xlu0 %5526
        %5528 = vrot.lane.b32.xlu0 %v5515, 62
        %v5529 = vpop.permute.xlu0 %5528
        %5530 = vrot.lane.b32.xlu0 %v5516, 62
        %v5531 = vpop.permute.xlu0 %5530
        %v5532 = vrot.slane %v5523, 4
        %v5533 = vrot.slane %v5525, 4
        %v5534 = vrot.slane %v5527, 4
        %v5535 = vrot.slane %v5529, 4
        %v5536 = vsel %vm1865, %v5532, %v5523
        %v5537 = vsel %vm680, %v5532, %v5533
        %v5538 = vsel %vm1865, %v5537, %v5525
        %v5539 = vsel %vm680, %v5533, %v5534
        %v5540 = vsel %vm1865, %v5539, %v5527
        %v5541 = vsel %vm680, %v5534, %v5535
        %v5542 = vsel %vm1865, %v5541, %v5529
        %v5543 = vsel %vm1865, %v5535, %v5531
        %v5549 = vadd.f32 %v5412, %v5536
        %v5550 = vadd.f32 %v5413, %v5538
        %v5551 = vadd.f32 %v5414, %v5540
        %v5552 = vadd.f32 %v5415, %v5542
        %v5553 = vadd.f32 %v5416, %v5543
        %v5554 = vld [vmem:[%s471] sm:$0xff]
        %v5555 = vld [vmem:[%s471 + $0x8] sm:$0xff]
        %v5556 = vld [vmem:[%s471 + $0x10] sm:$0xff]
        %v5557 = vld [vmem:[%s471 + $0x18] sm:$0xff]
        %v5558 = vld [vmem:[%s471 + $0x20] sm:$0xf]
        %v5559 = vmul.f32 %v5554, %v679
        %v5560 = vmul.f32 %v5555, %v682
        %v5561 = vmul.f32 %v5556, %v684
        %v5562 = vmul.f32 %v5557, %v686
        %v5563 = vmul.f32 %v5558, %v677
        %s5564 = sld [smem:[#allocation8 + $0x9]]
        %v5565 = vstv %s5564
        %v5566 = vmul.f32 %v5565, %v5559
        %v5567 = vmul.f32 %v5565, %v5560
        %v5568 = vmul.f32 %v5565, %v5561
        %v5569 = vmul.f32 %v5565, %v5562
        %v5570 = vmul.f32 %v5565, %v5563
        %v5571 = vadd.f32 %v5461, %v5566
        %v5572 = vadd.f32 %v5462, %v5567
        %v5573 = vadd.f32 %v5463, %v5568
        %v5574 = vadd.f32 %v5464, %v5569
        %v5575 = vadd.f32 %v5465, %v5570
        %s5576 = sld [smem:[#allocation8 + $0x24]]
        %v5577 = vstv %s5576
        %v5578 = vmul.f32 %v5577, %v5559
        %v5579 = vmul.f32 %v5577, %v5560
        %v5580 = vmul.f32 %v5577, %v5561
        %v5581 = vmul.f32 %v5577, %v5562
        %v5582 = vmul.f32 %v5577, %v5563
        %v5583 = vadd.f32 %v5505, %v5578
        %v5584 = vadd.f32 %v5506, %v5579
        %v5585 = vadd.f32 %v5507, %v5580
        %v5586 = vadd.f32 %v5508, %v5581
        %v5587 = vadd.f32 %v5509, %v5582
        %s5588 = sld [smem:[#allocation8 + $0x3f]]
        %v5589 = vstv %s5588
        %v5590 = vmul.f32 %v5589, %v5559
        %v5591 = vmul.f32 %v5589, %v5560
        %v5592 = vmul.f32 %v5589, %v5561
        %v5593 = vmul.f32 %v5589, %v5562
        %v5594 = vmul.f32 %v5589, %v5563
        %v5595 = vadd.f32 %v5549, %v5590
        %v5596 = vadd.f32 %v5550, %v5591
        %v5597 = vadd.f32 %v5551, %v5592
        %v5598 = vadd.f32 %v5552, %v5593
        %v5599 = vadd.f32 %v5553, %v5594
        %v5600 = vld [vmem:[%s471] sm:$0xff]
        %v5601 = vld [vmem:[%s471 + $0x8] sm:$0xff]
        %v5602 = vld [vmem:[%s471 + $0x10] sm:$0xff]
        %v5603 = vld [vmem:[%s471 + $0x18] sm:$0xff]
        %v5604 = vld [vmem:[%s471 + $0x20] sm:$0xf]
        %s5605 = sld [smem:[#allocation8 + $0xa]]
        %v5606 = vstv %s5605
        %v5607 = vmul.f32 %v5606, %v5600
        %v5608 = vmul.f32 %v5606, %v5601
        %v5609 = vmul.f32 %v5606, %v5602
        %v5610 = vmul.f32 %v5606, %v5603
        %v5611 = vmul.f32 %v5606, %v5604
        %5617 = vrot.lane.b32.xlu0 %v5607, 127
        %v5618 = vpop.permute.xlu0 %5617
        %5619 = vrot.lane.b32.xlu0 %v5608, 127
        %v5620 = vpop.permute.xlu0 %5619
        %5621 = vrot.lane.b32.xlu0 %v5609, 127
        %v5622 = vpop.permute.xlu0 %5621
        %5623 = vrot.lane.b32.xlu0 %v5610, 127
        %v5624 = vpop.permute.xlu0 %5623
        %5625 = vrot.lane.b32.xlu0 %v5611, 127
        %v5626 = vpop.permute.xlu0 %5625
        %v5627 = vrot.slane %v5618, 4
        %v5628 = vrot.slane %v5620, 4
        %v5629 = vrot.slane %v5622, 4
        %v5630 = vrot.slane %v5624, 4
        %v5631 = vrot.slane %v5626, 4
        %v5632 = vsel %vm680, %v5627, %v5628
        %v5633 = vsel %vm766, %v5618, %v5632
        %v5634 = vsel %vm680, %v5628, %v5629
        %v5635 = vsel %vm766, %v5620, %v5634
        %v5636 = vsel %vm680, %v5629, %v5630
        %v5637 = vsel %vm766, %v5622, %v5636
        %v5638 = vsel %vm680, %v5630, %v5631
        %v5639 = vsel %vm766, %v5624, %v5638
        %v5645 = vadd.f32 %v5571, %v5633
        %v5646 = vadd.f32 %v5572, %v5635
        %v5647 = vadd.f32 %v5573, %v5637
        %v5648 = vadd.f32 %v5574, %v5639
        %v5649 = vadd.f32 %v5575, %v5626
        %s5650 = sld [smem:[#allocation8 + $0x25]]
        %v5651 = vstv %s5650
        %v5652 = vmul.f32 %v5651, %v5600
        %v5653 = vmul.f32 %v5651, %v5601
        %v5654 = vmul.f32 %v5651, %v5602
        %v5655 = vmul.f32 %v5651, %v5603
        %v5656 = vmul.f32 %v5651, %v5604
        %5662 = vrot.lane.b32.xlu0 %v5652, 127
        %v5663 = vpop.permute.xlu0 %5662
        %5664 = vrot.lane.b32.xlu0 %v5653, 127
        %v5665 = vpop.permute.xlu0 %5664
        %5666 = vrot.lane.b32.xlu0 %v5654, 127
        %v5667 = vpop.permute.xlu0 %5666
        %5668 = vrot.lane.b32.xlu0 %v5655, 127
        %v5669 = vpop.permute.xlu0 %5668
        %5670 = vrot.lane.b32.xlu0 %v5656, 127
        %v5671 = vpop.permute.xlu0 %5670
        %v5672 = vrot.slane %v5663, 4
        %v5673 = vrot.slane %v5665, 4
        %v5674 = vrot.slane %v5667, 4
        %v5675 = vrot.slane %v5669, 4
        %v5676 = vrot.slane %v5671, 4
        %v5677 = vsel %vm680, %v5672, %v5673
        %v5678 = vsel %vm766, %v5663, %v5677
        %v5679 = vsel %vm680, %v5673, %v5674
        %v5680 = vsel %vm766, %v5665, %v5679
        %v5681 = vsel %vm680, %v5674, %v5675
        %v5682 = vsel %vm766, %v5667, %v5681
        %v5683 = vsel %vm680, %v5675, %v5676
        %v5684 = vsel %vm766, %v5669, %v5683
        %v5690 = vadd.f32 %v5583, %v5678
        %v5691 = vadd.f32 %v5584, %v5680
        %v5692 = vadd.f32 %v5585, %v5682
        %v5693 = vadd.f32 %v5586, %v5684
        %v5694 = vadd.f32 %v5587, %v5671
        %s5695 = sld [smem:[#allocation8 + $0x40]]
        %v5696 = vstv %s5695
        %v5697 = vmul.f32 %v5696, %v5600
        %v5698 = vmul.f32 %v5696, %v5601
        %v5699 = vmul.f32 %v5696, %v5602
        %v5700 = vmul.f32 %v5696, %v5603
        %v5701 = vmul.f32 %v5696, %v5604
        %5707 = vrot.lane.b32.xlu0 %v5697, 127
        %v5708 = vpop.permute.xlu0 %5707
        %5709 = vrot.lane.b32.xlu0 %v5698, 127
        %v5710 = vpop.permute.xlu0 %5709
        %5711 = vrot.lane.b32.xlu0 %v5699, 127
        %v5712 = vpop.permute.xlu0 %5711
        %5713 = vrot.lane.b32.xlu0 %v5700, 127
        %v5714 = vpop.permute.xlu0 %5713
        %5715 = vrot.lane.b32.xlu0 %v5701, 127
        %v5716 = vpop.permute.xlu0 %5715
        %v5717 = vrot.slane %v5708, 4
        %v5718 = vrot.slane %v5710, 4
        %v5719 = vrot.slane %v5712, 4
        %v5720 = vrot.slane %v5714, 4
        %v5721 = vrot.slane %v5716, 4
        %v5722 = vsel %vm680, %v5717, %v5718
        %v5723 = vsel %vm766, %v5708, %v5722
        %v5724 = vsel %vm680, %v5718, %v5719
        %v5725 = vsel %vm766, %v5710, %v5724
        %v5726 = vsel %vm680, %v5719, %v5720
        %v5727 = vsel %vm766, %v5712, %v5726
        %v5728 = vsel %vm680, %v5720, %v5721
        %v5729 = vsel %vm766, %v5714, %v5728
        %v5735 = vadd.f32 %v5595, %v5723
        %v5736 = vadd.f32 %v5596, %v5725
        %v5737 = vadd.f32 %v5597, %v5727
        %v5738 = vadd.f32 %v5598, %v5729
        %v5739 = vadd.f32 %v5599, %v5716
        %v5740 = vmul.f32 %v5600, %v891
        %v5741 = vmul.f32 %v5601, %v893
        %v5742 = vmul.f32 %v5602, %v895
        %v5743 = vmul.f32 %v5603, %v897
        %v5744 = vmul.f32 %v5604, %v889
        %s5745 = sld [smem:[#allocation8 + $0xb]]
        %v5746 = vstv %s5745
        %v5747 = vmul.f32 %v5746, %v5740
        %v5748 = vmul.f32 %v5746, %v5741
        %v5749 = vmul.f32 %v5746, %v5742
        %v5750 = vmul.f32 %v5746, %v5743
        %v5751 = vmul.f32 %v5746, %v5744
        %5757 = vrot.lane.b32.xlu0 %v5747, 126
        %v5758 = vpop.permute.xlu0 %5757
        %5759 = vrot.lane.b32.xlu0 %v5748, 126
        %v5760 = vpop.permute.xlu0 %5759
        %5761 = vrot.lane.b32.xlu0 %v5749, 126
        %v5762 = vpop.permute.xlu0 %5761
        %5763 = vrot.lane.b32.xlu0 %v5750, 126
        %v5764 = vpop.permute.xlu0 %5763
        %5765 = vrot.lane.b32.xlu0 %v5751, 126
        %v5766 = vpop.permute.xlu0 %5765
        %v5767 = vrot.slane %v5758, 4
        %v5768 = vrot.slane %v5760, 4
        %v5769 = vrot.slane %v5762, 4
        %v5770 = vrot.slane %v5764, 4
        %v5771 = vrot.slane %v5766, 4
        %v5772 = vsel %vm680, %v5767, %v5768
        %v5773 = vsel %vm936, %v5758, %v5772
        %v5774 = vsel %vm680, %v5768, %v5769
        %v5775 = vsel %vm936, %v5760, %v5774
        %v5776 = vsel %vm680, %v5769, %v5770
        %v5777 = vsel %vm936, %v5762, %v5776
        %v5778 = vsel %vm680, %v5770, %v5771
        %v5779 = vsel %vm936, %v5764, %v5778
        %v5785 = vadd.f32 %v5645, %v5773
        %v5786 = vadd.f32 %v5646, %v5775
        %v5787 = vadd.f32 %v5647, %v5777
        %v5788 = vadd.f32 %v5648, %v5779
        %v5789 = vadd.f32 %v5649, %v5766
        %s5790 = sld [smem:[#allocation8 + $0x26]]
        %v5791 = vstv %s5790
        %v5792 = vmul.f32 %v5791, %v5740
        %v5793 = vmul.f32 %v5791, %v5741
        %v5794 = vmul.f32 %v5791, %v5742
        %v5795 = vmul.f32 %v5791, %v5743
        %v5796 = vmul.f32 %v5791, %v5744
        %5802 = vrot.lane.b32.xlu0 %v5792, 126
        %v5803 = vpop.permute.xlu0 %5802
        %5804 = vrot.lane.b32.xlu0 %v5793, 126
        %v5805 = vpop.permute.xlu0 %5804
        %5806 = vrot.lane.b32.xlu0 %v5794, 126
        %v5807 = vpop.permute.xlu0 %5806
        %5808 = vrot.lane.b32.xlu0 %v5795, 126
        %v5809 = vpop.permute.xlu0 %5808
        %5810 = vrot.lane.b32.xlu0 %v5796, 126
        %v5811 = vpop.permute.xlu0 %5810
        %v5812 = vrot.slane %v5803, 4
        %v5813 = vrot.slane %v5805, 4
        %v5814 = vrot.slane %v5807, 4
        %v5815 = vrot.slane %v5809, 4
        %v5816 = vrot.slane %v5811, 4
        %v5817 = vsel %vm680, %v5812, %v5813
        %v5818 = vsel %vm936, %v5803, %v5817
        %v5819 = vsel %vm680, %v5813, %v5814
        %v5820 = vsel %vm936, %v5805, %v5819
        %v5821 = vsel %vm680, %v5814, %v5815
        %v5822 = vsel %vm936, %v5807, %v5821
        %v5823 = vsel %vm680, %v5815, %v5816
        %v5824 = vsel %vm936, %v5809, %v5823
        %v5830 = vadd.f32 %v5690, %v5818
        %v5831 = vadd.f32 %v5691, %v5820
        %v5832 = vadd.f32 %v5692, %v5822
        %v5833 = vadd.f32 %v5693, %v5824
        %v5834 = vadd.f32 %v5694, %v5811
        %s5835 = sld [smem:[#allocation8 + $0x41]]
        %v5836 = vstv %s5835
        %v5837 = vmul.f32 %v5836, %v5740
        %v5838 = vmul.f32 %v5836, %v5741
        %v5839 = vmul.f32 %v5836, %v5742
        %v5840 = vmul.f32 %v5836, %v5743
        %v5841 = vmul.f32 %v5836, %v5744
        %5847 = vrot.lane.b32.xlu0 %v5837, 126
        %v5848 = vpop.permute.xlu0 %5847
        %5849 = vrot.lane.b32.xlu0 %v5838, 126
        %v5850 = vpop.permute.xlu0 %5849
        %5851 = vrot.lane.b32.xlu0 %v5839, 126
        %v5852 = vpop.permute.xlu0 %5851
        %5853 = vrot.lane.b32.xlu0 %v5840, 126
        %v5854 = vpop.permute.xlu0 %5853
        %5855 = vrot.lane.b32.xlu0 %v5841, 126
        %v5856 = vpop.permute.xlu0 %5855
        %v5857 = vrot.slane %v5848, 4
        %v5858 = vrot.slane %v5850, 4
        %v5859 = vrot.slane %v5852, 4
        %v5860 = vrot.slane %v5854, 4
        %v5861 = vrot.slane %v5856, 4
        %v5862 = vsel %vm680, %v5857, %v5858
        %v5863 = vsel %vm936, %v5848, %v5862
        %v5864 = vsel %vm680, %v5858, %v5859
        %v5865 = vsel %vm936, %v5850, %v5864
        %v5866 = vsel %vm680, %v5859, %v5860
        %v5867 = vsel %vm936, %v5852, %v5866
        %v5868 = vsel %vm680, %v5860, %v5861
        %v5869 = vsel %vm936, %v5854, %v5868
        %v5875 = vadd.f32 %v5735, %v5863
        %v5876 = vadd.f32 %v5736, %v5865
        %v5877 = vadd.f32 %v5737, %v5867
        %v5878 = vadd.f32 %v5738, %v5869
        %v5879 = vadd.f32 %v5739, %v5856
        %v5880 = vld [vmem:[%s471] sm:$0xff]
        %v5881 = vld [vmem:[%s471 + $0x8] sm:$0xff]
        %v5882 = vld [vmem:[%s471 + $0x10] sm:$0xff]
        %v5883 = vld [vmem:[%s471 + $0x18] sm:$0xff]
        %v5884 = vld [vmem:[%s471 + $0x20] sm:$0xf]
        %v5885 = vmul.f32 %v5880, %v1061
        %v5886 = vmul.f32 %v5881, %v1063
        %v5887 = vmul.f32 %v5882, %v1065
        %v5888 = vmul.f32 %v5883, %v1067
        %v5889 = vmul.f32 %v5884, %v1060
        %s5890 = sld [smem:[#allocation8 + $0xc]]
        %v5891 = vstv %s5890
        %v5892 = vmul.f32 %v5891, %v5885
        %v5893 = vmul.f32 %v5891, %v5886
        %v5894 = vmul.f32 %v5891, %v5887
        %v5895 = vmul.f32 %v5891, %v5888
        %v5896 = vmul.f32 %v5891, %v5889
        %5902 = vrot.lane.b32.xlu0 %v5892, 96
        %v5903 = vpop.permute.xlu0 %5902
        %5904 = vrot.lane.b32.xlu0 %v5893, 96
        %v5905 = vpop.permute.xlu0 %5904
        %5906 = vrot.lane.b32.xlu0 %v5894, 96
        %v5907 = vpop.permute.xlu0 %5906
        %5908 = vrot.lane.b32.xlu0 %v5895, 96
        %v5909 = vpop.permute.xlu0 %5908
        %5910 = vrot.lane.b32.xlu0 %v5896, 96
        %v5911 = vpop.permute.xlu0 %5910
        %v5912 = vrot.slane %v5903, 4
        %v5913 = vrot.slane %v5905, 4
        %v5914 = vrot.slane %v5907, 4
        %v5915 = vrot.slane %v5909, 4
        %v5916 = vrot.slane %v5911, 4
        %v5917 = vsel %vm680, %v5912, %v5913
        %v5918 = vsel %vm1106, %v5903, %v5917
        %v5919 = vsel %vm680, %v5913, %v5914
        %v5920 = vsel %vm1106, %v5905, %v5919
        %v5921 = vsel %vm680, %v5914, %v5915
        %v5922 = vsel %vm1106, %v5907, %v5921
        %v5923 = vsel %vm680, %v5915, %v5916
        %v5924 = vsel %vm1106, %v5909, %v5923
        %v5930 = vadd.f32 %v5785, %v5918
        %v5931 = vadd.f32 %v5786, %v5920
        %v5932 = vadd.f32 %v5787, %v5922
        %v5933 = vadd.f32 %v5788, %v5924
        %v5934 = vadd.f32 %v5789, %v5911
        %s5935 = sld [smem:[#allocation8 + $0x27]]
        %v5936 = vstv %s5935
        %v5937 = vmul.f32 %v5936, %v5885
        %v5938 = vmul.f32 %v5936, %v5886
        %v5939 = vmul.f32 %v5936, %v5887
        %v5940 = vmul.f32 %v5936, %v5888
        %v5941 = vmul.f32 %v5936, %v5889
        %5947 = vrot.lane.b32.xlu0 %v5937, 96
        %v5948 = vpop.permute.xlu0 %5947
        %5949 = vrot.lane.b32.xlu0 %v5938, 96
        %v5950 = vpop.permute.xlu0 %5949
        %5951 = vrot.lane.b32.xlu0 %v5939, 96
        %v5952 = vpop.permute.xlu0 %5951
        %5953 = vrot.lane.b32.xlu0 %v5940, 96
        %v5954 = vpop.permute.xlu0 %5953
        %5955 = vrot.lane.b32.xlu0 %v5941, 96
        %v5956 = vpop.permute.xlu0 %5955
        %v5957 = vrot.slane %v5948, 4
        %v5958 = vrot.slane %v5950, 4
        %v5959 = vrot.slane %v5952, 4
        %v5960 = vrot.slane %v5954, 4
        %v5961 = vrot.slane %v5956, 4
        %v5962 = vsel %vm680, %v5957, %v5958
        %v5963 = vsel %vm1106, %v5948, %v5962
        %v5964 = vsel %vm680, %v5958, %v5959
        %v5965 = vsel %vm1106, %v5950, %v5964
        %v5966 = vsel %vm680, %v5959, %v5960
        %v5967 = vsel %vm1106, %v5952, %v5966
        %v5968 = vsel %vm680, %v5960, %v5961
        %v5969 = vsel %vm1106, %v5954, %v5968
        %v5975 = vadd.f32 %v5830, %v5963
        %v5976 = vadd.f32 %v5831, %v5965
        %v5977 = vadd.f32 %v5832, %v5967
        %v5978 = vadd.f32 %v5833, %v5969
        %v5979 = vadd.f32 %v5834, %v5956
        %s5980 = sld [smem:[#allocation8 + $0x42]]
        %v5981 = vstv %s5980
        %v5982 = vmul.f32 %v5981, %v5885
        %v5983 = vmul.f32 %v5981, %v5886
        %v5984 = vmul.f32 %v5981, %v5887
        %v5985 = vmul.f32 %v5981, %v5888
        %v5986 = vmul.f32 %v5981, %v5889
        %5992 = vrot.lane.b32.xlu0 %v5982, 96
        %v5993 = vpop.permute.xlu0 %5992
        %5994 = vrot.lane.b32.xlu0 %v5983, 96
        %v5995 = vpop.permute.xlu0 %5994
        %5996 = vrot.lane.b32.xlu0 %v5984, 96
        %v5997 = vpop.permute.xlu0 %5996
        %5998 = vrot.lane.b32.xlu0 %v5985, 96
        %v5999 = vpop.permute.xlu0 %5998
        %6000 = vrot.lane.b32.xlu0 %v5986, 96
        %v6001 = vpop.permute.xlu0 %6000
        %v6002 = vrot.slane %v5993, 4
        %v6003 = vrot.slane %v5995, 4
        %v6004 = vrot.slane %v5997, 4
        %v6005 = vrot.slane %v5999, 4
        %v6006 = vrot.slane %v6001, 4
        %v6007 = vsel %vm680, %v6002, %v6003
        %v6008 = vsel %vm1106, %v5993, %v6007
        %v6009 = vsel %vm680, %v6003, %v6004
        %v6010 = vsel %vm1106, %v5995, %v6009
        %v6011 = vsel %vm680, %v6004, %v6005
        %v6012 = vsel %vm1106, %v5997, %v6011
        %v6013 = vsel %vm680, %v6005, %v6006
        %v6014 = vsel %vm1106, %v5999, %v6013
        %v6020 = vadd.f32 %v5875, %v6008
        %v6021 = vadd.f32 %v5876, %v6010
        %v6022 = vadd.f32 %v5877, %v6012
        %v6023 = vadd.f32 %v5878, %v6014
        %v6024 = vadd.f32 %v5879, %v6001
        %v6025 = vld [vmem:[%s471 + $0x4] sm:$0xff]
        %v6026 = vld [vmem:[%s471 + $0xc] sm:$0xff]
        %v6027 = vld [vmem:[%s471 + $0x14] sm:$0xff]
        %v6028 = vld [vmem:[%s471 + $0x1c] sm:$0xff]
        %s6029 = sld [smem:[#allocation8 + $0xd]]
        %v6030 = vstv %s6029
        %v6031 = vmul.f32 %v6030, %v6025
        %v6032 = vmul.f32 %v6030, %v6026
        %v6033 = vmul.f32 %v6030, %v6027
        %v6034 = vmul.f32 %v6030, %v6028
        %6039 = vrot.lane.b32.xlu0 %v6031, 95
        %v6040 = vpop.permute.xlu0 %6039
        %6041 = vrot.lane.b32.xlu0 %v6032, 95
        %v6042 = vpop.permute.xlu0 %6041
        %6043 = vrot.lane.b32.xlu0 %v6033, 95
        %v6044 = vpop.permute.xlu0 %6043
        %6045 = vrot.lane.b32.xlu0 %v6034, 95
        %v6046 = vpop.permute.xlu0 %6045
        %v6047 = vrot.slane %v6040, 4
        %v6048 = vrot.slane %v6042, 4
        %v6049 = vrot.slane %v6044, 4
        %v6050 = vrot.slane %v6046, 4
        %v6051 = vsel %vm678, %v6047, %v6040
        %v6052 = vsel %vm680, %v6047, %v6048
        %v6053 = vsel %vm678, %v6052, %v6042
        %v6054 = vsel %vm680, %v6048, %v6049
        %v6055 = vsel %vm678, %v6054, %v6044
        %v6056 = vsel %vm680, %v6049, %v6050
        %v6057 = vsel %vm678, %v6056, %v6046
        %v6063 = vadd.f32 %v5930, %v6051
        %v6064 = vadd.f32 %v5931, %v6053
        %v6065 = vadd.f32 %v5932, %v6055
        %v6066 = vadd.f32 %v5933, %v6057
        %v6067 = vadd.f32 %v5934, %v6050
        %s6068 = sld [smem:[#allocation8 + $0x28]]
        %v6069 = vstv %s6068
        %v6070 = vmul.f32 %v6069, %v6025
        %v6071 = vmul.f32 %v6069, %v6026
        %v6072 = vmul.f32 %v6069, %v6027
        %v6073 = vmul.f32 %v6069, %v6028
        %6078 = vrot.lane.b32.xlu0 %v6070, 95
        %v6079 = vpop.permute.xlu0 %6078
        %6080 = vrot.lane.b32.xlu0 %v6071, 95
        %v6081 = vpop.permute.xlu0 %6080
        %6082 = vrot.lane.b32.xlu0 %v6072, 95
        %v6083 = vpop.permute.xlu0 %6082
        %6084 = vrot.lane.b32.xlu0 %v6073, 95
        %v6085 = vpop.permute.xlu0 %6084
        %v6086 = vrot.slane %v6079, 4
        %v6087 = vrot.slane %v6081, 4
        %v6088 = vrot.slane %v6083, 4
        %v6089 = vrot.slane %v6085, 4
        %v6090 = vsel %vm678, %v6086, %v6079
        %v6091 = vsel %vm680, %v6086, %v6087
        %v6092 = vsel %vm678, %v6091, %v6081
        %v6093 = vsel %vm680, %v6087, %v6088
        %v6094 = vsel %vm678, %v6093, %v6083
        %v6095 = vsel %vm680, %v6088, %v6089
        %v6096 = vsel %vm678, %v6095, %v6085
        %v6102 = vadd.f32 %v5975, %v6090
        %v6103 = vadd.f32 %v5976, %v6092
        %v6104 = vadd.f32 %v5977, %v6094
        %v6105 = vadd.f32 %v5978, %v6096
        %v6106 = vadd.f32 %v5979, %v6089
        %s6107 = sld [smem:[#allocation8 + $0x43]]
        %v6108 = vstv %s6107
        %v6109 = vmul.f32 %v6108, %v6025
        %v6110 = vmul.f32 %v6108, %v6026
        %v6111 = vmul.f32 %v6108, %v6027
        %v6112 = vmul.f32 %v6108, %v6028
        %6117 = vrot.lane.b32.xlu0 %v6109, 95
        %v6118 = vpop.permute.xlu0 %6117
        %6119 = vrot.lane.b32.xlu0 %v6110, 95
        %v6120 = vpop.permute.xlu0 %6119
        %6121 = vrot.lane.b32.xlu0 %v6111, 95
        %v6122 = vpop.permute.xlu0 %6121
        %6123 = vrot.lane.b32.xlu0 %v6112, 95
        %v6124 = vpop.permute.xlu0 %6123
        %v6125 = vrot.slane %v6118, 4
        %v6126 = vrot.slane %v6120, 4
        %v6127 = vrot.slane %v6122, 4
        %v6128 = vrot.slane %v6124, 4
        %v6129 = vsel %vm678, %v6125, %v6118
        %v6130 = vsel %vm680, %v6125, %v6126
        %v6131 = vsel %vm678, %v6130, %v6120
        %v6132 = vsel %vm680, %v6126, %v6127
        %v6133 = vsel %vm678, %v6132, %v6122
        %v6134 = vsel %vm680, %v6127, %v6128
        %v6135 = vsel %vm678, %v6134, %v6124
        %v6141 = vadd.f32 %v6020, %v6129
        %v6142 = vadd.f32 %v6021, %v6131
        %v6143 = vadd.f32 %v6022, %v6133
        %v6144 = vadd.f32 %v6023, %v6135
        %v6145 = vadd.f32 %v6024, %v6128
        %v6146 = vld [vmem:[%s471 + $0x4] sm:$0xff]
        %v6147 = vld [vmem:[%s471 + $0xc] sm:$0xff]
        %v6148 = vld [vmem:[%s471 + $0x14] sm:$0xff]
        %v6149 = vld [vmem:[%s471 + $0x1c] sm:$0xff]
        %v6150 = vld [vmem:[%s471 + $0x24] sm:$0xf]
        %v6151 = vmul.f32 %v6146, %v1353
        %v6152 = vmul.f32 %v6147, %v1355
        %v6153 = vmul.f32 %v6148, %v1357
        %v6154 = vmul.f32 %v6149, %v1359
        %v6155 = vmul.f32 %v6150, %v1351
        %s6156 = sld [smem:[#allocation8 + $0xe]]
        %v6157 = vstv %s6156
        %v6158 = vmul.f32 %v6157, %v6151
        %v6159 = vmul.f32 %v6157, %v6152
        %v6160 = vmul.f32 %v6157, %v6153
        %v6161 = vmul.f32 %v6157, %v6154
        %v6162 = vmul.f32 %v6157, %v6155
        %6168 = vrot.lane.b32.xlu0 %v6158, 94
        %v6169 = vpop.permute.xlu0 %6168
        %6170 = vrot.lane.b32.xlu0 %v6159, 94
        %v6171 = vpop.permute.xlu0 %6170
        %6172 = vrot.lane.b32.xlu0 %v6160, 94
        %v6173 = vpop.permute.xlu0 %6172
        %6174 = vrot.lane.b32.xlu0 %v6161, 94
        %v6175 = vpop.permute.xlu0 %6174
        %6176 = vrot.lane.b32.xlu0 %v6162, 94
        %v6177 = vpop.permute.xlu0 %6176
        %v6178 = vrot.slane %v6169, 4
        %v6179 = vrot.slane %v6171, 4
        %v6180 = vrot.slane %v6173, 4
        %v6181 = vrot.slane %v6175, 4
        %v6182 = vsel %vm1396, %v6178, %v6169
        %v6183 = vsel %vm680, %v6178, %v6179
        %v6184 = vsel %vm1396, %v6183, %v6171
        %v6185 = vsel %vm680, %v6179, %v6180
        %v6186 = vsel %vm1396, %v6185, %v6173
        %v6187 = vsel %vm680, %v6180, %v6181
        %v6188 = vsel %vm1396, %v6187, %v6175
        %v6189 = vsel %vm1396, %v6181, %v6177
        %v6195 = vadd.f32 %v6063, %v6182
        %v6196 = vadd.f32 %v6064, %v6184
        %v6197 = vadd.f32 %v6065, %v6186
        %v6198 = vadd.f32 %v6066, %v6188
        %v6199 = vadd.f32 %v6067, %v6189
        %s6200 = sld [smem:[#allocation8 + $0x29]]
        %v6201 = vstv %s6200
        %v6202 = vmul.f32 %v6201, %v6151
        %v6203 = vmul.f32 %v6201, %v6152
        %v6204 = vmul.f32 %v6201, %v6153
        %v6205 = vmul.f32 %v6201, %v6154
        %v6206 = vmul.f32 %v6201, %v6155
        %6212 = vrot.lane.b32.xlu0 %v6202, 94
        %v6213 = vpop.permute.xlu0 %6212
        %6214 = vrot.lane.b32.xlu0 %v6203, 94
        %v6215 = vpop.permute.xlu0 %6214
        %6216 = vrot.lane.b32.xlu0 %v6204, 94
        %v6217 = vpop.permute.xlu0 %6216
        %6218 = vrot.lane.b32.xlu0 %v6205, 94
        %v6219 = vpop.permute.xlu0 %6218
        %6220 = vrot.lane.b32.xlu0 %v6206, 94
        %v6221 = vpop.permute.xlu0 %6220
        %v6222 = vrot.slane %v6213, 4
        %v6223 = vrot.slane %v6215, 4
        %v6224 = vrot.slane %v6217, 4
        %v6225 = vrot.slane %v6219, 4
        %v6226 = vsel %vm1396, %v6222, %v6213
        %v6227 = vsel %vm680, %v6222, %v6223
        %v6228 = vsel %vm1396, %v6227, %v6215
        %v6229 = vsel %vm680, %v6223, %v6224
        %v6230 = vsel %vm1396, %v6229, %v6217
        %v6231 = vsel %vm680, %v6224, %v6225
        %v6232 = vsel %vm1396, %v6231, %v6219
        %v6233 = vsel %vm1396, %v6225, %v6221
        %v6239 = vadd.f32 %v6102, %v6226
        %v6240 = vadd.f32 %v6103, %v6228
        %v6241 = vadd.f32 %v6104, %v6230
        %v6242 = vadd.f32 %v6105, %v6232
        %v6243 = vadd.f32 %v6106, %v6233
        %s6244 = sld [smem:[#allocation8 + $0x44]]
        %v6245 = vstv %s6244
        %v6246 = vmul.f32 %v6245, %v6151
        %v6247 = vmul.f32 %v6245, %v6152
        %v6248 = vmul.f32 %v6245, %v6153
        %v6249 = vmul.f32 %v6245, %v6154
        %v6250 = vmul.f32 %v6245, %v6155
        %6256 = vrot.lane.b32.xlu0 %v6246, 94
        %v6257 = vpop.permute.xlu0 %6256
        %6258 = vrot.lane.b32.xlu0 %v6247, 94
        %v6259 = vpop.permute.xlu0 %6258
        %6260 = vrot.lane.b32.xlu0 %v6248, 94
        %v6261 = vpop.permute.xlu0 %6260
        %6262 = vrot.lane.b32.xlu0 %v6249, 94
        %v6263 = vpop.permute.xlu0 %6262
        %6264 = vrot.lane.b32.xlu0 %v6250, 94
        %v6265 = vpop.permute.xlu0 %6264
        %v6266 = vrot.slane %v6257, 4
        %v6267 = vrot.slane %v6259, 4
        %v6268 = vrot.slane %v6261, 4
        %v6269 = vrot.slane %v6263, 4
        %v6270 = vsel %vm1396, %v6266, %v6257
        %v6271 = vsel %vm680, %v6266, %v6267
        %v6272 = vsel %vm1396, %v6271, %v6259
        %v6273 = vsel %vm680, %v6267, %v6268
        %v6274 = vsel %vm1396, %v6273, %v6261
        %v6275 = vsel %vm680, %v6268, %v6269
        %v6276 = vsel %vm1396, %v6275, %v6263
        %v6277 = vsel %vm1396, %v6269, %v6265
        %v6283 = vadd.f32 %v6141, %v6270
        %v6284 = vadd.f32 %v6142, %v6272
        %v6285 = vadd.f32 %v6143, %v6274
        %v6286 = vadd.f32 %v6144, %v6276
        %v6287 = vadd.f32 %v6145, %v6277
        %v6288 = vld [vmem:[%s471 + $0x4] sm:$0xff]
        %v6289 = vld [vmem:[%s471 + $0xc] sm:$0xff]
        %v6290 = vld [vmem:[%s471 + $0x14] sm:$0xff]
        %v6291 = vld [vmem:[%s471 + $0x1c] sm:$0xff]
        %v6292 = vld [vmem:[%s471 + $0x24] sm:$0xf]
        %v6293 = vmul.f32 %v6288, %v1521
        %v6294 = vmul.f32 %v6289, %v1523
        %v6295 = vmul.f32 %v6290, %v1525
        %v6296 = vmul.f32 %v6291, %v1527
        %v6297 = vmul.f32 %v6292, %v1519
        %s6298 = sld [smem:[#allocation8 + $0xf]]
        %v6299 = vstv %s6298
        %v6300 = vmul.f32 %v6299, %v6293
        %v6301 = vmul.f32 %v6299, %v6294
        %v6302 = vmul.f32 %v6299, %v6295
        %v6303 = vmul.f32 %v6299, %v6296
        %v6304 = vmul.f32 %v6299, %v6297
        %6310 = vrot.lane.b32.xlu0 %v6300, 64
        %v6311 = vpop.permute.xlu0 %6310
        %6312 = vrot.lane.b32.xlu0 %v6301, 64
        %v6313 = vpop.permute.xlu0 %6312
        %6314 = vrot.lane.b32.xlu0 %v6302, 64
        %v6315 = vpop.permute.xlu0 %6314
        %6316 = vrot.lane.b32.xlu0 %v6303, 64
        %v6317 = vpop.permute.xlu0 %6316
        %6318 = vrot.lane.b32.xlu0 %v6304, 64
        %v6319 = vpop.permute.xlu0 %6318
        %v6320 = vrot.slane %v6311, 4
        %v6321 = vrot.slane %v6313, 4
        %v6322 = vrot.slane %v6315, 4
        %v6323 = vrot.slane %v6317, 4
        %v6324 = vsel %vm1564, %v6320, %v6311
        %v6325 = vsel %vm680, %v6320, %v6321
        %v6326 = vsel %vm1564, %v6325, %v6313
        %v6327 = vsel %vm680, %v6321, %v6322
        %v6328 = vsel %vm1564, %v6327, %v6315
        %v6329 = vsel %vm680, %v6322, %v6323
        %v6330 = vsel %vm1564, %v6329, %v6317
        %v6331 = vsel %vm1564, %v6323, %v6319
        %v6337 = vadd.f32 %v6195, %v6324
        %v6338 = vadd.f32 %v6196, %v6326
        %v6339 = vadd.f32 %v6197, %v6328
        %v6340 = vadd.f32 %v6198, %v6330
        %v6341 = vadd.f32 %v6199, %v6331
        %s6342 = sld [smem:[#allocation8 + $0x2a]]
        %v6343 = vstv %s6342
        %v6344 = vmul.f32 %v6343, %v6293
        %v6345 = vmul.f32 %v6343, %v6294
        %v6346 = vmul.f32 %v6343, %v6295
        %v6347 = vmul.f32 %v6343, %v6296
        %v6348 = vmul.f32 %v6343, %v6297
        %6354 = vrot.lane.b32.xlu0 %v6344, 64
        %v6355 = vpop.permute.xlu0 %6354
        %6356 = vrot.lane.b32.xlu0 %v6345, 64
        %v6357 = vpop.permute.xlu0 %6356
        %6358 = vrot.lane.b32.xlu0 %v6346, 64
        %v6359 = vpop.permute.xlu0 %6358
        %6360 = vrot.lane.b32.xlu0 %v6347, 64
        %v6361 = vpop.permute.xlu0 %6360
        %6362 = vrot.lane.b32.xlu0 %v6348, 64
        %v6363 = vpop.permute.xlu0 %6362
        %v6364 = vrot.slane %v6355, 4
        %v6365 = vrot.slane %v6357, 4
        %v6366 = vrot.slane %v6359, 4
        %v6367 = vrot.slane %v6361, 4
        %v6368 = vsel %vm1564, %v6364, %v6355
        %v6369 = vsel %vm680, %v6364, %v6365
        %v6370 = vsel %vm1564, %v6369, %v6357
        %v6371 = vsel %vm680, %v6365, %v6366
        %v6372 = vsel %vm1564, %v6371, %v6359
        %v6373 = vsel %vm680, %v6366, %v6367
        %v6374 = vsel %vm1564, %v6373, %v6361
        %v6375 = vsel %vm1564, %v6367, %v6363
        %v6381 = vadd.f32 %v6239, %v6368
        %v6382 = vadd.f32 %v6240, %v6370
        %v6383 = vadd.f32 %v6241, %v6372
        %v6384 = vadd.f32 %v6242, %v6374
        %v6385 = vadd.f32 %v6243, %v6375
        %s6386 = sld [smem:[#allocation8 + $0x45]]
        %v6387 = vstv %s6386
        %v6388 = vmul.f32 %v6387, %v6293
        %v6389 = vmul.f32 %v6387, %v6294
        %v6390 = vmul.f32 %v6387, %v6295
        %v6391 = vmul.f32 %v6387, %v6296
        %v6392 = vmul.f32 %v6387, %v6297
        %6398 = vrot.lane.b32.xlu0 %v6388, 64
        %v6399 = vpop.permute.xlu0 %6398
        %6400 = vrot.lane.b32.xlu0 %v6389, 64
        %v6401 = vpop.permute.xlu0 %6400
        %6402 = vrot.lane.b32.xlu0 %v6390, 64
        %v6403 = vpop.permute.xlu0 %6402
        %6404 = vrot.lane.b32.xlu0 %v6391, 64
        %v6405 = vpop.permute.xlu0 %6404
        %6406 = vrot.lane.b32.xlu0 %v6392, 64
        %v6407 = vpop.permute.xlu0 %6406
        %v6408 = vrot.slane %v6399, 4
        %v6409 = vrot.slane %v6401, 4
        %v6410 = vrot.slane %v6403, 4
        %v6411 = vrot.slane %v6405, 4
        %v6412 = vsel %vm1564, %v6408, %v6399
        %v6413 = vsel %vm680, %v6408, %v6409
        %v6414 = vsel %vm1564, %v6413, %v6401
        %v6415 = vsel %vm680, %v6409, %v6410
        %v6416 = vsel %vm1564, %v6415, %v6403
        %v6417 = vsel %vm680, %v6410, %v6411
        %v6418 = vsel %vm1564, %v6417, %v6405
        %v6419 = vsel %vm1564, %v6411, %v6407
        %v6425 = vadd.f32 %v6283, %v6412
        %v6426 = vadd.f32 %v6284, %v6414
        %v6427 = vadd.f32 %v6285, %v6416
        %v6428 = vadd.f32 %v6286, %v6418
        %v6429 = vadd.f32 %v6287, %v6419
        %v6430 = vld [vmem:[%s471 + $0x4] sm:$0xff]
        %v6431 = vld [vmem:[%s471 + $0xc] sm:$0xff]
        %v6432 = vld [vmem:[%s471 + $0x14] sm:$0xff]
        %v6433 = vld [vmem:[%s471 + $0x1c] sm:$0xff]
        %v6434 = vld [vmem:[%s471 + $0x24] sm:$0xf]
        %s6435 = sld [smem:[#allocation8 + $0x10]]
        %v6436 = vstv %s6435
        %v6437 = vmul.f32 %v6436, %v6430
        %v6438 = vmul.f32 %v6436, %v6431
        %v6439 = vmul.f32 %v6436, %v6432
        %v6440 = vmul.f32 %v6436, %v6433
        %v6441 = vmul.f32 %v6436, %v6434
        %6447 = vrot.lane.b32.xlu0 %v6437, 63
        %v6448 = vpop.permute.xlu0 %6447
        %6449 = vrot.lane.b32.xlu0 %v6438, 63
        %v6450 = vpop.permute.xlu0 %6449
        %6451 = vrot.lane.b32.xlu0 %v6439, 63
        %v6452 = vpop.permute.xlu0 %6451
        %6453 = vrot.lane.b32.xlu0 %v6440, 63
        %v6454 = vpop.permute.xlu0 %6453
        %6455 = vrot.lane.b32.xlu0 %v6441, 63
        %v6456 = vpop.permute.xlu0 %6455
        %v6457 = vrot.slane %v6448, 4
        %v6458 = vrot.slane %v6450, 4
        %v6459 = vrot.slane %v6452, 4
        %v6460 = vrot.slane %v6454, 4
        %v6461 = vsel %vm1702, %v6457, %v6448
        %v6462 = vsel %vm680, %v6457, %v6458
        %v6463 = vsel %vm1702, %v6462, %v6450
        %v6464 = vsel %vm680, %v6458, %v6459
        %v6465 = vsel %vm1702, %v6464, %v6452
        %v6466 = vsel %vm680, %v6459, %v6460
        %v6467 = vsel %vm1702, %v6466, %v6454
        %v6468 = vsel %vm1702, %v6460, %v6456
        %v6474 = vadd.f32 %v6337, %v6461
        %v6475 = vadd.f32 %v6338, %v6463
        %v6476 = vadd.f32 %v6339, %v6465
        %v6477 = vadd.f32 %v6340, %v6467
        %v6478 = vadd.f32 %v6341, %v6468
        %s6479 = sld [smem:[#allocation8 + $0x2b]]
        %v6480 = vstv %s6479
        %v6481 = vmul.f32 %v6480, %v6430
        %v6482 = vmul.f32 %v6480, %v6431
        %v6483 = vmul.f32 %v6480, %v6432
        %v6484 = vmul.f32 %v6480, %v6433
        %v6485 = vmul.f32 %v6480, %v6434
        %6491 = vrot.lane.b32.xlu0 %v6481, 63
        %v6492 = vpop.permute.xlu0 %6491
        %6493 = vrot.lane.b32.xlu0 %v6482, 63
        %v6494 = vpop.permute.xlu0 %6493
        %6495 = vrot.lane.b32.xlu0 %v6483, 63
        %v6496 = vpop.permute.xlu0 %6495
        %6497 = vrot.lane.b32.xlu0 %v6484, 63
        %v6498 = vpop.permute.xlu0 %6497
        %6499 = vrot.lane.b32.xlu0 %v6485, 63
        %v6500 = vpop.permute.xlu0 %6499
        %v6501 = vrot.slane %v6492, 4
        %v6502 = vrot.slane %v6494, 4
        %v6503 = vrot.slane %v6496, 4
        %v6504 = vrot.slane %v6498, 4
        %v6505 = vsel %vm1702, %v6501, %v6492
        %v6506 = vsel %vm680, %v6501, %v6502
        %v6507 = vsel %vm1702, %v6506, %v6494
        %v6508 = vsel %vm680, %v6502, %v6503
        %v6509 = vsel %vm1702, %v6508, %v6496
        %v6510 = vsel %vm680, %v6503, %v6504
        %v6511 = vsel %vm1702, %v6510, %v6498
        %v6512 = vsel %vm1702, %v6504, %v6500
        %v6518 = vadd.f32 %v6381, %v6505
        %v6519 = vadd.f32 %v6382, %v6507
        %v6520 = vadd.f32 %v6383, %v6509
        %v6521 = vadd.f32 %v6384, %v6511
        %v6522 = vadd.f32 %v6385, %v6512
        %s6523 = sld [smem:[#allocation8 + $0x46]]
        %v6524 = vstv %s6523
        %v6525 = vmul.f32 %v6524, %v6430
        %v6526 = vmul.f32 %v6524, %v6431
        %v6527 = vmul.f32 %v6524, %v6432
        %v6528 = vmul.f32 %v6524, %v6433
        %v6529 = vmul.f32 %v6524, %v6434
        %6535 = vrot.lane.b32.xlu0 %v6525, 63
        %v6536 = vpop.permute.xlu0 %6535
        %6537 = vrot.lane.b32.xlu0 %v6526, 63
        %v6538 = vpop.permute.xlu0 %6537
        %6539 = vrot.lane.b32.xlu0 %v6527, 63
        %v6540 = vpop.permute.xlu0 %6539
        %6541 = vrot.lane.b32.xlu0 %v6528, 63
        %v6542 = vpop.permute.xlu0 %6541
        %6543 = vrot.lane.b32.xlu0 %v6529, 63
        %v6544 = vpop.permute.xlu0 %6543
        %v6545 = vrot.slane %v6536, 4
        %v6546 = vrot.slane %v6538, 4
        %v6547 = vrot.slane %v6540, 4
        %v6548 = vrot.slane %v6542, 4
        %v6549 = vsel %vm1702, %v6545, %v6536
        %v6550 = vsel %vm680, %v6545, %v6546
        %v6551 = vsel %vm1702, %v6550, %v6538
        %v6552 = vsel %vm680, %v6546, %v6547
        %v6553 = vsel %vm1702, %v6552, %v6540
        %v6554 = vsel %vm680, %v6547, %v6548
        %v6555 = vsel %vm1702, %v6554, %v6542
        %v6556 = vsel %vm1702, %v6548, %v6544
        %v6562 = vadd.f32 %v6425, %v6549
        %v6563 = vadd.f32 %v6426, %v6551
        %v6564 = vadd.f32 %v6427, %v6553
        %v6565 = vadd.f32 %v6428, %v6555
        %v6566 = vadd.f32 %v6429, %v6556
        %v6567 = vmul.f32 %v6430, %v1822
        %v6568 = vmul.f32 %v6431, %v1824
        %v6569 = vmul.f32 %v6432, %v1826
        %v6570 = vmul.f32 %v6433, %v1828
        %v6571 = vmul.f32 %v6434, %v1820
        %s6572 = sld [smem:[#allocation8 + $0x11]]
        %v6573 = vstv %s6572
        %v6574 = vmul.f32 %v6573, %v6567
        %v6575 = vmul.f32 %v6573, %v6568
        %v6576 = vmul.f32 %v6573, %v6569
        %v6577 = vmul.f32 %v6573, %v6570
        %v6578 = vmul.f32 %v6573, %v6571
        %6584 = vrot.lane.b32.xlu0 %v6574, 62
        %v6585 = vpop.permute.xlu0 %6584
        %6586 = vrot.lane.b32.xlu0 %v6575, 62
        %v6587 = vpop.permute.xlu0 %6586
        %6588 = vrot.lane.b32.xlu0 %v6576, 62
        %v6589 = vpop.permute.xlu0 %6588
        %6590 = vrot.lane.b32.xlu0 %v6577, 62
        %v6591 = vpop.permute.xlu0 %6590
        %6592 = vrot.lane.b32.xlu0 %v6578, 62
        %v6593 = vpop.permute.xlu0 %6592
        %v6594 = vrot.slane %v6585, 4
        %v6595 = vrot.slane %v6587, 4
        %v6596 = vrot.slane %v6589, 4
        %v6597 = vrot.slane %v6591, 4
        %v6598 = vsel %vm1865, %v6594, %v6585
        %v6599 = vsel %vm680, %v6594, %v6595
        %v6600 = vsel %vm1865, %v6599, %v6587
        %v6601 = vsel %vm680, %v6595, %v6596
        %v6602 = vsel %vm1865, %v6601, %v6589
        %v6603 = vsel %vm680, %v6596, %v6597
        %v6604 = vsel %vm1865, %v6603, %v6591
        %v6605 = vsel %vm1865, %v6597, %v6593
        %v6611 = vadd.f32 %v6474, %v6598
        %v6612 = vadd.f32 %v6475, %v6600
        %v6613 = vadd.f32 %v6476, %v6602
        %v6614 = vadd.f32 %v6477, %v6604
        %v6615 = vadd.f32 %v6478, %v6605
        %s6616 = sld [smem:[#allocation8 + $0x2c]]
        %v6617 = vstv %s6616
        %v6618 = vmul.f32 %v6617, %v6567
        %v6619 = vmul.f32 %v6617, %v6568
        %v6620 = vmul.f32 %v6617, %v6569
        %v6621 = vmul.f32 %v6617, %v6570
        %v6622 = vmul.f32 %v6617, %v6571
        %6628 = vrot.lane.b32.xlu0 %v6618, 62
        %v6629 = vpop.permute.xlu0 %6628
        %6630 = vrot.lane.b32.xlu0 %v6619, 62
        %v6631 = vpop.permute.xlu0 %6630
        %6632 = vrot.lane.b32.xlu0 %v6620, 62
        %v6633 = vpop.permute.xlu0 %6632
        %6634 = vrot.lane.b32.xlu0 %v6621, 62
        %v6635 = vpop.permute.xlu0 %6634
        %6636 = vrot.lane.b32.xlu0 %v6622, 62
        %v6637 = vpop.permute.xlu0 %6636
        %v6638 = vrot.slane %v6629, 4
        %v6639 = vrot.slane %v6631, 4
        %v6640 = vrot.slane %v6633, 4
        %v6641 = vrot.slane %v6635, 4
        %v6642 = vsel %vm1865, %v6638, %v6629
        %v6643 = vsel %vm680, %v6638, %v6639
        %v6644 = vsel %vm1865, %v6643, %v6631
        %v6645 = vsel %vm680, %v6639, %v6640
        %v6646 = vsel %vm1865, %v6645, %v6633
        %v6647 = vsel %vm680, %v6640, %v6641
        %v6648 = vsel %vm1865, %v6647, %v6635
        %v6649 = vsel %vm1865, %v6641, %v6637
        %v6655 = vadd.f32 %v6518, %v6642
        %v6656 = vadd.f32 %v6519, %v6644
        %v6657 = vadd.f32 %v6520, %v6646
        %v6658 = vadd.f32 %v6521, %v6648
        %v6659 = vadd.f32 %v6522, %v6649
        %s6660 = sld [smem:[#allocation8 + $0x47]]
        %v6661 = vstv %s6660
        %v6662 = vmul.f32 %v6661, %v6567
        %v6663 = vmul.f32 %v6661, %v6568
        %v6664 = vmul.f32 %v6661, %v6569
        %v6665 = vmul.f32 %v6661, %v6570
        %v6666 = vmul.f32 %v6661, %v6571
        %6672 = vrot.lane.b32.xlu0 %v6662, 62
        %v6673 = vpop.permute.xlu0 %6672
        %6674 = vrot.lane.b32.xlu0 %v6663, 62
        %v6675 = vpop.permute.xlu0 %6674
        %6676 = vrot.lane.b32.xlu0 %v6664, 62
        %v6677 = vpop.permute.xlu0 %6676
        %6678 = vrot.lane.b32.xlu0 %v6665, 62
        %v6679 = vpop.permute.xlu0 %6678
        %6680 = vrot.lane.b32.xlu0 %v6666, 62
        %v6681 = vpop.permute.xlu0 %6680
        %v6682 = vrot.slane %v6673, 4
        %v6683 = vrot.slane %v6675, 4
        %v6684 = vrot.slane %v6677, 4
        %v6685 = vrot.slane %v6679, 4
        %v6686 = vsel %vm1865, %v6682, %v6673
        %v6687 = vsel %vm680, %v6682, %v6683
        %v6688 = vsel %vm1865, %v6687, %v6675
        %v6689 = vsel %vm680, %v6683, %v6684
        %v6690 = vsel %vm1865, %v6689, %v6677
        %v6691 = vsel %vm680, %v6684, %v6685
        %v6692 = vsel %vm1865, %v6691, %v6679
        %v6693 = vsel %vm1865, %v6685, %v6681
        %v6699 = vadd.f32 %v6562, %v6686
        %v6700 = vadd.f32 %v6563, %v6688
        %v6701 = vadd.f32 %v6564, %v6690
        %v6702 = vadd.f32 %v6565, %v6692
        %v6703 = vadd.f32 %v6566, %v6693
        %v6704 = vld [vmem:[%s561] sm:$0xff]
        %v6705 = vld [vmem:[%s561 + $0x8] sm:$0xff]
        %v6706 = vld [vmem:[%s561 + $0x10] sm:$0xff]
        %v6707 = vld [vmem:[%s561 + $0x18] sm:$0xff]
        %v6708 = vld [vmem:[%s561 + $0x20] sm:$0xf]
        %v6709 = vmul.f32 %v6704, %v679
        %v6710 = vmul.f32 %v6705, %v682
        %v6711 = vmul.f32 %v6706, %v684
        %v6712 = vmul.f32 %v6707, %v686
        %v6713 = vmul.f32 %v6708, %v677
        %s6714 = sld [smem:[#allocation8 + $0x12]]
        %v6715 = vstv %s6714
        %v6716 = vmul.f32 %v6715, %v6709
        %v6717 = vmul.f32 %v6715, %v6710
        %v6718 = vmul.f32 %v6715, %v6711
        %v6719 = vmul.f32 %v6715, %v6712
        %v6720 = vmul.f32 %v6715, %v6713
        %v6721 = vadd.f32 %v6611, %v6716
        %v6722 = vadd.f32 %v6612, %v6717
        %v6723 = vadd.f32 %v6613, %v6718
        %v6724 = vadd.f32 %v6614, %v6719
        %v6725 = vadd.f32 %v6615, %v6720
        %s6726 = sld [smem:[#allocation8 + $0x2d]]
        %v6727 = vstv %s6726
        %v6728 = vmul.f32 %v6727, %v6709
        %v6729 = vmul.f32 %v6727, %v6710
        %v6730 = vmul.f32 %v6727, %v6711
        %v6731 = vmul.f32 %v6727, %v6712
        %v6732 = vmul.f32 %v6727, %v6713
        %v6733 = vadd.f32 %v6655, %v6728
        %v6734 = vadd.f32 %v6656, %v6729
        %v6735 = vadd.f32 %v6657, %v6730
        %v6736 = vadd.f32 %v6658, %v6731
        %v6737 = vadd.f32 %v6659, %v6732
        %s6738 = sld [smem:[#allocation8 + $0x48]]
        %v6739 = vstv %s6738
        %v6740 = vmul.f32 %v6739, %v6709
        %v6741 = vmul.f32 %v6739, %v6710
        %v6742 = vmul.f32 %v6739, %v6711
        %v6743 = vmul.f32 %v6739, %v6712
        %v6744 = vmul.f32 %v6739, %v6713
        %v6745 = vadd.f32 %v6699, %v6740
        %v6746 = vadd.f32 %v6700, %v6741
        %v6747 = vadd.f32 %v6701, %v6742
        %v6748 = vadd.f32 %v6702, %v6743
        %v6749 = vadd.f32 %v6703, %v6744
        %v6750 = vld [vmem:[%s561] sm:$0xff]
        %v6751 = vld [vmem:[%s561 + $0x8] sm:$0xff]
        %v6752 = vld [vmem:[%s561 + $0x10] sm:$0xff]
        %v6753 = vld [vmem:[%s561 + $0x18] sm:$0xff]
        %v6754 = vld [vmem:[%s561 + $0x20] sm:$0xf]
        %s6755 = sld [smem:[#allocation8 + $0x13]]
        %v6756 = vstv %s6755
        %v6757 = vmul.f32 %v6756, %v6750
        %v6758 = vmul.f32 %v6756, %v6751
        %v6759 = vmul.f32 %v6756, %v6752
        %v6760 = vmul.f32 %v6756, %v6753
        %v6761 = vmul.f32 %v6756, %v6754
        %6767 = vrot.lane.b32.xlu0 %v6757, 127
        %v6768 = vpop.permute.xlu0 %6767
        %6769 = vrot.lane.b32.xlu0 %v6758, 127
        %v6770 = vpop.permute.xlu0 %6769
        %6771 = vrot.lane.b32.xlu0 %v6759, 127
        %v6772 = vpop.permute.xlu0 %6771
        %6773 = vrot.lane.b32.xlu0 %v6760, 127
        %v6774 = vpop.permute.xlu0 %6773
        %6775 = vrot.lane.b32.xlu0 %v6761, 127
        %v6776 = vpop.permute.xlu0 %6775
        %v6777 = vrot.slane %v6768, 4
        %v6778 = vrot.slane %v6770, 4
        %v6779 = vrot.slane %v6772, 4
        %v6780 = vrot.slane %v6774, 4
        %v6781 = vrot.slane %v6776, 4
        %v6782 = vsel %vm680, %v6777, %v6778
        %v6783 = vsel %vm766, %v6768, %v6782
        %v6784 = vsel %vm680, %v6778, %v6779
        %v6785 = vsel %vm766, %v6770, %v6784
        %v6786 = vsel %vm680, %v6779, %v6780
        %v6787 = vsel %vm766, %v6772, %v6786
        %v6788 = vsel %vm680, %v6780, %v6781
        %v6789 = vsel %vm766, %v6774, %v6788
        %v6795 = vadd.f32 %v6721, %v6783
        %v6796 = vadd.f32 %v6722, %v6785
        %v6797 = vadd.f32 %v6723, %v6787
        %v6798 = vadd.f32 %v6724, %v6789
        %v6799 = vadd.f32 %v6725, %v6776
        %s6800 = sld [smem:[#allocation8 + $0x2e]]
        %v6801 = vstv %s6800
        %v6802 = vmul.f32 %v6801, %v6750
        %v6803 = vmul.f32 %v6801, %v6751
        %v6804 = vmul.f32 %v6801, %v6752
        %v6805 = vmul.f32 %v6801, %v6753
        %v6806 = vmul.f32 %v6801, %v6754
        %6812 = vrot.lane.b32.xlu0 %v6802, 127
        %v6813 = vpop.permute.xlu0 %6812
        %6814 = vrot.lane.b32.xlu0 %v6803, 127
        %v6815 = vpop.permute.xlu0 %6814
        %6816 = vrot.lane.b32.xlu0 %v6804, 127
        %v6817 = vpop.permute.xlu0 %6816
        %6818 = vrot.lane.b32.xlu0 %v6805, 127
        %v6819 = vpop.permute.xlu0 %6818
        %6820 = vrot.lane.b32.xlu0 %v6806, 127
        %v6821 = vpop.permute.xlu0 %6820
        %v6822 = vrot.slane %v6813, 4
        %v6823 = vrot.slane %v6815, 4
        %v6824 = vrot.slane %v6817, 4
        %v6825 = vrot.slane %v6819, 4
        %v6826 = vrot.slane %v6821, 4
        %v6827 = vsel %vm680, %v6822, %v6823
        %v6828 = vsel %vm766, %v6813, %v6827
        %v6829 = vsel %vm680, %v6823, %v6824
        %v6830 = vsel %vm766, %v6815, %v6829
        %v6831 = vsel %vm680, %v6824, %v6825
        %v6832 = vsel %vm766, %v6817, %v6831
        %v6833 = vsel %vm680, %v6825, %v6826
        %v6834 = vsel %vm766, %v6819, %v6833
        %v6840 = vadd.f32 %v6733, %v6828
        %v6841 = vadd.f32 %v6734, %v6830
        %v6842 = vadd.f32 %v6735, %v6832
        %v6843 = vadd.f32 %v6736, %v6834
        %v6844 = vadd.f32 %v6737, %v6821
        %s6845 = sld [smem:[#allocation8 + $0x49]]
        %v6846 = vstv %s6845
        %v6847 = vmul.f32 %v6846, %v6750
        %v6848 = vmul.f32 %v6846, %v6751
        %v6849 = vmul.f32 %v6846, %v6752
        %v6850 = vmul.f32 %v6846, %v6753
        %v6851 = vmul.f32 %v6846, %v6754
        %6857 = vrot.lane.b32.xlu0 %v6847, 127
        %v6858 = vpop.permute.xlu0 %6857
        %6859 = vrot.lane.b32.xlu0 %v6848, 127
        %v6860 = vpop.permute.xlu0 %6859
        %6861 = vrot.lane.b32.xlu0 %v6849, 127
        %v6862 = vpop.permute.xlu0 %6861
        %6863 = vrot.lane.b32.xlu0 %v6850, 127
        %v6864 = vpop.permute.xlu0 %6863
        %6865 = vrot.lane.b32.xlu0 %v6851, 127
        %v6866 = vpop.permute.xlu0 %6865
        %v6867 = vrot.slane %v6858, 4
        %v6868 = vrot.slane %v6860, 4
        %v6869 = vrot.slane %v6862, 4
        %v6870 = vrot.slane %v6864, 4
        %v6871 = vrot.slane %v6866, 4
        %v6872 = vsel %vm680, %v6867, %v6868
        %v6873 = vsel %vm766, %v6858, %v6872
        %v6874 = vsel %vm680, %v6868, %v6869
        %v6875 = vsel %vm766, %v6860, %v6874
        %v6876 = vsel %vm680, %v6869, %v6870
        %v6877 = vsel %vm766, %v6862, %v6876
        %v6878 = vsel %vm680, %v6870, %v6871
        %v6879 = vsel %vm766, %v6864, %v6878
        %v6885 = vadd.f32 %v6745, %v6873
        %v6886 = vadd.f32 %v6746, %v6875
        %v6887 = vadd.f32 %v6747, %v6877
        %v6888 = vadd.f32 %v6748, %v6879
        %v6889 = vadd.f32 %v6749, %v6866
        %v6890 = vmul.f32 %v6750, %v891
        %v6891 = vmul.f32 %v6751, %v893
        %v6892 = vmul.f32 %v6752, %v895
        %v6893 = vmul.f32 %v6753, %v897
        %v6894 = vmul.f32 %v6754, %v889
        %s6895 = sld [smem:[#allocation8 + $0x14]]
        %v6896 = vstv %s6895
        %v6897 = vmul.f32 %v6896, %v6890
        %v6898 = vmul.f32 %v6896, %v6891
        %v6899 = vmul.f32 %v6896, %v6892
        %v6900 = vmul.f32 %v6896, %v6893
        %v6901 = vmul.f32 %v6896, %v6894
        %6907 = vrot.lane.b32.xlu0 %v6897, 126
        %v6908 = vpop.permute.xlu0 %6907
        %6909 = vrot.lane.b32.xlu0 %v6898, 126
        %v6910 = vpop.permute.xlu0 %6909
        %6911 = vrot.lane.b32.xlu0 %v6899, 126
        %v6912 = vpop.permute.xlu0 %6911
        %6913 = vrot.lane.b32.xlu0 %v6900, 126
        %v6914 = vpop.permute.xlu0 %6913
        %6915 = vrot.lane.b32.xlu0 %v6901, 126
        %v6916 = vpop.permute.xlu0 %6915
        %v6917 = vrot.slane %v6908, 4
        %v6918 = vrot.slane %v6910, 4
        %v6919 = vrot.slane %v6912, 4
        %v6920 = vrot.slane %v6914, 4
        %v6921 = vrot.slane %v6916, 4
        %v6922 = vsel %vm680, %v6917, %v6918
        %v6923 = vsel %vm936, %v6908, %v6922
        %v6924 = vsel %vm680, %v6918, %v6919
        %v6925 = vsel %vm936, %v6910, %v6924
        %v6926 = vsel %vm680, %v6919, %v6920
        %v6927 = vsel %vm936, %v6912, %v6926
        %v6928 = vsel %vm680, %v6920, %v6921
        %v6929 = vsel %vm936, %v6914, %v6928
        %v6935 = vadd.f32 %v6795, %v6923
        %v6936 = vadd.f32 %v6796, %v6925
        %v6937 = vadd.f32 %v6797, %v6927
        %v6938 = vadd.f32 %v6798, %v6929
        %v6939 = vadd.f32 %v6799, %v6916
        %s6940 = sld [smem:[#allocation8 + $0x2f]]
        %v6941 = vstv %s6940
        %v6942 = vmul.f32 %v6941, %v6890
        %v6943 = vmul.f32 %v6941, %v6891
        %v6944 = vmul.f32 %v6941, %v6892
        %v6945 = vmul.f32 %v6941, %v6893
        %v6946 = vmul.f32 %v6941, %v6894
        %6952 = vrot.lane.b32.xlu0 %v6942, 126
        %v6953 = vpop.permute.xlu0 %6952
        %6954 = vrot.lane.b32.xlu0 %v6943, 126
        %v6955 = vpop.permute.xlu0 %6954
        %6956 = vrot.lane.b32.xlu0 %v6944, 126
        %v6957 = vpop.permute.xlu0 %6956
        %6958 = vrot.lane.b32.xlu0 %v6945, 126
        %v6959 = vpop.permute.xlu0 %6958
        %6960 = vrot.lane.b32.xlu0 %v6946, 126
        %v6961 = vpop.permute.xlu0 %6960
        %v6962 = vrot.slane %v6953, 4
        %v6963 = vrot.slane %v6955, 4
        %v6964 = vrot.slane %v6957, 4
        %v6965 = vrot.slane %v6959, 4
        %v6966 = vrot.slane %v6961, 4
        %v6967 = vsel %vm680, %v6962, %v6963
        %v6968 = vsel %vm936, %v6953, %v6967
        %v6969 = vsel %vm680, %v6963, %v6964
        %v6970 = vsel %vm936, %v6955, %v6969
        %v6971 = vsel %vm680, %v6964, %v6965
        %v6972 = vsel %vm936, %v6957, %v6971
        %v6973 = vsel %vm680, %v6965, %v6966
        %v6974 = vsel %vm936, %v6959, %v6973
        %v6980 = vadd.f32 %v6840, %v6968
        %v6981 = vadd.f32 %v6841, %v6970
        %v6982 = vadd.f32 %v6842, %v6972
        %v6983 = vadd.f32 %v6843, %v6974
        %v6984 = vadd.f32 %v6844, %v6961
        %s6985 = sld [smem:[#allocation8 + $0x4a]]
        %v6986 = vstv %s6985
        %v6987 = vmul.f32 %v6986, %v6890
        %v6988 = vmul.f32 %v6986, %v6891
        %v6989 = vmul.f32 %v6986, %v6892
        %v6990 = vmul.f32 %v6986, %v6893
        %v6991 = vmul.f32 %v6986, %v6894
        %6997 = vrot.lane.b32.xlu0 %v6987, 126
        %v6998 = vpop.permute.xlu0 %6997
        %6999 = vrot.lane.b32.xlu0 %v6988, 126
        %v7000 = vpop.permute.xlu0 %6999
        %7001 = vrot.lane.b32.xlu0 %v6989, 126
        %v7002 = vpop.permute.xlu0 %7001
        %7003 = vrot.lane.b32.xlu0 %v6990, 126
        %v7004 = vpop.permute.xlu0 %7003
        %7005 = vrot.lane.b32.xlu0 %v6991, 126
        %v7006 = vpop.permute.xlu0 %7005
        %v7007 = vrot.slane %v6998, 4
        %v7008 = vrot.slane %v7000, 4
        %v7009 = vrot.slane %v7002, 4
        %v7010 = vrot.slane %v7004, 4
        %v7011 = vrot.slane %v7006, 4
        %v7012 = vsel %vm680, %v7007, %v7008
        %v7013 = vsel %vm936, %v6998, %v7012
        %v7014 = vsel %vm680, %v7008, %v7009
        %v7015 = vsel %vm936, %v7000, %v7014
        %v7016 = vsel %vm680, %v7009, %v7010
        %v7017 = vsel %vm936, %v7002, %v7016
        %v7018 = vsel %vm680, %v7010, %v7011
        %v7019 = vsel %vm936, %v7004, %v7018
        %v7025 = vadd.f32 %v6885, %v7013
        %v7026 = vadd.f32 %v6886, %v7015
        %v7027 = vadd.f32 %v6887, %v7017
        %v7028 = vadd.f32 %v6888, %v7019
        %v7029 = vadd.f32 %v6889, %v7006
        %v7030 = vld [vmem:[%s561] sm:$0xff]
        %v7031 = vld [vmem:[%s561 + $0x8] sm:$0xff]
        %v7032 = vld [vmem:[%s561 + $0x10] sm:$0xff]
        %v7033 = vld [vmem:[%s561 + $0x18] sm:$0xff]
        %v7034 = vld [vmem:[%s561 + $0x20] sm:$0xf]
        %v7035 = vmul.f32 %v7030, %v1061
        %v7036 = vmul.f32 %v7031, %v1063
        %v7037 = vmul.f32 %v7032, %v1065
        %v7038 = vmul.f32 %v7033, %v1067
        %v7039 = vmul.f32 %v7034, %v1060
        %s7040 = sld [smem:[#allocation8 + $0x15]]
        %v7041 = vstv %s7040
        %v7042 = vmul.f32 %v7041, %v7035
        %v7043 = vmul.f32 %v7041, %v7036
        %v7044 = vmul.f32 %v7041, %v7037
        %v7045 = vmul.f32 %v7041, %v7038
        %v7046 = vmul.f32 %v7041, %v7039
        %7052 = vrot.lane.b32.xlu0 %v7042, 96
        %v7053 = vpop.permute.xlu0 %7052
        %7054 = vrot.lane.b32.xlu0 %v7043, 96
        %v7055 = vpop.permute.xlu0 %7054
        %7056 = vrot.lane.b32.xlu0 %v7044, 96
        %v7057 = vpop.permute.xlu0 %7056
        %7058 = vrot.lane.b32.xlu0 %v7045, 96
        %v7059 = vpop.permute.xlu0 %7058
        %7060 = vrot.lane.b32.xlu0 %v7046, 96
        %v7061 = vpop.permute.xlu0 %7060
        %v7062 = vrot.slane %v7053, 4
        %v7063 = vrot.slane %v7055, 4
        %v7064 = vrot.slane %v7057, 4
        %v7065 = vrot.slane %v7059, 4
        %v7066 = vrot.slane %v7061, 4
        %v7067 = vsel %vm680, %v7062, %v7063
        %v7068 = vsel %vm1106, %v7053, %v7067
        %v7069 = vsel %vm680, %v7063, %v7064
        %v7070 = vsel %vm1106, %v7055, %v7069
        %v7071 = vsel %vm680, %v7064, %v7065
        %v7072 = vsel %vm1106, %v7057, %v7071
        %v7073 = vsel %vm680, %v7065, %v7066
        %v7074 = vsel %vm1106, %v7059, %v7073
        %v7080 = vadd.f32 %v6935, %v7068
        %v7081 = vadd.f32 %v6936, %v7070
        %v7082 = vadd.f32 %v6937, %v7072
        %v7083 = vadd.f32 %v6938, %v7074
        %v7084 = vadd.f32 %v6939, %v7061
        %s7085 = sld [smem:[#allocation8 + $0x30]]
        %v7086 = vstv %s7085
        %v7087 = vmul.f32 %v7086, %v7035
        %v7088 = vmul.f32 %v7086, %v7036
        %v7089 = vmul.f32 %v7086, %v7037
        %v7090 = vmul.f32 %v7086, %v7038
        %v7091 = vmul.f32 %v7086, %v7039
        %7097 = vrot.lane.b32.xlu0 %v7087, 96
        %v7098 = vpop.permute.xlu0 %7097
        %7099 = vrot.lane.b32.xlu0 %v7088, 96
        %v7100 = vpop.permute.xlu0 %7099
        %7101 = vrot.lane.b32.xlu0 %v7089, 96
        %v7102 = vpop.permute.xlu0 %7101
        %7103 = vrot.lane.b32.xlu0 %v7090, 96
        %v7104 = vpop.permute.xlu0 %7103
        %7105 = vrot.lane.b32.xlu0 %v7091, 96
        %v7106 = vpop.permute.xlu0 %7105
        %v7107 = vrot.slane %v7098, 4
        %v7108 = vrot.slane %v7100, 4
        %v7109 = vrot.slane %v7102, 4
        %v7110 = vrot.slane %v7104, 4
        %v7111 = vrot.slane %v7106, 4
        %v7112 = vsel %vm680, %v7107, %v7108
        %v7113 = vsel %vm1106, %v7098, %v7112
        %v7114 = vsel %vm680, %v7108, %v7109
        %v7115 = vsel %vm1106, %v7100, %v7114
        %v7116 = vsel %vm680, %v7109, %v7110
        %v7117 = vsel %vm1106, %v7102, %v7116
        %v7118 = vsel %vm680, %v7110, %v7111
        %v7119 = vsel %vm1106, %v7104, %v7118
        %v7125 = vadd.f32 %v6980, %v7113
        %v7126 = vadd.f32 %v6981, %v7115
        %v7127 = vadd.f32 %v6982, %v7117
        %v7128 = vadd.f32 %v6983, %v7119
        %v7129 = vadd.f32 %v6984, %v7106
        %s7130 = sld [smem:[#allocation8 + $0x4b]]
        %v7131 = vstv %s7130
        %v7132 = vmul.f32 %v7131, %v7035
        %v7133 = vmul.f32 %v7131, %v7036
        %v7134 = vmul.f32 %v7131, %v7037
        %v7135 = vmul.f32 %v7131, %v7038
        %v7136 = vmul.f32 %v7131, %v7039
        %7142 = vrot.lane.b32.xlu0 %v7132, 96
        %v7143 = vpop.permute.xlu0 %7142
        %7144 = vrot.lane.b32.xlu0 %v7133, 96
        %v7145 = vpop.permute.xlu0 %7144
        %7146 = vrot.lane.b32.xlu0 %v7134, 96
        %v7147 = vpop.permute.xlu0 %7146
        %7148 = vrot.lane.b32.xlu0 %v7135, 96
        %v7149 = vpop.permute.xlu0 %7148
        %7150 = vrot.lane.b32.xlu0 %v7136, 96
        %v7151 = vpop.permute.xlu0 %7150
        %v7152 = vrot.slane %v7143, 4
        %v7153 = vrot.slane %v7145, 4
        %v7154 = vrot.slane %v7147, 4
        %v7155 = vrot.slane %v7149, 4
        %v7156 = vrot.slane %v7151, 4
        %v7157 = vsel %vm680, %v7152, %v7153
        %v7158 = vsel %vm1106, %v7143, %v7157
        %v7159 = vsel %vm680, %v7153, %v7154
        %v7160 = vsel %vm1106, %v7145, %v7159
        %v7161 = vsel %vm680, %v7154, %v7155
        %v7162 = vsel %vm1106, %v7147, %v7161
        %v7163 = vsel %vm680, %v7155, %v7156
        %v7164 = vsel %vm1106, %v7149, %v7163
        %v7170 = vadd.f32 %v7025, %v7158
        %v7171 = vadd.f32 %v7026, %v7160
        %v7172 = vadd.f32 %v7027, %v7162
        %v7173 = vadd.f32 %v7028, %v7164
        %v7174 = vadd.f32 %v7029, %v7151
        %v7175 = vld [vmem:[%s561 + $0x4] sm:$0xff]
        %v7176 = vld [vmem:[%s561 + $0xc] sm:$0xff]
        %v7177 = vld [vmem:[%s561 + $0x14] sm:$0xff]
        %v7178 = vld [vmem:[%s561 + $0x1c] sm:$0xff]
        %s7179 = sld [smem:[#allocation8 + $0x16]]
        %v7180 = vstv %s7179
        %v7181 = vmul.f32 %v7180, %v7175
        %v7182 = vmul.f32 %v7180, %v7176
        %v7183 = vmul.f32 %v7180, %v7177
        %v7184 = vmul.f32 %v7180, %v7178
        %7189 = vrot.lane.b32.xlu0 %v7181, 95
        %v7190 = vpop.permute.xlu0 %7189
        %7191 = vrot.lane.b32.xlu0 %v7182, 95
        %v7192 = vpop.permute.xlu0 %7191
        %7193 = vrot.lane.b32.xlu0 %v7183, 95
        %v7194 = vpop.permute.xlu0 %7193
        %7195 = vrot.lane.b32.xlu0 %v7184, 95
        %v7196 = vpop.permute.xlu0 %7195
        %v7197 = vrot.slane %v7190, 4
        %v7198 = vrot.slane %v7192, 4
        %v7199 = vrot.slane %v7194, 4
        %v7200 = vrot.slane %v7196, 4
        %v7201 = vsel %vm678, %v7197, %v7190
        %v7202 = vsel %vm680, %v7197, %v7198
        %v7203 = vsel %vm678, %v7202, %v7192
        %v7204 = vsel %vm680, %v7198, %v7199
        %v7205 = vsel %vm678, %v7204, %v7194
        %v7206 = vsel %vm680, %v7199, %v7200
        %v7207 = vsel %vm678, %v7206, %v7196
        %v7213 = vadd.f32 %v7080, %v7201
        %v7214 = vadd.f32 %v7081, %v7203
        %v7215 = vadd.f32 %v7082, %v7205
        %v7216 = vadd.f32 %v7083, %v7207
        %v7217 = vadd.f32 %v7084, %v7200
        %s7218 = sld [smem:[#allocation8 + $0x31]]
        %v7219 = vstv %s7218
        %v7220 = vmul.f32 %v7219, %v7175
        %v7221 = vmul.f32 %v7219, %v7176
        %v7222 = vmul.f32 %v7219, %v7177
        %v7223 = vmul.f32 %v7219, %v7178
        %7228 = vrot.lane.b32.xlu0 %v7220, 95
        %v7229 = vpop.permute.xlu0 %7228
        %7230 = vrot.lane.b32.xlu0 %v7221, 95
        %v7231 = vpop.permute.xlu0 %7230
        %7232 = vrot.lane.b32.xlu0 %v7222, 95
        %v7233 = vpop.permute.xlu0 %7232
        %7234 = vrot.lane.b32.xlu0 %v7223, 95
        %v7235 = vpop.permute.xlu0 %7234
        %v7236 = vrot.slane %v7229, 4
        %v7237 = vrot.slane %v7231, 4
        %v7238 = vrot.slane %v7233, 4
        %v7239 = vrot.slane %v7235, 4
        %v7240 = vsel %vm678, %v7236, %v7229
        %v7241 = vsel %vm680, %v7236, %v7237
        %v7242 = vsel %vm678, %v7241, %v7231
        %v7243 = vsel %vm680, %v7237, %v7238
        %v7244 = vsel %vm678, %v7243, %v7233
        %v7245 = vsel %vm680, %v7238, %v7239
        %v7246 = vsel %vm678, %v7245, %v7235
        %v7252 = vadd.f32 %v7125, %v7240
        %v7253 = vadd.f32 %v7126, %v7242
        %v7254 = vadd.f32 %v7127, %v7244
        %v7255 = vadd.f32 %v7128, %v7246
        %v7256 = vadd.f32 %v7129, %v7239
        %s7257 = sld [smem:[#allocation8 + $0x4c]]
        %v7258 = vstv %s7257
        %v7259 = vmul.f32 %v7258, %v7175
        %v7260 = vmul.f32 %v7258, %v7176
        %v7261 = vmul.f32 %v7258, %v7177
        %v7262 = vmul.f32 %v7258, %v7178
        %7267 = vrot.lane.b32.xlu0 %v7259, 95
        %v7268 = vpop.permute.xlu0 %7267
        %7269 = vrot.lane.b32.xlu0 %v7260, 95
        %v7270 = vpop.permute.xlu0 %7269
        %7271 = vrot.lane.b32.xlu0 %v7261, 95
        %v7272 = vpop.permute.xlu0 %7271
        %7273 = vrot.lane.b32.xlu0 %v7262, 95
        %v7274 = vpop.permute.xlu0 %7273
        %v7275 = vrot.slane %v7268, 4
        %v7276 = vrot.slane %v7270, 4
        %v7277 = vrot.slane %v7272, 4
        %v7278 = vrot.slane %v7274, 4
        %v7279 = vsel %vm678, %v7275, %v7268
        %v7280 = vsel %vm680, %v7275, %v7276
        %v7281 = vsel %vm678, %v7280, %v7270
        %v7282 = vsel %vm680, %v7276, %v7277
        %v7283 = vsel %vm678, %v7282, %v7272
        %v7284 = vsel %vm680, %v7277, %v7278
        %v7285 = vsel %vm678, %v7284, %v7274
        %v7291 = vadd.f32 %v7170, %v7279
        %v7292 = vadd.f32 %v7171, %v7281
        %v7293 = vadd.f32 %v7172, %v7283
        %v7294 = vadd.f32 %v7173, %v7285
        %v7295 = vadd.f32 %v7174, %v7278
        %v7296 = vld [vmem:[%s561 + $0x4] sm:$0xff]
        %v7297 = vld [vmem:[%s561 + $0xc] sm:$0xff]
        %v7298 = vld [vmem:[%s561 + $0x14] sm:$0xff]
        %v7299 = vld [vmem:[%s561 + $0x1c] sm:$0xff]
        %v7300 = vld [vmem:[%s561 + $0x24] sm:$0xf]
        %v7301 = vmul.f32 %v7296, %v1353
        %v7302 = vmul.f32 %v7297, %v1355
        %v7303 = vmul.f32 %v7298, %v1357
        %v7304 = vmul.f32 %v7299, %v1359
        %v7305 = vmul.f32 %v7300, %v1351
        %s7306 = sld [smem:[#allocation8 + $0x17]]
        %v7307 = vstv %s7306
        %v7308 = vmul.f32 %v7307, %v7301
        %v7309 = vmul.f32 %v7307, %v7302
        %v7310 = vmul.f32 %v7307, %v7303
        %v7311 = vmul.f32 %v7307, %v7304
        %v7312 = vmul.f32 %v7307, %v7305
        %7318 = vrot.lane.b32.xlu0 %v7308, 94
        %v7319 = vpop.permute.xlu0 %7318
        %7320 = vrot.lane.b32.xlu0 %v7309, 94
        %v7321 = vpop.permute.xlu0 %7320
        %7322 = vrot.lane.b32.xlu0 %v7310, 94
        %v7323 = vpop.permute.xlu0 %7322
        %7324 = vrot.lane.b32.xlu0 %v7311, 94
        %v7325 = vpop.permute.xlu0 %7324
        %7326 = vrot.lane.b32.xlu0 %v7312, 94
        %v7327 = vpop.permute.xlu0 %7326
        %v7328 = vrot.slane %v7319, 4
        %v7329 = vrot.slane %v7321, 4
        %v7330 = vrot.slane %v7323, 4
        %v7331 = vrot.slane %v7325, 4
        %v7332 = vsel %vm1396, %v7328, %v7319
        %v7333 = vsel %vm680, %v7328, %v7329
        %v7334 = vsel %vm1396, %v7333, %v7321
        %v7335 = vsel %vm680, %v7329, %v7330
        %v7336 = vsel %vm1396, %v7335, %v7323
        %v7337 = vsel %vm680, %v7330, %v7331
        %v7338 = vsel %vm1396, %v7337, %v7325
        %v7339 = vsel %vm1396, %v7331, %v7327
        %v7345 = vadd.f32 %v7213, %v7332
        %v7346 = vadd.f32 %v7214, %v7334
        %v7347 = vadd.f32 %v7215, %v7336
        %v7348 = vadd.f32 %v7216, %v7338
        %v7349 = vadd.f32 %v7217, %v7339
        %s7350 = sld [smem:[#allocation8 + $0x32]]
        %v7351 = vstv %s7350
        %v7352 = vmul.f32 %v7351, %v7301
        %v7353 = vmul.f32 %v7351, %v7302
        %v7354 = vmul.f32 %v7351, %v7303
        %v7355 = vmul.f32 %v7351, %v7304
        %v7356 = vmul.f32 %v7351, %v7305
        %7362 = vrot.lane.b32.xlu0 %v7352, 94
        %v7363 = vpop.permute.xlu0 %7362
        %7364 = vrot.lane.b32.xlu0 %v7353, 94
        %v7365 = vpop.permute.xlu0 %7364
        %7366 = vrot.lane.b32.xlu0 %v7354, 94
        %v7367 = vpop.permute.xlu0 %7366
        %7368 = vrot.lane.b32.xlu0 %v7355, 94
        %v7369 = vpop.permute.xlu0 %7368
        %7370 = vrot.lane.b32.xlu0 %v7356, 94
        %v7371 = vpop.permute.xlu0 %7370
        %v7372 = vrot.slane %v7363, 4
        %v7373 = vrot.slane %v7365, 4
        %v7374 = vrot.slane %v7367, 4
        %v7375 = vrot.slane %v7369, 4
        %v7376 = vsel %vm1396, %v7372, %v7363
        %v7377 = vsel %vm680, %v7372, %v7373
        %v7378 = vsel %vm1396, %v7377, %v7365
        %v7379 = vsel %vm680, %v7373, %v7374
        %v7380 = vsel %vm1396, %v7379, %v7367
        %v7381 = vsel %vm680, %v7374, %v7375
        %v7382 = vsel %vm1396, %v7381, %v7369
        %v7383 = vsel %vm1396, %v7375, %v7371
        %v7389 = vadd.f32 %v7252, %v7376
        %v7390 = vadd.f32 %v7253, %v7378
        %v7391 = vadd.f32 %v7254, %v7380
        %v7392 = vadd.f32 %v7255, %v7382
        %v7393 = vadd.f32 %v7256, %v7383
        %s7394 = sld [smem:[#allocation8 + $0x4d]]
        %v7395 = vstv %s7394
        %v7396 = vmul.f32 %v7395, %v7301
        %v7397 = vmul.f32 %v7395, %v7302
        %v7398 = vmul.f32 %v7395, %v7303
        %v7399 = vmul.f32 %v7395, %v7304
        %v7400 = vmul.f32 %v7395, %v7305
        %7406 = vrot.lane.b32.xlu0 %v7396, 94
        %v7407 = vpop.permute.xlu0 %7406
        %7408 = vrot.lane.b32.xlu0 %v7397, 94
        %v7409 = vpop.permute.xlu0 %7408
        %7410 = vrot.lane.b32.xlu0 %v7398, 94
        %v7411 = vpop.permute.xlu0 %7410
        %7412 = vrot.lane.b32.xlu0 %v7399, 94
        %v7413 = vpop.permute.xlu0 %7412
        %7414 = vrot.lane.b32.xlu0 %v7400, 94
        %v7415 = vpop.permute.xlu0 %7414
        %v7416 = vrot.slane %v7407, 4
        %v7417 = vrot.slane %v7409, 4
        %v7418 = vrot.slane %v7411, 4
        %v7419 = vrot.slane %v7413, 4
        %v7420 = vsel %vm1396, %v7416, %v7407
        %v7421 = vsel %vm680, %v7416, %v7417
        %v7422 = vsel %vm1396, %v7421, %v7409
        %v7423 = vsel %vm680, %v7417, %v7418
        %v7424 = vsel %vm1396, %v7423, %v7411
        %v7425 = vsel %vm680, %v7418, %v7419
        %v7426 = vsel %vm1396, %v7425, %v7413
        %v7427 = vsel %vm1396, %v7419, %v7415
        %v7433 = vadd.f32 %v7291, %v7420
        %v7434 = vadd.f32 %v7292, %v7422
        %v7435 = vadd.f32 %v7293, %v7424
        %v7436 = vadd.f32 %v7294, %v7426
        %v7437 = vadd.f32 %v7295, %v7427
        %v7438 = vld [vmem:[%s561 + $0x4] sm:$0xff]
        %v7439 = vld [vmem:[%s561 + $0xc] sm:$0xff]
        %v7440 = vld [vmem:[%s561 + $0x14] sm:$0xff]
        %v7441 = vld [vmem:[%s561 + $0x1c] sm:$0xff]
        %v7442 = vld [vmem:[%s561 + $0x24] sm:$0xf]
        %v7443 = vmul.f32 %v7438, %v1521
        %v7444 = vmul.f32 %v7439, %v1523
        %v7445 = vmul.f32 %v7440, %v1525
        %v7446 = vmul.f32 %v7441, %v1527
        %v7447 = vmul.f32 %v7442, %v1519
        %s7448 = sld [smem:[#allocation8 + $0x18]]
        %v7449 = vstv %s7448
        %v7450 = vmul.f32 %v7449, %v7443
        %v7451 = vmul.f32 %v7449, %v7444
        %v7452 = vmul.f32 %v7449, %v7445
        %v7453 = vmul.f32 %v7449, %v7446
        %v7454 = vmul.f32 %v7449, %v7447
        %7460 = vrot.lane.b32.xlu0 %v7450, 64
        %v7461 = vpop.permute.xlu0 %7460
        %7462 = vrot.lane.b32.xlu0 %v7451, 64
        %v7463 = vpop.permute.xlu0 %7462
        %7464 = vrot.lane.b32.xlu0 %v7452, 64
        %v7465 = vpop.permute.xlu0 %7464
        %7466 = vrot.lane.b32.xlu0 %v7453, 64
        %v7467 = vpop.permute.xlu0 %7466
        %7468 = vrot.lane.b32.xlu0 %v7454, 64
        %v7469 = vpop.permute.xlu0 %7468
        %v7470 = vrot.slane %v7461, 4
        %v7471 = vrot.slane %v7463, 4
        %v7472 = vrot.slane %v7465, 4
        %v7473 = vrot.slane %v7467, 4
        %v7474 = vsel %vm1564, %v7470, %v7461
        %v7475 = vsel %vm680, %v7470, %v7471
        %v7476 = vsel %vm1564, %v7475, %v7463
        %v7477 = vsel %vm680, %v7471, %v7472
        %v7478 = vsel %vm1564, %v7477, %v7465
        %v7479 = vsel %vm680, %v7472, %v7473
        %v7480 = vsel %vm1564, %v7479, %v7467
        %v7481 = vsel %vm1564, %v7473, %v7469
        %v7487 = vadd.f32 %v7345, %v7474
        %v7488 = vadd.f32 %v7346, %v7476
        %v7489 = vadd.f32 %v7347, %v7478
        %v7490 = vadd.f32 %v7348, %v7480
        %v7491 = vadd.f32 %v7349, %v7481
        %s7492 = sld [smem:[#allocation8 + $0x33]]
        %v7493 = vstv %s7492
        %v7494 = vmul.f32 %v7493, %v7443
        %v7495 = vmul.f32 %v7493, %v7444
        %v7496 = vmul.f32 %v7493, %v7445
        %v7497 = vmul.f32 %v7493, %v7446
        %v7498 = vmul.f32 %v7493, %v7447
        %7504 = vrot.lane.b32.xlu0 %v7494, 64
        %v7505 = vpop.permute.xlu0 %7504
        %7506 = vrot.lane.b32.xlu0 %v7495, 64
        %v7507 = vpop.permute.xlu0 %7506
        %7508 = vrot.lane.b32.xlu0 %v7496, 64
        %v7509 = vpop.permute.xlu0 %7508
        %7510 = vrot.lane.b32.xlu0 %v7497, 64
        %v7511 = vpop.permute.xlu0 %7510
        %7512 = vrot.lane.b32.xlu0 %v7498, 64
        %v7513 = vpop.permute.xlu0 %7512
        %v7514 = vrot.slane %v7505, 4
        %v7515 = vrot.slane %v7507, 4
        %v7516 = vrot.slane %v7509, 4
        %v7517 = vrot.slane %v7511, 4
        %v7518 = vsel %vm1564, %v7514, %v7505
        %v7519 = vsel %vm680, %v7514, %v7515
        %v7520 = vsel %vm1564, %v7519, %v7507
        %v7521 = vsel %vm680, %v7515, %v7516
        %v7522 = vsel %vm1564, %v7521, %v7509
        %v7523 = vsel %vm680, %v7516, %v7517
        %v7524 = vsel %vm1564, %v7523, %v7511
        %v7525 = vsel %vm1564, %v7517, %v7513
        %v7531 = vadd.f32 %v7389, %v7518
        %v7532 = vadd.f32 %v7390, %v7520
        %v7533 = vadd.f32 %v7391, %v7522
        %v7534 = vadd.f32 %v7392, %v7524
        %v7535 = vadd.f32 %v7393, %v7525
        %s7536 = sld [smem:[#allocation8 + $0x4e]]
        %v7537 = vstv %s7536
        %v7538 = vmul.f32 %v7537, %v7443
        %v7539 = vmul.f32 %v7537, %v7444
        %v7540 = vmul.f32 %v7537, %v7445
        %v7541 = vmul.f32 %v7537, %v7446
        %v7542 = vmul.f32 %v7537, %v7447
        %7548 = vrot.lane.b32.xlu0 %v7538, 64
        %v7549 = vpop.permute.xlu0 %7548
        %7550 = vrot.lane.b32.xlu0 %v7539, 64
        %v7551 = vpop.permute.xlu0 %7550
        %7552 = vrot.lane.b32.xlu0 %v7540, 64
        %v7553 = vpop.permute.xlu0 %7552
        %7554 = vrot.lane.b32.xlu0 %v7541, 64
        %v7555 = vpop.permute.xlu0 %7554
        %7556 = vrot.lane.b32.xlu0 %v7542, 64
        %v7557 = vpop.permute.xlu0 %7556
        %v7558 = vrot.slane %v7549, 4
        %v7559 = vrot.slane %v7551, 4
        %v7560 = vrot.slane %v7553, 4
        %v7561 = vrot.slane %v7555, 4
        %v7562 = vsel %vm1564, %v7558, %v7549
        %v7563 = vsel %vm680, %v7558, %v7559
        %v7564 = vsel %vm1564, %v7563, %v7551
        %v7565 = vsel %vm680, %v7559, %v7560
        %v7566 = vsel %vm1564, %v7565, %v7553
        %v7567 = vsel %vm680, %v7560, %v7561
        %v7568 = vsel %vm1564, %v7567, %v7555
        %v7569 = vsel %vm1564, %v7561, %v7557
        %v7575 = vadd.f32 %v7433, %v7562
        %v7576 = vadd.f32 %v7434, %v7564
        %v7577 = vadd.f32 %v7435, %v7566
        %v7578 = vadd.f32 %v7436, %v7568
        %v7579 = vadd.f32 %v7437, %v7569
        %v7580 = vld [vmem:[%s561 + $0x4] sm:$0xff]
        %v7581 = vld [vmem:[%s561 + $0xc] sm:$0xff]
        %v7582 = vld [vmem:[%s561 + $0x14] sm:$0xff]
        %v7583 = vld [vmem:[%s561 + $0x1c] sm:$0xff]
        %v7584 = vld [vmem:[%s561 + $0x24] sm:$0xf]
        %s7585 = sld [smem:[#allocation8 + $0x19]]
        %v7586 = vstv %s7585
        %v7587 = vmul.f32 %v7586, %v7580
        %v7588 = vmul.f32 %v7586, %v7581
        %v7589 = vmul.f32 %v7586, %v7582
        %v7590 = vmul.f32 %v7586, %v7583
        %v7591 = vmul.f32 %v7586, %v7584
        %7597 = vrot.lane.b32.xlu0 %v7587, 63
        %v7598 = vpop.permute.xlu0 %7597
        %7599 = vrot.lane.b32.xlu0 %v7588, 63
        %v7600 = vpop.permute.xlu0 %7599
        %7601 = vrot.lane.b32.xlu0 %v7589, 63
        %v7602 = vpop.permute.xlu0 %7601
        %7603 = vrot.lane.b32.xlu0 %v7590, 63
        %v7604 = vpop.permute.xlu0 %7603
        %7605 = vrot.lane.b32.xlu0 %v7591, 63
        %v7606 = vpop.permute.xlu0 %7605
        %v7607 = vrot.slane %v7598, 4
        %v7608 = vrot.slane %v7600, 4
        %v7609 = vrot.slane %v7602, 4
        %v7610 = vrot.slane %v7604, 4
        %v7611 = vsel %vm1702, %v7607, %v7598
        %v7612 = vsel %vm680, %v7607, %v7608
        %v7613 = vsel %vm1702, %v7612, %v7600
        %v7614 = vsel %vm680, %v7608, %v7609
        %v7615 = vsel %vm1702, %v7614, %v7602
        %v7616 = vsel %vm680, %v7609, %v7610
        %v7617 = vsel %vm1702, %v7616, %v7604
        %v7618 = vsel %vm1702, %v7610, %v7606
        %v7624 = vadd.f32 %v7487, %v7611
        %v7625 = vadd.f32 %v7488, %v7613
        %v7626 = vadd.f32 %v7489, %v7615
        %v7627 = vadd.f32 %v7490, %v7617
        %v7628 = vadd.f32 %v7491, %v7618
        %s7629 = sld [smem:[#allocation8 + $0x34]]
        %v7630 = vstv %s7629
        %v7631 = vmul.f32 %v7630, %v7580
        %v7632 = vmul.f32 %v7630, %v7581
        %v7633 = vmul.f32 %v7630, %v7582
        %v7634 = vmul.f32 %v7630, %v7583
        %v7635 = vmul.f32 %v7630, %v7584
        %7641 = vrot.lane.b32.xlu0 %v7631, 63
        %v7642 = vpop.permute.xlu0 %7641
        %7643 = vrot.lane.b32.xlu0 %v7632, 63
        %v7644 = vpop.permute.xlu0 %7643
        %7645 = vrot.lane.b32.xlu0 %v7633, 63
        %v7646 = vpop.permute.xlu0 %7645
        %7647 = vrot.lane.b32.xlu0 %v7634, 63
        %v7648 = vpop.permute.xlu0 %7647
        %7649 = vrot.lane.b32.xlu0 %v7635, 63
        %v7650 = vpop.permute.xlu0 %7649
        %v7651 = vrot.slane %v7642, 4
        %v7652 = vrot.slane %v7644, 4
        %v7653 = vrot.slane %v7646, 4
        %v7654 = vrot.slane %v7648, 4
        %v7655 = vsel %vm1702, %v7651, %v7642
        %v7656 = vsel %vm680, %v7651, %v7652
        %v7657 = vsel %vm1702, %v7656, %v7644
        %v7658 = vsel %vm680, %v7652, %v7653
        %v7659 = vsel %vm1702, %v7658, %v7646
        %v7660 = vsel %vm680, %v7653, %v7654
        %v7661 = vsel %vm1702, %v7660, %v7648
        %v7662 = vsel %vm1702, %v7654, %v7650
        %v7668 = vadd.f32 %v7531, %v7655
        %v7669 = vadd.f32 %v7532, %v7657
        %v7670 = vadd.f32 %v7533, %v7659
        %v7671 = vadd.f32 %v7534, %v7661
        %v7672 = vadd.f32 %v7535, %v7662
        %s7673 = sld [smem:[#allocation8 + $0x4f]]
        %v7674 = vstv %s7673
        %v7675 = vmul.f32 %v7674, %v7580
        %v7676 = vmul.f32 %v7674, %v7581
        %v7677 = vmul.f32 %v7674, %v7582
        %v7678 = vmul.f32 %v7674, %v7583
        %v7679 = vmul.f32 %v7674, %v7584
        %7685 = vrot.lane.b32.xlu0 %v7675, 63
        %v7686 = vpop.permute.xlu0 %7685
        %7687 = vrot.lane.b32.xlu0 %v7676, 63
        %v7688 = vpop.permute.xlu0 %7687
        %7689 = vrot.lane.b32.xlu0 %v7677, 63
        %v7690 = vpop.permute.xlu0 %7689
        %7691 = vrot.lane.b32.xlu0 %v7678, 63
        %v7692 = vpop.permute.xlu0 %7691
        %7693 = vrot.lane.b32.xlu0 %v7679, 63
        %v7694 = vpop.permute.xlu0 %7693
        %v7695 = vrot.slane %v7686, 4
        %v7696 = vrot.slane %v7688, 4
        %v7697 = vrot.slane %v7690, 4
        %v7698 = vrot.slane %v7692, 4
        %v7699 = vsel %vm1702, %v7695, %v7686
        %v7700 = vsel %vm680, %v7695, %v7696
        %v7701 = vsel %vm1702, %v7700, %v7688
        %v7702 = vsel %vm680, %v7696, %v7697
        %v7703 = vsel %vm1702, %v7702, %v7690
        %v7704 = vsel %vm680, %v7697, %v7698
        %v7705 = vsel %vm1702, %v7704, %v7692
        %v7706 = vsel %vm1702, %v7698, %v7694
        %v7712 = vadd.f32 %v7575, %v7699
        %v7713 = vadd.f32 %v7576, %v7701
        %v7714 = vadd.f32 %v7577, %v7703
        %v7715 = vadd.f32 %v7578, %v7705
        %v7716 = vadd.f32 %v7579, %v7706
        %v7717 = vmul.f32 %v7580, %v1822
        %v7718 = vmul.f32 %v7581, %v1824
        %v7719 = vmul.f32 %v7582, %v1826
        %v7720 = vmul.f32 %v7583, %v1828
        %v7721 = vmul.f32 %v7584, %v1820
        %s7722 = sld [smem:[#allocation8 + $0x1a]]
        %v7723 = vstv %s7722
        %v7724 = vmul.f32 %v7723, %v7717
        %v7725 = vmul.f32 %v7723, %v7718
        %v7726 = vmul.f32 %v7723, %v7719
        %v7727 = vmul.f32 %v7723, %v7720
        %v7728 = vmul.f32 %v7723, %v7721
        %7734 = vrot.lane.b32.xlu0 %v7724, 62
        %v7735 = vpop.permute.xlu0 %7734
        %7736 = vrot.lane.b32.xlu0 %v7725, 62
        %v7737 = vpop.permute.xlu0 %7736
        %7738 = vrot.lane.b32.xlu0 %v7726, 62
        %v7739 = vpop.permute.xlu0 %7738
        %7740 = vrot.lane.b32.xlu0 %v7727, 62
        %v7741 = vpop.permute.xlu0 %7740
        %7742 = vrot.lane.b32.xlu0 %v7728, 62
        %v7743 = vpop.permute.xlu0 %7742
        %v7744 = vrot.slane %v7735, 4
        %v7745 = vrot.slane %v7737, 4
        %v7746 = vrot.slane %v7739, 4
        %v7747 = vrot.slane %v7741, 4
        %v7748 = vsel %vm1865, %v7744, %v7735
        %v7749 = vsel %vm680, %v7744, %v7745
        %v7750 = vsel %vm1865, %v7749, %v7737
        %v7751 = vsel %vm680, %v7745, %v7746
        %v7752 = vsel %vm1865, %v7751, %v7739
        %v7753 = vsel %vm680, %v7746, %v7747
        %v7754 = vsel %vm1865, %v7753, %v7741
        %v7755 = vsel %vm1865, %v7747, %v7743
        %v7761 = vadd.f32 %v7624, %v7748
        %v7762 = vadd.f32 %v7625, %v7750
        %v7763 = vadd.f32 %v7626, %v7752
        %v7764 = vadd.f32 %v7627, %v7754
        %v7765 = vadd.f32 %v7628, %v7755
        %s7766 = sld [smem:[#allocation8 + $0x35]]
        %v7767 = vstv %s7766
        %v7768 = vmul.f32 %v7767, %v7717
        %v7769 = vmul.f32 %v7767, %v7718
        %v7770 = vmul.f32 %v7767, %v7719
        %v7771 = vmul.f32 %v7767, %v7720
        %v7772 = vmul.f32 %v7767, %v7721
        %7778 = vrot.lane.b32.xlu0 %v7768, 62
        %v7779 = vpop.permute.xlu0 %7778
        %7780 = vrot.lane.b32.xlu0 %v7769, 62
        %v7781 = vpop.permute.xlu0 %7780
        %7782 = vrot.lane.b32.xlu0 %v7770, 62
        %v7783 = vpop.permute.xlu0 %7782
        %7784 = vrot.lane.b32.xlu0 %v7771, 62
        %v7785 = vpop.permute.xlu0 %7784
        %7786 = vrot.lane.b32.xlu0 %v7772, 62
        %v7787 = vpop.permute.xlu0 %7786
        %v7788 = vrot.slane %v7779, 4
        %v7789 = vrot.slane %v7781, 4
        %v7790 = vrot.slane %v7783, 4
        %v7791 = vrot.slane %v7785, 4
        %v7792 = vsel %vm1865, %v7788, %v7779
        %v7793 = vsel %vm680, %v7788, %v7789
        %v7794 = vsel %vm1865, %v7793, %v7781
        %v7795 = vsel %vm680, %v7789, %v7790
        %v7796 = vsel %vm1865, %v7795, %v7783
        %v7797 = vsel %vm680, %v7790, %v7791
        %v7798 = vsel %vm1865, %v7797, %v7785
        %v7799 = vsel %vm1865, %v7791, %v7787
        %v7805 = vadd.f32 %v7668, %v7792
        %v7806 = vadd.f32 %v7669, %v7794
        %v7807 = vadd.f32 %v7670, %v7796
        %v7808 = vadd.f32 %v7671, %v7798
        %v7809 = vadd.f32 %v7672, %v7799
        %s7810 = sld [smem:[#allocation8 + $0x50]]
        %v7811 = vstv %s7810
        %v7812 = vmul.f32 %v7811, %v7717
        %v7813 = vmul.f32 %v7811, %v7718
        %v7814 = vmul.f32 %v7811, %v7719
        %v7815 = vmul.f32 %v7811, %v7720
        %v7816 = vmul.f32 %v7811, %v7721
        %7822 = vrot.lane.b32.xlu0 %v7812, 62
        %v7823 = vpop.permute.xlu0 %7822
        %7824 = vrot.lane.b32.xlu0 %v7813, 62
        %v7825 = vpop.permute.xlu0 %7824
        %7826 = vrot.lane.b32.xlu0 %v7814, 62
        %v7827 = vpop.permute.xlu0 %7826
        %7828 = vrot.lane.b32.xlu0 %v7815, 62
        %v7829 = vpop.permute.xlu0 %7828
        %7830 = vrot.lane.b32.xlu0 %v7816, 62
        %v7831 = vpop.permute.xlu0 %7830
        %v7832 = vrot.slane %v7823, 4
        %v7833 = vrot.slane %v7825, 4
        %v7834 = vrot.slane %v7827, 4
        %v7835 = vrot.slane %v7829, 4
        %v7836 = vsel %vm1865, %v7832, %v7823
        %v7837 = vsel %vm680, %v7832, %v7833
        %v7838 = vsel %vm1865, %v7837, %v7825
        %v7839 = vsel %vm680, %v7833, %v7834
        %v7840 = vsel %vm1865, %v7839, %v7827
        %v7841 = vsel %vm680, %v7834, %v7835
        %v7842 = vsel %vm1865, %v7841, %v7829
        %v7843 = vsel %vm1865, %v7835, %v7831
        %v7849 = vadd.f32 %v7712, %v7836
        %v7850 = vadd.f32 %v7713, %v7838
        %v7851 = vadd.f32 %v7714, %v7840
        %v7852 = vadd.f32 %v7715, %v7842
        %v7853 = vadd.f32 %v7716, %v7843
        %v7854 = vld [vmem:[#allocation2 + $0x4] sm:$0xff]
        %v7855 = vld [vmem:[#allocation2 + $0xc] sm:$0xff]
        %v7856 = vld [vmem:[#allocation2 + $0x14] sm:$0xff]
        %v7857 = vld [vmem:[#allocation2 + $0x1c] sm:$0xff]
        %v7858 = vmax.f32 %v7761, 0.0
        %v7859 = vmax.f32 %v7762, 0.0
        %v7860 = vmax.f32 %v7763, 0.0
        %v7861 = vmax.f32 %v7764, 0.0
        %v7862 = vmax.f32 %v7765, 0.0
        %7867 = vrot.lane.b32.xlu0 %v7854, 95
        %v7868 = vpop.permute.xlu0 %7867
        %7869 = vrot.lane.b32.xlu0 %v7855, 95
        %v7870 = vpop.permute.xlu0 %7869
        %7871 = vrot.lane.b32.xlu0 %v7856, 95
        %v7872 = vpop.permute.xlu0 %7871
        %7873 = vrot.lane.b32.xlu0 %v7857, 95
        %v7874 = vpop.permute.xlu0 %7873
        %v7875 = vrot.slane %v7868, 4
        %v7876 = vrot.slane %v7870, 4
        %v7877 = vrot.slane %v7872, 4
        %v7878 = vrot.slane %v7874, 4
        %v7879 = vsel %vm678, %v7875, %v7868
        %v7880 = vsel %vm680, %v7875, %v7876
        %v7881 = vsel %vm678, %v7880, %v7870
        %v7882 = vsel %vm680, %v7876, %v7877
        %v7883 = vsel %vm678, %v7882, %v7872
        %v7884 = vsel %vm680, %v7877, %v7878
        %v7885 = vsel %vm678, %v7884, %v7874
        %v7891 = vadd.f32 %v7858, %v7879
        %v7892 = vadd.f32 %v7859, %v7881
        %v7893 = vadd.f32 %v7860, %v7883
        %v7894 = vadd.f32 %v7861, %v7885
        %v7895 = vadd.f32 %v7862, %v7878
        %v7902 = vunpack.c.l.s4 1966171168
        %v7903 = vunpack.c.0.s8 %v7902
        %v7904 = vlaneseq
        %v7905 = vshrl.u32 %v7904, 7
        %v7906 = vsub.s32 %v7903, %v7905
        %v7907 = vrot.slane %v7891, %v7906
        %v7909 = vunpack.c.l.s4 1966171168
        %v7910 = vunpack.c.0.s8 %v7909
        %v7911 = vlaneseq
        %v7912 = vshrl.u32 %v7911, 7
        %v7913 = vsub.s32 %v7910, %v7912
        %v7914 = vrot.slane %v7892, %v7913
        %v7916 = vunpack.c.l.s4 1966171168
        %v7917 = vunpack.c.0.s8 %v7916
        %v7918 = vlaneseq
        %v7919 = vshrl.u32 %v7918, 7
        %v7920 = vsub.s32 %v7917, %v7919
        %v7921 = vrot.slane %v7893, %v7920
        %v7923 = vunpack.c.l.s4 1966171168
        %v7924 = vunpack.c.0.s8 %v7923
        %v7925 = vlaneseq
        %v7926 = vshrl.u32 %v7925, 7
        %v7927 = vsub.s32 %v7924, %v7926
        %v7928 = vrot.slane %v7894, %v7927
        %v7929 = vcombine.low %v7907, %v7914
        %v7930 = vcombine.high %v7907, %v7914
        %v7931 = vcombine.low %v7921, %v7928
        %v7932 = vcombine.high %v7921, %v7928
        %v7934 = vunpack.c.l.s4 1966171168
        %v7935 = vunpack.c.0.s8 %v7934
        %v7936 = vlaneseq
        %v7937 = vshrl.u32 %v7936, 7
        %v7938 = vsub.s32 %v7935, %v7937
        %v7939 = vrot.slane %v7929, %v7938
        %v7941 = vunpack.c.l.s4 1966171168
        %v7942 = vunpack.c.0.s8 %v7941
        %v7943 = vlaneseq
        %v7944 = vshrl.u32 %v7943, 7
        %v7945 = vsub.s32 %v7942, %v7944
        %v7946 = vrot.slane %v7930, %v7945
        %v7948 = vunpack.c.l.s4 1966171168
        %v7949 = vunpack.c.0.s8 %v7948
        %v7950 = vlaneseq
        %v7951 = vshrl.u32 %v7950, 7
        %v7952 = vsub.s32 %v7949, %v7951
        %v7953 = vrot.slane %v7931, %v7952
        %v7955 = vunpack.c.l.s4 1966171168
        %v7956 = vunpack.c.0.s8 %v7955
        %v7957 = vlaneseq
        %v7958 = vshrl.u32 %v7957, 7
        %v7959 = vsub.s32 %v7956, %v7958
        %v7960 = vrot.slane %v7932, %v7959
        %v7961 = vcombine.low %v7939, %v7953
        %v7962 = vcombine.high %v7939, %v7953
        %v7963 = vcombine.low %v7946, %v7960
        %v7964 = vcombine.high %v7946, %v7960
        %v7966 = vunpack.c.l.s4 1966171168
        %v7967 = vunpack.c.0.s8 %v7966
        %v7968 = vlaneseq
        %v7969 = vshrl.u32 %v7968, 7
        %v7970 = vsub.s32 %v7967, %v7969
        %v7971 = vrot.slane %v7895, %v7970
        %v7972 = vcombine.high %v7971, %v7971
        %v7974 = vunpack.c.l.s4 1966171168
        %v7975 = vunpack.c.0.s8 %v7974
        %v7976 = vlaneseq
        %v7977 = vshrl.u32 %v7976, 7
        %v7978 = vsub.s32 %v7975, %v7977
        %v7979 = vrot.slane %v7971, %v7978
        %v7981 = vunpack.c.l.s4 1966171168
        %v7982 = vunpack.c.0.s8 %v7981
        %v7983 = vlaneseq
        %v7984 = vshrl.u32 %v7983, 7
        %v7985 = vsub.s32 %v7982, %v7984
        %v7986 = vrot.slane %v7972, %v7985
        %v7987 = vcombine.high %v7979, %v7979
        %v7988 = vcombine.high %v7986, %v7986
        %7989 = vrot.lane.b32.xlu0 %v7961, 33
        %v7990 = vpop.permute.xlu0 %7989
        %7991 = vrot.lane.b32.xlu0 %v7979, 33
        %v7992 = vpop.permute.xlu0 %7991
        %7993 = vrot.lane.b32.xlu0 %v7963, 33
        %v7994 = vpop.permute.xlu0 %7993
        %7995 = vrot.lane.b32.xlu0 %v7986, 33
        %v7996 = vpop.permute.xlu0 %7995
        %7997 = vrot.lane.b32.xlu0 %v7962, 33
        %v7998 = vpop.permute.xlu0 %7997
        %7999 = vrot.lane.b32.xlu0 %v7987, 33
        %v8000 = vpop.permute.xlu0 %7999
        %8001 = vrot.lane.b32.xlu0 %v7964, 33
        %v8002 = vpop.permute.xlu0 %8001
        %8003 = vrot.lane.b32.xlu0 %v7988, 33
        %v8004 = vpop.permute.xlu0 %8003
        %v8005 = vrot.slane %v7990, 1
        %v8006 = vrot.slane %v7992, 1
        %v8007 = vrot.slane %v7994, 1
        %v8008 = vrot.slane %v7996, 1
        %v8009 = vrot.slane %v7998, 1
        %v8010 = vrot.slane %v8000, 1
        %v8011 = vrot.slane %v8002, 1
        %v8012 = vrot.slane %v8004, 1
        %vm8013 = vcmask 1046528
        %v8014 = vsel %vm8013, %v8005, %v8006
        %v8015 = vsel %vm1821, %v7990, %v8014
        %v8016 = vsel %vm8013, %v8007, %v8008
        %v8017 = vsel %vm1821, %v7994, %v8016
        %v8018 = vsel %vm8013, %v8009, %v8010
        %v8019 = vsel %vm1821, %v7998, %v8018
        %v8020 = vsel %vm8013, %v8011, %v8012
        %v8021 = vsel %vm1821, %v8002, %v8020
        %8026 = vst [vmem:[%s310] ss:$4 sm:$0xff] %v8015
        %s8027 = scalar_lea.vmem %s310, 32
        %8028 = vst [vmem:[%s8027] ss:$4 sm:$0xff] %v8017
        %s8029 = scalar_lea.vmem %s310, 64
        %8030 = vst [vmem:[%s8029] ss:$4 sm:$0xff] %v8019
        %s8031 = scalar_lea.vmem %s310, 96
        %8032 = vst [vmem:[%s8031] ss:$4 sm:$0xff] %v8021
        %v8033 = vld [vmem:[%s468 + $0x4] sm:$0xff]
        %v8034 = vld [vmem:[%s468 + $0xc] sm:$0xff]
        %v8035 = vld [vmem:[%s468 + $0x14] sm:$0xff]
        %v8036 = vld [vmem:[%s468 + $0x1c] sm:$0xff]
        %v8037 = vmax.f32 %v7805, 0.0
        %v8038 = vmax.f32 %v7806, 0.0
        %v8039 = vmax.f32 %v7807, 0.0
        %v8040 = vmax.f32 %v7808, 0.0
        %v8041 = vmax.f32 %v7809, 0.0
        %8046 = vrot.lane.b32.xlu0 %v8033, 95
        %v8047 = vpop.permute.xlu0 %8046
        %8048 = vrot.lane.b32.xlu0 %v8034, 95
        %v8049 = vpop.permute.xlu0 %8048
        %8050 = vrot.lane.b32.xlu0 %v8035, 95
        %v8051 = vpop.permute.xlu0 %8050
        %8052 = vrot.lane.b32.xlu0 %v8036, 95
        %v8053 = vpop.permute.xlu0 %8052
        %v8054 = vrot.slane %v8047, 4
        %v8055 = vrot.slane %v8049, 4
        %v8056 = vrot.slane %v8051, 4
        %v8057 = vrot.slane %v8053, 4
        %v8058 = vsel %vm678, %v8054, %v8047
        %v8059 = vsel %vm680, %v8054, %v8055
        %v8060 = vsel %vm678, %v8059, %v8049
        %v8061 = vsel %vm680, %v8055, %v8056
        %v8062 = vsel %vm678, %v8061, %v8051
        %v8063 = vsel %vm680, %v8056, %v8057
        %v8064 = vsel %vm678, %v8063, %v8053
        %v8070 = vadd.f32 %v8037, %v8058
        %v8071 = vadd.f32 %v8038, %v8060
        %v8072 = vadd.f32 %v8039, %v8062
        %v8073 = vadd.f32 %v8040, %v8064
        %v8074 = vadd.f32 %v8041, %v8057
        %v8081 = vunpack.c.l.s4 1966171168
        %v8082 = vunpack.c.0.s8 %v8081
        %v8083 = vlaneseq
        %v8084 = vshrl.u32 %v8083, 7
        %v8085 = vsub.s32 %v8082, %v8084
        %v8086 = vrot.slane %v8070, %v8085
        %v8088 = vunpack.c.l.s4 1966171168
        %v8089 = vunpack.c.0.s8 %v8088
        %v8090 = vlaneseq
        %v8091 = vshrl.u32 %v8090, 7
        %v8092 = vsub.s32 %v8089, %v8091
        %v8093 = vrot.slane %v8071, %v8092
        %v8095 = vunpack.c.l.s4 1966171168
        %v8096 = vunpack.c.0.s8 %v8095
        %v8097 = vlaneseq
        %v8098 = vshrl.u32 %v8097, 7
        %v8099 = vsub.s32 %v8096, %v8098
        %v8100 = vrot.slane %v8072, %v8099
        %v8102 = vunpack.c.l.s4 1966171168
        %v8103 = vunpack.c.0.s8 %v8102
        %v8104 = vlaneseq
        %v8105 = vshrl.u32 %v8104, 7
        %v8106 = vsub.s32 %v8103, %v8105
        %v8107 = vrot.slane %v8073, %v8106
        %v8108 = vcombine.low %v8086, %v8093
        %v8109 = vcombine.high %v8086, %v8093
        %v8110 = vcombine.low %v8100, %v8107
        %v8111 = vcombine.high %v8100, %v8107
        %v8113 = vunpack.c.l.s4 1966171168
        %v8114 = vunpack.c.0.s8 %v8113
        %v8115 = vlaneseq
        %v8116 = vshrl.u32 %v8115, 7
        %v8117 = vsub.s32 %v8114, %v8116
        %v8118 = vrot.slane %v8108, %v8117
        %v8120 = vunpack.c.l.s4 1966171168
        %v8121 = vunpack.c.0.s8 %v8120
        %v8122 = vlaneseq
        %v8123 = vshrl.u32 %v8122, 7
        %v8124 = vsub.s32 %v8121, %v8123
        %v8125 = vrot.slane %v8109, %v8124
        %v8127 = vunpack.c.l.s4 1966171168
        %v8128 = vunpack.c.0.s8 %v8127
        %v8129 = vlaneseq
        %v8130 = vshrl.u32 %v8129, 7
        %v8131 = vsub.s32 %v8128, %v8130
        %v8132 = vrot.slane %v8110, %v8131
        %v8134 = vunpack.c.l.s4 1966171168
        %v8135 = vunpack.c.0.s8 %v8134
        %v8136 = vlaneseq
        %v8137 = vshrl.u32 %v8136, 7
        %v8138 = vsub.s32 %v8135, %v8137
        %v8139 = vrot.slane %v8111, %v8138
        %v8140 = vcombine.low %v8118, %v8132
        %v8141 = vcombine.high %v8118, %v8132
        %v8142 = vcombine.low %v8125, %v8139
        %v8143 = vcombine.high %v8125, %v8139
        %v8145 = vunpack.c.l.s4 1966171168
        %v8146 = vunpack.c.0.s8 %v8145
        %v8147 = vlaneseq
        %v8148 = vshrl.u32 %v8147, 7
        %v8149 = vsub.s32 %v8146, %v8148
        %v8150 = vrot.slane %v8074, %v8149
        %v8151 = vcombine.high %v8150, %v8150
        %v8153 = vunpack.c.l.s4 1966171168
        %v8154 = vunpack.c.0.s8 %v8153
        %v8155 = vlaneseq
        %v8156 = vshrl.u32 %v8155, 7
        %v8157 = vsub.s32 %v8154, %v8156
        %v8158 = vrot.slane %v8150, %v8157
        %v8160 = vunpack.c.l.s4 1966171168
        %v8161 = vunpack.c.0.s8 %v8160
        %v8162 = vlaneseq
        %v8163 = vshrl.u32 %v8162, 7
        %v8164 = vsub.s32 %v8161, %v8163
        %v8165 = vrot.slane %v8151, %v8164
        %v8166 = vcombine.high %v8158, %v8158
        %v8167 = vcombine.high %v8165, %v8165
        %8168 = vrot.lane.b32.xlu0 %v8140, 33
        %v8169 = vpop.permute.xlu0 %8168
        %8170 = vrot.lane.b32.xlu0 %v8158, 33
        %v8171 = vpop.permute.xlu0 %8170
        %8172 = vrot.lane.b32.xlu0 %v8142, 33
        %v8173 = vpop.permute.xlu0 %8172
        %8174 = vrot.lane.b32.xlu0 %v8165, 33
        %v8175 = vpop.permute.xlu0 %8174
        %8176 = vrot.lane.b32.xlu0 %v8141, 33
        %v8177 = vpop.permute.xlu0 %8176
        %8178 = vrot.lane.b32.xlu0 %v8166, 33
        %v8179 = vpop.permute.xlu0 %8178
        %8180 = vrot.lane.b32.xlu0 %v8143, 33
        %v8181 = vpop.permute.xlu0 %8180
        %8182 = vrot.lane.b32.xlu0 %v8167, 33
        %v8183 = vpop.permute.xlu0 %8182
        %v8184 = vrot.slane %v8169, 1
        %v8185 = vrot.slane %v8171, 1
        %v8186 = vrot.slane %v8173, 1
        %v8187 = vrot.slane %v8175, 1
        %v8188 = vrot.slane %v8177, 1
        %v8189 = vrot.slane %v8179, 1
        %v8190 = vrot.slane %v8181, 1
        %v8191 = vrot.slane %v8183, 1
        %v8192 = vsel %vm8013, %v8184, %v8185
        %v8193 = vsel %vm1821, %v8169, %v8192
        %v8194 = vsel %vm8013, %v8186, %v8187
        %v8195 = vsel %vm1821, %v8173, %v8194
        %v8196 = vsel %vm8013, %v8188, %v8189
        %v8197 = vsel %vm1821, %v8177, %v8196
        %v8198 = vsel %vm8013, %v8190, %v8191
        %v8199 = vsel %vm1821, %v8181, %v8198
        %s8204 = scalar_lea.vmem %s310, 1
        %8205 = vst [vmem:[%s8204] ss:$4 sm:$0xff] %v8193
        %s8206 = scalar_lea.vmem %s310, 33
        %8207 = vst [vmem:[%s8206] ss:$4 sm:$0xff] %v8195
        %s8208 = scalar_lea.vmem %s310, 65
        %8209 = vst [vmem:[%s8208] ss:$4 sm:$0xff] %v8197
        %s8210 = scalar_lea.vmem %s310, 97
        %8211 = vst [vmem:[%s8210] ss:$4 sm:$0xff] %v8199
        %v8212 = vld [vmem:[%s558 + $0x4] sm:$0xff]
        %v8213 = vld [vmem:[%s558 + $0xc] sm:$0xff]
        %v8214 = vld [vmem:[%s558 + $0x14] sm:$0xff]
        %v8215 = vld [vmem:[%s558 + $0x1c] sm:$0xff]
        %v8216 = vmax.f32 %v7849, 0.0
        %v8217 = vmax.f32 %v7850, 0.0
        %v8218 = vmax.f32 %v7851, 0.0
        %v8219 = vmax.f32 %v7852, 0.0
        %v8220 = vmax.f32 %v7853, 0.0
        %8225 = vrot.lane.b32.xlu0 %v8212, 95
        %v8226 = vpop.permute.xlu0 %8225
        %8227 = vrot.lane.b32.xlu0 %v8213, 95
        %v8228 = vpop.permute.xlu0 %8227
        %8229 = vrot.lane.b32.xlu0 %v8214, 95
        %v8230 = vpop.permute.xlu0 %8229
        %8231 = vrot.lane.b32.xlu0 %v8215, 95
        %v8232 = vpop.permute.xlu0 %8231
        %v8233 = vrot.slane %v8226, 4
        %v8234 = vrot.slane %v8228, 4
        %v8235 = vrot.slane %v8230, 4
        %v8236 = vrot.slane %v8232, 4
        %v8237 = vsel %vm678, %v8233, %v8226
        %v8238 = vsel %vm680, %v8233, %v8234
        %v8239 = vsel %vm678, %v8238, %v8228
        %v8240 = vsel %vm680, %v8234, %v8235
        %v8241 = vsel %vm678, %v8240, %v8230
        %v8242 = vsel %vm680, %v8235, %v8236
        %v8243 = vsel %vm678, %v8242, %v8232
        %v8249 = vadd.f32 %v8216, %v8237
        %v8250 = vadd.f32 %v8217, %v8239
        %v8251 = vadd.f32 %v8218, %v8241
        %v8252 = vadd.f32 %v8219, %v8243
        %v8253 = vadd.f32 %v8220, %v8236
        %v8260 = vunpack.c.l.s4 1966171168
        %v8261 = vunpack.c.0.s8 %v8260
        %v8262 = vlaneseq
        %v8263 = vshrl.u32 %v8262, 7
        %v8264 = vsub.s32 %v8261, %v8263
        %v8265 = vrot.slane %v8249, %v8264
        %v8267 = vunpack.c.l.s4 1966171168
        %v8268 = vunpack.c.0.s8 %v8267
        %v8269 = vlaneseq
        %v8270 = vshrl.u32 %v8269, 7
        %v8271 = vsub.s32 %v8268, %v8270
        %v8272 = vrot.slane %v8250, %v8271
        %v8274 = vunpack.c.l.s4 1966171168
        %v8275 = vunpack.c.0.s8 %v8274
        %v8276 = vlaneseq
        %v8277 = vshrl.u32 %v8276, 7
        %v8278 = vsub.s32 %v8275, %v8277
        %v8279 = vrot.slane %v8251, %v8278
        %v8281 = vunpack.c.l.s4 1966171168
        %v8282 = vunpack.c.0.s8 %v8281
        %v8283 = vlaneseq
        %v8284 = vshrl.u32 %v8283, 7
        %v8285 = vsub.s32 %v8282, %v8284
        %v8286 = vrot.slane %v8252, %v8285
        %v8287 = vcombine.low %v8265, %v8272
        %v8288 = vcombine.high %v8265, %v8272
        %v8289 = vcombine.low %v8279, %v8286
        %v8290 = vcombine.high %v8279, %v8286
        %v8292 = vunpack.c.l.s4 1966171168
        %v8293 = vunpack.c.0.s8 %v8292
        %v8294 = vlaneseq
        %v8295 = vshrl.u32 %v8294, 7
        %v8296 = vsub.s32 %v8293, %v8295
        %v8297 = vrot.slane %v8287, %v8296
        %v8299 = vunpack.c.l.s4 1966171168
        %v8300 = vunpack.c.0.s8 %v8299
        %v8301 = vlaneseq
        %v8302 = vshrl.u32 %v8301, 7
        %v8303 = vsub.s32 %v8300, %v8302
        %v8304 = vrot.slane %v8288, %v8303
        %v8306 = vunpack.c.l.s4 1966171168
        %v8307 = vunpack.c.0.s8 %v8306
        %v8308 = vlaneseq
        %v8309 = vshrl.u32 %v8308, 7
        %v8310 = vsub.s32 %v8307, %v8309
        %v8311 = vrot.slane %v8289, %v8310
        %v8313 = vunpack.c.l.s4 1966171168
        %v8314 = vunpack.c.0.s8 %v8313
        %v8315 = vlaneseq
        %v8316 = vshrl.u32 %v8315, 7
        %v8317 = vsub.s32 %v8314, %v8316
        %v8318 = vrot.slane %v8290, %v8317
        %v8319 = vcombine.low %v8297, %v8311
        %v8320 = vcombine.high %v8297, %v8311
        %v8321 = vcombine.low %v8304, %v8318
        %v8322 = vcombine.high %v8304, %v8318
        %v8324 = vunpack.c.l.s4 1966171168
        %v8325 = vunpack.c.0.s8 %v8324
        %v8326 = vlaneseq
        %v8327 = vshrl.u32 %v8326, 7
        %v8328 = vsub.s32 %v8325, %v8327
        %v8329 = vrot.slane %v8253, %v8328
        %v8330 = vcombine.high %v8329, %v8329
        %v8332 = vunpack.c.l.s4 1966171168
        %v8333 = vunpack.c.0.s8 %v8332
        %v8334 = vlaneseq
        %v8335 = vshrl.u32 %v8334, 7
        %v8336 = vsub.s32 %v8333, %v8335
        %v8337 = vrot.slane %v8329, %v8336
        %v8339 = vunpack.c.l.s4 1966171168
        %v8340 = vunpack.c.0.s8 %v8339
        %v8341 = vlaneseq
        %v8342 = vshrl.u32 %v8341, 7
        %v8343 = vsub.s32 %v8340, %v8342
        %v8344 = vrot.slane %v8330, %v8343
        %v8345 = vcombine.high %v8337, %v8337
        %v8346 = vcombine.high %v8344, %v8344
        %8347 = vrot.lane.b32.xlu0 %v8319, 33
        %v8348 = vpop.permute.xlu0 %8347
        %8349 = vrot.lane.b32.xlu0 %v8337, 33
        %v8350 = vpop.permute.xlu0 %8349
        %8351 = vrot.lane.b32.xlu0 %v8321, 33
        %v8352 = vpop.permute.xlu0 %8351
        %8353 = vrot.lane.b32.xlu0 %v8344, 33
        %v8354 = vpop.permute.xlu0 %8353
        %8355 = vrot.lane.b32.xlu0 %v8320, 33
        %v8356 = vpop.permute.xlu0 %8355
        %8357 = vrot.lane.b32.xlu0 %v8345, 33
        %v8358 = vpop.permute.xlu0 %8357
        %8359 = vrot.lane.b32.xlu0 %v8322, 33
        %v8360 = vpop.permute.xlu0 %8359
        %8361 = vrot.lane.b32.xlu0 %v8346, 33
        %v8362 = vpop.permute.xlu0 %8361
        %v8363 = vrot.slane %v8348, 1
        %v8364 = vrot.slane %v8350, 1
        %v8365 = vrot.slane %v8352, 1
        %v8366 = vrot.slane %v8354, 1
        %v8367 = vrot.slane %v8356, 1
        %v8368 = vrot.slane %v8358, 1
        %v8369 = vrot.slane %v8360, 1
        %v8370 = vrot.slane %v8362, 1
        %v8371 = vsel %vm8013, %v8363, %v8364
        %v8372 = vsel %vm1821, %v8348, %v8371
        %v8373 = vsel %vm8013, %v8365, %v8366
        %v8374 = vsel %vm1821, %v8352, %v8373
        %v8375 = vsel %vm8013, %v8367, %v8368
        %v8376 = vsel %vm1821, %v8356, %v8375
        %v8377 = vsel %vm8013, %v8369, %v8370
        %v8378 = vsel %vm1821, %v8360, %v8377
        %s8383 = scalar_lea.vmem %s310, 2
        %8384 = vst [vmem:[%s8383] ss:$4 sm:$0xff] %v8372
        %s8385 = scalar_lea.vmem %s310, 34
        %8386 = vst [vmem:[%s8385] ss:$4 sm:$0xff] %v8374
        %s8387 = scalar_lea.vmem %s310, 66
        %8388 = vst [vmem:[%s8387] ss:$4 sm:$0xff] %v8376
        %s8389 = scalar_lea.vmem %s310, 98
        %8390 = vst [vmem:[%s8389] ss:$4 sm:$0xff] %v8378
        %s8391 = smul.u32 4, %s20
        %p8392 = scmp.lt.s32.totalorder %s8391, 7
        %s8393 = scalar_select %p8392, %s8391, 7
        %s8394 = smul.addr %s8393, 8
        %s8395 = smul.addr %s8394, 4
        %s8396 = scalar_lea.vmem %s6, %s8395
        // Predicated region
        $region61: #{simple_residual_block.1} parent=43 // pred_check
          %p8397 = pneg %p169
        $region62: #{simple_residual_block.1} parent=43 // pred_check_branch
          %8399 = sbr.rel (%p8397) target = $region64
        $region63: #{simple_residual_block.1} parent=43 // pred_region
          %s8400 = smul.u32 4, %s20
        $region64: #{simple_residual_block.1} parent=43 // pred_fallthru
          _
      $region44: #{simple_residual_block.1} parent=5 // pred_fallthru
        _
      %p8401 = scmp.le.s32.totalorder 2, %s15
      // Predicated region
      $region65: #{simple_residual_block.1} parent=5 // pred_check
        %p8402 = pneg %p8401
      $region66: #{simple_residual_block.1} parent=5 // pred_check_branch
        %8404 = sbr.rel (%p8402) target = $region68
      $region67: #{simple_residual_block.1} parent=5 // pred_region
        %s8405 = ssub.s32 %s15, 2
        // Predicated region
        $region69: #{simple_residual_block.1} parent=67 // pred_check
          %p8406 = pneg %p175
        $region70: #{simple_residual_block.1} parent=67 // pred_check_branch
          %8408 = sbr.rel (%p8406) target = $region72
        $region71: #{simple_residual_block.1} parent=67 // pred_region
          %s8409 = smul.u32 4, %s21
          %p8410 = scmp.lt.s32.totalorder %s8409, 7
          %s8411 = scalar_select %p8410, %s8409, 7
          %s8412 = smul.addr %s8411, 8
          %s8413 = smul.addr %s8412, 4
          %s8414 = scalar_lea.vmem %s6, %s8413
        $region72: #{simple_residual_block.1} parent=67 // pred_fallthru
          _
      $region68: #{simple_residual_block.1} parent=5 // pred_fallthru
        _
    $region6: #{simple_residual_block.1} parent=1 // loop_footer
      %s19 = sadd.s32 1, %s15
    $region7: #{simple_residual_block.1} parent=1 // loop_footer_branch
      %14 = sbr.rel target = $region3
    $region8: #{simple_residual_block.1} parent=1 // loop_exit
      _
    %8415 = vsyncpa [#allocation5], 1
    %s8416 = scalar_lea.sflag [#allocation5], 1
    %8417 = vsyncpa %s8416, 1
    %8418 = vsyncpa [#allocation7], 1
    %8419 = vsyncpa [#allocation10], 1

</llo_original>
